<compile_context>
chip_gen: v7x
topology: tpu7x:2x2x1
jax: 0.10.0
libtpu: 0.0.40
codegen_flags: <defaults>
</compile_context>

<pallas_src>
import jax
import jax.numpy as jnp
from jax.experimental import pallas as pl
from jax.experimental.pallas import tpu as pltpu

# ----------------- small, PyTorch-consistent config -----------------
NUM_INPUTS = 24              # num_inputs
NUM_SUBSPACES = 4            # S  (sequence length after `divide`)
EMBED_DIM = 32               # E
NUM_HEADS = 4                # H
HEAD_DIM = EMBED_DIM // NUM_HEADS
HIDDEN = NUM_SUBSPACES * EMBED_DIM       # 128 == embed_dim * num_subspaces (lane-dense)
FFN_DIM = 64                 # feedforward_dim
LN_EPS = 1e-5                # torch.nn.LayerNorm default

BATCH_BLOCK = 8                          # batch rows per grid step
SB = NUM_SUBSPACES * BATCH_BLOCK         # 32 token rows per block, row = s*B + b
HEAD_PAD = 128                           # lane-dense packed [mask | reconstruction | 0-pad]

# MXU operand dtype (accumulation always f32). Use jnp.float32 if bit-level parity
# with the PyTorch reference is required.
MXU_DTYPE = jnp.bfloat16


def _layernorm(x, gamma, beta):
    mu = jnp.mean(x, axis=-1, keepdims=True)
    var = jnp.mean((x - mu) ** 2, axis=-1, keepdims=True)
    return (x - mu) * jax.lax.rsqrt(var + LN_EPS) * gamma + beta


def _mm(a, b):
    # MXU matmul: bf16 operands, f32 accumulation.
    return jnp.dot(a.astype(MXU_DTYPE), b.astype(MXU_DTYPE),
                   preferred_element_type=jnp.float32)


# ----------------- fused forward kernel (one batch block per grid step) -----------------
def _fwd_kernel(x_ref, ew_ref, eb_ref,
                wqkv_ref, bqkv_ref, wo_ref, bo_ref,
                w1_ref, b1_ref, w2_ref, b2_ref,
                g1_ref, be1_ref, g2_ref, be2_ref,
                hw_ref, hb_ref,
                x1_ref, x2_ref, x3_ref, head_ref,
                act_scr):
    S, B, E, H, Hd = NUM_SUBSPACES, BATCH_BLOCK, EMBED_DIM, NUM_HEADS, HEAD_DIM

    # ---- excite + relu: (B, NI) @ (NI, HIDDEN), lane-dense (8, 128) result ----
    h = jnp.maximum(_mm(x_ref[...], ew_ref[...]) + eb_ref[...], 0.0)

    # ---- divide: (B, S*E) -> token rows (S*B, E), row = s*B + b (torch (S,B,E) flatten) ----
    for s in range(S):
        act_scr[s * B:(s + 1) * B, :] = h[:, s * E:(s + 1) * E]
    act = act_scr[...]                                       # (SB, E) f32

    # additive attention bias (computed once): token (s, b) attends only to same batch b
    r = jax.lax.broadcasted_iota(jnp.int32, (SB, SB), 0) % B
    c = jax.lax.broadcasted_iota(jnp.int32, (SB, SB), 1) % B
    bias = jnp.where(r == c, 0.0, -1e30).astype(jnp.float32)

    out_refs = (x1_ref, x2_ref, x3_ref)
    for l in range(3):                                       # 3 transformer-encoder blocks
        wo_l = wo_ref[l]                                     # (H, Hd, E)
        # fused QKV projection (attention scale pre-folded into Wq / bq at init)
        qkv = _mm(act, wqkv_ref[l]) + bqkv_ref[l]            # (SB, 3E) f32

        # per-head attention; out_proj folded into the head loop (no ctx staging)
        attn = jnp.zeros((SB, E), jnp.float32)
        for hh in range(H):
            qh = qkv[:, hh * Hd:(hh + 1) * Hd]
            kh = qkv[:, E + hh * Hd:E + (hh + 1) * Hd]
            vh = qkv[:, 2 * E + hh * Hd:2 * E + (hh + 1) * Hd]
            s_mat = jax.lax.dot_general(
                qh.astype(MXU_DTYPE), kh.astype(MXU_DTYPE),
                (((1,), (1,)), ((), ())),
                preferred_element_type=jnp.float32) + bias   # (SB, SB)
            s_mat = s_mat - jnp.max(s_mat, axis=-1, keepdims=True)
            p = jnp.exp(s_mat)
            p = p / jnp.sum(p, axis=-1, keepdims=True)       # exact divide (no approx recip)
            ctx = _mm(p, vh)                                 # (SB, Hd)
            attn = attn + _mm(ctx, wo_l[hh])                 # accumulate out_proj per head
        attn = attn + bo_ref[l]

        y1 = _layernorm(act + attn, g1_ref[l], be1_ref[l])
        hid = jnp.maximum(_mm(y1, w1_ref[l]) + b1_ref[l], 0.0)
        ff = _mm(hid, w2_ref[l]) + b2_ref[l]
        act = _layernorm(y1 + ff, g2_ref[l], be2_ref[l])

        # combine: write lane slices directly into the lane-dense (B, S*E) output block
        for s in range(S):
            out_refs[l][:, s * E:(s + 1) * E] = act[s * B:(s + 1) * B, :]

    # ---- fused head: [mask_predictor | reconstructor] -> one lane-dense (B, 128) store ----
    comb = x3_ref[...]                                       # (B, HIDDEN) == combine(x3)
    head_ref[...] = _mm(comb, hw_ref[...]) + hb_ref[...]


# ----------------- deterministic parameter init (PyTorch shapes, pre-arranged) -----------------
_PARAM_ORDER = ("ew", "eb", "wqkv", "bqkv", "wo", "bo", "w1", "b1", "w2", "b2",
                "g1", "be1", "g2", "be2", "hw", "hb")


def init_params(key):
    def dense(k, out_f, in_f):
        k1, k2 = jax.random.split(k)
        w = jax.random.normal(k1, (out_f, in_f), jnp.float32) * 0.05
        b = jax.random.normal(k2, (out_f,), jnp.float32) * 0.02
        return w, b

    keys = jax.random.split(key, 6)
    E, Fd, NI = EMBED_DIM, FFN_DIM, NUM_INPUTS
    scale = 1.0 / float(HEAD_DIM) ** 0.5
    # fold attention scale into the q part of the fused in-proj (weight AND bias)
    scale_vec = jnp.concatenate([jnp.full((E,), scale, jnp.float32),
                                 jnp.ones((2 * E,), jnp.float32)])

    ew, eb = dense(keys[0], HIDDEN, NI)                      # excite (torch: out, in)
    enc = {k: [] for k in ("wqkv", "bqkv", "wo", "bo", "w1", "b1", "w2", "b2",
                           "g1", "be1", "g2", "be2")}
    for i in range(3):
        ks = jax.random.split(keys[1 + i], 4)
        ipw, ipb = dense(ks[0], 3 * E, E)                    # MHA in_proj (3E, E)
        ow, ob = dense(ks[1], E, E)                          # out_proj
        w1, b1 = dense(ks[2], Fd, E)                         # linear_1
        w2, b2 = dense(ks[3], E, Fd)                         # linear_2
        enc["wqkv"].append((ipw.T * scale_vec[None, :]).astype(MXU_DTYPE))   # (E, 3E)
        enc["bqkv"].append((ipb * scale_vec).reshape(1, 3 * E))
        enc["wo"].append(ow.T.reshape(NUM_HEADS, HEAD_DIM, E).astype(MXU_DTYPE))
        enc["bo"].append(ob.reshape(1, E))
        enc["w1"].append(w1.T.astype(MXU_DTYPE))             # (E, Fd)
        enc["b1"].append(b1.reshape(1, Fd))
        enc["w2"].append(w2.T.astype(MXU_DTYPE))             # (Fd, E)
        enc["b2"].append(b2.reshape(1, E))
        enc["g1"].append(jnp.ones((1, E), jnp.float32))
        enc["be1"].append(jnp.zeros((1, E), jnp.float32))
        enc["g2"].append(jnp.ones((1, E), jnp.float32))
        enc["be2"].append(jnp.zeros((1, E), jnp.float32))

    # head: mask_predictor + reconstructor fused into one lane-dense (HIDDEN, 128) weight.
    # rec = comb@Wra + pm@Wrb + rb with pm = comb@Wm + mb
    #     = comb@(Wra + Wm@Wrb) + (mb@Wrb + rb)
    mw, mb = dense(keys[4], NI, HIDDEN)                      # mask_predictor
    rw, rb = dense(keys[5], NI, HIDDEN + NI)                 # reconstructor
    wm = mw.T                                                # (HIDDEN, NI)
    rwa = rw[:, :HIDDEN].T                                   # (HIDDEN, NI)
    rwb = rw[:, HIDDEN:].T                                   # (NI, NI)
    hw = jnp.zeros((HIDDEN, HEAD_PAD), jnp.float32)
    hw = hw.at[:, :NI].set(wm)
    hw = hw.at[:, NI:2 * NI].set(rwa + wm @ rwb)
    hb = jnp.zeros((1, HEAD_PAD), jnp.float32)
    hb = hb.at[0, :NI].set(mb)
    hb = hb.at[0, NI:2 * NI].set(mb @ rwb + rb)

    params = dict(ew=ew.T.astype(MXU_DTYPE), eb=eb.reshape(1, HIDDEN),
                  hw=hw.astype(MXU_DTYPE), hb=hb)
    for k, v in enc.items():
        params[k] = jnp.stack(v)                             # leading dim = 3 encoders
    return params


# ----------------- forward (matches TransformerAutoEncoder.forward) -----------------
@jax.jit
def forward(params, x):
    bt = x.shape[0]
    assert bt % BATCH_BLOCK == 0, "batch must be a multiple of BATCH_BLOCK"
    nblk = bt // BATCH_BLOCK
    E, Fd, NI = EMBED_DIM, FFN_DIM, NUM_INPUTS
    f32 = jnp.float32

    wmap2 = lambda i: (0, 0)
    wmap3 = lambda i: (0, 0, 0)
    wmap4 = lambda i: (0, 0, 0, 0)
    in_specs = [
        pl.BlockSpec((BATCH_BLOCK, NI), lambda i: (i, 0)),               # x
        pl.BlockSpec((NI, HIDDEN), wmap2),                               # ew
        pl.BlockSpec((1, HIDDEN), wmap2),                                # eb
        pl.BlockSpec((3, E, 3 * E), wmap3),                              # wqkv
        pl.BlockSpec((3, 1, 3 * E), wmap3),                              # bqkv
        pl.BlockSpec((3, NUM_HEADS, HEAD_DIM, E), wmap4),                # wo (per-head)
        pl.BlockSpec((3, 1, E), wmap3),                                  # bo
        pl.BlockSpec((3, E, Fd), wmap3),                                 # w1
        pl.BlockSpec((3, 1, Fd), wmap3),                                 # b1
        pl.BlockSpec((3, Fd, E), wmap3),                                 # w2
        pl.BlockSpec((3, 1, E), wmap3),                                  # b2
        pl.BlockSpec((3, 1, E), wmap3),                                  # g1
        pl.BlockSpec((3, 1, E), wmap3),                                  # be1
        pl.BlockSpec((3, 1, E), wmap3),                                  # g2
        pl.BlockSpec((3, 1, E), wmap3),                                  # be2
        pl.BlockSpec((HIDDEN, HEAD_PAD), wmap2),                         # hw
        pl.BlockSpec((1, HEAD_PAD), wmap2),                              # hb
    ]
    out_specs = (
        pl.BlockSpec((BATCH_BLOCK, HIDDEN), lambda i: (i, 0)),           # combine(x1)
        pl.BlockSpec((BATCH_BLOCK, HIDDEN), lambda i: (i, 0)),           # combine(x2)
        pl.BlockSpec((BATCH_BLOCK, HIDDEN), lambda i: (i, 0)),           # combine(x3)
        pl.BlockSpec((BATCH_BLOCK, HEAD_PAD), lambda i: (i, 0)),         # [mask | rec | pad]
    )
    out_shape = (
        jax.ShapeDtypeStruct((bt, HIDDEN), f32),
        jax.ShapeDtypeStruct((bt, HIDDEN), f32),
        jax.ShapeDtypeStruct((bt, HIDDEN), f32),
        jax.ShapeDtypeStruct((bt, HEAD_PAD), f32),
    )

    x1c, x2c, x3c, head = pl.pallas_call(
        _fwd_kernel,
        out_shape=out_shape,
        grid_spec=pltpu.PrefetchScalarGridSpec(
            num_scalar_prefetch=0,
            grid=(nblk,),
            in_specs=in_specs,
            out_specs=out_specs,
            scratch_shapes=[pltpu.VMEM((SB, EMBED_DIM), f32)],           # divide staging
        ),
        compiler_params=pltpu.CompilerParams(
            dimension_semantics=("parallel",)),   # batch blocks shard across TCs on v7x
    )(x, *[params[k] for k in _PARAM_ORDER])

    # back to PyTorch (S, B, E) convention for the attention-block outputs
    to_sbe = lambda t: jnp.transpose(
        t.reshape(bt, NUM_SUBSPACES, EMBED_DIM), (1, 0, 2))
    predicted_mask = head[:, :NUM_INPUTS]
    reconstruction = head[:, NUM_INPUTS:2 * NUM_INPUTS]
    return (to_sbe(x1c), to_sbe(x2c), to_sbe(x3c)), (reconstruction, predicted_mask)


if __name__ == "__main__":
    key = jax.random.PRNGKey(0)
    pkey, xkey = jax.random.split(key)
    params = init_params(pkey)

    demo_batch = 2 * BATCH_BLOCK                  # 16 rows -> grid=(2,), exercises pipelining
    x = jax.random.normal(xkey, (demo_batch, NUM_INPUTS), jnp.float32)

    (x1, x2, x3), (reconstruction, predicted_mask) = forward(params, x)
    jax.block_until_ready((x1, x2, x3, reconstruction, predicted_mask))

    assert x1.shape == (NUM_SUBSPACES, demo_batch, EMBED_DIM)
    assert x2.shape == (NUM_SUBSPACES, demo_batch, EMBED_DIM)
    assert x3.shape == (NUM_SUBSPACES, demo_batch, EMBED_DIM)
    assert reconstruction.shape == (demo_batch, NUM_INPUTS)
    assert predicted_mask.shape == (demo_batch, NUM_INPUTS)
    assert bool(jnp.all(jnp.isfinite(x1)))
    assert bool(jnp.all(jnp.isfinite(x3)))
    assert bool(jnp.all(jnp.isfinite(reconstruction)))
    assert bool(jnp.all(jnp.isfinite(predicted_mask)))
    print("KERNEL_OK")
</pallas_src>

<mosaic_0001>
module attributes {stable_mosaic.version = 11 : i64} {
  func.func @_fwd_kernel(%arg0: i32, %arg1: memref<8x24xf32, #tpu.memory_space<vmem>>, %arg2: memref<24x128xbf16, #tpu.memory_space<vmem>>, %arg3: memref<1x128xf32, #tpu.memory_space<vmem>>, %arg4: memref<3x32x96xbf16, #tpu.memory_space<vmem>>, %arg5: memref<3x1x96xf32, #tpu.memory_space<vmem>>, %arg6: memref<3x4x8x32xbf16, #tpu.memory_space<vmem>>, %arg7: memref<3x1x32xf32, #tpu.memory_space<vmem>>, %arg8: memref<3x32x64xbf16, #tpu.memory_space<vmem>>, %arg9: memref<3x1x64xf32, #tpu.memory_space<vmem>>, %arg10: memref<3x64x32xbf16, #tpu.memory_space<vmem>>, %arg11: memref<3x1x32xf32, #tpu.memory_space<vmem>>, %arg12: memref<3x1x32xf32, #tpu.memory_space<vmem>>, %arg13: memref<3x1x32xf32, #tpu.memory_space<vmem>>, %arg14: memref<3x1x32xf32, #tpu.memory_space<vmem>>, %arg15: memref<3x1x32xf32, #tpu.memory_space<vmem>>, %arg16: memref<128x128xbf16, #tpu.memory_space<vmem>>, %arg17: memref<1x128xf32, #tpu.memory_space<vmem>>, %arg18: memref<8x128xf32, #tpu.memory_space<vmem>>, %arg19: memref<8x128xf32, #tpu.memory_space<vmem>>, %arg20: memref<8x128xf32, #tpu.memory_space<vmem>>, %arg21: memref<8x128xf32, #tpu.memory_space<vmem>>, %arg22: memref<32x32xf32, #tpu.memory_space<vmem>>) attributes {dimension_semantics = [#tpu.dimension_semantics<parallel>], iteration_bounds = array<i64: 2>, scalar_prefetch = 0 : i64, scratch_operands = 1 : i64, tpu.core_type = #tpu.core_type<tc>, window_params = [{transform_indices = @transform_0, window_bounds = array<i64: 8, 24>}, {pipeline_mode = #tpu.pipeline_mode<synchronous>, transform_indices = @transform_1, window_bounds = array<i64: 24, 128>}, {pipeline_mode = #tpu.pipeline_mode<synchronous>, transform_indices = @transform_2, window_bounds = array<i64: 1, 128>}, {pipeline_mode = #tpu.pipeline_mode<synchronous>, transform_indices = @transform_3, window_bounds = array<i64: 3, 32, 96>}, {pipeline_mode = #tpu.pipeline_mode<synchronous>, transform_indices = @transform_4, window_bounds = array<i64: 3, 1, 96>}, {pipeline_mode = #tpu.pipeline_mode<synchronous>, transform_indices = @transform_5, window_bounds = array<i64: 3, 4, 8, 32>}, {pipeline_mode = #tpu.pipeline_mode<synchronous>, transform_indices = @transform_6, window_bounds = array<i64: 3, 1, 32>}, {pipeline_mode = #tpu.pipeline_mode<synchronous>, transform_indices = @transform_7, window_bounds = array<i64: 3, 32, 64>}, {pipeline_mode = #tpu.pipeline_mode<synchronous>, transform_indices = @transform_8, window_bounds = array<i64: 3, 1, 64>}, {pipeline_mode = #tpu.pipeline_mode<synchronous>, transform_indices = @transform_9, window_bounds = array<i64: 3, 64, 32>}, {pipeline_mode = #tpu.pipeline_mode<synchronous>, transform_indices = @transform_10, window_bounds = array<i64: 3, 1, 32>}, {pipeline_mode = #tpu.pipeline_mode<synchronous>, transform_indices = @transform_11, window_bounds = array<i64: 3, 1, 32>}, {pipeline_mode = #tpu.pipeline_mode<synchronous>, transform_indices = @transform_12, window_bounds = array<i64: 3, 1, 32>}, {pipeline_mode = #tpu.pipeline_mode<synchronous>, transform_indices = @transform_13, window_bounds = array<i64: 3, 1, 32>}, {pipeline_mode = #tpu.pipeline_mode<synchronous>, transform_indices = @transform_14, window_bounds = array<i64: 3, 1, 32>}, {pipeline_mode = #tpu.pipeline_mode<synchronous>, transform_indices = @transform_15, window_bounds = array<i64: 128, 128>}, {pipeline_mode = #tpu.pipeline_mode<synchronous>, transform_indices = @transform_16, window_bounds = array<i64: 1, 128>}, {transform_indices = @transform_17, window_bounds = array<i64: 8, 128>}, {transform_indices = @transform_18, window_bounds = array<i64: 8, 128>}, {transform_indices = @transform_19, window_bounds = array<i64: 8, 128>}, {transform_indices = @transform_20, window_bounds = array<i64: 8, 128>}]} {
    %c0 = arith.constant 0 : index
    %c0_0 = arith.constant 0 : index
    %0 = vector.load %arg1[%c0, %c0_0] : memref<8x24xf32, #tpu.memory_space<vmem>>, vector<8x24xf32>
    %c0_1 = arith.constant 0 : index
    %c0_2 = arith.constant 0 : index
    %1 = vector.load %arg2[%c0_1, %c0_2] : memref<24x128xbf16, #tpu.memory_space<vmem>>, vector<24x128xbf16>
    %2 = arith.truncf %0 : vector<8x24xf32> to vector<8x24xbf16>
    %cst = arith.constant dense<0.000000e+00> : vector<8x128xf32>
    %3 = tpu.matmul %2, %1, %cst {dimension_numbers = #tpu.dot_dimension_numbers<[1], [0], [0], [1], [0, 0, 1, 1], [], []>} : vector<8x24xbf16>, vector<24x128xbf16>, vector<8x128xf32> -> vector<8x128xf32>
    %c0_3 = arith.constant 0 : index
    %c0_4 = arith.constant 0 : index
    %4 = vector.load %arg3[%c0_3, %c0_4] : memref<1x128xf32, #tpu.memory_space<vmem>>, vector<1x128xf32>
    %5 = vector.broadcast %4 : vector<1x128xf32> to vector<8x128xf32>
    %6 = arith.addf %3, %5 : vector<8x128xf32>
    %cst_5 = arith.constant 0.000000e+00 : f32
    %7 = vector.broadcast %cst_5 : f32 to vector<8x128xf32>
    %8 = arith.maximumf %6, %7 : vector<8x128xf32>
    %9 = vector.extract_strided_slice %8 {offsets = [0, 0], sizes = [8, 32], strides = [1, 1]} : vector<8x128xf32> to vector<8x32xf32>
    %c0_6 = arith.constant 0 : index
    %c0_7 = arith.constant 0 : index
    %10 = vector.load %arg22[%c0_6, %c0_7] : memref<32x32xf32, #tpu.memory_space<vmem>>, vector<8x32xf32>
    tpu.vector_store %arg22[%c0_6, %c0_7], %9 {strides = array<i32>} : memref<32x32xf32, #tpu.memory_space<vmem>>, vector<8x32xf32>,
    %11 = vector.extract_strided_slice %8 {offsets = [0, 32], sizes = [8, 32], strides = [1, 1]} : vector<8x128xf32> to vector<8x32xf32>
    %c8 = arith.constant 8 : index
    %c0_8 = arith.constant 0 : index
    %12 = vector.load %arg22[%c8, %c0_8] : memref<32x32xf32, #tpu.memory_space<vmem>>, vector<8x32xf32>
    tpu.vector_store %arg22[%c8, %c0_8], %11 {strides = array<i32>} : memref<32x32xf32, #tpu.memory_space<vmem>>, vector<8x32xf32>,
    %13 = vector.extract_strided_slice %8 {offsets = [0, 64], sizes = [8, 32], strides = [1, 1]} : vector<8x128xf32> to vector<8x32xf32>
    %c16 = arith.constant 16 : index
    %c0_9 = arith.constant 0 : index
    %14 = vector.load %arg22[%c16, %c0_9] : memref<32x32xf32, #tpu.memory_space<vmem>>, vector<8x32xf32>
    tpu.vector_store %arg22[%c16, %c0_9], %13 {strides = array<i32>} : memref<32x32xf32, #tpu.memory_space<vmem>>, vector<8x32xf32>,
    %15 = vector.extract_strided_slice %8 {offsets = [0, 96], sizes = [8, 32], strides = [1, 1]} : vector<8x128xf32> to vector<8x32xf32>
    %c24 = arith.constant 24 : index
    %c0_10 = arith.constant 0 : index
    %16 = vector.load %arg22[%c24, %c0_10] : memref<32x32xf32, #tpu.memory_space<vmem>>, vector<8x32xf32>
    tpu.vector_store %arg22[%c24, %c0_10], %15 {strides = array<i32>} : memref<32x32xf32, #tpu.memory_space<vmem>>, vector<8x32xf32>,
    %c0_11 = arith.constant 0 : index
    %c0_12 = arith.constant 0 : index
    %17 = vector.load %arg22[%c0_11, %c0_12] : memref<32x32xf32, #tpu.memory_space<vmem>>, vector<32x32xf32>
    %18 = tpu.iota {dimensions = array<i32: 0>} : vector<32x32xi32>
    %c8_i32 = arith.constant 8 : i32
    %c0_i32 = arith.constant 0 : i32
    %19 = arith.cmpi eq, %c8_i32, %c0_i32 : i32
    %c1_i32 = arith.constant 1 : i32
    %20 = arith.select %19, %c1_i32, %c8_i32 : i32
    %21 = vector.broadcast %20 : i32 to vector<32x32xi32>
    %22 = arith.remsi %18, %21 : vector<32x32xi32>
    %c0_i32_13 = arith.constant 0 : i32
    %23 = vector.broadcast %c0_i32_13 : i32 to vector<32x32xi32>
    %24 = arith.cmpi ne, %22, %23 : vector<32x32xi32>
    %c0_i32_14 = arith.constant 0 : i32
    %25 = vector.broadcast %c0_i32_14 : i32 to vector<32x32xi32>
    %26 = arith.cmpi slt, %22, %25 : vector<32x32xi32>
    %c0_i32_15 = arith.constant 0 : i32
    %27 = arith.cmpi slt, %20, %c0_i32_15 : i32
    %28 = vector.broadcast %27 : i1 to vector<32x32xi1>
    %29 = vector.broadcast %28 : vector<32x32xi1> to vector<32x32xi1>
    %30 = arith.xori %26, %29 : vector<32x32xi1>
    %31 = arith.andi %30, %24 : vector<32x32xi1>
    %32 = vector.broadcast %20 : i32 to vector<32x32xi32>
    %33 = arith.addi %22, %32 : vector<32x32xi32>
    %34 = arith.select %31, %33, %22 : vector<32x32xi1>, vector<32x32xi32>
    %35 = tpu.iota {dimensions = array<i32: 1>} : vector<32x32xi32>
    %c8_i32_16 = arith.constant 8 : i32
    %c0_i32_17 = arith.constant 0 : i32
    %36 = arith.cmpi eq, %c8_i32_16, %c0_i32_17 : i32
    %c1_i32_18 = arith.constant 1 : i32
    %37 = arith.select %36, %c1_i32_18, %c8_i32_16 : i32
    %38 = vector.broadcast %37 : i32 to vector<32x32xi32>
    %39 = arith.remsi %35, %38 : vector<32x32xi32>
    %c0_i32_19 = arith.constant 0 : i32
    %40 = vector.broadcast %c0_i32_19 : i32 to vector<32x32xi32>
    %41 = arith.cmpi ne, %39, %40 : vector<32x32xi32>
    %c0_i32_20 = arith.constant 0 : i32
    %42 = vector.broadcast %c0_i32_20 : i32 to vector<32x32xi32>
    %43 = arith.cmpi slt, %39, %42 : vector<32x32xi32>
    %c0_i32_21 = arith.constant 0 : i32
    %44 = arith.cmpi slt, %37, %c0_i32_21 : i32
    %45 = vector.broadcast %44 : i1 to vector<32x32xi1>
    %46 = vector.broadcast %45 : vector<32x32xi1> to vector<32x32xi1>
    %47 = arith.xori %43, %46 : vector<32x32xi1>
    %48 = arith.andi %47, %41 : vector<32x32xi1>
    %49 = vector.broadcast %37 : i32 to vector<32x32xi32>
    %50 = arith.addi %39, %49 : vector<32x32xi32>
    %51 = arith.select %48, %50, %39 : vector<32x32xi1>, vector<32x32xi32>
    %52 = arith.cmpi eq, %34, %51 : vector<32x32xi32>
    %cst_22 = arith.constant 0.000000e+00 : f32
    %cst_23 = arith.constant -1.000000e+30 : f32
    %53 = vector.broadcast %cst_22 : f32 to vector<32x32xf32>
    %54 = vector.broadcast %cst_23 : f32 to vector<32x32xf32>
    %55 = arith.select %52, %53, %54 : vector<32x32xi1>, vector<32x32xf32>
    %c0_24 = arith.constant 0 : index
    %c0_25 = arith.constant 0 : index
    %c0_26 = arith.constant 0 : index
    %c0_27 = arith.constant 0 : index
    %56 = vector.load %arg6[%c0_24, %c0_25, %c0_26, %c0_27] : memref<3x4x8x32xbf16, #tpu.memory_space<vmem>>, vector<1x4x8x32xbf16>
    %57 = vector.shape_cast %56 : vector<1x4x8x32xbf16> to vector<4x8x32xbf16>
    %c0_28 = arith.constant 0 : index
    %c0_29 = arith.constant 0 : index
    %c0_30 = arith.constant 0 : index
    %58 = vector.load %arg4[%c0_28, %c0_29, %c0_30] : memref<3x32x96xbf16, #tpu.memory_space<vmem>>, vector<1x32x96xbf16>
    %59 = vector.shape_cast %58 : vector<1x32x96xbf16> to vector<32x96xbf16>
    %60 = arith.truncf %17 : vector<32x32xf32> to vector<32x32xbf16>
    %cst_31 = arith.constant dense<0.000000e+00> : vector<32x96xf32>
    %61 = tpu.matmul %60, %59, %cst_31 {dimension_numbers = #tpu.dot_dimension_numbers<[1], [0], [0], [1], [0, 0, 1, 1], [], []>} : vector<32x32xbf16>, vector<32x96xbf16>, vector<32x96xf32> -> vector<32x96xf32>
    %c0_32 = arith.constant 0 : index
    %c0_33 = arith.constant 0 : index
    %c0_34 = arith.constant 0 : index
    %62 = vector.load %arg5[%c0_32, %c0_33, %c0_34] : memref<3x1x96xf32, #tpu.memory_space<vmem>>, vector<1x1x96xf32>
    %63 = vector.shape_cast %62 : vector<1x1x96xf32> to vector<1x96xf32>
    %64 = vector.broadcast %63 : vector<1x96xf32> to vector<32x96xf32>
    %65 = arith.addf %61, %64 : vector<32x96xf32>
    %cst_35 = arith.constant 0.000000e+00 : f32
    %66 = vector.broadcast %cst_35 : f32 to vector<32x32xf32>
    %67 = vector.extract_strided_slice %65 {offsets = [0, 0], sizes = [32, 8], strides = [1, 1]} : vector<32x96xf32> to vector<32x8xf32>
    %68 = vector.extract_strided_slice %65 {offsets = [0, 32], sizes = [32, 8], strides = [1, 1]} : vector<32x96xf32> to vector<32x8xf32>
    %69 = vector.extract_strided_slice %65 {offsets = [0, 64], sizes = [32, 8], strides = [1, 1]} : vector<32x96xf32> to vector<32x8xf32>
    %70 = arith.truncf %67 : vector<32x8xf32> to vector<32x8xbf16>
    %71 = arith.truncf %68 : vector<32x8xf32> to vector<32x8xbf16>
    %cst_36 = arith.constant dense<0.000000e+00> : vector<32x32xf32>
    %72 = tpu.matmul %70, %71, %cst_36 {dimension_numbers = #tpu.dot_dimension_numbers<[1], [1], [0], [0], [0, 0, 1, 0], [], []>} : vector<32x8xbf16>, vector<32x8xbf16>, vector<32x32xf32> -> vector<32x32xf32>
    %73 = arith.addf %72, %55 : vector<32x32xf32>
    %cst_37 = arith.constant dense<0xFF800000> : vector<32xf32>
    %74 = vector.multi_reduction <maximumf>, %73, %cst_37 [1] : vector<32x32xf32> to vector<32xf32>
    %75 = vector.shape_cast %74 : vector<32xf32> to vector<32x1xf32>
    %76 = vector.broadcast %75 : vector<32x1xf32> to vector<32x32xf32>
    %77 = arith.subf %73, %76 : vector<32x32xf32>
    %78 = math.exp %77 : vector<32x32xf32>
    %cst_38 = arith.constant dense<0.000000e+00> : vector<32xf32>
    %79 = vector.multi_reduction <add>, %78, %cst_38 [1] : vector<32x32xf32> to vector<32xf32>
    %80 = vector.shape_cast %79 : vector<32xf32> to vector<32x1xf32>
    %81 = vector.broadcast %80 : vector<32x1xf32> to vector<32x32xf32>
    %82 = arith.divf %78, %81 : vector<32x32xf32>
    %83 = arith.truncf %82 : vector<32x32xf32> to vector<32x32xbf16>
    %84 = arith.truncf %69 : vector<32x8xf32> to vector<32x8xbf16>
    %cst_39 = arith.constant dense<0.000000e+00> : vector<32x8xf32>
    %85 = tpu.matmul %83, %84, %cst_39 {dimension_numbers = #tpu.dot_dimension_numbers<[1], [0], [0], [1], [0, 0, 1, 1], [], []>} : vector<32x32xbf16>, vector<32x8xbf16>, vector<32x8xf32> -> vector<32x8xf32>
    %86 = vector.extract_strided_slice %57 {offsets = [0, 0, 0], sizes = [1, 8, 32], strides = [1, 1, 1]} : vector<4x8x32xbf16> to vector<1x8x32xbf16>
    %87 = vector.shape_cast %86 : vector<1x8x32xbf16> to vector<8x32xbf16>
    %88 = arith.truncf %85 : vector<32x8xf32> to vector<32x8xbf16>
    %cst_40 = arith.constant dense<0.000000e+00> : vector<32x32xf32>
    %89 = tpu.matmul %88, %87, %cst_40 {dimension_numbers = #tpu.dot_dimension_numbers<[1], [0], [0], [1], [0, 0, 1, 1], [], []>} : vector<32x8xbf16>, vector<8x32xbf16>, vector<32x32xf32> -> vector<32x32xf32>
    %90 = arith.addf %66, %89 : vector<32x32xf32>
    %91 = vector.extract_strided_slice %65 {offsets = [0, 8], sizes = [32, 8], strides = [1, 1]} : vector<32x96xf32> to vector<32x8xf32>
    %92 = vector.extract_strided_slice %65 {offsets = [0, 40], sizes = [32, 8], strides = [1, 1]} : vector<32x96xf32> to vector<32x8xf32>
    %93 = vector.extract_strided_slice %65 {offsets = [0, 72], sizes = [32, 8], strides = [1, 1]} : vector<32x96xf32> to vector<32x8xf32>
    %94 = arith.truncf %91 : vector<32x8xf32> to vector<32x8xbf16>
    %95 = arith.truncf %92 : vector<32x8xf32> to vector<32x8xbf16>
    %cst_41 = arith.constant dense<0.000000e+00> : vector<32x32xf32>
    %96 = tpu.matmul %94, %95, %cst_41 {dimension_numbers = #tpu.dot_dimension_numbers<[1], [1], [0], [0], [0, 0, 1, 0], [], []>} : vector<32x8xbf16>, vector<32x8xbf16>, vector<32x32xf32> -> vector<32x32xf32>
    %97 = arith.addf %96, %55 : vector<32x32xf32>
    %cst_42 = arith.constant dense<0xFF800000> : vector<32xf32>
    %98 = vector.multi_reduction <maximumf>, %97, %cst_42 [1] : vector<32x32xf32> to vector<32xf32>
    %99 = vector.shape_cast %98 : vector<32xf32> to vector<32x1xf32>
    %100 = vector.broadcast %99 : vector<32x1xf32> to vector<32x32xf32>
    %101 = arith.subf %97, %100 : vector<32x32xf32>
    %102 = math.exp %101 : vector<32x32xf32>
    %cst_43 = arith.constant dense<0.000000e+00> : vector<32xf32>
    %103 = vector.multi_reduction <add>, %102, %cst_43 [1] : vector<32x32xf32> to vector<32xf32>
    %104 = vector.shape_cast %103 : vector<32xf32> to vector<32x1xf32>
    %105 = vector.broadcast %104 : vector<32x1xf32> to vector<32x32xf32>
    %106 = arith.divf %102, %105 : vector<32x32xf32>
    %107 = arith.truncf %106 : vector<32x32xf32> to vector<32x32xbf16>
    %108 = arith.truncf %93 : vector<32x8xf32> to vector<32x8xbf16>
    %cst_44 = arith.constant dense<0.000000e+00> : vector<32x8xf32>
    %109 = tpu.matmul %107, %108, %cst_44 {dimension_numbers = #tpu.dot_dimension_numbers<[1], [0], [0], [1], [0, 0, 1, 1], [], []>} : vector<32x32xbf16>, vector<32x8xbf16>, vector<32x8xf32> -> vector<32x8xf32>
    %110 = vector.extract_strided_slice %57 {offsets = [1, 0, 0], sizes = [1, 8, 32], strides = [1, 1, 1]} : vector<4x8x32xbf16> to vector<1x8x32xbf16>
    %111 = vector.shape_cast %110 : vector<1x8x32xbf16> to vector<8x32xbf16>
    %112 = arith.truncf %109 : vector<32x8xf32> to vector<32x8xbf16>
    %cst_45 = arith.constant dense<0.000000e+00> : vector<32x32xf32>
    %113 = tpu.matmul %112, %111, %cst_45 {dimension_numbers = #tpu.dot_dimension_numbers<[1], [0], [0], [1], [0, 0, 1, 1], [], []>} : vector<32x8xbf16>, vector<8x32xbf16>, vector<32x32xf32> -> vector<32x32xf32>
    %114 = arith.addf %90, %113 : vector<32x32xf32>
    %115 = vector.extract_strided_slice %65 {offsets = [0, 16], sizes = [32, 8], strides = [1, 1]} : vector<32x96xf32> to vector<32x8xf32>
    %116 = vector.extract_strided_slice %65 {offsets = [0, 48], sizes = [32, 8], strides = [1, 1]} : vector<32x96xf32> to vector<32x8xf32>
    %117 = vector.extract_strided_slice %65 {offsets = [0, 80], sizes = [32, 8], strides = [1, 1]} : vector<32x96xf32> to vector<32x8xf32>
    %118 = arith.truncf %115 : vector<32x8xf32> to vector<32x8xbf16>
    %119 = arith.truncf %116 : vector<32x8xf32> to vector<32x8xbf16>
    %cst_46 = arith.constant dense<0.000000e+00> : vector<32x32xf32>
    %120 = tpu.matmul %118, %119, %cst_46 {dimension_numbers = #tpu.dot_dimension_numbers<[1], [1], [0], [0], [0, 0, 1, 0], [], []>} : vector<32x8xbf16>, vector<32x8xbf16>, vector<32x32xf32> -> vector<32x32xf32>
    %121 = arith.addf %120, %55 : vector<32x32xf32>
    %cst_47 = arith.constant dense<0xFF800000> : vector<32xf32>
    %122 = vector.multi_reduction <maximumf>, %121, %cst_47 [1] : vector<32x32xf32> to vector<32xf32>
    %123 = vector.shape_cast %122 : vector<32xf32> to vector<32x1xf32>
    %124 = vector.broadcast %123 : vector<32x1xf32> to vector<32x32xf32>
    %125 = arith.subf %121, %124 : vector<32x32xf32>
    %126 = math.exp %125 : vector<32x32xf32>
    %cst_48 = arith.constant dense<0.000000e+00> : vector<32xf32>
    %127 = vector.multi_reduction <add>, %126, %cst_48 [1] : vector<32x32xf32> to vector<32xf32>
    %128 = vector.shape_cast %127 : vector<32xf32> to vector<32x1xf32>
    %129 = vector.broadcast %128 : vector<32x1xf32> to vector<32x32xf32>
    %130 = arith.divf %126, %129 : vector<32x32xf32>
    %131 = arith.truncf %130 : vector<32x32xf32> to vector<32x32xbf16>
    %132 = arith.truncf %117 : vector<32x8xf32> to vector<32x8xbf16>
    %cst_49 = arith.constant dense<0.000000e+00> : vector<32x8xf32>
    %133 = tpu.matmul %131, %132, %cst_49 {dimension_numbers = #tpu.dot_dimension_numbers<[1], [0], [0], [1], [0, 0, 1, 1], [], []>} : vector<32x32xbf16>, vector<32x8xbf16>, vector<32x8xf32> -> vector<32x8xf32>
    %134 = vector.extract_strided_slice %57 {offsets = [2, 0, 0], sizes = [1, 8, 32], strides = [1, 1, 1]} : vector<4x8x32xbf16> to vector<1x8x32xbf16>
    %135 = vector.shape_cast %134 : vector<1x8x32xbf16> to vector<8x32xbf16>
    %136 = arith.truncf %133 : vector<32x8xf32> to vector<32x8xbf16>
    %cst_50 = arith.constant dense<0.000000e+00> : vector<32x32xf32>
    %137 = tpu.matmul %136, %135, %cst_50 {dimension_numbers = #tpu.dot_dimension_numbers<[1], [0], [0], [1], [0, 0, 1, 1], [], []>} : vector<32x8xbf16>, vector<8x32xbf16>, vector<32x32xf32> -> vector<32x32xf32>
    %138 = arith.addf %114, %137 : vector<32x32xf32>
    %139 = vector.extract_strided_slice %65 {offsets = [0, 24], sizes = [32, 8], strides = [1, 1]} : vector<32x96xf32> to vector<32x8xf32>
    %140 = vector.extract_strided_slice %65 {offsets = [0, 56], sizes = [32, 8], strides = [1, 1]} : vector<32x96xf32> to vector<32x8xf32>
    %141 = vector.extract_strided_slice %65 {offsets = [0, 88], sizes = [32, 8], strides = [1, 1]} : vector<32x96xf32> to vector<32x8xf32>
    %142 = arith.truncf %139 : vector<32x8xf32> to vector<32x8xbf16>
    %143 = arith.truncf %140 : vector<32x8xf32> to vector<32x8xbf16>
    %cst_51 = arith.constant dense<0.000000e+00> : vector<32x32xf32>
    %144 = tpu.matmul %142, %143, %cst_51 {dimension_numbers = #tpu.dot_dimension_numbers<[1], [1], [0], [0], [0, 0, 1, 0], [], []>} : vector<32x8xbf16>, vector<32x8xbf16>, vector<32x32xf32> -> vector<32x32xf32>
    %145 = arith.addf %144, %55 : vector<32x32xf32>
    %cst_52 = arith.constant dense<0xFF800000> : vector<32xf32>
    %146 = vector.multi_reduction <maximumf>, %145, %cst_52 [1] : vector<32x32xf32> to vector<32xf32>
    %147 = vector.shape_cast %146 : vector<32xf32> to vector<32x1xf32>
    %148 = vector.broadcast %147 : vector<32x1xf32> to vector<32x32xf32>
    %149 = arith.subf %145, %148 : vector<32x32xf32>
    %150 = math.exp %149 : vector<32x32xf32>
    %cst_53 = arith.constant dense<0.000000e+00> : vector<32xf32>
    %151 = vector.multi_reduction <add>, %150, %cst_53 [1] : vector<32x32xf32> to vector<32xf32>
    %152 = vector.shape_cast %151 : vector<32xf32> to vector<32x1xf32>
    %153 = vector.broadcast %152 : vector<32x1xf32> to vector<32x32xf32>
    %154 = arith.divf %150, %153 : vector<32x32xf32>
    %155 = arith.truncf %154 : vector<32x32xf32> to vector<32x32xbf16>
    %156 = arith.truncf %141 : vector<32x8xf32> to vector<32x8xbf16>
    %cst_54 = arith.constant dense<0.000000e+00> : vector<32x8xf32>
    %157 = tpu.matmul %155, %156, %cst_54 {dimension_numbers = #tpu.dot_dimension_numbers<[1], [0], [0], [1], [0, 0, 1, 1], [], []>} : vector<32x32xbf16>, vector<32x8xbf16>, vector<32x8xf32> -> vector<32x8xf32>
    %158 = vector.extract_strided_slice %57 {offsets = [3, 0, 0], sizes = [1, 8, 32], strides = [1, 1, 1]} : vector<4x8x32xbf16> to vector<1x8x32xbf16>
    %159 = vector.shape_cast %158 : vector<1x8x32xbf16> to vector<8x32xbf16>
    %160 = arith.truncf %157 : vector<32x8xf32> to vector<32x8xbf16>
    %cst_55 = arith.constant dense<0.000000e+00> : vector<32x32xf32>
    %161 = tpu.matmul %160, %159, %cst_55 {dimension_numbers = #tpu.dot_dimension_numbers<[1], [0], [0], [1], [0, 0, 1, 1], [], []>} : vector<32x8xbf16>, vector<8x32xbf16>, vector<32x32xf32> -> vector<32x32xf32>
    %162 = arith.addf %138, %161 : vector<32x32xf32>
    %c0_56 = arith.constant 0 : index
    %c0_57 = arith.constant 0 : index
    %c0_58 = arith.constant 0 : index
    %163 = vector.load %arg7[%c0_56, %c0_57, %c0_58] : memref<3x1x32xf32, #tpu.memory_space<vmem>>, vector<1x1x32xf32>
    %164 = vector.shape_cast %163 : vector<1x1x32xf32> to vector<1x32xf32>
    %165 = vector.broadcast %164 : vector<1x32xf32> to vector<32x32xf32>
    %166 = arith.addf %162, %165 : vector<32x32xf32>
    %167 = arith.addf %17, %166 : vector<32x32xf32>
    %c0_59 = arith.constant 0 : index
    %c0_60 = arith.constant 0 : index
    %c0_61 = arith.constant 0 : index
    %168 = vector.load %arg12[%c0_59, %c0_60, %c0_61] : memref<3x1x32xf32, #tpu.memory_space<vmem>>, vector<1x1x32xf32>
    %169 = vector.shape_cast %168 : vector<1x1x32xf32> to vector<1x32xf32>
    %c0_62 = arith.constant 0 : index
    %c0_63 = arith.constant 0 : index
    %c0_64 = arith.constant 0 : index
    %170 = vector.load %arg13[%c0_62, %c0_63, %c0_64] : memref<3x1x32xf32, #tpu.memory_space<vmem>>, vector<1x1x32xf32>
    %171 = vector.shape_cast %170 : vector<1x1x32xf32> to vector<1x32xf32>
    %cst_65 = arith.constant dense<0.000000e+00> : vector<32xf32>
    %172 = vector.multi_reduction <add>, %167, %cst_65 [1] : vector<32x32xf32> to vector<32xf32>
    %173 = vector.shape_cast %172 : vector<32xf32> to vector<32x1xf32>
    %cst_66 = arith.constant 3.200000e+01 : f32
    %174 = vector.broadcast %cst_66 : f32 to vector<32x1xf32>
    %175 = arith.divf %173, %174 : vector<32x1xf32>
    %176 = vector.broadcast %175 : vector<32x1xf32> to vector<32x32xf32>
    %177 = arith.subf %167, %176 : vector<32x32xf32>
    %178 = arith.mulf %177, %177 : vector<32x32xf32>
    %cst_67 = arith.constant dense<0.000000e+00> : vector<32xf32>
    %179 = vector.multi_reduction <add>, %178, %cst_67 [1] : vector<32x32xf32> to vector<32xf32>
    %180 = vector.shape_cast %179 : vector<32xf32> to vector<32x1xf32>
    %cst_68 = arith.constant 3.200000e+01 : f32
    %181 = vector.broadcast %cst_68 : f32 to vector<32x1xf32>
    %182 = arith.divf %180, %181 : vector<32x1xf32>
    %183 = vector.broadcast %175 : vector<32x1xf32> to vector<32x32xf32>
    %184 = arith.subf %167, %183 : vector<32x32xf32>
    %cst_69 = arith.constant 9.99999974E-6 : f32
    %185 = vector.broadcast %cst_69 : f32 to vector<32x1xf32>
    %186 = arith.addf %182, %185 : vector<32x1xf32>
    %187 = math.rsqrt %186 : vector<32x1xf32>
    %188 = vector.broadcast %187 : vector<32x1xf32> to vector<32x32xf32>
    %189 = arith.mulf %184, %188 : vector<32x32xf32>
    %190 = vector.broadcast %169 : vector<1x32xf32> to vector<32x32xf32>
    %191 = arith.mulf %189, %190 : vector<32x32xf32>
    %192 = vector.broadcast %171 : vector<1x32xf32> to vector<32x32xf32>
    %193 = arith.addf %191, %192 : vector<32x32xf32>
    %c0_70 = arith.constant 0 : index
    %c0_71 = arith.constant 0 : index
    %c0_72 = arith.constant 0 : index
    %194 = vector.load %arg8[%c0_70, %c0_71, %c0_72] : memref<3x32x64xbf16, #tpu.memory_space<vmem>>, vector<1x32x64xbf16>
    %195 = vector.shape_cast %194 : vector<1x32x64xbf16> to vector<32x64xbf16>
    %196 = arith.truncf %193 : vector<32x32xf32> to vector<32x32xbf16>
    %cst_73 = arith.constant dense<0.000000e+00> : vector<32x64xf32>
    %197 = tpu.matmul %196, %195, %cst_73 {dimension_numbers = #tpu.dot_dimension_numbers<[1], [0], [0], [1], [0, 0, 1, 1], [], []>} : vector<32x32xbf16>, vector<32x64xbf16>, vector<32x64xf32> -> vector<32x64xf32>
    %c0_74 = arith.constant 0 : index
    %c0_75 = arith.constant 0 : index
    %c0_76 = arith.constant 0 : index
    %198 = vector.load %arg9[%c0_74, %c0_75, %c0_76] : memref<3x1x64xf32, #tpu.memory_space<vmem>>, vector<1x1x64xf32>
    %199 = vector.shape_cast %198 : vector<1x1x64xf32> to vector<1x64xf32>
    %200 = vector.broadcast %199 : vector<1x64xf32> to vector<32x64xf32>
    %201 = arith.addf %197, %200 : vector<32x64xf32>
    %cst_77 = arith.constant 0.000000e+00 : f32
    %202 = vector.broadcast %cst_77 : f32 to vector<32x64xf32>
    %203 = arith.maximumf %201, %202 : vector<32x64xf32>
    %c0_78 = arith.constant 0 : index
    %c0_79 = arith.constant 0 : index
    %c0_80 = arith.constant 0 : index
    %204 = vector.load %arg10[%c0_78, %c0_79, %c0_80] : memref<3x64x32xbf16, #tpu.memory_space<vmem>>, vector<1x64x32xbf16>
    %205 = vector.shape_cast %204 : vector<1x64x32xbf16> to vector<64x32xbf16>
    %206 = arith.truncf %203 : vector<32x64xf32> to vector<32x64xbf16>
    %cst_81 = arith.constant dense<0.000000e+00> : vector<32x32xf32>
    %207 = tpu.matmul %206, %205, %cst_81 {dimension_numbers = #tpu.dot_dimension_numbers<[1], [0], [0], [1], [0, 0, 1, 1], [], []>} : vector<32x64xbf16>, vector<64x32xbf16>, vector<32x32xf32> -> vector<32x32xf32>
    %c0_82 = arith.constant 0 : index
    %c0_83 = arith.constant 0 : index
    %c0_84 = arith.constant 0 : index
    %208 = vector.load %arg11[%c0_82, %c0_83, %c0_84] : memref<3x1x32xf32, #tpu.memory_space<vmem>>, vector<1x1x32xf32>
    %209 = vector.shape_cast %208 : vector<1x1x32xf32> to vector<1x32xf32>
    %210 = vector.broadcast %209 : vector<1x32xf32> to vector<32x32xf32>
    %211 = arith.addf %207, %210 : vector<32x32xf32>
    %212 = arith.addf %193, %211 : vector<32x32xf32>
    %c0_85 = arith.constant 0 : index
    %c0_86 = arith.constant 0 : index
    %c0_87 = arith.constant 0 : index
    %213 = vector.load %arg14[%c0_85, %c0_86, %c0_87] : memref<3x1x32xf32, #tpu.memory_space<vmem>>, vector<1x1x32xf32>
    %214 = vector.shape_cast %213 : vector<1x1x32xf32> to vector<1x32xf32>
    %c0_88 = arith.constant 0 : index
    %c0_89 = arith.constant 0 : index
    %c0_90 = arith.constant 0 : index
    %215 = vector.load %arg15[%c0_88, %c0_89, %c0_90] : memref<3x1x32xf32, #tpu.memory_space<vmem>>, vector<1x1x32xf32>
    %216 = vector.shape_cast %215 : vector<1x1x32xf32> to vector<1x32xf32>
    %cst_91 = arith.constant dense<0.000000e+00> : vector<32xf32>
    %217 = vector.multi_reduction <add>, %212, %cst_91 [1] : vector<32x32xf32> to vector<32xf32>
    %218 = vector.shape_cast %217 : vector<32xf32> to vector<32x1xf32>
    %cst_92 = arith.constant 3.200000e+01 : f32
    %219 = vector.broadcast %cst_92 : f32 to vector<32x1xf32>
    %220 = arith.divf %218, %219 : vector<32x1xf32>
    %221 = vector.broadcast %220 : vector<32x1xf32> to vector<32x32xf32>
    %222 = arith.subf %212, %221 : vector<32x32xf32>
    %223 = arith.mulf %222, %222 : vector<32x32xf32>
    %cst_93 = arith.constant dense<0.000000e+00> : vector<32xf32>
    %224 = vector.multi_reduction <add>, %223, %cst_93 [1] : vector<32x32xf32> to vector<32xf32>
    %225 = vector.shape_cast %224 : vector<32xf32> to vector<32x1xf32>
    %cst_94 = arith.constant 3.200000e+01 : f32
    %226 = vector.broadcast %cst_94 : f32 to vector<32x1xf32>
    %227 = arith.divf %225, %226 : vector<32x1xf32>
    %228 = vector.broadcast %220 : vector<32x1xf32> to vector<32x32xf32>
    %229 = arith.subf %212, %228 : vector<32x32xf32>
    %cst_95 = arith.constant 9.99999974E-6 : f32
    %230 = vector.broadcast %cst_95 : f32 to vector<32x1xf32>
    %231 = arith.addf %227, %230 : vector<32x1xf32>
    %232 = math.rsqrt %231 : vector<32x1xf32>
    %233 = vector.broadcast %232 : vector<32x1xf32> to vector<32x32xf32>
    %234 = arith.mulf %229, %233 : vector<32x32xf32>
    %235 = vector.broadcast %214 : vector<1x32xf32> to vector<32x32xf32>
    %236 = arith.mulf %234, %235 : vector<32x32xf32>
    %237 = vector.broadcast %216 : vector<1x32xf32> to vector<32x32xf32>
    %238 = arith.addf %236, %237 : vector<32x32xf32>
    %239 = vector.extract_strided_slice %238 {offsets = [0, 0], sizes = [8, 32], strides = [1, 1]} : vector<32x32xf32> to vector<8x32xf32>
    %c0_96 = arith.constant 0 : index
    %c0_97 = arith.constant 0 : index
    %240 = vector.load %arg18[%c0_96, %c0_97] : memref<8x128xf32, #tpu.memory_space<vmem>>, vector<8x32xf32>
    tpu.vector_store %arg18[%c0_96, %c0_97], %239 {strides = array<i32>} : memref<8x128xf32, #tpu.memory_space<vmem>>, vector<8x32xf32>,
    %241 = vector.extract_strided_slice %238 {offsets = [8, 0], sizes = [8, 32], strides = [1, 1]} : vector<32x32xf32> to vector<8x32xf32>
    %c0_98 = arith.constant 0 : index
    %c32 = arith.constant 32 : index
    %242 = vector.load %arg18[%c0_98, %c32] : memref<8x128xf32, #tpu.memory_space<vmem>>, vector<8x32xf32>
    tpu.vector_store %arg18[%c0_98, %c32], %241 {strides = array<i32>} : memref<8x128xf32, #tpu.memory_space<vmem>>, vector<8x32xf32>,
    %243 = vector.extract_strided_slice %238 {offsets = [16, 0], sizes = [8, 32], strides = [1, 1]} : vector<32x32xf32> to vector<8x32xf32>
    %c0_99 = arith.constant 0 : index
    %c64 = arith.constant 64 : index
    %244 = vector.load %arg18[%c0_99, %c64] : memref<8x128xf32, #tpu.memory_space<vmem>>, vector<8x32xf32>
    tpu.vector_store %arg18[%c0_99, %c64], %243 {strides = array<i32>} : memref<8x128xf32, #tpu.memory_space<vmem>>, vector<8x32xf32>,
    %245 = vector.extract_strided_slice %238 {offsets = [24, 0], sizes = [8, 32], strides = [1, 1]} : vector<32x32xf32> to vector<8x32xf32>
    %c0_100 = arith.constant 0 : index
    %c96 = arith.constant 96 : index
    %246 = vector.load %arg18[%c0_100, %c96] : memref<8x128xf32, #tpu.memory_space<vmem>>, vector<8x32xf32>
    tpu.vector_store %arg18[%c0_100, %c96], %245 {strides = array<i32>} : memref<8x128xf32, #tpu.memory_space<vmem>>, vector<8x32xf32>,
    %c1 = arith.constant 1 : index
    %c0_101 = arith.constant 0 : index
    %c0_102 = arith.constant 0 : index
    %c0_103 = arith.constant 0 : index
    %247 = vector.load %arg6[%c1, %c0_101, %c0_102, %c0_103] : memref<3x4x8x32xbf16, #tpu.memory_space<vmem>>, vector<1x4x8x32xbf16>
    %248 = vector.shape_cast %247 : vector<1x4x8x32xbf16> to vector<4x8x32xbf16>
    %c1_104 = arith.constant 1 : index
    %c0_105 = arith.constant 0 : index
    %c0_106 = arith.constant 0 : index
    %249 = vector.load %arg4[%c1_104, %c0_105, %c0_106] : memref<3x32x96xbf16, #tpu.memory_space<vmem>>, vector<1x32x96xbf16>
    %250 = vector.shape_cast %249 : vector<1x32x96xbf16> to vector<32x96xbf16>
    %251 = arith.truncf %238 : vector<32x32xf32> to vector<32x32xbf16>
    %cst_107 = arith.constant dense<0.000000e+00> : vector<32x96xf32>
    %252 = tpu.matmul %251, %250, %cst_107 {dimension_numbers = #tpu.dot_dimension_numbers<[1], [0], [0], [1], [0, 0, 1, 1], [], []>} : vector<32x32xbf16>, vector<32x96xbf16>, vector<32x96xf32> -> vector<32x96xf32>
    %c1_108 = arith.constant 1 : index
    %c0_109 = arith.constant 0 : index
    %c0_110 = arith.constant 0 : index
    %253 = vector.load %arg5[%c1_108, %c0_109, %c0_110] : memref<3x1x96xf32, #tpu.memory_space<vmem>>, vector<1x1x96xf32>
    %254 = vector.shape_cast %253 : vector<1x1x96xf32> to vector<1x96xf32>
    %255 = vector.broadcast %254 : vector<1x96xf32> to vector<32x96xf32>
    %256 = arith.addf %252, %255 : vector<32x96xf32>
    %cst_111 = arith.constant 0.000000e+00 : f32
    %257 = vector.broadcast %cst_111 : f32 to vector<32x32xf32>
    %258 = vector.extract_strided_slice %256 {offsets = [0, 0], sizes = [32, 8], strides = [1, 1]} : vector<32x96xf32> to vector<32x8xf32>
    %259 = vector.extract_strided_slice %256 {offsets = [0, 32], sizes = [32, 8], strides = [1, 1]} : vector<32x96xf32> to vector<32x8xf32>
    %260 = vector.extract_strided_slice %256 {offsets = [0, 64], sizes = [32, 8], strides = [1, 1]} : vector<32x96xf32> to vector<32x8xf32>
    %261 = arith.truncf %258 : vector<32x8xf32> to vector<32x8xbf16>
    %262 = arith.truncf %259 : vector<32x8xf32> to vector<32x8xbf16>
    %cst_112 = arith.constant dense<0.000000e+00> : vector<32x32xf32>
    %263 = tpu.matmul %261, %262, %cst_112 {dimension_numbers = #tpu.dot_dimension_numbers<[1], [1], [0], [0], [0, 0, 1, 0], [], []>} : vector<32x8xbf16>, vector<32x8xbf16>, vector<32x32xf32> -> vector<32x32xf32>
    %264 = arith.addf %263, %55 : vector<32x32xf32>
    %cst_113 = arith.constant dense<0xFF800000> : vector<32xf32>
    %265 = vector.multi_reduction <maximumf>, %264, %cst_113 [1] : vector<32x32xf32> to vector<32xf32>
    %266 = vector.shape_cast %265 : vector<32xf32> to vector<32x1xf32>
    %267 = vector.broadcast %266 : vector<32x1xf32> to vector<32x32xf32>
    %268 = arith.subf %264, %267 : vector<32x32xf32>
    %269 = math.exp %268 : vector<32x32xf32>
    %cst_114 = arith.constant dense<0.000000e+00> : vector<32xf32>
    %270 = vector.multi_reduction <add>, %269, %cst_114 [1] : vector<32x32xf32> to vector<32xf32>
    %271 = vector.shape_cast %270 : vector<32xf32> to vector<32x1xf32>
    %272 = vector.broadcast %271 : vector<32x1xf32> to vector<32x32xf32>
    %273 = arith.divf %269, %272 : vector<32x32xf32>
    %274 = arith.truncf %273 : vector<32x32xf32> to vector<32x32xbf16>
    %275 = arith.truncf %260 : vector<32x8xf32> to vector<32x8xbf16>
    %cst_115 = arith.constant dense<0.000000e+00> : vector<32x8xf32>
    %276 = tpu.matmul %274, %275, %cst_115 {dimension_numbers = #tpu.dot_dimension_numbers<[1], [0], [0], [1], [0, 0, 1, 1], [], []>} : vector<32x32xbf16>, vector<32x8xbf16>, vector<32x8xf32> -> vector<32x8xf32>
    %277 = vector.extract_strided_slice %248 {offsets = [0, 0, 0], sizes = [1, 8, 32], strides = [1, 1, 1]} : vector<4x8x32xbf16> to vector<1x8x32xbf16>
    %278 = vector.shape_cast %277 : vector<1x8x32xbf16> to vector<8x32xbf16>
    %279 = arith.truncf %276 : vector<32x8xf32> to vector<32x8xbf16>
    %cst_116 = arith.constant dense<0.000000e+00> : vector<32x32xf32>
    %280 = tpu.matmul %279, %278, %cst_116 {dimension_numbers = #tpu.dot_dimension_numbers<[1], [0], [0], [1], [0, 0, 1, 1], [], []>} : vector<32x8xbf16>, vector<8x32xbf16>, vector<32x32xf32> -> vector<32x32xf32>
    %281 = arith.addf %257, %280 : vector<32x32xf32>
    %282 = vector.extract_strided_slice %256 {offsets = [0, 8], sizes = [32, 8], strides = [1, 1]} : vector<32x96xf32> to vector<32x8xf32>
    %283 = vector.extract_strided_slice %256 {offsets = [0, 40], sizes = [32, 8], strides = [1, 1]} : vector<32x96xf32> to vector<32x8xf32>
    %284 = vector.extract_strided_slice %256 {offsets = [0, 72], sizes = [32, 8], strides = [1, 1]} : vector<32x96xf32> to vector<32x8xf32>
    %285 = arith.truncf %282 : vector<32x8xf32> to vector<32x8xbf16>
    %286 = arith.truncf %283 : vector<32x8xf32> to vector<32x8xbf16>
    %cst_117 = arith.constant dense<0.000000e+00> : vector<32x32xf32>
    %287 = tpu.matmul %285, %286, %cst_117 {dimension_numbers = #tpu.dot_dimension_numbers<[1], [1], [0], [0], [0, 0, 1, 0], [], []>} : vector<32x8xbf16>, vector<32x8xbf16>, vector<32x32xf32> -> vector<32x32xf32>
    %288 = arith.addf %287, %55 : vector<32x32xf32>
    %cst_118 = arith.constant dense<0xFF800000> : vector<32xf32>
    %289 = vector.multi_reduction <maximumf>, %288, %cst_118 [1] : vector<32x32xf32> to vector<32xf32>
    %290 = vector.shape_cast %289 : vector<32xf32> to vector<32x1xf32>
    %291 = vector.broadcast %290 : vector<32x1xf32> to vector<32x32xf32>
    %292 = arith.subf %288, %291 : vector<32x32xf32>
    %293 = math.exp %292 : vector<32x32xf32>
    %cst_119 = arith.constant dense<0.000000e+00> : vector<32xf32>
    %294 = vector.multi_reduction <add>, %293, %cst_119 [1] : vector<32x32xf32> to vector<32xf32>
    %295 = vector.shape_cast %294 : vector<32xf32> to vector<32x1xf32>
    %296 = vector.broadcast %295 : vector<32x1xf32> to vector<32x32xf32>
    %297 = arith.divf %293, %296 : vector<32x32xf32>
    %298 = arith.truncf %297 : vector<32x32xf32> to vector<32x32xbf16>
    %299 = arith.truncf %284 : vector<32x8xf32> to vector<32x8xbf16>
    %cst_120 = arith.constant dense<0.000000e+00> : vector<32x8xf32>
    %300 = tpu.matmul %298, %299, %cst_120 {dimension_numbers = #tpu.dot_dimension_numbers<[1], [0], [0], [1], [0, 0, 1, 1], [], []>} : vector<32x32xbf16>, vector<32x8xbf16>, vector<32x8xf32> -> vector<32x8xf32>
    %301 = vector.extract_strided_slice %248 {offsets = [1, 0, 0], sizes = [1, 8, 32], strides = [1, 1, 1]} : vector<4x8x32xbf16> to vector<1x8x32xbf16>
    %302 = vector.shape_cast %301 : vector<1x8x32xbf16> to vector<8x32xbf16>
    %303 = arith.truncf %300 : vector<32x8xf32> to vector<32x8xbf16>
    %cst_121 = arith.constant dense<0.000000e+00> : vector<32x32xf32>
    %304 = tpu.matmul %303, %302, %cst_121 {dimension_numbers = #tpu.dot_dimension_numbers<[1], [0], [0], [1], [0, 0, 1, 1], [], []>} : vector<32x8xbf16>, vector<8x32xbf16>, vector<32x32xf32> -> vector<32x32xf32>
    %305 = arith.addf %281, %304 : vector<32x32xf32>
    %306 = vector.extract_strided_slice %256 {offsets = [0, 16], sizes = [32, 8], strides = [1, 1]} : vector<32x96xf32> to vector<32x8xf32>
    %307 = vector.extract_strided_slice %256 {offsets = [0, 48], sizes = [32, 8], strides = [1, 1]} : vector<32x96xf32> to vector<32x8xf32>
    %308 = vector.extract_strided_slice %256 {offsets = [0, 80], sizes = [32, 8], strides = [1, 1]} : vector<32x96xf32> to vector<32x8xf32>
    %309 = arith.truncf %306 : vector<32x8xf32> to vector<32x8xbf16>
    %310 = arith.truncf %307 : vector<32x8xf32> to vector<32x8xbf16>
    %cst_122 = arith.constant dense<0.000000e+00> : vector<32x32xf32>
    %311 = tpu.matmul %309, %310, %cst_122 {dimension_numbers = #tpu.dot_dimension_numbers<[1], [1], [0], [0], [0, 0, 1, 0], [], []>} : vector<32x8xbf16>, vector<32x8xbf16>, vector<32x32xf32> -> vector<32x32xf32>
    %312 = arith.addf %311, %55 : vector<32x32xf32>
    %cst_123 = arith.constant dense<0xFF800000> : vector<32xf32>
    %313 = vector.multi_reduction <maximumf>, %312, %cst_123 [1] : vector<32x32xf32> to vector<32xf32>
    %314 = vector.shape_cast %313 : vector<32xf32> to vector<32x1xf32>
    %315 = vector.broadcast %314 : vector<32x1xf32> to vector<32x32xf32>
    %316 = arith.subf %312, %315 : vector<32x32xf32>
    %317 = math.exp %316 : vector<32x32xf32>
    %cst_124 = arith.constant dense<0.000000e+00> : vector<32xf32>
    %318 = vector.multi_reduction <add>, %317, %cst_124 [1] : vector<32x32xf32> to vector<32xf32>
    %319 = vector.shape_cast %318 : vector<32xf32> to vector<32x1xf32>
    %320 = vector.broadcast %319 : vector<32x1xf32> to vector<32x32xf32>
    %321 = arith.divf %317, %320 : vector<32x32xf32>
    %322 = arith.truncf %321 : vector<32x32xf32> to vector<32x32xbf16>
    %323 = arith.truncf %308 : vector<32x8xf32> to vector<32x8xbf16>
    %cst_125 = arith.constant dense<0.000000e+00> : vector<32x8xf32>
    %324 = tpu.matmul %322, %323, %cst_125 {dimension_numbers = #tpu.dot_dimension_numbers<[1], [0], [0], [1], [0, 0, 1, 1], [], []>} : vector<32x32xbf16>, vector<32x8xbf16>, vector<32x8xf32> -> vector<32x8xf32>
    %325 = vector.extract_strided_slice %248 {offsets = [2, 0, 0], sizes = [1, 8, 32], strides = [1, 1, 1]} : vector<4x8x32xbf16> to vector<1x8x32xbf16>
    %326 = vector.shape_cast %325 : vector<1x8x32xbf16> to vector<8x32xbf16>
    %327 = arith.truncf %324 : vector<32x8xf32> to vector<32x8xbf16>
    %cst_126 = arith.constant dense<0.000000e+00> : vector<32x32xf32>
    %328 = tpu.matmul %327, %326, %cst_126 {dimension_numbers = #tpu.dot_dimension_numbers<[1], [0], [0], [1], [0, 0, 1, 1], [], []>} : vector<32x8xbf16>, vector<8x32xbf16>, vector<32x32xf32> -> vector<32x32xf32>
    %329 = arith.addf %305, %328 : vector<32x32xf32>
    %330 = vector.extract_strided_slice %256 {offsets = [0, 24], sizes = [32, 8], strides = [1, 1]} : vector<32x96xf32> to vector<32x8xf32>
    %331 = vector.extract_strided_slice %256 {offsets = [0, 56], sizes = [32, 8], strides = [1, 1]} : vector<32x96xf32> to vector<32x8xf32>
    %332 = vector.extract_strided_slice %256 {offsets = [0, 88], sizes = [32, 8], strides = [1, 1]} : vector<32x96xf32> to vector<32x8xf32>
    %333 = arith.truncf %330 : vector<32x8xf32> to vector<32x8xbf16>
    %334 = arith.truncf %331 : vector<32x8xf32> to vector<32x8xbf16>
    %cst_127 = arith.constant dense<0.000000e+00> : vector<32x32xf32>
    %335 = tpu.matmul %333, %334, %cst_127 {dimension_numbers = #tpu.dot_dimension_numbers<[1], [1], [0], [0], [0, 0, 1, 0], [], []>} : vector<32x8xbf16>, vector<32x8xbf16>, vector<32x32xf32> -> vector<32x32xf32>
    %336 = arith.addf %335, %55 : vector<32x32xf32>
    %cst_128 = arith.constant dense<0xFF800000> : vector<32xf32>
    %337 = vector.multi_reduction <maximumf>, %336, %cst_128 [1] : vector<32x32xf32> to vector<32xf32>
    %338 = vector.shape_cast %337 : vector<32xf32> to vector<32x1xf32>
    %339 = vector.broadcast %338 : vector<32x1xf32> to vector<32x32xf32>
    %340 = arith.subf %336, %339 : vector<32x32xf32>
    %341 = math.exp %340 : vector<32x32xf32>
    %cst_129 = arith.constant dense<0.000000e+00> : vector<32xf32>
    %342 = vector.multi_reduction <add>, %341, %cst_129 [1] : vector<32x32xf32> to vector<32xf32>
    %343 = vector.shape_cast %342 : vector<32xf32> to vector<32x1xf32>
    %344 = vector.broadcast %343 : vector<32x1xf32> to vector<32x32xf32>
    %345 = arith.divf %341, %344 : vector<32x32xf32>
    %346 = arith.truncf %345 : vector<32x32xf32> to vector<32x32xbf16>
    %347 = arith.truncf %332 : vector<32x8xf32> to vector<32x8xbf16>
    %cst_130 = arith.constant dense<0.000000e+00> : vector<32x8xf32>
    %348 = tpu.matmul %346, %347, %cst_130 {dimension_numbers = #tpu.dot_dimension_numbers<[1], [0], [0], [1], [0, 0, 1, 1], [], []>} : vector<32x32xbf16>, vector<32x8xbf16>, vector<32x8xf32> -> vector<32x8xf32>
    %349 = vector.extract_strided_slice %248 {offsets = [3, 0, 0], sizes = [1, 8, 32], strides = [1, 1, 1]} : vector<4x8x32xbf16> to vector<1x8x32xbf16>
    %350 = vector.shape_cast %349 : vector<1x8x32xbf16> to vector<8x32xbf16>
    %351 = arith.truncf %348 : vector<32x8xf32> to vector<32x8xbf16>
    %cst_131 = arith.constant dense<0.000000e+00> : vector<32x32xf32>
    %352 = tpu.matmul %351, %350, %cst_131 {dimension_numbers = #tpu.dot_dimension_numbers<[1], [0], [0], [1], [0, 0, 1, 1], [], []>} : vector<32x8xbf16>, vector<8x32xbf16>, vector<32x32xf32> -> vector<32x32xf32>
    %353 = arith.addf %329, %352 : vector<32x32xf32>
    %c1_132 = arith.constant 1 : index
    %c0_133 = arith.constant 0 : index
    %c0_134 = arith.constant 0 : index
    %354 = vector.load %arg7[%c1_132, %c0_133, %c0_134] : memref<3x1x32xf32, #tpu.memory_space<vmem>>, vector<1x1x32xf32>
    %355 = vector.shape_cast %354 : vector<1x1x32xf32> to vector<1x32xf32>
    %356 = vector.broadcast %355 : vector<1x32xf32> to vector<32x32xf32>
    %357 = arith.addf %353, %356 : vector<32x32xf32>
    %358 = arith.addf %238, %357 : vector<32x32xf32>
    %c1_135 = arith.constant 1 : index
    %c0_136 = arith.constant 0 : index
    %c0_137 = arith.constant 0 : index
    %359 = vector.load %arg12[%c1_135, %c0_136, %c0_137] : memref<3x1x32xf32, #tpu.memory_space<vmem>>, vector<1x1x32xf32>
    %360 = vector.shape_cast %359 : vector<1x1x32xf32> to vector<1x32xf32>
    %c1_138 = arith.constant 1 : index
    %c0_139 = arith.constant 0 : index
    %c0_140 = arith.constant 0 : index
    %361 = vector.load %arg13[%c1_138, %c0_139, %c0_140] : memref<3x1x32xf32, #tpu.memory_space<vmem>>, vector<1x1x32xf32>
    %362 = vector.shape_cast %361 : vector<1x1x32xf32> to vector<1x32xf32>
    %cst_141 = arith.constant dense<0.000000e+00> : vector<32xf32>
    %363 = vector.multi_reduction <add>, %358, %cst_141 [1] : vector<32x32xf32> to vector<32xf32>
    %364 = vector.shape_cast %363 : vector<32xf32> to vector<32x1xf32>
    %cst_142 = arith.constant 3.200000e+01 : f32
    %365 = vector.broadcast %cst_142 : f32 to vector<32x1xf32>
    %366 = arith.divf %364, %365 : vector<32x1xf32>
    %367 = vector.broadcast %366 : vector<32x1xf32> to vector<32x32xf32>
    %368 = arith.subf %358, %367 : vector<32x32xf32>
    %369 = arith.mulf %368, %368 : vector<32x32xf32>
    %cst_143 = arith.constant dense<0.000000e+00> : vector<32xf32>
    %370 = vector.multi_reduction <add>, %369, %cst_143 [1] : vector<32x32xf32> to vector<32xf32>
    %371 = vector.shape_cast %370 : vector<32xf32> to vector<32x1xf32>
    %cst_144 = arith.constant 3.200000e+01 : f32
    %372 = vector.broadcast %cst_144 : f32 to vector<32x1xf32>
    %373 = arith.divf %371, %372 : vector<32x1xf32>
    %374 = vector.broadcast %366 : vector<32x1xf32> to vector<32x32xf32>
    %375 = arith.subf %358, %374 : vector<32x32xf32>
    %cst_145 = arith.constant 9.99999974E-6 : f32
    %376 = vector.broadcast %cst_145 : f32 to vector<32x1xf32>
    %377 = arith.addf %373, %376 : vector<32x1xf32>
    %378 = math.rsqrt %377 : vector<32x1xf32>
    %379 = vector.broadcast %378 : vector<32x1xf32> to vector<32x32xf32>
    %380 = arith.mulf %375, %379 : vector<32x32xf32>
    %381 = vector.broadcast %360 : vector<1x32xf32> to vector<32x32xf32>
    %382 = arith.mulf %380, %381 : vector<32x32xf32>
    %383 = vector.broadcast %362 : vector<1x32xf32> to vector<32x32xf32>
    %384 = arith.addf %382, %383 : vector<32x32xf32>
    %c1_146 = arith.constant 1 : index
    %c0_147 = arith.constant 0 : index
    %c0_148 = arith.constant 0 : index
    %385 = vector.load %arg8[%c1_146, %c0_147, %c0_148] : memref<3x32x64xbf16, #tpu.memory_space<vmem>>, vector<1x32x64xbf16>
    %386 = vector.shape_cast %385 : vector<1x32x64xbf16> to vector<32x64xbf16>
    %387 = arith.truncf %384 : vector<32x32xf32> to vector<32x32xbf16>
    %cst_149 = arith.constant dense<0.000000e+00> : vector<32x64xf32>
    %388 = tpu.matmul %387, %386, %cst_149 {dimension_numbers = #tpu.dot_dimension_numbers<[1], [0], [0], [1], [0, 0, 1, 1], [], []>} : vector<32x32xbf16>, vector<32x64xbf16>, vector<32x64xf32> -> vector<32x64xf32>
    %c1_150 = arith.constant 1 : index
    %c0_151 = arith.constant 0 : index
    %c0_152 = arith.constant 0 : index
    %389 = vector.load %arg9[%c1_150, %c0_151, %c0_152] : memref<3x1x64xf32, #tpu.memory_space<vmem>>, vector<1x1x64xf32>
    %390 = vector.shape_cast %389 : vector<1x1x64xf32> to vector<1x64xf32>
    %391 = vector.broadcast %390 : vector<1x64xf32> to vector<32x64xf32>
    %392 = arith.addf %388, %391 : vector<32x64xf32>
    %cst_153 = arith.constant 0.000000e+00 : f32
    %393 = vector.broadcast %cst_153 : f32 to vector<32x64xf32>
    %394 = arith.maximumf %392, %393 : vector<32x64xf32>
    %c1_154 = arith.constant 1 : index
    %c0_155 = arith.constant 0 : index
    %c0_156 = arith.constant 0 : index
    %395 = vector.load %arg10[%c1_154, %c0_155, %c0_156] : memref<3x64x32xbf16, #tpu.memory_space<vmem>>, vector<1x64x32xbf16>
    %396 = vector.shape_cast %395 : vector<1x64x32xbf16> to vector<64x32xbf16>
    %397 = arith.truncf %394 : vector<32x64xf32> to vector<32x64xbf16>
    %cst_157 = arith.constant dense<0.000000e+00> : vector<32x32xf32>
    %398 = tpu.matmul %397, %396, %cst_157 {dimension_numbers = #tpu.dot_dimension_numbers<[1], [0], [0], [1], [0, 0, 1, 1], [], []>} : vector<32x64xbf16>, vector<64x32xbf16>, vector<32x32xf32> -> vector<32x32xf32>
    %c1_158 = arith.constant 1 : index
    %c0_159 = arith.constant 0 : index
    %c0_160 = arith.constant 0 : index
    %399 = vector.load %arg11[%c1_158, %c0_159, %c0_160] : memref<3x1x32xf32, #tpu.memory_space<vmem>>, vector<1x1x32xf32>
    %400 = vector.shape_cast %399 : vector<1x1x32xf32> to vector<1x32xf32>
    %401 = vector.broadcast %400 : vector<1x32xf32> to vector<32x32xf32>
    %402 = arith.addf %398, %401 : vector<32x32xf32>
    %403 = arith.addf %384, %402 : vector<32x32xf32>
    %c1_161 = arith.constant 1 : index
    %c0_162 = arith.constant 0 : index
    %c0_163 = arith.constant 0 : index
    %404 = vector.load %arg14[%c1_161, %c0_162, %c0_163] : memref<3x1x32xf32, #tpu.memory_space<vmem>>, vector<1x1x32xf32>
    %405 = vector.shape_cast %404 : vector<1x1x32xf32> to vector<1x32xf32>
    %c1_164 = arith.constant 1 : index
    %c0_165 = arith.constant 0 : index
    %c0_166 = arith.constant 0 : index
    %406 = vector.load %arg15[%c1_164, %c0_165, %c0_166] : memref<3x1x32xf32, #tpu.memory_space<vmem>>, vector<1x1x32xf32>
    %407 = vector.shape_cast %406 : vector<1x1x32xf32> to vector<1x32xf32>
    %cst_167 = arith.constant dense<0.000000e+00> : vector<32xf32>
    %408 = vector.multi_reduction <add>, %403, %cst_167 [1] : vector<32x32xf32> to vector<32xf32>
    %409 = vector.shape_cast %408 : vector<32xf32> to vector<32x1xf32>
    %cst_168 = arith.constant 3.200000e+01 : f32
    %410 = vector.broadcast %cst_168 : f32 to vector<32x1xf32>
    %411 = arith.divf %409, %410 : vector<32x1xf32>
    %412 = vector.broadcast %411 : vector<32x1xf32> to vector<32x32xf32>
    %413 = arith.subf %403, %412 : vector<32x32xf32>
    %414 = arith.mulf %413, %413 : vector<32x32xf32>
    %cst_169 = arith.constant dense<0.000000e+00> : vector<32xf32>
    %415 = vector.multi_reduction <add>, %414, %cst_169 [1] : vector<32x32xf32> to vector<32xf32>
    %416 = vector.shape_cast %415 : vector<32xf32> to vector<32x1xf32>
    %cst_170 = arith.constant 3.200000e+01 : f32
    %417 = vector.broadcast %cst_170 : f32 to vector<32x1xf32>
    %418 = arith.divf %416, %417 : vector<32x1xf32>
    %419 = vector.broadcast %411 : vector<32x1xf32> to vector<32x32xf32>
    %420 = arith.subf %403, %419 : vector<32x32xf32>
    %cst_171 = arith.constant 9.99999974E-6 : f32
    %421 = vector.broadcast %cst_171 : f32 to vector<32x1xf32>
    %422 = arith.addf %418, %421 : vector<32x1xf32>
    %423 = math.rsqrt %422 : vector<32x1xf32>
    %424 = vector.broadcast %423 : vector<32x1xf32> to vector<32x32xf32>
    %425 = arith.mulf %420, %424 : vector<32x32xf32>
    %426 = vector.broadcast %405 : vector<1x32xf32> to vector<32x32xf32>
    %427 = arith.mulf %425, %426 : vector<32x32xf32>
    %428 = vector.broadcast %407 : vector<1x32xf32> to vector<32x32xf32>
    %429 = arith.addf %427, %428 : vector<32x32xf32>
    %430 = vector.extract_strided_slice %429 {offsets = [0, 0], sizes = [8, 32], strides = [1, 1]} : vector<32x32xf32> to vector<8x32xf32>
    %c0_172 = arith.constant 0 : index
    %c0_173 = arith.constant 0 : index
    %431 = vector.load %arg19[%c0_172, %c0_173] : memref<8x128xf32, #tpu.memory_space<vmem>>, vector<8x32xf32>
    tpu.vector_store %arg19[%c0_172, %c0_173], %430 {strides = array<i32>} : memref<8x128xf32, #tpu.memory_space<vmem>>, vector<8x32xf32>,
    %432 = vector.extract_strided_slice %429 {offsets = [8, 0], sizes = [8, 32], strides = [1, 1]} : vector<32x32xf32> to vector<8x32xf32>
    %c0_174 = arith.constant 0 : index
    %c32_175 = arith.constant 32 : index
    %433 = vector.load %arg19[%c0_174, %c32_175] : memref<8x128xf32, #tpu.memory_space<vmem>>, vector<8x32xf32>
    tpu.vector_store %arg19[%c0_174, %c32_175], %432 {strides = array<i32>} : memref<8x128xf32, #tpu.memory_space<vmem>>, vector<8x32xf32>,
    %434 = vector.extract_strided_slice %429 {offsets = [16, 0], sizes = [8, 32], strides = [1, 1]} : vector<32x32xf32> to vector<8x32xf32>
    %c0_176 = arith.constant 0 : index
    %c64_177 = arith.constant 64 : index
    %435 = vector.load %arg19[%c0_176, %c64_177] : memref<8x128xf32, #tpu.memory_space<vmem>>, vector<8x32xf32>
    tpu.vector_store %arg19[%c0_176, %c64_177], %434 {strides = array<i32>} : memref<8x128xf32, #tpu.memory_space<vmem>>, vector<8x32xf32>,
    %436 = vector.extract_strided_slice %429 {offsets = [24, 0], sizes = [8, 32], strides = [1, 1]} : vector<32x32xf32> to vector<8x32xf32>
    %c0_178 = arith.constant 0 : index
    %c96_179 = arith.constant 96 : index
    %437 = vector.load %arg19[%c0_178, %c96_179] : memref<8x128xf32, #tpu.memory_space<vmem>>, vector<8x32xf32>
    tpu.vector_store %arg19[%c0_178, %c96_179], %436 {strides = array<i32>} : memref<8x128xf32, #tpu.memory_space<vmem>>, vector<8x32xf32>,
    %c2 = arith.constant 2 : index
    %c0_180 = arith.constant 0 : index
    %c0_181 = arith.constant 0 : index
    %c0_182 = arith.constant 0 : index
    %438 = vector.load %arg6[%c2, %c0_180, %c0_181, %c0_182] : memref<3x4x8x32xbf16, #tpu.memory_space<vmem>>, vector<1x4x8x32xbf16>
    %439 = vector.shape_cast %438 : vector<1x4x8x32xbf16> to vector<4x8x32xbf16>
    %c2_183 = arith.constant 2 : index
    %c0_184 = arith.constant 0 : index
    %c0_185 = arith.constant 0 : index
    %440 = vector.load %arg4[%c2_183, %c0_184, %c0_185] : memref<3x32x96xbf16, #tpu.memory_space<vmem>>, vector<1x32x96xbf16>
    %441 = vector.shape_cast %440 : vector<1x32x96xbf16> to vector<32x96xbf16>
    %442 = arith.truncf %429 : vector<32x32xf32> to vector<32x32xbf16>
    %cst_186 = arith.constant dense<0.000000e+00> : vector<32x96xf32>
    %443 = tpu.matmul %442, %441, %cst_186 {dimension_numbers = #tpu.dot_dimension_numbers<[1], [0], [0], [1], [0, 0, 1, 1], [], []>} : vector<32x32xbf16>, vector<32x96xbf16>, vector<32x96xf32> -> vector<32x96xf32>
    %c2_187 = arith.constant 2 : index
    %c0_188 = arith.constant 0 : index
    %c0_189 = arith.constant 0 : index
    %444 = vector.load %arg5[%c2_187, %c0_188, %c0_189] : memref<3x1x96xf32, #tpu.memory_space<vmem>>, vector<1x1x96xf32>
    %445 = vector.shape_cast %444 : vector<1x1x96xf32> to vector<1x96xf32>
    %446 = vector.broadcast %445 : vector<1x96xf32> to vector<32x96xf32>
    %447 = arith.addf %443, %446 : vector<32x96xf32>
    %cst_190 = arith.constant 0.000000e+00 : f32
    %448 = vector.broadcast %cst_190 : f32 to vector<32x32xf32>
    %449 = vector.extract_strided_slice %447 {offsets = [0, 0], sizes = [32, 8], strides = [1, 1]} : vector<32x96xf32> to vector<32x8xf32>
    %450 = vector.extract_strided_slice %447 {offsets = [0, 32], sizes = [32, 8], strides = [1, 1]} : vector<32x96xf32> to vector<32x8xf32>
    %451 = vector.extract_strided_slice %447 {offsets = [0, 64], sizes = [32, 8], strides = [1, 1]} : vector<32x96xf32> to vector<32x8xf32>
    %452 = arith.truncf %449 : vector<32x8xf32> to vector<32x8xbf16>
    %453 = arith.truncf %450 : vector<32x8xf32> to vector<32x8xbf16>
    %cst_191 = arith.constant dense<0.000000e+00> : vector<32x32xf32>
    %454 = tpu.matmul %452, %453, %cst_191 {dimension_numbers = #tpu.dot_dimension_numbers<[1], [1], [0], [0], [0, 0, 1, 0], [], []>} : vector<32x8xbf16>, vector<32x8xbf16>, vector<32x32xf32> -> vector<32x32xf32>
    %455 = arith.addf %454, %55 : vector<32x32xf32>
    %cst_192 = arith.constant dense<0xFF800000> : vector<32xf32>
    %456 = vector.multi_reduction <maximumf>, %455, %cst_192 [1] : vector<32x32xf32> to vector<32xf32>
    %457 = vector.shape_cast %456 : vector<32xf32> to vector<32x1xf32>
    %458 = vector.broadcast %457 : vector<32x1xf32> to vector<32x32xf32>
    %459 = arith.subf %455, %458 : vector<32x32xf32>
    %460 = math.exp %459 : vector<32x32xf32>
    %cst_193 = arith.constant dense<0.000000e+00> : vector<32xf32>
    %461 = vector.multi_reduction <add>, %460, %cst_193 [1] : vector<32x32xf32> to vector<32xf32>
    %462 = vector.shape_cast %461 : vector<32xf32> to vector<32x1xf32>
    %463 = vector.broadcast %462 : vector<32x1xf32> to vector<32x32xf32>
    %464 = arith.divf %460, %463 : vector<32x32xf32>
    %465 = arith.truncf %464 : vector<32x32xf32> to vector<32x32xbf16>
    %466 = arith.truncf %451 : vector<32x8xf32> to vector<32x8xbf16>
    %cst_194 = arith.constant dense<0.000000e+00> : vector<32x8xf32>
    %467 = tpu.matmul %465, %466, %cst_194 {dimension_numbers = #tpu.dot_dimension_numbers<[1], [0], [0], [1], [0, 0, 1, 1], [], []>} : vector<32x32xbf16>, vector<32x8xbf16>, vector<32x8xf32> -> vector<32x8xf32>
    %468 = vector.extract_strided_slice %439 {offsets = [0, 0, 0], sizes = [1, 8, 32], strides = [1, 1, 1]} : vector<4x8x32xbf16> to vector<1x8x32xbf16>
    %469 = vector.shape_cast %468 : vector<1x8x32xbf16> to vector<8x32xbf16>
    %470 = arith.truncf %467 : vector<32x8xf32> to vector<32x8xbf16>
    %cst_195 = arith.constant dense<0.000000e+00> : vector<32x32xf32>
    %471 = tpu.matmul %470, %469, %cst_195 {dimension_numbers = #tpu.dot_dimension_numbers<[1], [0], [0], [1], [0, 0, 1, 1], [], []>} : vector<32x8xbf16>, vector<8x32xbf16>, vector<32x32xf32> -> vector<32x32xf32>
    %472 = arith.addf %448, %471 : vector<32x32xf32>
    %473 = vector.extract_strided_slice %447 {offsets = [0, 8], sizes = [32, 8], strides = [1, 1]} : vector<32x96xf32> to vector<32x8xf32>
    %474 = vector.extract_strided_slice %447 {offsets = [0, 40], sizes = [32, 8], strides = [1, 1]} : vector<32x96xf32> to vector<32x8xf32>
    %475 = vector.extract_strided_slice %447 {offsets = [0, 72], sizes = [32, 8], strides = [1, 1]} : vector<32x96xf32> to vector<32x8xf32>
    %476 = arith.truncf %473 : vector<32x8xf32> to vector<32x8xbf16>
    %477 = arith.truncf %474 : vector<32x8xf32> to vector<32x8xbf16>
    %cst_196 = arith.constant dense<0.000000e+00> : vector<32x32xf32>
    %478 = tpu.matmul %476, %477, %cst_196 {dimension_numbers = #tpu.dot_dimension_numbers<[1], [1], [0], [0], [0, 0, 1, 0], [], []>} : vector<32x8xbf16>, vector<32x8xbf16>, vector<32x32xf32> -> vector<32x32xf32>
    %479 = arith.addf %478, %55 : vector<32x32xf32>
    %cst_197 = arith.constant dense<0xFF800000> : vector<32xf32>
    %480 = vector.multi_reduction <maximumf>, %479, %cst_197 [1] : vector<32x32xf32> to vector<32xf32>
    %481 = vector.shape_cast %480 : vector<32xf32> to vector<32x1xf32>
    %482 = vector.broadcast %481 : vector<32x1xf32> to vector<32x32xf32>
    %483 = arith.subf %479, %482 : vector<32x32xf32>
    %484 = math.exp %483 : vector<32x32xf32>
    %cst_198 = arith.constant dense<0.000000e+00> : vector<32xf32>
    %485 = vector.multi_reduction <add>, %484, %cst_198 [1] : vector<32x32xf32> to vector<32xf32>
    %486 = vector.shape_cast %485 : vector<32xf32> to vector<32x1xf32>
    %487 = vector.broadcast %486 : vector<32x1xf32> to vector<32x32xf32>
    %488 = arith.divf %484, %487 : vector<32x32xf32>
    %489 = arith.truncf %488 : vector<32x32xf32> to vector<32x32xbf16>
    %490 = arith.truncf %475 : vector<32x8xf32> to vector<32x8xbf16>
    %cst_199 = arith.constant dense<0.000000e+00> : vector<32x8xf32>
    %491 = tpu.matmul %489, %490, %cst_199 {dimension_numbers = #tpu.dot_dimension_numbers<[1], [0], [0], [1], [0, 0, 1, 1], [], []>} : vector<32x32xbf16>, vector<32x8xbf16>, vector<32x8xf32> -> vector<32x8xf32>
    %492 = vector.extract_strided_slice %439 {offsets = [1, 0, 0], sizes = [1, 8, 32], strides = [1, 1, 1]} : vector<4x8x32xbf16> to vector<1x8x32xbf16>
    %493 = vector.shape_cast %492 : vector<1x8x32xbf16> to vector<8x32xbf16>
    %494 = arith.truncf %491 : vector<32x8xf32> to vector<32x8xbf16>
    %cst_200 = arith.constant dense<0.000000e+00> : vector<32x32xf32>
    %495 = tpu.matmul %494, %493, %cst_200 {dimension_numbers = #tpu.dot_dimension_numbers<[1], [0], [0], [1], [0, 0, 1, 1], [], []>} : vector<32x8xbf16>, vector<8x32xbf16>, vector<32x32xf32> -> vector<32x32xf32>
    %496 = arith.addf %472, %495 : vector<32x32xf32>
    %497 = vector.extract_strided_slice %447 {offsets = [0, 16], sizes = [32, 8], strides = [1, 1]} : vector<32x96xf32> to vector<32x8xf32>
    %498 = vector.extract_strided_slice %447 {offsets = [0, 48], sizes = [32, 8], strides = [1, 1]} : vector<32x96xf32> to vector<32x8xf32>
    %499 = vector.extract_strided_slice %447 {offsets = [0, 80], sizes = [32, 8], strides = [1, 1]} : vector<32x96xf32> to vector<32x8xf32>
    %500 = arith.truncf %497 : vector<32x8xf32> to vector<32x8xbf16>
    %501 = arith.truncf %498 : vector<32x8xf32> to vector<32x8xbf16>
    %cst_201 = arith.constant dense<0.000000e+00> : vector<32x32xf32>
    %502 = tpu.matmul %500, %501, %cst_201 {dimension_numbers = #tpu.dot_dimension_numbers<[1], [1], [0], [0], [0, 0, 1, 0], [], []>} : vector<32x8xbf16>, vector<32x8xbf16>, vector<32x32xf32> -> vector<32x32xf32>
    %503 = arith.addf %502, %55 : vector<32x32xf32>
    %cst_202 = arith.constant dense<0xFF800000> : vector<32xf32>
    %504 = vector.multi_reduction <maximumf>, %503, %cst_202 [1] : vector<32x32xf32> to vector<32xf32>
    %505 = vector.shape_cast %504 : vector<32xf32> to vector<32x1xf32>
    %506 = vector.broadcast %505 : vector<32x1xf32> to vector<32x32xf32>
    %507 = arith.subf %503, %506 : vector<32x32xf32>
    %508 = math.exp %507 : vector<32x32xf32>
    %cst_203 = arith.constant dense<0.000000e+00> : vector<32xf32>
    %509 = vector.multi_reduction <add>, %508, %cst_203 [1] : vector<32x32xf32> to vector<32xf32>
    %510 = vector.shape_cast %509 : vector<32xf32> to vector<32x1xf32>
    %511 = vector.broadcast %510 : vector<32x1xf32> to vector<32x32xf32>
    %512 = arith.divf %508, %511 : vector<32x32xf32>
    %513 = arith.truncf %512 : vector<32x32xf32> to vector<32x32xbf16>
    %514 = arith.truncf %499 : vector<32x8xf32> to vector<32x8xbf16>
    %cst_204 = arith.constant dense<0.000000e+00> : vector<32x8xf32>
    %515 = tpu.matmul %513, %514, %cst_204 {dimension_numbers = #tpu.dot_dimension_numbers<[1], [0], [0], [1], [0, 0, 1, 1], [], []>} : vector<32x32xbf16>, vector<32x8xbf16>, vector<32x8xf32> -> vector<32x8xf32>
    %516 = vector.extract_strided_slice %439 {offsets = [2, 0, 0], sizes = [1, 8, 32], strides = [1, 1, 1]} : vector<4x8x32xbf16> to vector<1x8x32xbf16>
    %517 = vector.shape_cast %516 : vector<1x8x32xbf16> to vector<8x32xbf16>
    %518 = arith.truncf %515 : vector<32x8xf32> to vector<32x8xbf16>
    %cst_205 = arith.constant dense<0.000000e+00> : vector<32x32xf32>
    %519 = tpu.matmul %518, %517, %cst_205 {dimension_numbers = #tpu.dot_dimension_numbers<[1], [0], [0], [1], [0, 0, 1, 1], [], []>} : vector<32x8xbf16>, vector<8x32xbf16>, vector<32x32xf32> -> vector<32x32xf32>
    %520 = arith.addf %496, %519 : vector<32x32xf32>
    %521 = vector.extract_strided_slice %447 {offsets = [0, 24], sizes = [32, 8], strides = [1, 1]} : vector<32x96xf32> to vector<32x8xf32>
    %522 = vector.extract_strided_slice %447 {offsets = [0, 56], sizes = [32, 8], strides = [1, 1]} : vector<32x96xf32> to vector<32x8xf32>
    %523 = vector.extract_strided_slice %447 {offsets = [0, 88], sizes = [32, 8], strides = [1, 1]} : vector<32x96xf32> to vector<32x8xf32>
    %524 = arith.truncf %521 : vector<32x8xf32> to vector<32x8xbf16>
    %525 = arith.truncf %522 : vector<32x8xf32> to vector<32x8xbf16>
    %cst_206 = arith.constant dense<0.000000e+00> : vector<32x32xf32>
    %526 = tpu.matmul %524, %525, %cst_206 {dimension_numbers = #tpu.dot_dimension_numbers<[1], [1], [0], [0], [0, 0, 1, 0], [], []>} : vector<32x8xbf16>, vector<32x8xbf16>, vector<32x32xf32> -> vector<32x32xf32>
    %527 = arith.addf %526, %55 : vector<32x32xf32>
    %cst_207 = arith.constant dense<0xFF800000> : vector<32xf32>
    %528 = vector.multi_reduction <maximumf>, %527, %cst_207 [1] : vector<32x32xf32> to vector<32xf32>
    %529 = vector.shape_cast %528 : vector<32xf32> to vector<32x1xf32>
    %530 = vector.broadcast %529 : vector<32x1xf32> to vector<32x32xf32>
    %531 = arith.subf %527, %530 : vector<32x32xf32>
    %532 = math.exp %531 : vector<32x32xf32>
    %cst_208 = arith.constant dense<0.000000e+00> : vector<32xf32>
    %533 = vector.multi_reduction <add>, %532, %cst_208 [1] : vector<32x32xf32> to vector<32xf32>
    %534 = vector.shape_cast %533 : vector<32xf32> to vector<32x1xf32>
    %535 = vector.broadcast %534 : vector<32x1xf32> to vector<32x32xf32>
    %536 = arith.divf %532, %535 : vector<32x32xf32>
    %537 = arith.truncf %536 : vector<32x32xf32> to vector<32x32xbf16>
    %538 = arith.truncf %523 : vector<32x8xf32> to vector<32x8xbf16>
    %cst_209 = arith.constant dense<0.000000e+00> : vector<32x8xf32>
    %539 = tpu.matmul %537, %538, %cst_209 {dimension_numbers = #tpu.dot_dimension_numbers<[1], [0], [0], [1], [0, 0, 1, 1], [], []>} : vector<32x32xbf16>, vector<32x8xbf16>, vector<32x8xf32> -> vector<32x8xf32>
    %540 = vector.extract_strided_slice %439 {offsets = [3, 0, 0], sizes = [1, 8, 32], strides = [1, 1, 1]} : vector<4x8x32xbf16> to vector<1x8x32xbf16>
    %541 = vector.shape_cast %540 : vector<1x8x32xbf16> to vector<8x32xbf16>
    %542 = arith.truncf %539 : vector<32x8xf32> to vector<32x8xbf16>
    %cst_210 = arith.constant dense<0.000000e+00> : vector<32x32xf32>
    %543 = tpu.matmul %542, %541, %cst_210 {dimension_numbers = #tpu.dot_dimension_numbers<[1], [0], [0], [1], [0, 0, 1, 1], [], []>} : vector<32x8xbf16>, vector<8x32xbf16>, vector<32x32xf32> -> vector<32x32xf32>
    %544 = arith.addf %520, %543 : vector<32x32xf32>
    %c2_211 = arith.constant 2 : index
    %c0_212 = arith.constant 0 : index
    %c0_213 = arith.constant 0 : index
    %545 = vector.load %arg7[%c2_211, %c0_212, %c0_213] : memref<3x1x32xf32, #tpu.memory_space<vmem>>, vector<1x1x32xf32>
    %546 = vector.shape_cast %545 : vector<1x1x32xf32> to vector<1x32xf32>
    %547 = vector.broadcast %546 : vector<1x32xf32> to vector<32x32xf32>
    %548 = arith.addf %544, %547 : vector<32x32xf32>
    %549 = arith.addf %429, %548 : vector<32x32xf32>
    %c2_214 = arith.constant 2 : index
    %c0_215 = arith.constant 0 : index
    %c0_216 = arith.constant 0 : index
    %550 = vector.load %arg12[%c2_214, %c0_215, %c0_216] : memref<3x1x32xf32, #tpu.memory_space<vmem>>, vector<1x1x32xf32>
    %551 = vector.shape_cast %550 : vector<1x1x32xf32> to vector<1x32xf32>
    %c2_217 = arith.constant 2 : index
    %c0_218 = arith.constant 0 : index
    %c0_219 = arith.constant 0 : index
    %552 = vector.load %arg13[%c2_217, %c0_218, %c0_219] : memref<3x1x32xf32, #tpu.memory_space<vmem>>, vector<1x1x32xf32>
    %553 = vector.shape_cast %552 : vector<1x1x32xf32> to vector<1x32xf32>
    %cst_220 = arith.constant dense<0.000000e+00> : vector<32xf32>
    %554 = vector.multi_reduction <add>, %549, %cst_220 [1] : vector<32x32xf32> to vector<32xf32>
    %555 = vector.shape_cast %554 : vector<32xf32> to vector<32x1xf32>
    %cst_221 = arith.constant 3.200000e+01 : f32
    %556 = vector.broadcast %cst_221 : f32 to vector<32x1xf32>
    %557 = arith.divf %555, %556 : vector<32x1xf32>
    %558 = vector.broadcast %557 : vector<32x1xf32> to vector<32x32xf32>
    %559 = arith.subf %549, %558 : vector<32x32xf32>
    %560 = arith.mulf %559, %559 : vector<32x32xf32>
    %cst_222 = arith.constant dense<0.000000e+00> : vector<32xf32>
    %561 = vector.multi_reduction <add>, %560, %cst_222 [1] : vector<32x32xf32> to vector<32xf32>
    %562 = vector.shape_cast %561 : vector<32xf32> to vector<32x1xf32>
    %cst_223 = arith.constant 3.200000e+01 : f32
    %563 = vector.broadcast %cst_223 : f32 to vector<32x1xf32>
    %564 = arith.divf %562, %563 : vector<32x1xf32>
    %565 = vector.broadcast %557 : vector<32x1xf32> to vector<32x32xf32>
    %566 = arith.subf %549, %565 : vector<32x32xf32>
    %cst_224 = arith.constant 9.99999974E-6 : f32
    %567 = vector.broadcast %cst_224 : f32 to vector<32x1xf32>
    %568 = arith.addf %564, %567 : vector<32x1xf32>
    %569 = math.rsqrt %568 : vector<32x1xf32>
    %570 = vector.broadcast %569 : vector<32x1xf32> to vector<32x32xf32>
    %571 = arith.mulf %566, %570 : vector<32x32xf32>
    %572 = vector.broadcast %551 : vector<1x32xf32> to vector<32x32xf32>
    %573 = arith.mulf %571, %572 : vector<32x32xf32>
    %574 = vector.broadcast %553 : vector<1x32xf32> to vector<32x32xf32>
    %575 = arith.addf %573, %574 : vector<32x32xf32>
    %c2_225 = arith.constant 2 : index
    %c0_226 = arith.constant 0 : index
    %c0_227 = arith.constant 0 : index
    %576 = vector.load %arg8[%c2_225, %c0_226, %c0_227] : memref<3x32x64xbf16, #tpu.memory_space<vmem>>, vector<1x32x64xbf16>
    %577 = vector.shape_cast %576 : vector<1x32x64xbf16> to vector<32x64xbf16>
    %578 = arith.truncf %575 : vector<32x32xf32> to vector<32x32xbf16>
    %cst_228 = arith.constant dense<0.000000e+00> : vector<32x64xf32>
    %579 = tpu.matmul %578, %577, %cst_228 {dimension_numbers = #tpu.dot_dimension_numbers<[1], [0], [0], [1], [0, 0, 1, 1], [], []>} : vector<32x32xbf16>, vector<32x64xbf16>, vector<32x64xf32> -> vector<32x64xf32>
    %c2_229 = arith.constant 2 : index
    %c0_230 = arith.constant 0 : index
    %c0_231 = arith.constant 0 : index
    %580 = vector.load %arg9[%c2_229, %c0_230, %c0_231] : memref<3x1x64xf32, #tpu.memory_space<vmem>>, vector<1x1x64xf32>
    %581 = vector.shape_cast %580 : vector<1x1x64xf32> to vector<1x64xf32>
    %582 = vector.broadcast %581 : vector<1x64xf32> to vector<32x64xf32>
    %583 = arith.addf %579, %582 : vector<32x64xf32>
    %cst_232 = arith.constant 0.000000e+00 : f32
    %584 = vector.broadcast %cst_232 : f32 to vector<32x64xf32>
    %585 = arith.maximumf %583, %584 : vector<32x64xf32>
    %c2_233 = arith.constant 2 : index
    %c0_234 = arith.constant 0 : index
    %c0_235 = arith.constant 0 : index
    %586 = vector.load %arg10[%c2_233, %c0_234, %c0_235] : memref<3x64x32xbf16, #tpu.memory_space<vmem>>, vector<1x64x32xbf16>
    %587 = vector.shape_cast %586 : vector<1x64x32xbf16> to vector<64x32xbf16>
    %588 = arith.truncf %585 : vector<32x64xf32> to vector<32x64xbf16>
    %cst_236 = arith.constant dense<0.000000e+00> : vector<32x32xf32>
    %589 = tpu.matmul %588, %587, %cst_236 {dimension_numbers = #tpu.dot_dimension_numbers<[1], [0], [0], [1], [0, 0, 1, 1], [], []>} : vector<32x64xbf16>, vector<64x32xbf16>, vector<32x32xf32> -> vector<32x32xf32>
    %c2_237 = arith.constant 2 : index
    %c0_238 = arith.constant 0 : index
    %c0_239 = arith.constant 0 : index
    %590 = vector.load %arg11[%c2_237, %c0_238, %c0_239] : memref<3x1x32xf32, #tpu.memory_space<vmem>>, vector<1x1x32xf32>
    %591 = vector.shape_cast %590 : vector<1x1x32xf32> to vector<1x32xf32>
    %592 = vector.broadcast %591 : vector<1x32xf32> to vector<32x32xf32>
    %593 = arith.addf %589, %592 : vector<32x32xf32>
    %594 = arith.addf %575, %593 : vector<32x32xf32>
    %c2_240 = arith.constant 2 : index
    %c0_241 = arith.constant 0 : index
    %c0_242 = arith.constant 0 : index
    %595 = vector.load %arg14[%c2_240, %c0_241, %c0_242] : memref<3x1x32xf32, #tpu.memory_space<vmem>>, vector<1x1x32xf32>
    %596 = vector.shape_cast %595 : vector<1x1x32xf32> to vector<1x32xf32>
    %c2_243 = arith.constant 2 : index
    %c0_244 = arith.constant 0 : index
    %c0_245 = arith.constant 0 : index
    %597 = vector.load %arg15[%c2_243, %c0_244, %c0_245] : memref<3x1x32xf32, #tpu.memory_space<vmem>>, vector<1x1x32xf32>
    %598 = vector.shape_cast %597 : vector<1x1x32xf32> to vector<1x32xf32>
    %cst_246 = arith.constant dense<0.000000e+00> : vector<32xf32>
    %599 = vector.multi_reduction <add>, %594, %cst_246 [1] : vector<32x32xf32> to vector<32xf32>
    %600 = vector.shape_cast %599 : vector<32xf32> to vector<32x1xf32>
    %cst_247 = arith.constant 3.200000e+01 : f32
    %601 = vector.broadcast %cst_247 : f32 to vector<32x1xf32>
    %602 = arith.divf %600, %601 : vector<32x1xf32>
    %603 = vector.broadcast %602 : vector<32x1xf32> to vector<32x32xf32>
    %604 = arith.subf %594, %603 : vector<32x32xf32>
    %605 = arith.mulf %604, %604 : vector<32x32xf32>
    %cst_248 = arith.constant dense<0.000000e+00> : vector<32xf32>
    %606 = vector.multi_reduction <add>, %605, %cst_248 [1] : vector<32x32xf32> to vector<32xf32>
    %607 = vector.shape_cast %606 : vector<32xf32> to vector<32x1xf32>
    %cst_249 = arith.constant 3.200000e+01 : f32
    %608 = vector.broadcast %cst_249 : f32 to vector<32x1xf32>
    %609 = arith.divf %607, %608 : vector<32x1xf32>
    %610 = vector.broadcast %602 : vector<32x1xf32> to vector<32x32xf32>
    %611 = arith.subf %594, %610 : vector<32x32xf32>
    %cst_250 = arith.constant 9.99999974E-6 : f32
    %612 = vector.broadcast %cst_250 : f32 to vector<32x1xf32>
    %613 = arith.addf %609, %612 : vector<32x1xf32>
    %614 = math.rsqrt %613 : vector<32x1xf32>
    %615 = vector.broadcast %614 : vector<32x1xf32> to vector<32x32xf32>
    %616 = arith.mulf %611, %615 : vector<32x32xf32>
    %617 = vector.broadcast %596 : vector<1x32xf32> to vector<32x32xf32>
    %618 = arith.mulf %616, %617 : vector<32x32xf32>
    %619 = vector.broadcast %598 : vector<1x32xf32> to vector<32x32xf32>
    %620 = arith.addf %618, %619 : vector<32x32xf32>
    %621 = vector.extract_strided_slice %620 {offsets = [0, 0], sizes = [8, 32], strides = [1, 1]} : vector<32x32xf32> to vector<8x32xf32>
    %c0_251 = arith.constant 0 : index
    %c0_252 = arith.constant 0 : index
    %622 = vector.load %arg20[%c0_251, %c0_252] : memref<8x128xf32, #tpu.memory_space<vmem>>, vector<8x32xf32>
    tpu.vector_store %arg20[%c0_251, %c0_252], %621 {strides = array<i32>} : memref<8x128xf32, #tpu.memory_space<vmem>>, vector<8x32xf32>,
    %623 = vector.extract_strided_slice %620 {offsets = [8, 0], sizes = [8, 32], strides = [1, 1]} : vector<32x32xf32> to vector<8x32xf32>
    %c0_253 = arith.constant 0 : index
    %c32_254 = arith.constant 32 : index
    %624 = vector.load %arg20[%c0_253, %c32_254] : memref<8x128xf32, #tpu.memory_space<vmem>>, vector<8x32xf32>
    tpu.vector_store %arg20[%c0_253, %c32_254], %623 {strides = array<i32>} : memref<8x128xf32, #tpu.memory_space<vmem>>, vector<8x32xf32>,
    %625 = vector.extract_strided_slice %620 {offsets = [16, 0], sizes = [8, 32], strides = [1, 1]} : vector<32x32xf32> to vector<8x32xf32>
    %c0_255 = arith.constant 0 : index
    %c64_256 = arith.constant 64 : index
    %626 = vector.load %arg20[%c0_255, %c64_256] : memref<8x128xf32, #tpu.memory_space<vmem>>, vector<8x32xf32>
    tpu.vector_store %arg20[%c0_255, %c64_256], %625 {strides = array<i32>} : memref<8x128xf32, #tpu.memory_space<vmem>>, vector<8x32xf32>,
    %627 = vector.extract_strided_slice %620 {offsets = [24, 0], sizes = [8, 32], strides = [1, 1]} : vector<32x32xf32> to vector<8x32xf32>
    %c0_257 = arith.constant 0 : index
    %c96_258 = arith.constant 96 : index
    %628 = vector.load %arg20[%c0_257, %c96_258] : memref<8x128xf32, #tpu.memory_space<vmem>>, vector<8x32xf32>
    tpu.vector_store %arg20[%c0_257, %c96_258], %627 {strides = array<i32>} : memref<8x128xf32, #tpu.memory_space<vmem>>, vector<8x32xf32>,
    %c0_259 = arith.constant 0 : index
    %c0_260 = arith.constant 0 : index
    %629 = vector.load %arg20[%c0_259, %c0_260] : memref<8x128xf32, #tpu.memory_space<vmem>>, vector<8x128xf32>
    %c0_261 = arith.constant 0 : index
    %c0_262 = arith.constant 0 : index
    %630 = vector.load %arg16[%c0_261, %c0_262] : memref<128x128xbf16, #tpu.memory_space<vmem>>, vector<128x128xbf16>
    %631 = arith.truncf %629 : vector<8x128xf32> to vector<8x128xbf16>
    %cst_263 = arith.constant dense<0.000000e+00> : vector<8x128xf32>
    %632 = tpu.matmul %631, %630, %cst_263 {dimension_numbers = #tpu.dot_dimension_numbers<[1], [0], [0], [1], [0, 0, 1, 1], [], []>} : vector<8x128xbf16>, vector<128x128xbf16>, vector<8x128xf32> -> vector<8x128xf32>
    %c0_264 = arith.constant 0 : index
    %c0_265 = arith.constant 0 : index
    %633 = vector.load %arg17[%c0_264, %c0_265] : memref<1x128xf32, #tpu.memory_space<vmem>>, vector<1x128xf32>
    %634 = vector.broadcast %633 : vector<1x128xf32> to vector<8x128xf32>
    %635 = arith.addf %632, %634 : vector<8x128xf32>
    %c0_266 = arith.constant 0 : index
    %c0_267 = arith.constant 0 : index
    %636 = vector.load %arg21[%c0_266, %c0_267] : memref<8x128xf32, #tpu.memory_space<vmem>>, vector<8x128xf32>
    tpu.vector_store %arg21[%c0_266, %c0_267], %635 {strides = array<i32>} : memref<8x128xf32, #tpu.memory_space<vmem>>, vector<8x128xf32>,
    return
  }
  func.func @transform_0(%arg0: i32) -> (i32, i32) {
    %c0_i32 = arith.constant 0 : i32
    %c0_i32_0 = arith.constant 0 : i32
    return %arg0, %c0_i32 : i32, i32
  }
  func.func @transform_1(%arg0: i32) -> (i32, i32) {
    %c0_i32 = arith.constant 0 : i32
    %c0_i32_0 = arith.constant 0 : i32
    %c0_i32_1 = arith.constant 0 : i32
    return %c0_i32, %c0_i32_0 : i32, i32
  }
  func.func @transform_2(%arg0: i32) -> (i32, i32) {
    %c0_i32 = arith.constant 0 : i32
    %c0_i32_0 = arith.constant 0 : i32
    %c0_i32_1 = arith.constant 0 : i32
    return %c0_i32, %c0_i32_0 : i32, i32
  }
  func.func @transform_3(%arg0: i32) -> (i32, i32, i32) {
    %c0_i32 = arith.constant 0 : i32
    %c0_i32_0 = arith.constant 0 : i32
    %c0_i32_1 = arith.constant 0 : i32
    %c0_i32_2 = arith.constant 0 : i32
    return %c0_i32, %c0_i32_0, %c0_i32_1 : i32, i32, i32
  }
  func.func @transform_4(%arg0: i32) -> (i32, i32, i32) {
    %c0_i32 = arith.constant 0 : i32
    %c0_i32_0 = arith.constant 0 : i32
    %c0_i32_1 = arith.constant 0 : i32
    %c0_i32_2 = arith.constant 0 : i32
    return %c0_i32, %c0_i32_0, %c0_i32_1 : i32, i32, i32
  }
  func.func @transform_5(%arg0: i32) -> (i32, i32, i32, i32) {
    %c0_i32 = arith.constant 0 : i32
    %c0_i32_0 = arith.constant 0 : i32
    %c0_i32_1 = arith.constant 0 : i32
    %c0_i32_2 = arith.constant 0 : i32
    %c0_i32_3 = arith.constant 0 : i32
    return %c0_i32, %c0_i32_0, %c0_i32_1, %c0_i32_2 : i32, i32, i32, i32
  }
  func.func @transform_6(%arg0: i32) -> (i32, i32, i32) {
    %c0_i32 = arith.constant 0 : i32
    %c0_i32_0 = arith.constant 0 : i32
    %c0_i32_1 = arith.constant 0 : i32
    %c0_i32_2 = arith.constant 0 : i32
    return %c0_i32, %c0_i32_0, %c0_i32_1 : i32, i32, i32
  }
  func.func @transform_7(%arg0: i32) -> (i32, i32, i32) {
    %c0_i32 = arith.constant 0 : i32
    %c0_i32_0 = arith.constant 0 : i32
    %c0_i32_1 = arith.constant 0 : i32
    %c0_i32_2 = arith.constant 0 : i32
    return %c0_i32, %c0_i32_0, %c0_i32_1 : i32, i32, i32
  }
  func.func @transform_8(%arg0: i32) -> (i32, i32, i32) {
    %c0_i32 = arith.constant 0 : i32
    %c0_i32_0 = arith.constant 0 : i32
    %c0_i32_1 = arith.constant 0 : i32
    %c0_i32_2 = arith.constant 0 : i32
    return %c0_i32, %c0_i32_0, %c0_i32_1 : i32, i32, i32
  }
  func.func @transform_9(%arg0: i32) -> (i32, i32, i32) {
    %c0_i32 = arith.constant 0 : i32
    %c0_i32_0 = arith.constant 0 : i32
    %c0_i32_1 = arith.constant 0 : i32
    %c0_i32_2 = arith.constant 0 : i32
    return %c0_i32, %c0_i32_0, %c0_i32_1 : i32, i32, i32
  }
  func.func @transform_10(%arg0: i32) -> (i32, i32, i32) {
    %c0_i32 = arith.constant 0 : i32
    %c0_i32_0 = arith.constant 0 : i32
    %c0_i32_1 = arith.constant 0 : i32
    %c0_i32_2 = arith.constant 0 : i32
    return %c0_i32, %c0_i32_0, %c0_i32_1 : i32, i32, i32
  }
  func.func @transform_11(%arg0: i32) -> (i32, i32, i32) {
    %c0_i32 = arith.constant 0 : i32
    %c0_i32_0 = arith.constant 0 : i32
    %c0_i32_1 = arith.constant 0 : i32
    %c0_i32_2 = arith.constant 0 : i32
    return %c0_i32, %c0_i32_0, %c0_i32_1 : i32, i32, i32
  }
  func.func @transform_12(%arg0: i32) -> (i32, i32, i32) {
    %c0_i32 = arith.constant 0 : i32
    %c0_i32_0 = arith.constant 0 : i32
    %c0_i32_1 = arith.constant 0 : i32
    %c0_i32_2 = arith.constant 0 : i32
    return %c0_i32, %c0_i32_0, %c0_i32_1 : i32, i32, i32
  }
  func.func @transform_13(%arg0: i32) -> (i32, i32, i32) {
    %c0_i32 = arith.constant 0 : i32
    %c0_i32_0 = arith.constant 0 : i32
    %c0_i32_1 = arith.constant 0 : i32
    %c0_i32_2 = arith.constant 0 : i32
    return %c0_i32, %c0_i32_0, %c0_i32_1 : i32, i32, i32
  }
  func.func @transform_14(%arg0: i32) -> (i32, i32, i32) {
    %c0_i32 = arith.constant 0 : i32
    %c0_i32_0 = arith.constant 0 : i32
    %c0_i32_1 = arith.constant 0 : i32
    %c0_i32_2 = arith.constant 0 : i32
    return %c0_i32, %c0_i32_0, %c0_i32_1 : i32, i32, i32
  }
  func.func @transform_15(%arg0: i32) -> (i32, i32) {
    %c0_i32 = arith.constant 0 : i32
    %c0_i32_0 = arith.constant 0 : i32
    %c0_i32_1 = arith.constant 0 : i32
    return %c0_i32, %c0_i32_0 : i32, i32
  }
  func.func @transform_16(%arg0: i32) -> (i32, i32) {
    %c0_i32 = arith.constant 0 : i32
    %c0_i32_0 = arith.constant 0 : i32
    %c0_i32_1 = arith.constant 0 : i32
    return %c0_i32, %c0_i32_0 : i32, i32
  }
  func.func @transform_17(%arg0: i32) -> (i32, i32) {
    %c0_i32 = arith.constant 0 : i32
    %c0_i32_0 = arith.constant 0 : i32
    return %arg0, %c0_i32 : i32, i32
  }
  func.func @transform_18(%arg0: i32) -> (i32, i32) {
    %c0_i32 = arith.constant 0 : i32
    %c0_i32_0 = arith.constant 0 : i32
    return %arg0, %c0_i32 : i32, i32
  }
  func.func @transform_19(%arg0: i32) -> (i32, i32) {
    %c0_i32 = arith.constant 0 : i32
    %c0_i32_0 = arith.constant 0 : i32
    return %arg0, %c0_i32 : i32, i32
  }
  func.func @transform_20(%arg0: i32) -> (i32, i32) {
    %c0_i32 = arith.constant 0 : i32
    %c0_i32_0 = arith.constant 0 : i32
    return %arg0, %c0_i32 : i32, i32
  }
}

</mosaic_0001>

<llo_original>
// kernel: forward.1
$region0: #{forward.1}
  #allocation0 [shape = 'u32[]', space=smem, size = 0x4, offset = 0x4, fixed_abs, tag = 'smem constant byte address 0x4 - core index']
  #allocation1 [shape = 'u32[144,128]{1,0:T(1,128)}', space=vmem, size = 0x12000, scoped, tag = 'internal scratch']
  #allocation2 [shape = 'f32[32,32]{1,0:T(8,128)}', space=vmem, size = 0x4000, scoped, tag = 'scratch operand']
  %s0 = inlined_call_operand.vmem [shape: f32[16,24], index: 0, kind: input, shape index: {}]
  %s1 = inlined_call_operand.vmem [shape: bf16[24,128], index: 1, kind: input, shape index: {}]
  %s2 = inlined_call_operand.vmem [shape: f32[1,128], index: 2, kind: input, shape index: {}]
  %s3 = inlined_call_operand.vmem [shape: bf16[3,32,96], index: 3, kind: input, shape index: {}]
  %s4 = inlined_call_operand.vmem [shape: f32[3,1,96], index: 4, kind: input, shape index: {}]
  %s5 = inlined_call_operand.hbm [shape: bf16[3,4,8,32], index: 5, kind: input, shape index: {}]
  %s6 = inlined_call_operand.vmem [shape: f32[3,1,32], index: 6, kind: input, shape index: {}]
  %s7 = inlined_call_operand.hbm [shape: bf16[3,32,64], index: 7, kind: input, shape index: {}]
  %s8 = inlined_call_operand.vmem [shape: f32[3,1,64], index: 8, kind: input, shape index: {}]
  %s9 = inlined_call_operand.vmem [shape: bf16[3,64,32], index: 9, kind: input, shape index: {}]
  %s10 = inlined_call_operand.vmem [shape: f32[3,1,32], index: 10, kind: input, shape index: {}]
  %s11 = inlined_call_operand.vmem [shape: f32[3,1,32], index: 11, kind: input, shape index: {}]
  %s12 = inlined_call_operand.hbm [shape: f32[3,1,32], index: 12, kind: input, shape index: {}]
  %s13 = inlined_call_operand.hbm [shape: f32[3,1,32], index: 13, kind: input, shape index: {}]
  %s14 = inlined_call_operand.hbm [shape: f32[3,1,32], index: 14, kind: input, shape index: {}]
  %s15 = inlined_call_operand.vmem [shape: bf16[128,128], index: 15, kind: input, shape index: {}]
  %s16 = inlined_call_operand.hbm [shape: f32[1,128], index: 16, kind: input, shape index: {}]
  %s17 = inlined_call_operand.vmem [shape: f32[16,128], index: 17, kind: output, shape index: {0}]
  %s18 = inlined_call_operand.vmem [shape: f32[16,128], index: 18, kind: output, shape index: {1}]
  %s19 = inlined_call_operand.vmem [shape: f32[16,128], index: 19, kind: output, shape index: {2}]
  %s20 = inlined_call_operand.vmem [shape: f32[16,128], index: 20, kind: output, shape index: {3}]
  %21 = xla_tuple %s17, %s18, %s19, %s20
  %s22 = sld [smem:[#allocation0]]
  $region149: #{forward.1} parent=0
    _
  %s24 = ssub.s32 1, %s22
  %s25 = scalar_select 0, %s24, %s22
  $region1: #{forward.1} parent=0
    #allocation3 [shape = 'u8[24576]{0}', space=vmem, size = 0x6000, scoped, tag = 'input window, operand 5, single buffered']
    #allocation4 [shape = 's32[2]{0}', space=sflag, size = 0x8, scoped, tag = 'scoped memory for forward.1']
    #allocation5 [shape = 'u8[24576]{0}', space=vmem, size = 0x6000, scoped, tag = 'input window, operand 7, single buffered']
    #allocation6 [shape = 's32[1]{0}', space=sflag, size = 0x4, scoped, tag = 'scoped memory for forward.1']
    #allocation7 [shape = 'u8[1536]{0}', space=vmem, size = 0x800, scoped, tag = 'input window, operand 12, single buffered']
    #allocation8 [shape = 'u8[1536]{0}', space=vmem, size = 0x800, scoped, tag = 'input window, operand 13, single buffered']
    #allocation9 [shape = 's32[1]{0}', space=sflag, size = 0x4, scoped, tag = 'scoped memory for forward.1']
    #allocation10 [shape = 'u8[1536]{0}', space=vmem, size = 0x800, scoped, tag = 'input window, operand 14, single buffered']
    #allocation11 [shape = 'u8[512]{0}', space=vmem, size = 0x400, scoped, tag = 'input window, operand 16, single buffered']
    #allocation12 [shape = 's32[1]{0}', space=sflag, size = 0x4, scoped, tag = 'scoped memory for forward.1']
    %26 = vsyncpa [#allocation4], 0
    %27 = vsyncpa [#allocation6], 0
    %28 = vsyncpa [#allocation9], 0
    %29 = vsyncpa [#allocation12], 0
    loop: start=0, step=1, limit=4
    $region2: #{forward.1} parent=1 // loop_pre_header
      _
    $region3: #{forward.1} parent=1 // loop_header
      %s31 = sphi 0, %s35
      %p32 = scmp.ge.s32.totalorder %s31, 4
      %s41 = sphi 0, %s43
      %s44 = sphi 0, %s41
      %s45 = sphi 0, %s44
      %s61 = sphi 0, %s45
      %s65 = sphi 0, %s65
      %s67 = sphi 0, %s65
      %s68 = sphi 0, %s67
      %s82 = sphi 0, %s68
      %s86 = sphi 0, %s86
      %s88 = sphi 0, %s86
      %s89 = sphi 0, %s88
      %s103 = sphi 0, %s89
      %s107 = sphi 0, %s107
      %s109 = sphi 0, %s107
      %s110 = sphi 0, %s109
      %s124 = sphi 0, %s110
      %s128 = sphi 0, %s128
      %s130 = sphi 0, %s128
      %s131 = sphi 0, %s130
      %s145 = sphi 0, %s131
      %s149 = sphi 0, %s149
      %s151 = sphi 0, %s149
      %s152 = sphi 0, %s151
      %s166 = sphi 0, %s152
      %s170 = sphi 0, %s170
      %s172 = sphi 0, %s170
      %s173 = sphi 0, %s172
      %s187 = sphi 0, %s173
      %s191 = sphi 0, %s191
      %s193 = sphi 0, %s191
      %s194 = sphi 0, %s193
      %s208 = sphi 0, %s194
      %s212 = sphi 0, %s212
      %s214 = sphi 0, %s212
      %s215 = sphi 0, %s214
      %s229 = sphi 0, %s215
      %s233 = sphi 0, %s233
      %s235 = sphi 0, %s233
      %s236 = sphi 0, %s235
      %s250 = sphi 0, %s236
      %s254 = sphi 0, %s254
      %s256 = sphi 0, %s254
      %s257 = sphi 0, %s256
      %s271 = sphi 0, %s257
      %s275 = sphi 0, %s275
      %s277 = sphi 0, %s275
      %s278 = sphi 0, %s277
      %s292 = sphi 0, %s278
      %s296 = sphi 0, %s296
      %s298 = sphi 0, %s296
      %s299 = sphi 0, %s298
      %s313 = sphi 0, %s299
      %s317 = sphi 0, %s317
      %s319 = sphi 0, %s317
      %s320 = sphi 0, %s319
      %s334 = sphi 0, %s320
      %s338 = sphi 0, %s338
      %s340 = sphi 0, %s338
      %s341 = sphi 0, %s340
      %s355 = sphi 0, %s341
      %s359 = sphi 0, %s359
      %s361 = sphi 0, %s359
      %s362 = sphi 0, %s361
      %s376 = sphi 0, %s362
      %s380 = sphi 0, %s380
      %s382 = sphi 0, %s380
      %s383 = sphi 0, %s382
      %s397 = sphi 0, %s383
      %s403 = sphi 0, %s405
      %s406 = sphi 0, %s403
      %s407 = sphi 0, %s406
      %s423 = sphi 0, %s407
      %s429 = sphi 0, %s431
      %s432 = sphi 0, %s429
      %s433 = sphi 0, %s432
      %s449 = sphi 0, %s433
      %s455 = sphi 0, %s457
      %s458 = sphi 0, %s455
      %s459 = sphi 0, %s458
      %s475 = sphi 0, %s459
      %s481 = sphi 0, %s483
      %s484 = sphi 0, %s481
      %s485 = sphi 0, %s484
      %s501 = sphi 0, %s485
    $region4: #{forward.1} parent=1 // loop_header_branch
      %34 = sbr.rel (%p32) target = $region8
    $region5: #{forward.1} parent=1 // loop_body
      %s36 = ssub.s32 %s31, 1
      %s37 = ssub.s32 %s31, 2
      %s38 = sadd.s32 %s31, 1
      %s39 = ssub.s32 %s31, %s38
      %p40 = scmp.eq.s32.totalorder %s39, 0
      %s42 = sadd.s32 %s41, 1
      %s43 = scalar_select %p40, %s41, %s42
      %p46 = pneg %p40
      %p47 = scmp.eq.s32.totalorder %s31, 1
      %p48 = por %p46, %p47
      %p49 = scmp.ne.s32.totalorder %s41, %s44
      %p50 = scmp.eq.s32.totalorder %s31, 0
      %p51 = por %p49, %p50
      %p52 = scmp.ne.s32.totalorder %s41, %s44
      %p53 = scmp.eq.s32.totalorder %s36, 1
      %p54 = por %p52, %p53
      %p55 = scmp.ne.s32.totalorder %s44, %s45
      %p56 = scmp.eq.s32.totalorder %s36, 0
      %p57 = por %p55, %p56
      %p58 = scmp.ne.s32.totalorder %s44, %s45
      %p59 = scmp.eq.s32.totalorder %s37, 1
      %p60 = por %p58, %p59
      %p62 = scmp.ne.s32.totalorder %s45, %s61
      %p63 = scmp.eq.s32.totalorder %s37, 0
      %p64 = por %p62, %p63
      %s66 = sadd.s32 %s65, 1
      %p69 = scmp.eq.s32.totalorder %s31, 1
      %p70 = scmp.ne.s32.totalorder %s65, %s67
      %p71 = scmp.eq.s32.totalorder %s31, 0
      %p72 = por %p70, %p71
      %p73 = scmp.ne.s32.totalorder %s65, %s67
      %p74 = scmp.eq.s32.totalorder %s36, 1
      %p75 = por %p73, %p74
      %p76 = scmp.ne.s32.totalorder %s67, %s68
      %p77 = scmp.eq.s32.totalorder %s36, 0
      %p78 = por %p76, %p77
      %p79 = scmp.ne.s32.totalorder %s67, %s68
      %p80 = scmp.eq.s32.totalorder %s37, 1
      %p81 = por %p79, %p80
      %p83 = scmp.ne.s32.totalorder %s68, %s82
      %p84 = scmp.eq.s32.totalorder %s37, 0
      %p85 = por %p83, %p84
      %s87 = sadd.s32 %s86, 1
      %p90 = scmp.eq.s32.totalorder %s31, 1
      %p91 = scmp.ne.s32.totalorder %s86, %s88
      %p92 = scmp.eq.s32.totalorder %s31, 0
      %p93 = por %p91, %p92
      %p94 = scmp.ne.s32.totalorder %s86, %s88
      %p95 = scmp.eq.s32.totalorder %s36, 1
      %p96 = por %p94, %p95
      %p97 = scmp.ne.s32.totalorder %s88, %s89
      %p98 = scmp.eq.s32.totalorder %s36, 0
      %p99 = por %p97, %p98
      %p100 = scmp.ne.s32.totalorder %s88, %s89
      %p101 = scmp.eq.s32.totalorder %s37, 1
      %p102 = por %p100, %p101
      %p104 = scmp.ne.s32.totalorder %s89, %s103
      %p105 = scmp.eq.s32.totalorder %s37, 0
      %p106 = por %p104, %p105
      %s108 = sadd.s32 %s107, 1
      %p111 = scmp.eq.s32.totalorder %s31, 1
      %p112 = scmp.ne.s32.totalorder %s107, %s109
      %p113 = scmp.eq.s32.totalorder %s31, 0
      %p114 = por %p112, %p113
      %p115 = scmp.ne.s32.totalorder %s107, %s109
      %p116 = scmp.eq.s32.totalorder %s36, 1
      %p117 = por %p115, %p116
      %p118 = scmp.ne.s32.totalorder %s109, %s110
      %p119 = scmp.eq.s32.totalorder %s36, 0
      %p120 = por %p118, %p119
      %p121 = scmp.ne.s32.totalorder %s109, %s110
      %p122 = scmp.eq.s32.totalorder %s37, 1
      %p123 = por %p121, %p122
      %p125 = scmp.ne.s32.totalorder %s110, %s124
      %p126 = scmp.eq.s32.totalorder %s37, 0
      %p127 = por %p125, %p126
      %s129 = sadd.s32 %s128, 1
      %p132 = scmp.eq.s32.totalorder %s31, 1
      %p133 = scmp.ne.s32.totalorder %s128, %s130
      %p134 = scmp.eq.s32.totalorder %s31, 0
      %p135 = por %p133, %p134
      %p136 = scmp.ne.s32.totalorder %s128, %s130
      %p137 = scmp.eq.s32.totalorder %s36, 1
      %p138 = por %p136, %p137
      %p139 = scmp.ne.s32.totalorder %s130, %s131
      %p140 = scmp.eq.s32.totalorder %s36, 0
      %p141 = por %p139, %p140
      %p142 = scmp.ne.s32.totalorder %s130, %s131
      %p143 = scmp.eq.s32.totalorder %s37, 1
      %p144 = por %p142, %p143
      %p146 = scmp.ne.s32.totalorder %s131, %s145
      %p147 = scmp.eq.s32.totalorder %s37, 0
      %p148 = por %p146, %p147
      %s150 = sadd.s32 %s149, 1
      %p153 = scmp.eq.s32.totalorder %s31, 1
      %p154 = scmp.ne.s32.totalorder %s149, %s151
      %p155 = scmp.eq.s32.totalorder %s31, 0
      %p156 = por %p154, %p155
      %p157 = scmp.ne.s32.totalorder %s149, %s151
      %p158 = scmp.eq.s32.totalorder %s36, 1
      %p159 = por %p157, %p158
      %p160 = scmp.ne.s32.totalorder %s151, %s152
      %p161 = scmp.eq.s32.totalorder %s36, 0
      %p162 = por %p160, %p161
      %p163 = scmp.ne.s32.totalorder %s151, %s152
      %p164 = scmp.eq.s32.totalorder %s37, 1
      %p165 = por %p163, %p164
      %p167 = scmp.ne.s32.totalorder %s152, %s166
      %p168 = scmp.eq.s32.totalorder %s37, 0
      %p169 = por %p167, %p168
      %s171 = sadd.s32 %s170, 1
      %p174 = scmp.eq.s32.totalorder %s31, 1
      %p175 = scmp.ne.s32.totalorder %s170, %s172
      %p176 = scmp.eq.s32.totalorder %s31, 0
      %p177 = por %p175, %p176
      %p178 = scmp.ne.s32.totalorder %s170, %s172
      %p179 = scmp.eq.s32.totalorder %s36, 1
      %p180 = por %p178, %p179
      %p181 = scmp.ne.s32.totalorder %s172, %s173
      %p182 = scmp.eq.s32.totalorder %s36, 0
      %p183 = por %p181, %p182
      %p184 = scmp.ne.s32.totalorder %s172, %s173
      %p185 = scmp.eq.s32.totalorder %s37, 1
      %p186 = por %p184, %p185
      %p188 = scmp.ne.s32.totalorder %s173, %s187
      %p189 = scmp.eq.s32.totalorder %s37, 0
      %p190 = por %p188, %p189
      %s192 = sadd.s32 %s191, 1
      %p195 = scmp.eq.s32.totalorder %s31, 1
      %p196 = scmp.ne.s32.totalorder %s191, %s193
      %p197 = scmp.eq.s32.totalorder %s31, 0
      %p198 = por %p196, %p197
      %p199 = scmp.ne.s32.totalorder %s191, %s193
      %p200 = scmp.eq.s32.totalorder %s36, 1
      %p201 = por %p199, %p200
      %p202 = scmp.ne.s32.totalorder %s193, %s194
      %p203 = scmp.eq.s32.totalorder %s36, 0
      %p204 = por %p202, %p203
      %p205 = scmp.ne.s32.totalorder %s193, %s194
      %p206 = scmp.eq.s32.totalorder %s37, 1
      %p207 = por %p205, %p206
      %p209 = scmp.ne.s32.totalorder %s194, %s208
      %p210 = scmp.eq.s32.totalorder %s37, 0
      %p211 = por %p209, %p210
      %s213 = sadd.s32 %s212, 1
      %p216 = scmp.eq.s32.totalorder %s31, 1
      %p217 = scmp.ne.s32.totalorder %s212, %s214
      %p218 = scmp.eq.s32.totalorder %s31, 0
      %p219 = por %p217, %p218
      %p220 = scmp.ne.s32.totalorder %s212, %s214
      %p221 = scmp.eq.s32.totalorder %s36, 1
      %p222 = por %p220, %p221
      %p223 = scmp.ne.s32.totalorder %s214, %s215
      %p224 = scmp.eq.s32.totalorder %s36, 0
      %p225 = por %p223, %p224
      %p226 = scmp.ne.s32.totalorder %s214, %s215
      %p227 = scmp.eq.s32.totalorder %s37, 1
      %p228 = por %p226, %p227
      %p230 = scmp.ne.s32.totalorder %s215, %s229
      %p231 = scmp.eq.s32.totalorder %s37, 0
      %p232 = por %p230, %p231
      %s234 = sadd.s32 %s233, 1
      %p237 = scmp.eq.s32.totalorder %s31, 1
      %p238 = scmp.ne.s32.totalorder %s233, %s235
      %p239 = scmp.eq.s32.totalorder %s31, 0
      %p240 = por %p238, %p239
      %p241 = scmp.ne.s32.totalorder %s233, %s235
      %p242 = scmp.eq.s32.totalorder %s36, 1
      %p243 = por %p241, %p242
      %p244 = scmp.ne.s32.totalorder %s235, %s236
      %p245 = scmp.eq.s32.totalorder %s36, 0
      %p246 = por %p244, %p245
      %p247 = scmp.ne.s32.totalorder %s235, %s236
      %p248 = scmp.eq.s32.totalorder %s37, 1
      %p249 = por %p247, %p248
      %p251 = scmp.ne.s32.totalorder %s236, %s250
      %p252 = scmp.eq.s32.totalorder %s37, 0
      %p253 = por %p251, %p252
      %s255 = sadd.s32 %s254, 1
      %p258 = scmp.eq.s32.totalorder %s31, 1
      %p259 = scmp.ne.s32.totalorder %s254, %s256
      %p260 = scmp.eq.s32.totalorder %s31, 0
      %p261 = por %p259, %p260
      %p262 = scmp.ne.s32.totalorder %s254, %s256
      %p263 = scmp.eq.s32.totalorder %s36, 1
      %p264 = por %p262, %p263
      %p265 = scmp.ne.s32.totalorder %s256, %s257
      %p266 = scmp.eq.s32.totalorder %s36, 0
      %p267 = por %p265, %p266
      %p268 = scmp.ne.s32.totalorder %s256, %s257
      %p269 = scmp.eq.s32.totalorder %s37, 1
      %p270 = por %p268, %p269
      %p272 = scmp.ne.s32.totalorder %s257, %s271
      %p273 = scmp.eq.s32.totalorder %s37, 0
      %p274 = por %p272, %p273
      %s276 = sadd.s32 %s275, 1
      %p279 = scmp.eq.s32.totalorder %s31, 1
      %p280 = scmp.ne.s32.totalorder %s275, %s277
      %p281 = scmp.eq.s32.totalorder %s31, 0
      %p282 = por %p280, %p281
      %p283 = scmp.ne.s32.totalorder %s275, %s277
      %p284 = scmp.eq.s32.totalorder %s36, 1
      %p285 = por %p283, %p284
      %p286 = scmp.ne.s32.totalorder %s277, %s278
      %p287 = scmp.eq.s32.totalorder %s36, 0
      %p288 = por %p286, %p287
      %p289 = scmp.ne.s32.totalorder %s277, %s278
      %p290 = scmp.eq.s32.totalorder %s37, 1
      %p291 = por %p289, %p290
      %p293 = scmp.ne.s32.totalorder %s278, %s292
      %p294 = scmp.eq.s32.totalorder %s37, 0
      %p295 = por %p293, %p294
      %s297 = sadd.s32 %s296, 1
      %p300 = scmp.eq.s32.totalorder %s31, 1
      %p301 = scmp.ne.s32.totalorder %s296, %s298
      %p302 = scmp.eq.s32.totalorder %s31, 0
      %p303 = por %p301, %p302
      %p304 = scmp.ne.s32.totalorder %s296, %s298
      %p305 = scmp.eq.s32.totalorder %s36, 1
      %p306 = por %p304, %p305
      %p307 = scmp.ne.s32.totalorder %s298, %s299
      %p308 = scmp.eq.s32.totalorder %s36, 0
      %p309 = por %p307, %p308
      %p310 = scmp.ne.s32.totalorder %s298, %s299
      %p311 = scmp.eq.s32.totalorder %s37, 1
      %p312 = por %p310, %p311
      %p314 = scmp.ne.s32.totalorder %s299, %s313
      %p315 = scmp.eq.s32.totalorder %s37, 0
      %p316 = por %p314, %p315
      %s318 = sadd.s32 %s317, 1
      %p321 = scmp.eq.s32.totalorder %s31, 1
      %p322 = scmp.ne.s32.totalorder %s317, %s319
      %p323 = scmp.eq.s32.totalorder %s31, 0
      %p324 = por %p322, %p323
      %p325 = scmp.ne.s32.totalorder %s317, %s319
      %p326 = scmp.eq.s32.totalorder %s36, 1
      %p327 = por %p325, %p326
      %p328 = scmp.ne.s32.totalorder %s319, %s320
      %p329 = scmp.eq.s32.totalorder %s36, 0
      %p330 = por %p328, %p329
      %p331 = scmp.ne.s32.totalorder %s319, %s320
      %p332 = scmp.eq.s32.totalorder %s37, 1
      %p333 = por %p331, %p332
      %p335 = scmp.ne.s32.totalorder %s320, %s334
      %p336 = scmp.eq.s32.totalorder %s37, 0
      %p337 = por %p335, %p336
      %s339 = sadd.s32 %s338, 1
      %p342 = scmp.eq.s32.totalorder %s31, 1
      %p343 = scmp.ne.s32.totalorder %s338, %s340
      %p344 = scmp.eq.s32.totalorder %s31, 0
      %p345 = por %p343, %p344
      %p346 = scmp.ne.s32.totalorder %s338, %s340
      %p347 = scmp.eq.s32.totalorder %s36, 1
      %p348 = por %p346, %p347
      %p349 = scmp.ne.s32.totalorder %s340, %s341
      %p350 = scmp.eq.s32.totalorder %s36, 0
      %p351 = por %p349, %p350
      %p352 = scmp.ne.s32.totalorder %s340, %s341
      %p353 = scmp.eq.s32.totalorder %s37, 1
      %p354 = por %p352, %p353
      %p356 = scmp.ne.s32.totalorder %s341, %s355
      %p357 = scmp.eq.s32.totalorder %s37, 0
      %p358 = por %p356, %p357
      %s360 = sadd.s32 %s359, 1
      %p363 = scmp.eq.s32.totalorder %s31, 1
      %p364 = scmp.ne.s32.totalorder %s359, %s361
      %p365 = scmp.eq.s32.totalorder %s31, 0
      %p366 = por %p364, %p365
      %p367 = scmp.ne.s32.totalorder %s359, %s361
      %p368 = scmp.eq.s32.totalorder %s36, 1
      %p369 = por %p367, %p368
      %p370 = scmp.ne.s32.totalorder %s361, %s362
      %p371 = scmp.eq.s32.totalorder %s36, 0
      %p372 = por %p370, %p371
      %p373 = scmp.ne.s32.totalorder %s361, %s362
      %p374 = scmp.eq.s32.totalorder %s37, 1
      %p375 = por %p373, %p374
      %p377 = scmp.ne.s32.totalorder %s362, %s376
      %p378 = scmp.eq.s32.totalorder %s37, 0
      %p379 = por %p377, %p378
      %s381 = sadd.s32 %s380, 1
      %p384 = scmp.eq.s32.totalorder %s31, 1
      %p385 = scmp.ne.s32.totalorder %s380, %s382
      %p386 = scmp.eq.s32.totalorder %s31, 0
      %p387 = por %p385, %p386
      %p388 = scmp.ne.s32.totalorder %s380, %s382
      %p389 = scmp.eq.s32.totalorder %s36, 1
      %p390 = por %p388, %p389
      %p391 = scmp.ne.s32.totalorder %s382, %s383
      %p392 = scmp.eq.s32.totalorder %s36, 0
      %p393 = por %p391, %p392
      %p394 = scmp.ne.s32.totalorder %s382, %s383
      %p395 = scmp.eq.s32.totalorder %s37, 1
      %p396 = por %p394, %p395
      %p398 = scmp.ne.s32.totalorder %s383, %s397
      %p399 = scmp.eq.s32.totalorder %s37, 0
      %p400 = por %p398, %p399
      %s401 = ssub.s32 %s31, %s38
      %p402 = scmp.eq.s32.totalorder %s401, 0
      %s404 = sadd.s32 %s403, 1
      %s405 = scalar_select %p402, %s403, %s404
      %p408 = pneg %p402
      %p409 = scmp.eq.s32.totalorder %s31, 1
      %p410 = por %p408, %p409
      %p411 = scmp.ne.s32.totalorder %s403, %s406
      %p412 = scmp.eq.s32.totalorder %s31, 0
      %p413 = por %p411, %p412
      %p414 = scmp.ne.s32.totalorder %s403, %s406
      %p415 = scmp.eq.s32.totalorder %s36, 1
      %p416 = por %p414, %p415
      %p417 = scmp.ne.s32.totalorder %s406, %s407
      %p418 = scmp.eq.s32.totalorder %s36, 0
      %p419 = por %p417, %p418
      %p420 = scmp.ne.s32.totalorder %s406, %s407
      %p421 = scmp.eq.s32.totalorder %s37, 1
      %p422 = por %p420, %p421
      %p424 = scmp.ne.s32.totalorder %s407, %s423
      %p425 = scmp.eq.s32.totalorder %s37, 0
      %p426 = por %p424, %p425
      %s427 = ssub.s32 %s31, %s38
      %p428 = scmp.eq.s32.totalorder %s427, 0
      %s430 = sadd.s32 %s429, 1
      %s431 = scalar_select %p428, %s429, %s430
      %p434 = pneg %p428
      %p435 = scmp.eq.s32.totalorder %s31, 1
      %p436 = por %p434, %p435
      %p437 = scmp.ne.s32.totalorder %s429, %s432
      %p438 = scmp.eq.s32.totalorder %s31, 0
      %p439 = por %p437, %p438
      %p440 = scmp.ne.s32.totalorder %s429, %s432
      %p441 = scmp.eq.s32.totalorder %s36, 1
      %p442 = por %p440, %p441
      %p443 = scmp.ne.s32.totalorder %s432, %s433
      %p444 = scmp.eq.s32.totalorder %s36, 0
      %p445 = por %p443, %p444
      %p446 = scmp.ne.s32.totalorder %s432, %s433
      %p447 = scmp.eq.s32.totalorder %s37, 1
      %p448 = por %p446, %p447
      %p450 = scmp.ne.s32.totalorder %s433, %s449
      %p451 = scmp.eq.s32.totalorder %s37, 0
      %p452 = por %p450, %p451
      %s453 = ssub.s32 %s31, %s38
      %p454 = scmp.eq.s32.totalorder %s453, 0
      %s456 = sadd.s32 %s455, 1
      %s457 = scalar_select %p454, %s455, %s456
      %p460 = pneg %p454
      %p461 = scmp.eq.s32.totalorder %s31, 1
      %p462 = por %p460, %p461
      %p463 = scmp.ne.s32.totalorder %s455, %s458
      %p464 = scmp.eq.s32.totalorder %s31, 0
      %p465 = por %p463, %p464
      %p466 = scmp.ne.s32.totalorder %s455, %s458
      %p467 = scmp.eq.s32.totalorder %s36, 1
      %p468 = por %p466, %p467
      %p469 = scmp.ne.s32.totalorder %s458, %s459
      %p470 = scmp.eq.s32.totalorder %s36, 0
      %p471 = por %p469, %p470
      %p472 = scmp.ne.s32.totalorder %s458, %s459
      %p473 = scmp.eq.s32.totalorder %s37, 1
      %p474 = por %p472, %p473
      %p476 = scmp.ne.s32.totalorder %s459, %s475
      %p477 = scmp.eq.s32.totalorder %s37, 0
      %p478 = por %p476, %p477
      %s479 = ssub.s32 %s31, %s38
      %p480 = scmp.eq.s32.totalorder %s479, 0
      %s482 = sadd.s32 %s481, 1
      %s483 = scalar_select %p480, %s481, %s482
      %p486 = pneg %p480
      %p487 = scmp.eq.s32.totalorder %s31, 1
      %p488 = por %p486, %p487
      %p489 = scmp.ne.s32.totalorder %s481, %s484
      %p490 = scmp.eq.s32.totalorder %s31, 0
      %p491 = por %p489, %p490
      %p492 = scmp.ne.s32.totalorder %s481, %s484
      %p493 = scmp.eq.s32.totalorder %s36, 1
      %p494 = por %p492, %p493
      %p495 = scmp.ne.s32.totalorder %s484, %s485
      %p496 = scmp.eq.s32.totalorder %s36, 0
      %p497 = por %p495, %p496
      %p498 = scmp.ne.s32.totalorder %s484, %s485
      %p499 = scmp.eq.s32.totalorder %s37, 1
      %p500 = por %p498, %p499
      %p502 = scmp.ne.s32.totalorder %s485, %s501
      %p503 = scmp.eq.s32.totalorder %s37, 0
      %p504 = por %p502, %p503
      %p505 = scmp.le.s32.totalorder 1, %s31
      %p506 = scmp.lt.s32.totalorder %s31, 3
      %p507 = pnand %p505, %p506
      %p508 = pneg %p507
      // Predicated region
      $region9: #{forward.1} parent=5 // pred_check
        _
      $region10: #{forward.1} parent=5 // pred_check_branch
        %510 = sbr.rel (%p507) target = $region12
      $region11: #{forward.1} parent=5 // pred_region
        %s511 = ssub.s32 %s31, 1
        // Predicated region
        $region13: #{forward.1} parent=11 // pred_check
          %p512 = pneg %p78
        $region14: #{forward.1} parent=11 // pred_check_branch
          %514 = sbr.rel (%p512) target = $region16
        $region15: #{forward.1} parent=11 // pred_region
          _
        $region16: #{forward.1} parent=11 // pred_fallthru
          _
        // Predicated region
        $region17: #{forward.1} parent=11 // pred_check
          %p515 = pneg %p99
        $region18: #{forward.1} parent=11 // pred_check_branch
          %517 = sbr.rel (%p515) target = $region20
        $region19: #{forward.1} parent=11 // pred_region
          _
        $region20: #{forward.1} parent=11 // pred_fallthru
          _
        // Predicated region
        $region21: #{forward.1} parent=11 // pred_check
          %p518 = pneg %p120
        $region22: #{forward.1} parent=11 // pred_check_branch
          %520 = sbr.rel (%p518) target = $region24
        $region23: #{forward.1} parent=11 // pred_region
          _
        $region24: #{forward.1} parent=11 // pred_fallthru
          _
        // Predicated region
        $region25: #{forward.1} parent=11 // pred_check
          %p521 = pneg %p141
        $region26: #{forward.1} parent=11 // pred_check_branch
          %523 = sbr.rel (%p521) target = $region28
        $region27: #{forward.1} parent=11 // pred_region
          _
        $region28: #{forward.1} parent=11 // pred_fallthru
          _
        // Predicated region
        $region29: #{forward.1} parent=11 // pred_check
          %p524 = pneg %p162
        $region30: #{forward.1} parent=11 // pred_check_branch
          %526 = sbr.rel (%p524) target = $region32
        $region31: #{forward.1} parent=11 // pred_region
          %s528 = ssub.s32 768, 768
          %529 = vsyncadd [#allocation4], %s528
          %s530 = sshll.u32 [#allocation3], 4
          %s531 = int_to_ptr.vmem [resolvable:$true] %s530
          %536 = dma.hbm_to_vmem [thread:$0]  %s5, 768, %s531, [#allocation4], 64, 64, 4
        $region32: #{forward.1} parent=11 // pred_fallthru
          _
        // Predicated region
        $region33: #{forward.1} parent=11 // pred_check
          %p537 = pneg %p183
        $region34: #{forward.1} parent=11 // pred_check_branch
          %539 = sbr.rel (%p537) target = $region36
        $region35: #{forward.1} parent=11 // pred_region
          _
        $region36: #{forward.1} parent=11 // pred_fallthru
          _
        // Predicated region
        $region37: #{forward.1} parent=11 // pred_check
          %p540 = pneg %p204
        $region38: #{forward.1} parent=11 // pred_check_branch
          %542 = sbr.rel (%p540) target = $region40
        $region39: #{forward.1} parent=11 // pred_region
          %s544 = ssub.s32 768, 768
          %545 = vsyncadd [#allocation6], %s544
          %s546 = sshll.u32 [#allocation5], 4
          %s547 = int_to_ptr.vmem [resolvable:$true] %s546
          %552 = dma.hbm_to_vmem [thread:$0]  %s7, 768, %s547, [#allocation6], 64, 64, 4
        $region40: #{forward.1} parent=11 // pred_fallthru
          _
        // Predicated region
        $region41: #{forward.1} parent=11 // pred_check
          %p553 = pneg %p225
        $region42: #{forward.1} parent=11 // pred_check_branch
          %555 = sbr.rel (%p553) target = $region44
        $region43: #{forward.1} parent=11 // pred_region
          _
        $region44: #{forward.1} parent=11 // pred_fallthru
          _
        // Predicated region
        $region45: #{forward.1} parent=11 // pred_check
          %p556 = pneg %p246
        $region46: #{forward.1} parent=11 // pred_check_branch
          %558 = sbr.rel (%p556) target = $region48
        $region47: #{forward.1} parent=11 // pred_region
          _
        $region48: #{forward.1} parent=11 // pred_fallthru
          _
        // Predicated region
        $region49: #{forward.1} parent=11 // pred_check
          %p559 = pneg %p267
        $region50: #{forward.1} parent=11 // pred_check_branch
          %561 = sbr.rel (%p559) target = $region52
        $region51: #{forward.1} parent=11 // pred_region
          _
        $region52: #{forward.1} parent=11 // pred_fallthru
          _
        // Predicated region
        $region53: #{forward.1} parent=11 // pred_check
          %p562 = pneg %p288
        $region54: #{forward.1} parent=11 // pred_check_branch
          %564 = sbr.rel (%p562) target = $region56
        $region55: #{forward.1} parent=11 // pred_region
          _
        $region56: #{forward.1} parent=11 // pred_fallthru
          _
        // Predicated region
        $region57: #{forward.1} parent=11 // pred_check
          %p565 = pneg %p309
        $region58: #{forward.1} parent=11 // pred_check_branch
          %567 = sbr.rel (%p565) target = $region60
        $region59: #{forward.1} parent=11 // pred_region
          %s569 = ssub.s32 48, 48
          %570 = vsyncadd [#allocation6], %s569
          %s571 = sshll.u32 [#allocation7], 4
          %s572 = int_to_ptr.vmem [resolvable:$true] %s571
          %577 = dma.hbm_to_vmem [thread:$0]  %s12, 48, %s572, [#allocation6], 16, 16, 1
        $region60: #{forward.1} parent=11 // pred_fallthru
          _
        // Predicated region
        $region61: #{forward.1} parent=11 // pred_check
          %p578 = pneg %p330
        $region62: #{forward.1} parent=11 // pred_check_branch
          %580 = sbr.rel (%p578) target = $region64
        $region63: #{forward.1} parent=11 // pred_region
          %s582 = ssub.s32 48, 48
          %583 = vsyncadd [#allocation9], %s582
          %s584 = sshll.u32 [#allocation8], 4
          %s585 = int_to_ptr.vmem [resolvable:$true] %s584
          %590 = dma.hbm_to_vmem [thread:$0]  %s13, 48, %s585, [#allocation9], 16, 16, 1
        $region64: #{forward.1} parent=11 // pred_fallthru
          _
        // Predicated region
        $region65: #{forward.1} parent=11 // pred_check
          %p591 = pneg %p351
        $region66: #{forward.1} parent=11 // pred_check_branch
          %593 = sbr.rel (%p591) target = $region68
        $region67: #{forward.1} parent=11 // pred_region
          %s595 = ssub.s32 48, 48
          %596 = vsyncadd [#allocation9], %s595
          %s597 = sshll.u32 [#allocation10], 4
          %s598 = int_to_ptr.vmem [resolvable:$true] %s597
          %603 = dma.hbm_to_vmem [thread:$0]  %s14, 48, %s598, [#allocation9], 16, 16, 1
        $region68: #{forward.1} parent=11 // pred_fallthru
          _
        // Predicated region
        $region69: #{forward.1} parent=11 // pred_check
          %p604 = pneg %p372
        $region70: #{forward.1} parent=11 // pred_check_branch
          %606 = sbr.rel (%p604) target = $region72
        $region71: #{forward.1} parent=11 // pred_region
          _
        $region72: #{forward.1} parent=11 // pred_fallthru
          _
        // Predicated region
        $region73: #{forward.1} parent=11 // pred_check
          %p607 = pneg %p393
        $region74: #{forward.1} parent=11 // pred_check_branch
          %609 = sbr.rel (%p607) target = $region76
        $region75: #{forward.1} parent=11 // pred_region
          %s611 = ssub.s32 16, 16
          %612 = vsyncadd [#allocation12], %s611
          %s614 = sshll.u32 [#allocation11], 4
          %s615 = int_to_ptr.vmem [resolvable:$true] %s614
          %617 = dma.hbm_to_vmem [thread:$0]  %s16, 16, %s615, [#allocation12]
        $region76: #{forward.1} parent=11 // pred_fallthru
          _
      $region12: #{forward.1} parent=5 // pred_fallthru
        _
      %p618 = scmp.lt.s32.totalorder %s31, 2
      // Predicated region
      $region77: #{forward.1} parent=5 // pred_check
        %p619 = pneg %p618
      $region78: #{forward.1} parent=5 // pred_check_branch
        %621 = sbr.rel (%p619) target = $region80
      $region79: #{forward.1} parent=5 // pred_region
        // Predicated region
        $region81: #{forward.1} parent=79 // pred_check
          %p622 = pneg %p51
        $region82: #{forward.1} parent=79 // pred_check_branch
          %624 = sbr.rel (%p622) target = $region84
        $region83: #{forward.1} parent=79 // pred_region
          %p625 = scmp.lt.s32.totalorder %s31, 1
          %s626 = scalar_select %p625, %s31, 1
          %s627 = smul.addr %s626, 8
          %s628 = scalar_lea.vmem %s0, %s627
        $region84: #{forward.1} parent=79 // pred_fallthru
          _
      $region80: #{forward.1} parent=5 // pred_fallthru
        _
      %p629 = scmp.le.s32.totalorder 1, %s31
      %p630 = scmp.lt.s32.totalorder %s31, 3
      %p631 = pnand %p629, %p630
      %p632 = pneg %p631
      // Predicated region
      $region85: #{forward.1} parent=5 // pred_check
        _
      $region86: #{forward.1} parent=5 // pred_check_branch
        %634 = sbr.rel (%p631) target = $region88
      $region87: #{forward.1} parent=5 // pred_region
        %s635 = ssub.s32 %s31, 1
        // Predicated region
        $region89: #{forward.1} parent=87 // pred_check
          %p636 = pneg %p162
        $region90: #{forward.1} parent=87 // pred_check_branch
          %638 = sbr.rel (%p636) target = $region92
        $region91: #{forward.1} parent=87 // pred_region
          %639 = dma.done [#allocation4], 768
        $region92: #{forward.1} parent=87 // pred_fallthru
          _
        // Predicated region
        $region93: #{forward.1} parent=87 // pred_check
          %p640 = pneg %p204
        $region94: #{forward.1} parent=87 // pred_check_branch
          %642 = sbr.rel (%p640) target = $region96
        $region95: #{forward.1} parent=87 // pred_region
          %643 = dma.done [#allocation6], 768
        $region96: #{forward.1} parent=87 // pred_fallthru
          _
        // Predicated region
        $region97: #{forward.1} parent=87 // pred_check
          %p644 = pneg %p309
        $region98: #{forward.1} parent=87 // pred_check_branch
          %646 = sbr.rel (%p644) target = $region100
        $region99: #{forward.1} parent=87 // pred_region
          %647 = dma.done [#allocation6], 48
        $region100: #{forward.1} parent=87 // pred_fallthru
          _
        // Predicated region
        $region101: #{forward.1} parent=87 // pred_check
          %p648 = pneg %p330
        $region102: #{forward.1} parent=87 // pred_check_branch
          %650 = sbr.rel (%p648) target = $region104
        $region103: #{forward.1} parent=87 // pred_region
          %651 = dma.done [#allocation9], 48
        $region104: #{forward.1} parent=87 // pred_fallthru
          _
        // Predicated region
        $region105: #{forward.1} parent=87 // pred_check
          %p652 = pneg %p351
        $region106: #{forward.1} parent=87 // pred_check_branch
          %654 = sbr.rel (%p652) target = $region108
        $region107: #{forward.1} parent=87 // pred_region
          %655 = dma.done [#allocation9], 48
        $region108: #{forward.1} parent=87 // pred_fallthru
          _
        // Predicated region
        $region109: #{forward.1} parent=87 // pred_check
          %p656 = pneg %p393
        $region110: #{forward.1} parent=87 // pred_check_branch
          %658 = sbr.rel (%p656) target = $region112
        $region111: #{forward.1} parent=87 // pred_region
          %659 = dma.done [#allocation12], 16
        $region112: #{forward.1} parent=87 // pred_fallthru
          _
        %p660 = scmp.lt.s32.totalorder %s36, 1
        %s661 = scalar_select %p660, %s36, 1
        %s662 = smul.addr %s661, 8
        %s663 = scalar_lea.vmem %s0, %s662
        %p664 = pneg %p57
        %p665 = pneg %p54
        %p666 = pneg %p78
        %p667 = pneg %p75
        %p668 = pneg %p99
        %p669 = pneg %p96
        %p670 = pneg %p120
        %p671 = pneg %p117
        %p672 = pneg %p141
        %p673 = pneg %p138
        %p674 = pneg %p162
        %p675 = pneg %p159
        %p676 = pneg %p183
        %p677 = pneg %p180
        %p678 = pneg %p204
        %p679 = pneg %p201
        %p680 = pneg %p225
        %p681 = pneg %p222
        %p682 = pneg %p246
        %p683 = pneg %p243
        %p684 = pneg %p267
        %p685 = pneg %p264
        %p686 = pneg %p288
        %p687 = pneg %p285
        %p688 = pneg %p309
        %p689 = pneg %p306
        %p690 = pneg %p330
        %p691 = pneg %p327
        %p692 = pneg %p351
        %p693 = pneg %p348
        %p694 = pneg %p372
        %p695 = pneg %p369
        %p696 = pneg %p393
        %p697 = pneg %p390
        %p698 = pneg %p419
        %p699 = pneg %p416
        %p700 = scmp.lt.s32.totalorder %s36, 1
        %s701 = scalar_select %p700, %s36, 1
        %s702 = smul.addr %s701, 8
        %s703 = scalar_lea.vmem %s17, %s702
        %p704 = pneg %p445
        %p705 = pneg %p442
        %p706 = scmp.lt.s32.totalorder %s36, 1
        %s707 = scalar_select %p706, %s36, 1
        %s708 = smul.addr %s707, 8
        %s709 = scalar_lea.vmem %s18, %s708
        %p710 = pneg %p471
        %p711 = pneg %p468
        %p712 = scmp.lt.s32.totalorder %s36, 1
        %s713 = scalar_select %p712, %s36, 1
        %s714 = smul.addr %s713, 8
        %s715 = scalar_lea.vmem %s19, %s714
        %p716 = pneg %p497
        %p717 = pneg %p494
        %p718 = scmp.lt.s32.totalorder %s36, 1
        %s719 = scalar_select %p718, %s36, 1
        %s720 = smul.addr %s719, 8
        %s721 = scalar_lea.vmem %s20, %s720
        %p722 = scmp.lt.s32.totalorder %s36, 1
        %s723 = scalar_select %p722, %s36, 1
        %s724 = smul.addr %s723, 8
        %s725 = scalar_lea.vmem %s0, %s724
        %p726 = scmp.lt.s32.totalorder %s36, 1
        %s727 = scalar_select %p726, %s36, 1
        %s728 = smul.addr %s727, 8
        %s729 = scalar_lea.vmem %s17, %s728
        %p730 = scmp.lt.s32.totalorder %s36, 1
        %s731 = scalar_select %p730, %s36, 1
        %s732 = smul.addr %s731, 8
        %s733 = scalar_lea.vmem %s18, %s732
        %p734 = scmp.lt.s32.totalorder %s36, 1
        %s735 = scalar_select %p734, %s36, 1
        %s736 = smul.addr %s735, 8
        %s737 = scalar_lea.vmem %s19, %s736
        %p738 = scmp.lt.s32.totalorder %s36, 1
        %s739 = scalar_select %p738, %s36, 1
        %s740 = smul.addr %s739, 8
        %s741 = scalar_lea.vmem %s20, %s740
        %v743 = vld [vmem:[%s725] sm:$0xff]
        %v744 = vld [vmem:[%s1] sm:$0xf]
        %v745 = vld [vmem:[%s1 + $0x4] sm:$0xf]
        %v746 = vld [vmem:[%s1 + $0x8] sm:$0xf]
        %v747 = vpack.c.bf16 %v743, %v743
        %v748 = vld [vmem:[%s2] sm:$0x1]
        %v750 = vlaneseq
        %v751 = vshrl.u32 %v750, 7
        %v752 = vsub.s32 0, %v751
        %v753 = vrot.slane %v748, %v752
        %v758 = vunpack.c.l.b16 %v744
        %v759 = vunpack.c.l.b16 %v745
        %v760 = vunpack.c.l.b16 %v746
        %v761 = vpack.c.b16 %v759, %v758
        %v762 = vpack.c.b16 %v760, %v760
        %vm764 = vcmask 195584
        %v766 = vsel %vm764, %v747, 0
        %vm768 = vcmask 1043456
        %v770 = vsel %vm768, %v762, 0
        %772 = vmatprep.subr.bf16.mxu0 0
        %773 = vmatpush1.bf16.msra.mxu0 %v761
        %774 = vmatprep.subr.bf16.mxu0 0
        %775 = vmatpush1.bf16.msra.mxu0 %v770
        %776 = vmatprep.subr.bf16.mxu0 0
        %777 = vmatpush1.bf16.msra.mxu0 0
        %778 = vmatprep.subr.bf16.mxu0 0
        %779 = vmatpush1.bf16.msra.mxu0 0
        %780 = vmatprep.subr.bf16.mxu0 0
        %781 = vmatpush1.bf16.msra.mxu0 0
        %782 = vmatprep.subr.bf16.mxu0 0
        %783 = vmatpush1.bf16.msra.mxu0 0
        %784 = vmatprep.subr.bf16.mxu0 0
        %785 = vmatpush1.bf16.msra.mxu0 0
        %786 = vmatprep.subr.bf16.mxu0 0
        %787 = vmatpush1.bf16.msra.mxu0 0
        %788 = vmatprep.subr.bf16.mxu0 0
        %789 = vmatpush1.bf16.msra.mxu0 0
        %790 = vmatprep.subr.bf16.mxu0 0
        %791 = vmatpush1.bf16.msra.mxu0 0
        %792 = vmatprep.subr.bf16.mxu0 0
        %793 = vmatpush1.bf16.msra.mxu0 0
        %794 = vmatprep.subr.bf16.mxu0 0
        %795 = vmatpush1.bf16.msra.mxu0 0
        %796 = vmatprep.subr.bf16.mxu0 0
        %797 = vmatpush1.bf16.msra.mxu0 0
        %798 = vmatprep.subr.bf16.mxu0 0
        %799 = vmatpush1.bf16.msra.mxu0 0
        %800 = vmatprep.subr.bf16.mxu0 0
        %801 = vmatpush1.bf16.msra.mxu0 0
        %802 = vmatprep.subr.bf16.mxu0 0
        %803 = vmatpush1.bf16.msra.mxu0 0
        %804 = vmatprep.mubr.bf16.mxu0 0
        %805 = vmatmul.mubr.bf16.gmra.mrb[0].mxu0 %v766
        %v806 = vpop.f32.mrb[0].mxu0
        %v807 = vadd.f32 %v753, %v806
        %v808 = vpop.f32.mrb[0].mxu0
        %v809 = vpop.f32.mrb[0].mxu0
        %v810 = vpop.f32.mrb[0].mxu0
        %811 = vdwg.mxu0
        %v812 = vmax.f32 %v807, 0.0
        %vm813 = vcmask 261120
        %814 = vst.msk [vmem:[#allocation2] sm:$0xff] %vm813, %v812
        %816 = vrot.lane.b32.xlu0 %v812, 96
        %v817 = vpop.permute.xlu0 %816
        %819 = vst.msk [vmem:[#allocation2 + $0x8] sm:$0xff] %vm813, %v817
        %820 = vrot.lane.b32.xlu0 %v812, 64
        %v821 = vpop.permute.xlu0 %820
        %823 = vst.msk [vmem:[#allocation2 + $0x10] sm:$0xff] %vm813, %v821
        %824 = vrot.lane.b32.xlu0 %v812, 32
        %v825 = vpop.permute.xlu0 %824
        %827 = vst.msk [vmem:[#allocation2 + $0x18] sm:$0xff] %vm813, %v825
        %v828 = vld [vmem:[#allocation2] sm:$0xff]
        %v829 = vld [vmem:[#allocation2 + $0x8] sm:$0xff]
        %v830 = vld [vmem:[#allocation2 + $0x10] sm:$0xff]
        %v831 = vld [vmem:[#allocation2 + $0x18] sm:$0xff]
        %v832 = vlaneseq
        %v833 = vshrl.u32 %v832, 7
        %v834 = vadd.s32 %v833, 8
        %v835 = vadd.s32 %v833, 16
        %v836 = vadd.s32 %v833, 24
        %vm837 = vcmp.lt.s32.totalorder %v833, 0
        %v838 = vsub.s32 0, %v833
        %v839 = vsel %vm837, %v838, %v833
        %v840 = vshrl.u32 %v839, 3
        %v841 = vand.u32 %v839, 7
        %v842 = vsub.s32 0, %v841
        %v843 = vsel %vm837, %v842, %v841
        %vm844 = vcmp.lt.s32.totalorder %v834, 0
        %v845 = vsub.s32 0, %v834
        %v846 = vsel %vm844, %v845, %v834
        %v847 = vshrl.u32 %v846, 3
        %v848 = vand.u32 %v846, 7
        %v849 = vsub.s32 0, %v848
        %v850 = vsel %vm844, %v849, %v848
        %vm851 = vcmp.lt.s32.totalorder %v835, 0
        %v852 = vsub.s32 0, %v835
        %v853 = vsel %vm851, %v852, %v835
        %v854 = vshrl.u32 %v853, 3
        %v855 = vand.u32 %v853, 7
        %v856 = vsub.s32 0, %v855
        %v857 = vsel %vm851, %v856, %v855
        %vm858 = vcmp.lt.s32.totalorder %v836, 0
        %v859 = vsub.s32 0, %v836
        %v860 = vsel %vm858, %v859, %v836
        %v861 = vshrl.u32 %v860, 3
        %v862 = vand.u32 %v860, 7
        %v863 = vsub.s32 0, %v862
        %v864 = vsel %vm858, %v863, %v862
        %vm865 = vcmp.ne.s32.totalorder %v843, 0
        %vm866 = vcmp.ne.s32.totalorder %v850, 0
        %vm867 = vcmp.ne.s32.totalorder %v857, 0
        %vm868 = vcmp.ne.s32.totalorder %v864, 0
        %vm869 = vcmp.lt.s32.totalorder %v843, 0
        %vm870 = vcmp.lt.s32.totalorder %v850, 0
        %vm871 = vcmp.lt.s32.totalorder %v857, 0
        %vm872 = vcmp.lt.s32.totalorder %v864, 0
        %vm873 = vmand %vm869, %vm865
        %vm874 = vmand %vm870, %vm866
        %vm875 = vmand %vm871, %vm867
        %vm876 = vmand %vm872, %vm868
        %v877 = vadd.s32 %v843, 8
        %v878 = vadd.s32 %v850, 8
        %v879 = vadd.s32 %v857, 8
        %v880 = vadd.s32 %v864, 8
        %v881 = vsel %vm873, %v877, %v843
        %v882 = vsel %vm874, %v878, %v850
        %v883 = vsel %vm875, %v879, %v857
        %v884 = vsel %vm876, %v880, %v864
        %v885 = vlaneseq
        %v886 = vand.u32 %v885, 127
        %vm887 = vcmp.lt.s32.totalorder %v886, 0
        %v888 = vsub.s32 0, %v886
        %v889 = vsel %vm887, %v888, %v886
        %v890 = vshrl.u32 %v889, 3
        %v891 = vand.u32 %v889, 7
        %v892 = vsub.s32 0, %v891
        %v893 = vsel %vm887, %v892, %v891
        %vm894 = vcmp.ne.s32.totalorder %v893, 0
        %vm895 = vcmp.lt.s32.totalorder %v893, 0
        %vm896 = vmand %vm895, %vm894
        %v897 = vadd.s32 %v893, 8
        %v898 = vsel %vm896, %v897, %v893
        %vm899 = vcmp.eq.s32.totalorder %v881, %v898
        %vm900 = vcmp.eq.s32.totalorder %v882, %v898
        %vm901 = vcmp.eq.s32.totalorder %v883, %v898
        %vm902 = vcmp.eq.s32.totalorder %v884, %v898
        %v903 = vsel %vm899, 0.0, -1e+30
        %v904 = vsel %vm900, 0.0, -1e+30
        %v905 = vsel %vm901, 0.0, -1e+30
        %v906 = vsel %vm902, 0.0, -1e+30
        %v907 = vld [vmem:[#allocation3] sm:$0xf]
        %v908 = vld [vmem:[#allocation3 + $0x4] sm:$0xf]
        %v909 = vld [vmem:[#allocation3 + $0x8] sm:$0xf]
        %v910 = vld [vmem:[#allocation3 + $0xc] sm:$0xf]
        %v911 = vld [vmem:[%s3] sm:$0xf]
        %v912 = vld [vmem:[%s3 + $0x4] sm:$0xf]
        %v913 = vld [vmem:[%s3 + $0x8] sm:$0xf]
        %v914 = vld [vmem:[%s3 + $0xc] sm:$0xf]
        %v915 = vpack.c.bf16 %v829, %v828
        %v916 = vpack.c.bf16 %v831, %v830
        %v917 = vld [vmem:[%s4] sm:$0x1]
        %v919 = vlaneseq
        %v920 = vshrl.u32 %v919, 7
        %v921 = vsub.s32 0, %v920
        %v922 = vrot.slane %v917, %v921
        %v928 = vunpack.c.l.b16 %v911
        %v929 = vunpack.c.l.b16 %v912
        %v930 = vunpack.c.l.b16 %v913
        %v931 = vunpack.c.l.b16 %v914
        %v932 = vpack.c.b16 %v929, %v928
        %v933 = vpack.c.b16 %v931, %v930
        %v937 = vsel %vm813, %v915, 0
        %v940 = vsel %vm813, %v916, 0
        %942 = vmatprep.subr.bf16.mxu0 0
        %943 = vmatpush1.bf16.msra.mxu0 %v932
        %944 = vmatprep.subr.bf16.mxu0 0
        %945 = vmatpush1.bf16.msra.mxu0 %v933
        %946 = vmatprep.subr.bf16.mxu0 0
        %947 = vmatpush1.bf16.msra.mxu0 0
        %948 = vmatprep.subr.bf16.mxu0 0
        %949 = vmatpush1.bf16.msra.mxu0 0
        %950 = vmatprep.subr.bf16.mxu0 0
        %951 = vmatpush1.bf16.msra.mxu0 0
        %952 = vmatprep.subr.bf16.mxu0 0
        %953 = vmatpush1.bf16.msra.mxu0 0
        %954 = vmatprep.subr.bf16.mxu0 0
        %955 = vmatpush1.bf16.msra.mxu0 0
        %956 = vmatprep.subr.bf16.mxu0 0
        %957 = vmatpush1.bf16.msra.mxu0 0
        %958 = vmatprep.subr.bf16.mxu0 0
        %959 = vmatpush1.bf16.msra.mxu0 0
        %960 = vmatprep.subr.bf16.mxu0 0
        %961 = vmatpush1.bf16.msra.mxu0 0
        %962 = vmatprep.subr.bf16.mxu0 0
        %963 = vmatpush1.bf16.msra.mxu0 0
        %964 = vmatprep.subr.bf16.mxu0 0
        %965 = vmatpush1.bf16.msra.mxu0 0
        %966 = vmatprep.subr.bf16.mxu0 0
        %967 = vmatpush1.bf16.msra.mxu0 0
        %968 = vmatprep.subr.bf16.mxu0 0
        %969 = vmatpush1.bf16.msra.mxu0 0
        %970 = vmatprep.subr.bf16.mxu0 0
        %971 = vmatpush1.bf16.msra.mxu0 0
        %972 = vmatprep.subr.bf16.mxu0 0
        %973 = vmatpush1.bf16.msra.mxu0 0
        %974 = vmatprep.mubr.bf16.mxu0 0
        %975 = vmatmul.mubr.bf16.gmra.mrb[0].mxu0 %v937
        %v976 = vpop.f32.mrb[0].mxu0
        %v977 = vadd.f32 %v922, %v976
        %v978 = vpop.f32.mrb[0].mxu0
        %v979 = vpop.f32.mrb[0].mxu0
        %v980 = vadd.f32 %v922, %v979
        %v981 = vpop.f32.mrb[0].mxu0
        %982 = vmatprep.mubr.bf16.mxu0 0
        %983 = vmatmul.mubr.bf16.gmra.mrb[0].mxu0 %v940
        %v984 = vpop.f32.mrb[0].mxu0
        %v985 = vadd.f32 %v922, %v984
        %v986 = vpop.f32.mrb[0].mxu0
        %v987 = vpop.f32.mrb[0].mxu0
        %v988 = vadd.f32 %v922, %v987
        %v989 = vpop.f32.mrb[0].mxu0
        %990 = vdwg.mxu0
        %v991 = vpack.c.bf16 %v980, %v977
        %v992 = vpack.c.bf16 %v988, %v985
        %995 = vrot.lane.b32.xlu0 %v991, 96
        %v996 = vpop.permute.xlu0 %995
        %997 = vrot.lane.b32.xlu0 %v992, 96
        %v998 = vpop.permute.xlu0 %997
        %vm999 = vcmask 64512
        %v1001 = vsel %vm999, %v991, 0
        %v1004 = vsel %vm999, %v992, 0
        %v1007 = vsel %vm999, %v996, 0
        %v1010 = vsel %vm999, %v998, 0
        %1012 = vmatprep.subr.bf16.mxu0 0
        %1013 = vmatpush1.bf16.xpose.msra.mxu0 %v1007
        %1014 = vmatprep.subr.bf16.mxu0 0
        %1015 = vmatpush1.bf16.xpose.msra.mxu0 %v1010
        %1016 = vmatprep.subr.bf16.mxu0 0
        %1017 = vmatpush1.bf16.xpose.msra.mxu0 0
        %1018 = vmatprep.subr.bf16.mxu0 0
        %1019 = vmatpush1.bf16.xpose.msra.mxu0 0
        %1020 = vmatprep.subr.bf16.mxu0 0
        %1021 = vmatpush1.bf16.xpose.msra.mxu0 0
        %1022 = vmatprep.subr.bf16.mxu0 0
        %1023 = vmatpush1.bf16.xpose.msra.mxu0 0
        %1024 = vmatprep.subr.bf16.mxu0 0
        %1025 = vmatpush1.bf16.xpose.msra.mxu0 0
        %1026 = vmatprep.subr.bf16.mxu0 0
        %1027 = vmatpush1.bf16.xpose.msra.mxu0 0
        %1028 = vmatprep.subr.bf16.mxu0 0
        %1029 = vmatpush1.bf16.xpose.msra.mxu0 0
        %1030 = vmatprep.subr.bf16.mxu0 0
        %1031 = vmatpush1.bf16.xpose.msra.mxu0 0
        %1032 = vmatprep.subr.bf16.mxu0 0
        %1033 = vmatpush1.bf16.xpose.msra.mxu0 0
        %1034 = vmatprep.subr.bf16.mxu0 0
        %1035 = vmatpush1.bf16.xpose.msra.mxu0 0
        %1036 = vmatprep.subr.bf16.mxu0 0
        %1037 = vmatpush1.bf16.xpose.msra.mxu0 0
        %1038 = vmatprep.subr.bf16.mxu0 0
        %1039 = vmatpush1.bf16.xpose.msra.mxu0 0
        %1040 = vmatprep.subr.bf16.mxu0 0
        %1041 = vmatpush1.bf16.xpose.msra.mxu0 0
        %1042 = vmatprep.subr.bf16.mxu0 0
        %1043 = vmatpush1.bf16.xpose.msra.mxu0 0
        %1044 = vmatprep.mubr.bf16.mxu0 0
        %1045 = vmatmul.mubr.bf16.gmra.mrb[0].mxu0 %v1001
        %v1046 = vpop.f32.mrb[0].mxu0
        %v1047 = vadd.f32 %v903, %v1046
        %v1048 = vpop.f32.mrb[0].mxu0
        %v1049 = vpop.f32.mrb[0].mxu0
        %v1050 = vadd.f32 %v904, %v1049
        %v1051 = vpop.f32.mrb[0].mxu0
        %1052 = vmatprep.mubr.bf16.mxu0 0
        %1053 = vmatmul.mubr.bf16.gmra.mrb[0].mxu0 %v1004
        %v1054 = vpop.f32.mrb[0].mxu0
        %v1055 = vadd.f32 %v905, %v1054
        %v1056 = vpop.f32.mrb[0].mxu0
        %v1057 = vpop.f32.mrb[0].mxu0
        %v1058 = vadd.f32 %v906, %v1057
        %v1059 = vpop.f32.mrb[0].mxu0
        %1060 = vdwg.mxu0
        %v1061 = vsel %vm813, %v1047, -inf
        %1062 = vmax.xlane.f32.xlu0 %v1061
        %v1063 = vpop.xlane.xlu0 %1062
        %v1064 = vsel %vm813, %v1050, -inf
        %1065 = vmax.xlane.f32.xlu0 %v1064
        %v1066 = vpop.xlane.xlu0 %1065
        %v1067 = vsel %vm813, %v1055, -inf
        %1068 = vmax.xlane.f32.xlu0 %v1067
        %v1069 = vpop.xlane.xlu0 %1068
        %v1070 = vsel %vm813, %v1058, -inf
        %1071 = vmax.xlane.f32.xlu0 %v1070
        %v1072 = vpop.xlane.xlu0 %1071
        %v1073 = vsub.f32 %v1047, %v1063
        %v1074 = vsub.f32 %v1050, %v1066
        %v1075 = vsub.f32 %v1055, %v1069
        %v1076 = vsub.f32 %v1058, %v1072
        %v1077 = vmul.f32 %v1073, 1.442695
        %v1078 = vpow.pop %v1077
        %v1079 = vmul.f32 %v1074, 1.442695
        %v1080 = vpow.pop %v1079
        %v1081 = vmul.f32 %v1075, 1.442695
        %v1082 = vpow.pop %v1081
        %v1083 = vmul.f32 %v1076, 1.442695
        %v1084 = vpow.pop %v1083
        %v1085 = vsel %vm813, %v1078, 0.0
        %1086 = vadd.xlane.f32.xlu0 %v1085
        %v1087 = vpop.xlane.xlu0 %1086
        %v1088 = vsel %vm813, %v1080, 0.0
        %1089 = vadd.xlane.f32.xlu0 %v1088
        %v1090 = vpop.xlane.xlu0 %1089
        %v1091 = vsel %vm813, %v1082, 0.0
        %1092 = vadd.xlane.f32.xlu0 %v1091
        %v1093 = vpop.xlane.xlu0 %1092
        %v1094 = vsel %vm813, %v1084, 0.0
        %1095 = vadd.xlane.f32.xlu0 %v1094
        %v1096 = vpop.xlane.xlu0 %1095
        %v1097 = vrcp.pop %v1087
        %v1098 = vmul.f32 %v1078, %v1097
        %v1099 = vrcp.pop %v1090
        %v1100 = vmul.f32 %v1080, %v1099
        %v1101 = vrcp.pop %v1093
        %v1102 = vmul.f32 %v1082, %v1101
        %v1103 = vrcp.pop %v1096
        %v1104 = vmul.f32 %v1084, %v1103
        %v1105 = vpack.c.bf16 %v1100, %v1098
        %v1106 = vpack.c.bf16 %v1104, %v1102
        %1107 = vrot.lane.b32.xlu0 %v991, 64
        %v1108 = vpop.permute.xlu0 %1107
        %1109 = vrot.lane.b32.xlu0 %v992, 64
        %v1110 = vpop.permute.xlu0 %1109
        %v1114 = vsel %vm813, %v1105, 0
        %v1117 = vsel %vm813, %v1106, 0
        %1119 = vmatprep.subr.bf16.mxu0 0
        %1120 = vmatpush1.bf16.msra.mxu0 %v1108
        %1121 = vmatprep.subr.bf16.mxu0 0
        %1122 = vmatpush1.bf16.msra.mxu0 %v1110
        %1123 = vmatprep.subr.bf16.mxu0 0
        %1124 = vmatpush1.bf16.msra.mxu0 0
        %1125 = vmatprep.subr.bf16.mxu0 0
        %1126 = vmatpush1.bf16.msra.mxu0 0
        %1127 = vmatprep.subr.bf16.mxu0 0
        %1128 = vmatpush1.bf16.msra.mxu0 0
        %1129 = vmatprep.subr.bf16.mxu0 0
        %1130 = vmatpush1.bf16.msra.mxu0 0
        %1131 = vmatprep.subr.bf16.mxu0 0
        %1132 = vmatpush1.bf16.msra.mxu0 0
        %1133 = vmatprep.subr.bf16.mxu0 0
        %1134 = vmatpush1.bf16.msra.mxu0 0
        %1135 = vmatprep.subr.bf16.mxu0 0
        %1136 = vmatpush1.bf16.msra.mxu0 0
        %1137 = vmatprep.subr.bf16.mxu0 0
        %1138 = vmatpush1.bf16.msra.mxu0 0
        %1139 = vmatprep.subr.bf16.mxu0 0
        %1140 = vmatpush1.bf16.msra.mxu0 0
        %1141 = vmatprep.subr.bf16.mxu0 0
        %1142 = vmatpush1.bf16.msra.mxu0 0
        %1143 = vmatprep.subr.bf16.mxu0 0
        %1144 = vmatpush1.bf16.msra.mxu0 0
        %1145 = vmatprep.subr.bf16.mxu0 0
        %1146 = vmatpush1.bf16.msra.mxu0 0
        %1147 = vmatprep.subr.bf16.mxu0 0
        %1148 = vmatpush1.bf16.msra.mxu0 0
        %1149 = vmatprep.subr.bf16.mxu0 0
        %1150 = vmatpush1.bf16.msra.mxu0 0
        %1151 = vmatprep.mubr.bf16.mxu0 0
        %1152 = vmatmul.mubr.bf16.gmra.mrb[0].mxu0 %v1114
        %v1153 = vpop.f32.mrb[0].mxu0
        %v1154 = vadd.f32 0.0, %v1153
        %v1155 = vpop.f32.mrb[0].mxu0
        %v1156 = vpop.f32.mrb[0].mxu0
        %v1157 = vadd.f32 0.0, %v1156
        %v1158 = vpop.f32.mrb[0].mxu0
        %1159 = vmatprep.mubr.bf16.mxu0 0
        %1160 = vmatmul.mubr.bf16.gmra.mrb[0].mxu0 %v1117
        %v1161 = vpop.f32.mrb[0].mxu0
        %v1162 = vadd.f32 0.0, %v1161
        %v1163 = vpop.f32.mrb[0].mxu0
        %v1164 = vpop.f32.mrb[0].mxu0
        %v1165 = vadd.f32 0.0, %v1164
        %v1166 = vpop.f32.mrb[0].mxu0
        %1167 = vdwg.mxu0
        %v1168 = vpack.c.bf16 %v1157, %v1154
        %v1169 = vpack.c.bf16 %v1165, %v1162
        %1170 = vrot.lane.b32.xlu0 %v991, 120
        %v1171 = vpop.permute.xlu0 %1170
        %1172 = vrot.lane.b32.xlu0 %v992, 120
        %v1173 = vpop.permute.xlu0 %1172
        %1174 = vrot.lane.b32.xlu0 %v991, 88
        %v1175 = vpop.permute.xlu0 %1174
        %1176 = vrot.lane.b32.xlu0 %v992, 88
        %v1177 = vpop.permute.xlu0 %1176
        %v1179 = vsel %vm999, %v1171, 0
        %v1182 = vsel %vm999, %v1173, 0
        %v1185 = vsel %vm999, %v1175, 0
        %v1188 = vsel %vm999, %v1177, 0
        %1190 = vmatprep.subr.bf16.mxu0 0
        %1191 = vmatpush1.bf16.xpose.msra.mxu0 %v1185
        %1192 = vmatprep.subr.bf16.mxu0 0
        %1193 = vmatpush1.bf16.xpose.msra.mxu0 %v1188
        %1194 = vmatprep.subr.bf16.mxu0 0
        %1195 = vmatpush1.bf16.xpose.msra.mxu0 0
        %1196 = vmatprep.subr.bf16.mxu0 0
        %1197 = vmatpush1.bf16.xpose.msra.mxu0 0
        %1198 = vmatprep.subr.bf16.mxu0 0
        %1199 = vmatpush1.bf16.xpose.msra.mxu0 0
        %1200 = vmatprep.subr.bf16.mxu0 0
        %1201 = vmatpush1.bf16.xpose.msra.mxu0 0
        %1202 = vmatprep.subr.bf16.mxu0 0
        %1203 = vmatpush1.bf16.xpose.msra.mxu0 0
        %1204 = vmatprep.subr.bf16.mxu0 0
        %1205 = vmatpush1.bf16.xpose.msra.mxu0 0
        %1206 = vmatprep.subr.bf16.mxu0 0
        %1207 = vmatpush1.bf16.xpose.msra.mxu0 0
        %1208 = vmatprep.subr.bf16.mxu0 0
        %1209 = vmatpush1.bf16.xpose.msra.mxu0 0
        %1210 = vmatprep.subr.bf16.mxu0 0
        %1211 = vmatpush1.bf16.xpose.msra.mxu0 0
        %1212 = vmatprep.subr.bf16.mxu0 0
        %1213 = vmatpush1.bf16.xpose.msra.mxu0 0
        %1214 = vmatprep.subr.bf16.mxu0 0
        %1215 = vmatpush1.bf16.xpose.msra.mxu0 0
        %1216 = vmatprep.subr.bf16.mxu0 0
        %1217 = vmatpush1.bf16.xpose.msra.mxu0 0
        %1218 = vmatprep.subr.bf16.mxu0 0
        %1219 = vmatpush1.bf16.xpose.msra.mxu0 0
        %1220 = vmatprep.subr.bf16.mxu0 0
        %1221 = vmatpush1.bf16.xpose.msra.mxu0 0
        %1222 = vmatprep.mubr.bf16.mxu0 0
        %1223 = vmatmul.mubr.bf16.gmra.mrb[0].mxu0 %v1179
        %v1224 = vpop.f32.mrb[0].mxu0
        %v1225 = vadd.f32 %v903, %v1224
        %v1226 = vpop.f32.mrb[0].mxu0
        %v1227 = vpop.f32.mrb[0].mxu0
        %v1228 = vadd.f32 %v904, %v1227
        %v1229 = vpop.f32.mrb[0].mxu0
        %1230 = vmatprep.mubr.bf16.mxu0 0
        %1231 = vmatmul.mubr.bf16.gmra.mrb[0].mxu0 %v1182
        %v1232 = vpop.f32.mrb[0].mxu0
        %v1233 = vadd.f32 %v905, %v1232
        %v1234 = vpop.f32.mrb[0].mxu0
        %v1235 = vpop.f32.mrb[0].mxu0
        %v1236 = vadd.f32 %v906, %v1235
        %v1237 = vpop.f32.mrb[0].mxu0
        %1238 = vdwg.mxu0
        %v1239 = vsel %vm813, %v1225, -inf
        %1240 = vmax.xlane.f32.xlu0 %v1239
        %v1241 = vpop.xlane.xlu0 %1240
        %v1242 = vsel %vm813, %v1228, -inf
        %1243 = vmax.xlane.f32.xlu0 %v1242
        %v1244 = vpop.xlane.xlu0 %1243
        %v1245 = vsel %vm813, %v1233, -inf
        %1246 = vmax.xlane.f32.xlu0 %v1245
        %v1247 = vpop.xlane.xlu0 %1246
        %v1248 = vsel %vm813, %v1236, -inf
        %1249 = vmax.xlane.f32.xlu0 %v1248
        %v1250 = vpop.xlane.xlu0 %1249
        %v1251 = vsub.f32 %v1225, %v1241
        %v1252 = vsub.f32 %v1228, %v1244
        %v1253 = vsub.f32 %v1233, %v1247
        %v1254 = vsub.f32 %v1236, %v1250
        %v1255 = vmul.f32 %v1251, 1.442695
        %v1256 = vpow.pop %v1255
        %v1257 = vmul.f32 %v1252, 1.442695
        %v1258 = vpow.pop %v1257
        %v1259 = vmul.f32 %v1253, 1.442695
        %v1260 = vpow.pop %v1259
        %v1261 = vmul.f32 %v1254, 1.442695
        %v1262 = vpow.pop %v1261
        %v1263 = vsel %vm813, %v1256, 0.0
        %1264 = vadd.xlane.f32.xlu0 %v1263
        %v1265 = vpop.xlane.xlu0 %1264
        %v1266 = vsel %vm813, %v1258, 0.0
        %1267 = vadd.xlane.f32.xlu0 %v1266
        %v1268 = vpop.xlane.xlu0 %1267
        %v1269 = vsel %vm813, %v1260, 0.0
        %1270 = vadd.xlane.f32.xlu0 %v1269
        %v1271 = vpop.xlane.xlu0 %1270
        %v1272 = vsel %vm813, %v1262, 0.0
        %1273 = vadd.xlane.f32.xlu0 %v1272
        %v1274 = vpop.xlane.xlu0 %1273
        %v1275 = vrcp.pop %v1265
        %v1276 = vmul.f32 %v1256, %v1275
        %v1277 = vrcp.pop %v1268
        %v1278 = vmul.f32 %v1258, %v1277
        %v1279 = vrcp.pop %v1271
        %v1280 = vmul.f32 %v1260, %v1279
        %v1281 = vrcp.pop %v1274
        %v1282 = vmul.f32 %v1262, %v1281
        %v1283 = vpack.c.bf16 %v1278, %v1276
        %v1284 = vpack.c.bf16 %v1282, %v1280
        %1285 = vrot.lane.b32.xlu0 %v991, 56
        %v1286 = vpop.permute.xlu0 %1285
        %1287 = vrot.lane.b32.xlu0 %v992, 56
        %v1288 = vpop.permute.xlu0 %1287
        %v1292 = vsel %vm813, %v1283, 0
        %v1295 = vsel %vm813, %v1284, 0
        %1297 = vmatprep.subr.bf16.mxu0 0
        %1298 = vmatpush1.bf16.msra.mxu0 %v1286
        %1299 = vmatprep.subr.bf16.mxu0 0
        %1300 = vmatpush1.bf16.msra.mxu0 %v1288
        %1301 = vmatprep.subr.bf16.mxu0 0
        %1302 = vmatpush1.bf16.msra.mxu0 0
        %1303 = vmatprep.subr.bf16.mxu0 0
        %1304 = vmatpush1.bf16.msra.mxu0 0
        %1305 = vmatprep.subr.bf16.mxu0 0
        %1306 = vmatpush1.bf16.msra.mxu0 0
        %1307 = vmatprep.subr.bf16.mxu0 0
        %1308 = vmatpush1.bf16.msra.mxu0 0
        %1309 = vmatprep.subr.bf16.mxu0 0
        %1310 = vmatpush1.bf16.msra.mxu0 0
        %1311 = vmatprep.subr.bf16.mxu0 0
        %1312 = vmatpush1.bf16.msra.mxu0 0
        %1313 = vmatprep.subr.bf16.mxu0 0
        %1314 = vmatpush1.bf16.msra.mxu0 0
        %1315 = vmatprep.subr.bf16.mxu0 0
        %1316 = vmatpush1.bf16.msra.mxu0 0
        %1317 = vmatprep.subr.bf16.mxu0 0
        %1318 = vmatpush1.bf16.msra.mxu0 0
        %1319 = vmatprep.subr.bf16.mxu0 0
        %1320 = vmatpush1.bf16.msra.mxu0 0
        %1321 = vmatprep.subr.bf16.mxu0 0
        %1322 = vmatpush1.bf16.msra.mxu0 0
        %1323 = vmatprep.subr.bf16.mxu0 0
        %1324 = vmatpush1.bf16.msra.mxu0 0
        %1325 = vmatprep.subr.bf16.mxu0 0
        %1326 = vmatpush1.bf16.msra.mxu0 0
        %1327 = vmatprep.subr.bf16.mxu0 0
        %1328 = vmatpush1.bf16.msra.mxu0 0
        %1329 = vmatprep.mubr.bf16.mxu0 0
        %1330 = vmatmul.mubr.bf16.gmra.mrb[0].mxu0 %v1292
        %v1331 = vpop.f32.mrb[0].mxu0
        %v1332 = vadd.f32 0.0, %v1331
        %v1333 = vpop.f32.mrb[0].mxu0
        %v1334 = vpop.f32.mrb[0].mxu0
        %v1335 = vadd.f32 0.0, %v1334
        %v1336 = vpop.f32.mrb[0].mxu0
        %1337 = vmatprep.mubr.bf16.mxu0 0
        %1338 = vmatmul.mubr.bf16.gmra.mrb[0].mxu0 %v1295
        %v1339 = vpop.f32.mrb[0].mxu0
        %v1340 = vadd.f32 0.0, %v1339
        %v1341 = vpop.f32.mrb[0].mxu0
        %v1342 = vpop.f32.mrb[0].mxu0
        %v1343 = vadd.f32 0.0, %v1342
        %v1344 = vpop.f32.mrb[0].mxu0
        %1345 = vdwg.mxu0
        %v1346 = vpack.c.bf16 %v1335, %v1332
        %v1347 = vpack.c.bf16 %v1343, %v1340
        %v1349 = vsel %vm999, %v1346, 0
        %v1352 = vsel %vm999, %v1347, 0
        %v1355 = vsel %vm768, %v908, 0
        %1357 = vmatprep.subr.bf16.mxu0 0
        %1358 = vmatpush1.bf16.msra.mxu0 %v1355
        %1359 = vmatprep.subr.bf16.mxu0 0
        %1360 = vmatpush1.bf16.msra.mxu0 0
        %1361 = vmatprep.subr.bf16.mxu0 0
        %1362 = vmatpush1.bf16.msra.mxu0 0
        %1363 = vmatprep.subr.bf16.mxu0 0
        %1364 = vmatpush1.bf16.msra.mxu0 0
        %1365 = vmatprep.subr.bf16.mxu0 0
        %1366 = vmatpush1.bf16.msra.mxu0 0
        %1367 = vmatprep.subr.bf16.mxu0 0
        %1368 = vmatpush1.bf16.msra.mxu0 0
        %1369 = vmatprep.subr.bf16.mxu0 0
        %1370 = vmatpush1.bf16.msra.mxu0 0
        %1371 = vmatprep.subr.bf16.mxu0 0
        %1372 = vmatpush1.bf16.msra.mxu0 0
        %1373 = vmatprep.subr.bf16.mxu0 0
        %1374 = vmatpush1.bf16.msra.mxu0 0
        %1375 = vmatprep.subr.bf16.mxu0 0
        %1376 = vmatpush1.bf16.msra.mxu0 0
        %1377 = vmatprep.subr.bf16.mxu0 0
        %1378 = vmatpush1.bf16.msra.mxu0 0
        %1379 = vmatprep.subr.bf16.mxu0 0
        %1380 = vmatpush1.bf16.msra.mxu0 0
        %1381 = vmatprep.subr.bf16.mxu0 0
        %1382 = vmatpush1.bf16.msra.mxu0 0
        %1383 = vmatprep.subr.bf16.mxu0 0
        %1384 = vmatpush1.bf16.msra.mxu0 0
        %1385 = vmatprep.subr.bf16.mxu0 0
        %1386 = vmatpush1.bf16.msra.mxu0 0
        %1387 = vmatprep.subr.bf16.mxu0 0
        %1388 = vmatpush1.bf16.msra.mxu0 0
        %1389 = vmatprep.mubr.bf16.mxu0 0
        %1390 = vmatmul.mubr.bf16.gmra.mrb[0].mxu0 %v1349
        %v1391 = vpop.f32.mrb[0].mxu0
        %v1392 = vadd.f32 0.0, %v1391
        %v1393 = vpop.f32.mrb[0].mxu0
        %v1394 = vpop.f32.mrb[0].mxu0
        %v1395 = vadd.f32 0.0, %v1394
        %v1396 = vpop.f32.mrb[0].mxu0
        %1397 = vmatprep.mubr.bf16.mxu0 0
        %1398 = vmatmul.mubr.bf16.gmra.mrb[0].mxu0 %v1352
        %v1399 = vpop.f32.mrb[0].mxu0
        %v1400 = vadd.f32 0.0, %v1399
        %v1401 = vpop.f32.mrb[0].mxu0
        %v1402 = vpop.f32.mrb[0].mxu0
        %v1403 = vadd.f32 0.0, %v1402
        %v1404 = vpop.f32.mrb[0].mxu0
        %1405 = vdwg.mxu0
        %v1407 = vsel %vm999, %v1168, 0
        %v1410 = vsel %vm999, %v1169, 0
        %v1413 = vsel %vm768, %v907, 0
        %1415 = vmatprep.subr.bf16.mxu0 0
        %1416 = vmatpush1.bf16.msra.mxu0 %v1413
        %1417 = vmatprep.subr.bf16.mxu0 0
        %1418 = vmatpush1.bf16.msra.mxu0 0
        %1419 = vmatprep.subr.bf16.mxu0 0
        %1420 = vmatpush1.bf16.msra.mxu0 0
        %1421 = vmatprep.subr.bf16.mxu0 0
        %1422 = vmatpush1.bf16.msra.mxu0 0
        %1423 = vmatprep.subr.bf16.mxu0 0
        %1424 = vmatpush1.bf16.msra.mxu0 0
        %1425 = vmatprep.subr.bf16.mxu0 0
        %1426 = vmatpush1.bf16.msra.mxu0 0
        %1427 = vmatprep.subr.bf16.mxu0 0
        %1428 = vmatpush1.bf16.msra.mxu0 0
        %1429 = vmatprep.subr.bf16.mxu0 0
        %1430 = vmatpush1.bf16.msra.mxu0 0
        %1431 = vmatprep.subr.bf16.mxu0 0
        %1432 = vmatpush1.bf16.msra.mxu0 0
        %1433 = vmatprep.subr.bf16.mxu0 0
        %1434 = vmatpush1.bf16.msra.mxu0 0
        %1435 = vmatprep.subr.bf16.mxu0 0
        %1436 = vmatpush1.bf16.msra.mxu0 0
        %1437 = vmatprep.subr.bf16.mxu0 0
        %1438 = vmatpush1.bf16.msra.mxu0 0
        %1439 = vmatprep.subr.bf16.mxu0 0
        %1440 = vmatpush1.bf16.msra.mxu0 0
        %1441 = vmatprep.subr.bf16.mxu0 0
        %1442 = vmatpush1.bf16.msra.mxu0 0
        %1443 = vmatprep.subr.bf16.mxu0 0
        %1444 = vmatpush1.bf16.msra.mxu0 0
        %1445 = vmatprep.subr.bf16.mxu0 0
        %1446 = vmatpush1.bf16.msra.mxu0 0
        %1447 = vmatprep.mubr.bf16.mxu0 0
        %1448 = vmatmul.mubr.bf16.gmra.mrb[0].mxu0 %v1407
        %v1449 = vpop.f32.mrb[0].mxu0
        %v1450 = vadd.f32 %v1392, %v1449
        %v1451 = vpop.f32.mrb[0].mxu0
        %v1452 = vpop.f32.mrb[0].mxu0
        %v1453 = vadd.f32 %v1395, %v1452
        %v1454 = vpop.f32.mrb[0].mxu0
        %1455 = vmatprep.mubr.bf16.mxu0 0
        %1456 = vmatmul.mubr.bf16.gmra.mrb[0].mxu0 %v1410
        %v1457 = vpop.f32.mrb[0].mxu0
        %v1458 = vadd.f32 %v1400, %v1457
        %v1459 = vpop.f32.mrb[0].mxu0
        %v1460 = vpop.f32.mrb[0].mxu0
        %v1461 = vadd.f32 %v1403, %v1460
        %v1462 = vpop.f32.mrb[0].mxu0
        %1463 = vdwg.mxu0
        %1464 = vrot.lane.b32.xlu0 %v991, 112
        %v1465 = vpop.permute.xlu0 %1464
        %1466 = vrot.lane.b32.xlu0 %v992, 112
        %v1467 = vpop.permute.xlu0 %1466
        %1468 = vrot.lane.b32.xlu0 %v991, 80
        %v1469 = vpop.permute.xlu0 %1468
        %1470 = vrot.lane.b32.xlu0 %v992, 80
        %v1471 = vpop.permute.xlu0 %1470
        %v1473 = vsel %vm999, %v1465, 0
        %v1476 = vsel %vm999, %v1467, 0
        %v1479 = vsel %vm999, %v1469, 0
        %v1482 = vsel %vm999, %v1471, 0
        %1484 = vmatprep.subr.bf16.mxu0 0
        %1485 = vmatpush1.bf16.xpose.msra.mxu0 %v1479
        %1486 = vmatprep.subr.bf16.mxu0 0
        %1487 = vmatpush1.bf16.xpose.msra.mxu0 %v1482
        %1488 = vmatprep.subr.bf16.mxu0 0
        %1489 = vmatpush1.bf16.xpose.msra.mxu0 0
        %1490 = vmatprep.subr.bf16.mxu0 0
        %1491 = vmatpush1.bf16.xpose.msra.mxu0 0
        %1492 = vmatprep.subr.bf16.mxu0 0
        %1493 = vmatpush1.bf16.xpose.msra.mxu0 0
        %1494 = vmatprep.subr.bf16.mxu0 0
        %1495 = vmatpush1.bf16.xpose.msra.mxu0 0
        %1496 = vmatprep.subr.bf16.mxu0 0
        %1497 = vmatpush1.bf16.xpose.msra.mxu0 0
        %1498 = vmatprep.subr.bf16.mxu0 0
        %1499 = vmatpush1.bf16.xpose.msra.mxu0 0
        %1500 = vmatprep.subr.bf16.mxu0 0
        %1501 = vmatpush1.bf16.xpose.msra.mxu0 0
        %1502 = vmatprep.subr.bf16.mxu0 0
        %1503 = vmatpush1.bf16.xpose.msra.mxu0 0
        %1504 = vmatprep.subr.bf16.mxu0 0
        %1505 = vmatpush1.bf16.xpose.msra.mxu0 0
        %1506 = vmatprep.subr.bf16.mxu0 0
        %1507 = vmatpush1.bf16.xpose.msra.mxu0 0
        %1508 = vmatprep.subr.bf16.mxu0 0
        %1509 = vmatpush1.bf16.xpose.msra.mxu0 0
        %1510 = vmatprep.subr.bf16.mxu0 0
        %1511 = vmatpush1.bf16.xpose.msra.mxu0 0
        %1512 = vmatprep.subr.bf16.mxu0 0
        %1513 = vmatpush1.bf16.xpose.msra.mxu0 0
        %1514 = vmatprep.subr.bf16.mxu0 0
        %1515 = vmatpush1.bf16.xpose.msra.mxu0 0
        %1516 = vmatprep.mubr.bf16.mxu0 0
        %1517 = vmatmul.mubr.bf16.gmra.mrb[0].mxu0 %v1473
        %v1518 = vpop.f32.mrb[0].mxu0
        %v1519 = vadd.f32 %v903, %v1518
        %v1520 = vpop.f32.mrb[0].mxu0
        %v1521 = vpop.f32.mrb[0].mxu0
        %v1522 = vadd.f32 %v904, %v1521
        %v1523 = vpop.f32.mrb[0].mxu0
        %1524 = vmatprep.mubr.bf16.mxu0 0
        %1525 = vmatmul.mubr.bf16.gmra.mrb[0].mxu0 %v1476
        %v1526 = vpop.f32.mrb[0].mxu0
        %v1527 = vadd.f32 %v905, %v1526
        %v1528 = vpop.f32.mrb[0].mxu0
        %v1529 = vpop.f32.mrb[0].mxu0
        %v1530 = vadd.f32 %v906, %v1529
        %v1531 = vpop.f32.mrb[0].mxu0
        %1532 = vdwg.mxu0
        %v1533 = vsel %vm813, %v1519, -inf
        %1534 = vmax.xlane.f32.xlu0 %v1533
        %v1535 = vpop.xlane.xlu0 %1534
        %v1536 = vsel %vm813, %v1522, -inf
        %1537 = vmax.xlane.f32.xlu0 %v1536
        %v1538 = vpop.xlane.xlu0 %1537
        %v1539 = vsel %vm813, %v1527, -inf
        %1540 = vmax.xlane.f32.xlu0 %v1539
        %v1541 = vpop.xlane.xlu0 %1540
        %v1542 = vsel %vm813, %v1530, -inf
        %1543 = vmax.xlane.f32.xlu0 %v1542
        %v1544 = vpop.xlane.xlu0 %1543
        %v1545 = vsub.f32 %v1519, %v1535
        %v1546 = vsub.f32 %v1522, %v1538
        %v1547 = vsub.f32 %v1527, %v1541
        %v1548 = vsub.f32 %v1530, %v1544
        %v1549 = vmul.f32 %v1545, 1.442695
        %v1550 = vpow.pop %v1549
        %v1551 = vmul.f32 %v1546, 1.442695
        %v1552 = vpow.pop %v1551
        %v1553 = vmul.f32 %v1547, 1.442695
        %v1554 = vpow.pop %v1553
        %v1555 = vmul.f32 %v1548, 1.442695
        %v1556 = vpow.pop %v1555
        %v1557 = vsel %vm813, %v1550, 0.0
        %1558 = vadd.xlane.f32.xlu0 %v1557
        %v1559 = vpop.xlane.xlu0 %1558
        %v1560 = vsel %vm813, %v1552, 0.0
        %1561 = vadd.xlane.f32.xlu0 %v1560
        %v1562 = vpop.xlane.xlu0 %1561
        %v1563 = vsel %vm813, %v1554, 0.0
        %1564 = vadd.xlane.f32.xlu0 %v1563
        %v1565 = vpop.xlane.xlu0 %1564
        %v1566 = vsel %vm813, %v1556, 0.0
        %1567 = vadd.xlane.f32.xlu0 %v1566
        %v1568 = vpop.xlane.xlu0 %1567
        %v1569 = vrcp.pop %v1559
        %v1570 = vmul.f32 %v1550, %v1569
        %v1571 = vrcp.pop %v1562
        %v1572 = vmul.f32 %v1552, %v1571
        %v1573 = vrcp.pop %v1565
        %v1574 = vmul.f32 %v1554, %v1573
        %v1575 = vrcp.pop %v1568
        %v1576 = vmul.f32 %v1556, %v1575
        %v1577 = vpack.c.bf16 %v1572, %v1570
        %v1578 = vpack.c.bf16 %v1576, %v1574
        %1579 = vrot.lane.b32.xlu0 %v991, 48
        %v1580 = vpop.permute.xlu0 %1579
        %1581 = vrot.lane.b32.xlu0 %v992, 48
        %v1582 = vpop.permute.xlu0 %1581
        %v1586 = vsel %vm813, %v1577, 0
        %v1589 = vsel %vm813, %v1578, 0
        %1591 = vmatprep.subr.bf16.mxu0 0
        %1592 = vmatpush1.bf16.msra.mxu0 %v1580
        %1593 = vmatprep.subr.bf16.mxu0 0
        %1594 = vmatpush1.bf16.msra.mxu0 %v1582
        %1595 = vmatprep.subr.bf16.mxu0 0
        %1596 = vmatpush1.bf16.msra.mxu0 0
        %1597 = vmatprep.subr.bf16.mxu0 0
        %1598 = vmatpush1.bf16.msra.mxu0 0
        %1599 = vmatprep.subr.bf16.mxu0 0
        %1600 = vmatpush1.bf16.msra.mxu0 0
        %1601 = vmatprep.subr.bf16.mxu0 0
        %1602 = vmatpush1.bf16.msra.mxu0 0
        %1603 = vmatprep.subr.bf16.mxu0 0
        %1604 = vmatpush1.bf16.msra.mxu0 0
        %1605 = vmatprep.subr.bf16.mxu0 0
        %1606 = vmatpush1.bf16.msra.mxu0 0
        %1607 = vmatprep.subr.bf16.mxu0 0
        %1608 = vmatpush1.bf16.msra.mxu0 0
        %1609 = vmatprep.subr.bf16.mxu0 0
        %1610 = vmatpush1.bf16.msra.mxu0 0
        %1611 = vmatprep.subr.bf16.mxu0 0
        %1612 = vmatpush1.bf16.msra.mxu0 0
        %1613 = vmatprep.subr.bf16.mxu0 0
        %1614 = vmatpush1.bf16.msra.mxu0 0
        %1615 = vmatprep.subr.bf16.mxu0 0
        %1616 = vmatpush1.bf16.msra.mxu0 0
        %1617 = vmatprep.subr.bf16.mxu0 0
        %1618 = vmatpush1.bf16.msra.mxu0 0
        %1619 = vmatprep.subr.bf16.mxu0 0
        %1620 = vmatpush1.bf16.msra.mxu0 0
        %1621 = vmatprep.subr.bf16.mxu0 0
        %1622 = vmatpush1.bf16.msra.mxu0 0
        %1623 = vmatprep.mubr.bf16.mxu0 0
        %1624 = vmatmul.mubr.bf16.gmra.mrb[0].mxu0 %v1586
        %v1625 = vpop.f32.mrb[0].mxu0
        %v1626 = vadd.f32 0.0, %v1625
        %v1627 = vpop.f32.mrb[0].mxu0
        %v1628 = vpop.f32.mrb[0].mxu0
        %v1629 = vadd.f32 0.0, %v1628
        %v1630 = vpop.f32.mrb[0].mxu0
        %1631 = vmatprep.mubr.bf16.mxu0 0
        %1632 = vmatmul.mubr.bf16.gmra.mrb[0].mxu0 %v1589
        %v1633 = vpop.f32.mrb[0].mxu0
        %v1634 = vadd.f32 0.0, %v1633
        %v1635 = vpop.f32.mrb[0].mxu0
        %v1636 = vpop.f32.mrb[0].mxu0
        %v1637 = vadd.f32 0.0, %v1636
        %v1638 = vpop.f32.mrb[0].mxu0
        %1639 = vdwg.mxu0
        %v1640 = vpack.c.bf16 %v1629, %v1626
        %v1641 = vpack.c.bf16 %v1637, %v1634
        %v1643 = vsel %vm999, %v1640, 0
        %v1646 = vsel %vm999, %v1641, 0
        %v1649 = vsel %vm768, %v909, 0
        %1651 = vmatprep.subr.bf16.mxu0 0
        %1652 = vmatpush1.bf16.msra.mxu0 %v1649
        %1653 = vmatprep.subr.bf16.mxu0 0
        %1654 = vmatpush1.bf16.msra.mxu0 0
        %1655 = vmatprep.subr.bf16.mxu0 0
        %1656 = vmatpush1.bf16.msra.mxu0 0
        %1657 = vmatprep.subr.bf16.mxu0 0
        %1658 = vmatpush1.bf16.msra.mxu0 0
        %1659 = vmatprep.subr.bf16.mxu0 0
        %1660 = vmatpush1.bf16.msra.mxu0 0
        %1661 = vmatprep.subr.bf16.mxu0 0
        %1662 = vmatpush1.bf16.msra.mxu0 0
        %1663 = vmatprep.subr.bf16.mxu0 0
        %1664 = vmatpush1.bf16.msra.mxu0 0
        %1665 = vmatprep.subr.bf16.mxu0 0
        %1666 = vmatpush1.bf16.msra.mxu0 0
        %1667 = vmatprep.subr.bf16.mxu0 0
        %1668 = vmatpush1.bf16.msra.mxu0 0
        %1669 = vmatprep.subr.bf16.mxu0 0
        %1670 = vmatpush1.bf16.msra.mxu0 0
        %1671 = vmatprep.subr.bf16.mxu0 0
        %1672 = vmatpush1.bf16.msra.mxu0 0
        %1673 = vmatprep.subr.bf16.mxu0 0
        %1674 = vmatpush1.bf16.msra.mxu0 0
        %1675 = vmatprep.subr.bf16.mxu0 0
        %1676 = vmatpush1.bf16.msra.mxu0 0
        %1677 = vmatprep.subr.bf16.mxu0 0
        %1678 = vmatpush1.bf16.msra.mxu0 0
        %1679 = vmatprep.subr.bf16.mxu0 0
        %1680 = vmatpush1.bf16.msra.mxu0 0
        %1681 = vmatprep.subr.bf16.mxu0 0
        %1682 = vmatpush1.bf16.msra.mxu0 0
        %1683 = vmatprep.mubr.bf16.mxu0 0
        %1684 = vmatmul.mubr.bf16.gmra.mrb[0].mxu0 %v1643
        %v1685 = vpop.f32.mrb[0].mxu0
        %v1686 = vadd.f32 0.0, %v1685
        %v1687 = vpop.f32.mrb[0].mxu0
        %v1688 = vpop.f32.mrb[0].mxu0
        %v1689 = vadd.f32 0.0, %v1688
        %v1690 = vpop.f32.mrb[0].mxu0
        %1691 = vmatprep.mubr.bf16.mxu0 0
        %1692 = vmatmul.mubr.bf16.gmra.mrb[0].mxu0 %v1646
        %v1693 = vpop.f32.mrb[0].mxu0
        %v1694 = vadd.f32 0.0, %v1693
        %v1695 = vpop.f32.mrb[0].mxu0
        %v1696 = vpop.f32.mrb[0].mxu0
        %v1697 = vadd.f32 0.0, %v1696
        %v1698 = vpop.f32.mrb[0].mxu0
        %1699 = vdwg.mxu0
        %v1700 = vadd.f32 %v1450, %v1686
        %v1701 = vadd.f32 %v1453, %v1689
        %v1702 = vadd.f32 %v1458, %v1694
        %v1703 = vadd.f32 %v1461, %v1697
        %1704 = vrot.lane.b32.xlu0 %v991, 104
        %v1705 = vpop.permute.xlu0 %1704
        %1706 = vrot.lane.b32.xlu0 %v992, 104
        %v1707 = vpop.permute.xlu0 %1706
        %1708 = vrot.lane.b32.xlu0 %v991, 72
        %v1709 = vpop.permute.xlu0 %1708
        %1710 = vrot.lane.b32.xlu0 %v992, 72
        %v1711 = vpop.permute.xlu0 %1710
        %v1713 = vsel %vm999, %v1705, 0
        %v1716 = vsel %vm999, %v1707, 0
        %v1719 = vsel %vm999, %v1709, 0
        %v1722 = vsel %vm999, %v1711, 0
        %1724 = vmatprep.subr.bf16.mxu0 0
        %1725 = vmatpush1.bf16.xpose.msra.mxu0 %v1719
        %1726 = vmatprep.subr.bf16.mxu0 0
        %1727 = vmatpush1.bf16.xpose.msra.mxu0 %v1722
        %1728 = vmatprep.subr.bf16.mxu0 0
        %1729 = vmatpush1.bf16.xpose.msra.mxu0 0
        %1730 = vmatprep.subr.bf16.mxu0 0
        %1731 = vmatpush1.bf16.xpose.msra.mxu0 0
        %1732 = vmatprep.subr.bf16.mxu0 0
        %1733 = vmatpush1.bf16.xpose.msra.mxu0 0
        %1734 = vmatprep.subr.bf16.mxu0 0
        %1735 = vmatpush1.bf16.xpose.msra.mxu0 0
        %1736 = vmatprep.subr.bf16.mxu0 0
        %1737 = vmatpush1.bf16.xpose.msra.mxu0 0
        %1738 = vmatprep.subr.bf16.mxu0 0
        %1739 = vmatpush1.bf16.xpose.msra.mxu0 0
        %1740 = vmatprep.subr.bf16.mxu0 0
        %1741 = vmatpush1.bf16.xpose.msra.mxu0 0
        %1742 = vmatprep.subr.bf16.mxu0 0
        %1743 = vmatpush1.bf16.xpose.msra.mxu0 0
        %1744 = vmatprep.subr.bf16.mxu0 0
        %1745 = vmatpush1.bf16.xpose.msra.mxu0 0
        %1746 = vmatprep.subr.bf16.mxu0 0
        %1747 = vmatpush1.bf16.xpose.msra.mxu0 0
        %1748 = vmatprep.subr.bf16.mxu0 0
        %1749 = vmatpush1.bf16.xpose.msra.mxu0 0
        %1750 = vmatprep.subr.bf16.mxu0 0
        %1751 = vmatpush1.bf16.xpose.msra.mxu0 0
        %1752 = vmatprep.subr.bf16.mxu0 0
        %1753 = vmatpush1.bf16.xpose.msra.mxu0 0
        %1754 = vmatprep.subr.bf16.mxu0 0
        %1755 = vmatpush1.bf16.xpose.msra.mxu0 0
        %1756 = vmatprep.mubr.bf16.mxu0 0
        %1757 = vmatmul.mubr.bf16.gmra.mrb[0].mxu0 %v1713
        %v1758 = vpop.f32.mrb[0].mxu0
        %v1759 = vadd.f32 %v903, %v1758
        %v1760 = vpop.f32.mrb[0].mxu0
        %v1761 = vpop.f32.mrb[0].mxu0
        %v1762 = vadd.f32 %v904, %v1761
        %v1763 = vpop.f32.mrb[0].mxu0
        %1764 = vmatprep.mubr.bf16.mxu0 0
        %1765 = vmatmul.mubr.bf16.gmra.mrb[0].mxu0 %v1716
        %v1766 = vpop.f32.mrb[0].mxu0
        %v1767 = vadd.f32 %v905, %v1766
        %v1768 = vpop.f32.mrb[0].mxu0
        %v1769 = vpop.f32.mrb[0].mxu0
        %v1770 = vadd.f32 %v906, %v1769
        %v1771 = vpop.f32.mrb[0].mxu0
        %1772 = vdwg.mxu0
        %v1773 = vsel %vm813, %v1759, -inf
        %1774 = vmax.xlane.f32.xlu0 %v1773
        %v1775 = vpop.xlane.xlu0 %1774
        %v1776 = vsel %vm813, %v1762, -inf
        %1777 = vmax.xlane.f32.xlu0 %v1776
        %v1778 = vpop.xlane.xlu0 %1777
        %v1779 = vsel %vm813, %v1767, -inf
        %1780 = vmax.xlane.f32.xlu0 %v1779
        %v1781 = vpop.xlane.xlu0 %1780
        %v1782 = vsel %vm813, %v1770, -inf
        %1783 = vmax.xlane.f32.xlu0 %v1782
        %v1784 = vpop.xlane.xlu0 %1783
        %v1785 = vsub.f32 %v1759, %v1775
        %v1786 = vsub.f32 %v1762, %v1778
        %v1787 = vsub.f32 %v1767, %v1781
        %v1788 = vsub.f32 %v1770, %v1784
        %v1789 = vmul.f32 %v1785, 1.442695
        %v1790 = vpow.pop %v1789
        %v1791 = vmul.f32 %v1786, 1.442695
        %v1792 = vpow.pop %v1791
        %v1793 = vmul.f32 %v1787, 1.442695
        %v1794 = vpow.pop %v1793
        %v1795 = vmul.f32 %v1788, 1.442695
        %v1796 = vpow.pop %v1795
        %v1797 = vsel %vm813, %v1790, 0.0
        %1798 = vadd.xlane.f32.xlu0 %v1797
        %v1799 = vpop.xlane.xlu0 %1798
        %v1800 = vsel %vm813, %v1792, 0.0
        %1801 = vadd.xlane.f32.xlu0 %v1800
        %v1802 = vpop.xlane.xlu0 %1801
        %v1803 = vsel %vm813, %v1794, 0.0
        %1804 = vadd.xlane.f32.xlu0 %v1803
        %v1805 = vpop.xlane.xlu0 %1804
        %v1806 = vsel %vm813, %v1796, 0.0
        %1807 = vadd.xlane.f32.xlu0 %v1806
        %v1808 = vpop.xlane.xlu0 %1807
        %v1809 = vrcp.pop %v1799
        %v1810 = vmul.f32 %v1790, %v1809
        %v1811 = vrcp.pop %v1802
        %v1812 = vmul.f32 %v1792, %v1811
        %v1813 = vrcp.pop %v1805
        %v1814 = vmul.f32 %v1794, %v1813
        %v1815 = vrcp.pop %v1808
        %v1816 = vmul.f32 %v1796, %v1815
        %v1817 = vpack.c.bf16 %v1812, %v1810
        %v1818 = vpack.c.bf16 %v1816, %v1814
        %1819 = vrot.lane.b32.xlu0 %v991, 40
        %v1820 = vpop.permute.xlu0 %1819
        %1821 = vrot.lane.b32.xlu0 %v992, 40
        %v1822 = vpop.permute.xlu0 %1821
        %v1826 = vsel %vm813, %v1817, 0
        %v1829 = vsel %vm813, %v1818, 0
        %1831 = vmatprep.subr.bf16.mxu0 0
        %1832 = vmatpush1.bf16.msra.mxu0 %v1820
        %1833 = vmatprep.subr.bf16.mxu0 0
        %1834 = vmatpush1.bf16.msra.mxu0 %v1822
        %1835 = vmatprep.subr.bf16.mxu0 0
        %1836 = vmatpush1.bf16.msra.mxu0 0
        %1837 = vmatprep.subr.bf16.mxu0 0
        %1838 = vmatpush1.bf16.msra.mxu0 0
        %1839 = vmatprep.subr.bf16.mxu0 0
        %1840 = vmatpush1.bf16.msra.mxu0 0
        %1841 = vmatprep.subr.bf16.mxu0 0
        %1842 = vmatpush1.bf16.msra.mxu0 0
        %1843 = vmatprep.subr.bf16.mxu0 0
        %1844 = vmatpush1.bf16.msra.mxu0 0
        %1845 = vmatprep.subr.bf16.mxu0 0
        %1846 = vmatpush1.bf16.msra.mxu0 0
        %1847 = vmatprep.subr.bf16.mxu0 0
        %1848 = vmatpush1.bf16.msra.mxu0 0
        %1849 = vmatprep.subr.bf16.mxu0 0
        %1850 = vmatpush1.bf16.msra.mxu0 0
        %1851 = vmatprep.subr.bf16.mxu0 0
        %1852 = vmatpush1.bf16.msra.mxu0 0
        %1853 = vmatprep.subr.bf16.mxu0 0
        %1854 = vmatpush1.bf16.msra.mxu0 0
        %1855 = vmatprep.subr.bf16.mxu0 0
        %1856 = vmatpush1.bf16.msra.mxu0 0
        %1857 = vmatprep.subr.bf16.mxu0 0
        %1858 = vmatpush1.bf16.msra.mxu0 0
        %1859 = vmatprep.subr.bf16.mxu0 0
        %1860 = vmatpush1.bf16.msra.mxu0 0
        %1861 = vmatprep.subr.bf16.mxu0 0
        %1862 = vmatpush1.bf16.msra.mxu0 0
        %1863 = vmatprep.mubr.bf16.mxu0 0
        %1864 = vmatmul.mubr.bf16.gmra.mrb[0].mxu0 %v1826
        %v1865 = vpop.f32.mrb[0].mxu0
        %v1866 = vadd.f32 0.0, %v1865
        %v1867 = vpop.f32.mrb[0].mxu0
        %v1868 = vpop.f32.mrb[0].mxu0
        %v1869 = vadd.f32 0.0, %v1868
        %v1870 = vpop.f32.mrb[0].mxu0
        %1871 = vmatprep.mubr.bf16.mxu0 0
        %1872 = vmatmul.mubr.bf16.gmra.mrb[0].mxu0 %v1829
        %v1873 = vpop.f32.mrb[0].mxu0
        %v1874 = vadd.f32 0.0, %v1873
        %v1875 = vpop.f32.mrb[0].mxu0
        %v1876 = vpop.f32.mrb[0].mxu0
        %v1877 = vadd.f32 0.0, %v1876
        %v1878 = vpop.f32.mrb[0].mxu0
        %1879 = vdwg.mxu0
        %v1880 = vpack.c.bf16 %v1869, %v1866
        %v1881 = vpack.c.bf16 %v1877, %v1874
        %v1883 = vsel %vm999, %v1880, 0
        %v1886 = vsel %vm999, %v1881, 0
        %v1889 = vsel %vm768, %v910, 0
        %1891 = vmatprep.subr.bf16.mxu0 0
        %1892 = vmatpush1.bf16.msra.mxu0 %v1889
        %1893 = vmatprep.subr.bf16.mxu0 0
        %1894 = vmatpush1.bf16.msra.mxu0 0
        %1895 = vmatprep.subr.bf16.mxu0 0
        %1896 = vmatpush1.bf16.msra.mxu0 0
        %1897 = vmatprep.subr.bf16.mxu0 0
        %1898 = vmatpush1.bf16.msra.mxu0 0
        %1899 = vmatprep.subr.bf16.mxu0 0
        %1900 = vmatpush1.bf16.msra.mxu0 0
        %1901 = vmatprep.subr.bf16.mxu0 0
        %1902 = vmatpush1.bf16.msra.mxu0 0
        %1903 = vmatprep.subr.bf16.mxu0 0
        %1904 = vmatpush1.bf16.msra.mxu0 0
        %1905 = vmatprep.subr.bf16.mxu0 0
        %1906 = vmatpush1.bf16.msra.mxu0 0
        %1907 = vmatprep.subr.bf16.mxu0 0
        %1908 = vmatpush1.bf16.msra.mxu0 0
        %1909 = vmatprep.subr.bf16.mxu0 0
        %1910 = vmatpush1.bf16.msra.mxu0 0
        %1911 = vmatprep.subr.bf16.mxu0 0
        %1912 = vmatpush1.bf16.msra.mxu0 0
        %1913 = vmatprep.subr.bf16.mxu0 0
        %1914 = vmatpush1.bf16.msra.mxu0 0
        %1915 = vmatprep.subr.bf16.mxu0 0
        %1916 = vmatpush1.bf16.msra.mxu0 0
        %1917 = vmatprep.subr.bf16.mxu0 0
        %1918 = vmatpush1.bf16.msra.mxu0 0
        %1919 = vmatprep.subr.bf16.mxu0 0
        %1920 = vmatpush1.bf16.msra.mxu0 0
        %1921 = vmatprep.subr.bf16.mxu0 0
        %1922 = vmatpush1.bf16.msra.mxu0 0
        %1923 = vmatprep.mubr.bf16.mxu0 0
        %1924 = vmatmul.mubr.bf16.gmra.mrb[0].mxu0 %v1883
        %v1925 = vpop.f32.mrb[0].mxu0
        %v1926 = vadd.f32 0.0, %v1925
        %v1927 = vpop.f32.mrb[0].mxu0
        %v1928 = vpop.f32.mrb[0].mxu0
        %v1929 = vadd.f32 0.0, %v1928
        %v1930 = vpop.f32.mrb[0].mxu0
        %1931 = vmatprep.mubr.bf16.mxu0 0
        %1932 = vmatmul.mubr.bf16.gmra.mrb[0].mxu0 %v1886
        %v1933 = vpop.f32.mrb[0].mxu0
        %v1934 = vadd.f32 0.0, %v1933
        %v1935 = vpop.f32.mrb[0].mxu0
        %v1936 = vpop.f32.mrb[0].mxu0
        %v1937 = vadd.f32 0.0, %v1936
        %v1938 = vpop.f32.mrb[0].mxu0
        %1939 = vdwg.mxu0
        %v1940 = vadd.f32 %v1700, %v1926
        %v1941 = vadd.f32 %v1701, %v1929
        %v1942 = vadd.f32 %v1702, %v1934
        %v1943 = vadd.f32 %v1703, %v1937
        %v1944 = vld [vmem:[%s6] sm:$0x1]
        %v1946 = vlaneseq
        %v1947 = vshrl.u32 %v1946, 7
        %v1948 = vsub.s32 0, %v1947
        %v1949 = vrot.slane %v1944, %v1948
        %v1951 = vadd.f32 %v1940, %v1949
        %v1952 = vadd.f32 %v1941, %v1949
        %v1953 = vadd.f32 %v1942, %v1949
        %v1954 = vadd.f32 %v1943, %v1949
        %v1955 = vadd.f32 %v828, %v1951
        %v1956 = vadd.f32 %v829, %v1952
        %v1957 = vadd.f32 %v830, %v1953
        %v1958 = vadd.f32 %v831, %v1954
        %v1959 = vld [vmem:[%s11] sm:$0x1]
        %v1960 = vld [vmem:[#allocation7] sm:$0x1]
        %v1961 = vsel %vm813, %v1955, 0.0
        %1962 = vadd.xlane.f32.xlu0 %v1961
        %v1963 = vpop.xlane.xlu0 %1962
        %v1964 = vsel %vm813, %v1956, 0.0
        %1965 = vadd.xlane.f32.xlu0 %v1964
        %v1966 = vpop.xlane.xlu0 %1965
        %v1967 = vsel %vm813, %v1957, 0.0
        %1968 = vadd.xlane.f32.xlu0 %v1967
        %v1969 = vpop.xlane.xlu0 %1968
        %v1970 = vsel %vm813, %v1958, 0.0
        %1971 = vadd.xlane.f32.xlu0 %v1970
        %v1972 = vpop.xlane.xlu0 %1971
        %v1973 = vrcp.pop 32.0
        %v1974 = vmul.f32 %v1963, %v1973
        %v1975 = vmul.f32 %v1966, %v1973
        %v1976 = vmul.f32 %v1969, %v1973
        %v1977 = vmul.f32 %v1972, %v1973
        %v1978 = vsub.f32 %v1955, %v1974
        %v1979 = vsub.f32 %v1956, %v1975
        %v1980 = vsub.f32 %v1957, %v1976
        %v1981 = vsub.f32 %v1958, %v1977
        %v1982 = vmul.f32 %v1978, %v1978
        %v1983 = vmul.f32 %v1979, %v1979
        %v1984 = vmul.f32 %v1980, %v1980
        %v1985 = vmul.f32 %v1981, %v1981
        %v1986 = vsel %vm813, %v1982, 0.0
        %1987 = vadd.xlane.f32.xlu0 %v1986
        %v1988 = vpop.xlane.xlu0 %1987
        %v1989 = vsel %vm813, %v1983, 0.0
        %1990 = vadd.xlane.f32.xlu0 %v1989
        %v1991 = vpop.xlane.xlu0 %1990
        %v1992 = vsel %vm813, %v1984, 0.0
        %1993 = vadd.xlane.f32.xlu0 %v1992
        %v1994 = vpop.xlane.xlu0 %1993
        %v1995 = vsel %vm813, %v1985, 0.0
        %1996 = vadd.xlane.f32.xlu0 %v1995
        %v1997 = vpop.xlane.xlu0 %1996
        %v1998 = vmul.f32 %v1988, %v1973
        %v1999 = vmul.f32 %v1991, %v1973
        %v2000 = vmul.f32 %v1994, %v1973
        %v2001 = vmul.f32 %v1997, %v1973
        %v2002 = vadd.f32 %v1998, 1e-05
        %v2003 = vadd.f32 %v1999, 1e-05
        %v2004 = vadd.f32 %v2000, 1e-05
        %v2005 = vadd.f32 %v2001, 1e-05
        %v2006 = vrsqrt.pop %v2002
        %v2007 = vrsqrt.pop %v2003
        %v2008 = vrsqrt.pop %v2004
        %v2009 = vrsqrt.pop %v2005
        %v2010 = vmul.f32 %v1978, %v2006
        %v2011 = vmul.f32 %v1979, %v2007
        %v2012 = vmul.f32 %v1980, %v2008
        %v2013 = vmul.f32 %v1981, %v2009
        %v2015 = vlaneseq
        %v2016 = vshrl.u32 %v2015, 7
        %v2017 = vsub.s32 0, %v2016
        %v2018 = vrot.slane %v1959, %v2017
        %v2020 = vmul.f32 %v2010, %v2018
        %v2021 = vmul.f32 %v2011, %v2018
        %v2022 = vmul.f32 %v2012, %v2018
        %v2023 = vmul.f32 %v2013, %v2018
        %v2025 = vlaneseq
        %v2026 = vshrl.u32 %v2025, 7
        %v2027 = vsub.s32 0, %v2026
        %v2028 = vrot.slane %v1960, %v2027
        %v2030 = vadd.f32 %v2020, %v2028
        %v2031 = vadd.f32 %v2021, %v2028
        %v2032 = vadd.f32 %v2022, %v2028
        %v2033 = vadd.f32 %v2023, %v2028
        %v2034 = vld [vmem:[#allocation5] sm:$0xf]
        %v2035 = vld [vmem:[#allocation5 + $0x4] sm:$0xf]
        %v2036 = vld [vmem:[#allocation5 + $0x8] sm:$0xf]
        %v2037 = vld [vmem:[#allocation5 + $0xc] sm:$0xf]
        %v2038 = vpack.c.bf16 %v2031, %v2030
        %v2039 = vpack.c.bf16 %v2033, %v2032
        %v2040 = vld [vmem:[%s8] sm:$0x1]
        %v2042 = vlaneseq
        %v2043 = vshrl.u32 %v2042, 7
        %v2044 = vsub.s32 0, %v2043
        %v2045 = vrot.slane %v2040, %v2044
        %v2051 = vunpack.c.l.b16 %v2034
        %v2052 = vunpack.c.l.b16 %v2035
        %v2053 = vunpack.c.l.b16 %v2036
        %v2054 = vunpack.c.l.b16 %v2037
        %v2055 = vpack.c.b16 %v2052, %v2051
        %v2056 = vpack.c.b16 %v2054, %v2053
        %v2060 = vsel %vm813, %v2038, 0
        %v2063 = vsel %vm813, %v2039, 0
        %2065 = vmatprep.subr.bf16.mxu0 0
        %2066 = vmatpush1.bf16.msra.mxu0 %v2055
        %2067 = vmatprep.subr.bf16.mxu0 0
        %2068 = vmatpush1.bf16.msra.mxu0 %v2056
        %2069 = vmatprep.subr.bf16.mxu0 0
        %2070 = vmatpush1.bf16.msra.mxu0 0
        %2071 = vmatprep.subr.bf16.mxu0 0
        %2072 = vmatpush1.bf16.msra.mxu0 0
        %2073 = vmatprep.subr.bf16.mxu0 0
        %2074 = vmatpush1.bf16.msra.mxu0 0
        %2075 = vmatprep.subr.bf16.mxu0 0
        %2076 = vmatpush1.bf16.msra.mxu0 0
        %2077 = vmatprep.subr.bf16.mxu0 0
        %2078 = vmatpush1.bf16.msra.mxu0 0
        %2079 = vmatprep.subr.bf16.mxu0 0
        %2080 = vmatpush1.bf16.msra.mxu0 0
        %2081 = vmatprep.subr.bf16.mxu0 0
        %2082 = vmatpush1.bf16.msra.mxu0 0
        %2083 = vmatprep.subr.bf16.mxu0 0
        %2084 = vmatpush1.bf16.msra.mxu0 0
        %2085 = vmatprep.subr.bf16.mxu0 0
        %2086 = vmatpush1.bf16.msra.mxu0 0
        %2087 = vmatprep.subr.bf16.mxu0 0
        %2088 = vmatpush1.bf16.msra.mxu0 0
        %2089 = vmatprep.subr.bf16.mxu0 0
        %2090 = vmatpush1.bf16.msra.mxu0 0
        %2091 = vmatprep.subr.bf16.mxu0 0
        %2092 = vmatpush1.bf16.msra.mxu0 0
        %2093 = vmatprep.subr.bf16.mxu0 0
        %2094 = vmatpush1.bf16.msra.mxu0 0
        %2095 = vmatprep.subr.bf16.mxu0 0
        %2096 = vmatpush1.bf16.msra.mxu0 0
        %2097 = vmatprep.mubr.bf16.mxu0 0
        %2098 = vmatmul.mubr.bf16.gmra.mrb[0].mxu0 %v2060
        %v2099 = vpop.f32.mrb[0].mxu0
        %v2100 = vadd.f32 %v2045, %v2099
        %v2101 = vpop.f32.mrb[0].mxu0
        %v2102 = vpop.f32.mrb[0].mxu0
        %v2103 = vadd.f32 %v2045, %v2102
        %v2104 = vpop.f32.mrb[0].mxu0
        %2105 = vmatprep.mubr.bf16.mxu0 0
        %2106 = vmatmul.mubr.bf16.gmra.mrb[0].mxu0 %v2063
        %v2107 = vpop.f32.mrb[0].mxu0
        %v2108 = vadd.f32 %v2045, %v2107
        %v2109 = vpop.f32.mrb[0].mxu0
        %v2110 = vpop.f32.mrb[0].mxu0
        %v2111 = vadd.f32 %v2045, %v2110
        %v2112 = vpop.f32.mrb[0].mxu0
        %2113 = vdwg.mxu0
        %v2114 = vmax.f32 %v2100, 0.0
        %v2115 = vmax.f32 %v2103, 0.0
        %v2116 = vmax.f32 %v2108, 0.0
        %v2117 = vmax.f32 %v2111, 0.0
        %v2118 = vld [vmem:[%s9] sm:$0xf]
        %v2119 = vld [vmem:[%s9 + $0x4] sm:$0xf]
        %v2120 = vld [vmem:[%s9 + $0x8] sm:$0xf]
        %v2121 = vld [vmem:[%s9 + $0xc] sm:$0xf]
        %v2122 = vld [vmem:[%s9 + $0x10] sm:$0xf]
        %v2123 = vld [vmem:[%s9 + $0x14] sm:$0xf]
        %v2124 = vld [vmem:[%s9 + $0x18] sm:$0xf]
        %v2125 = vld [vmem:[%s9 + $0x1c] sm:$0xf]
        %v2126 = vpack.c.bf16 %v2115, %v2114
        %v2127 = vpack.c.bf16 %v2117, %v2116
        %v2128 = vld [vmem:[%s10] sm:$0x1]
        %v2130 = vlaneseq
        %v2131 = vshrl.u32 %v2130, 7
        %v2132 = vsub.s32 0, %v2131
        %v2133 = vrot.slane %v2128, %v2132
        %v2143 = vunpack.c.l.b16 %v2118
        %v2144 = vunpack.c.l.b16 %v2119
        %v2145 = vunpack.c.l.b16 %v2120
        %v2146 = vunpack.c.l.b16 %v2121
        %v2147 = vunpack.c.l.b16 %v2122
        %v2148 = vunpack.c.l.b16 %v2123
        %v2149 = vunpack.c.l.b16 %v2124
        %v2150 = vunpack.c.l.b16 %v2125
        %v2151 = vpack.c.b16 %v2144, %v2143
        %v2152 = vpack.c.b16 %v2146, %v2145
        %v2153 = vpack.c.b16 %v2148, %v2147
        %v2154 = vpack.c.b16 %v2150, %v2149
        %vm2159 = vcmask 523264
        %v2161 = vsel %vm2159, %v2126, 0
        %v2164 = vsel %vm2159, %v2127, 0
        %2166 = vmatprep.subr.bf16.mxu0 0
        %2167 = vmatpush1.bf16.msra.mxu0 %v2151
        %2168 = vmatprep.subr.bf16.mxu0 0
        %2169 = vmatpush1.bf16.msra.mxu0 %v2152
        %2170 = vmatprep.subr.bf16.mxu0 0
        %2171 = vmatpush1.bf16.msra.mxu0 %v2153
        %2172 = vmatprep.subr.bf16.mxu0 0
        %2173 = vmatpush1.bf16.msra.mxu0 %v2154
        %2174 = vmatprep.subr.bf16.mxu0 0
        %2175 = vmatpush1.bf16.msra.mxu0 0
        %2176 = vmatprep.subr.bf16.mxu0 0
        %2177 = vmatpush1.bf16.msra.mxu0 0
        %2178 = vmatprep.subr.bf16.mxu0 0
        %2179 = vmatpush1.bf16.msra.mxu0 0
        %2180 = vmatprep.subr.bf16.mxu0 0
        %2181 = vmatpush1.bf16.msra.mxu0 0
        %2182 = vmatprep.subr.bf16.mxu0 0
        %2183 = vmatpush1.bf16.msra.mxu0 0
        %2184 = vmatprep.subr.bf16.mxu0 0
        %2185 = vmatpush1.bf16.msra.mxu0 0
        %2186 = vmatprep.subr.bf16.mxu0 0
        %2187 = vmatpush1.bf16.msra.mxu0 0
        %2188 = vmatprep.subr.bf16.mxu0 0
        %2189 = vmatpush1.bf16.msra.mxu0 0
        %2190 = vmatprep.subr.bf16.mxu0 0
        %2191 = vmatpush1.bf16.msra.mxu0 0
        %2192 = vmatprep.subr.bf16.mxu0 0
        %2193 = vmatpush1.bf16.msra.mxu0 0
        %2194 = vmatprep.subr.bf16.mxu0 0
        %2195 = vmatpush1.bf16.msra.mxu0 0
        %2196 = vmatprep.subr.bf16.mxu0 0
        %2197 = vmatpush1.bf16.msra.mxu0 0
        %2198 = vmatprep.mubr.bf16.mxu0 0
        %2199 = vmatmul.mubr.bf16.gmra.mrb[0].mxu0 %v2161
        %v2200 = vpop.f32.mrb[0].mxu0
        %v2201 = vadd.f32 %v2133, %v2200
        %v2202 = vpop.f32.mrb[0].mxu0
        %v2203 = vpop.f32.mrb[0].mxu0
        %v2204 = vadd.f32 %v2133, %v2203
        %v2205 = vpop.f32.mrb[0].mxu0
        %2206 = vmatprep.mubr.bf16.mxu0 0
        %2207 = vmatmul.mubr.bf16.gmra.mrb[0].mxu0 %v2164
        %v2208 = vpop.f32.mrb[0].mxu0
        %v2209 = vadd.f32 %v2133, %v2208
        %v2210 = vpop.f32.mrb[0].mxu0
        %v2211 = vpop.f32.mrb[0].mxu0
        %v2212 = vadd.f32 %v2133, %v2211
        %v2213 = vpop.f32.mrb[0].mxu0
        %2214 = vdwg.mxu0
        %v2215 = vadd.f32 %v2030, %v2201
        %v2216 = vadd.f32 %v2031, %v2204
        %v2217 = vadd.f32 %v2032, %v2209
        %v2218 = vadd.f32 %v2033, %v2212
        %v2219 = vld [vmem:[#allocation8] sm:$0x1]
        %v2220 = vld [vmem:[#allocation10] sm:$0x1]
        %v2221 = vsel %vm813, %v2215, 0.0
        %2222 = vadd.xlane.f32.xlu0 %v2221
        %v2223 = vpop.xlane.xlu0 %2222
        %v2224 = vsel %vm813, %v2216, 0.0
        %2225 = vadd.xlane.f32.xlu0 %v2224
        %v2226 = vpop.xlane.xlu0 %2225
        %v2227 = vsel %vm813, %v2217, 0.0
        %2228 = vadd.xlane.f32.xlu0 %v2227
        %v2229 = vpop.xlane.xlu0 %2228
        %v2230 = vsel %vm813, %v2218, 0.0
        %2231 = vadd.xlane.f32.xlu0 %v2230
        %v2232 = vpop.xlane.xlu0 %2231
        %v2233 = vmul.f32 %v2223, %v1973
        %v2234 = vmul.f32 %v2226, %v1973
        %v2235 = vmul.f32 %v2229, %v1973
        %v2236 = vmul.f32 %v2232, %v1973
        %v2237 = vsub.f32 %v2215, %v2233
        %v2238 = vsub.f32 %v2216, %v2234
        %v2239 = vsub.f32 %v2217, %v2235
        %v2240 = vsub.f32 %v2218, %v2236
        %v2241 = vmul.f32 %v2237, %v2237
        %v2242 = vmul.f32 %v2238, %v2238
        %v2243 = vmul.f32 %v2239, %v2239
        %v2244 = vmul.f32 %v2240, %v2240
        %v2245 = vsel %vm813, %v2241, 0.0
        %2246 = vadd.xlane.f32.xlu0 %v2245
        %v2247 = vpop.xlane.xlu0 %2246
        %v2248 = vsel %vm813, %v2242, 0.0
        %2249 = vadd.xlane.f32.xlu0 %v2248
        %v2250 = vpop.xlane.xlu0 %2249
        %v2251 = vsel %vm813, %v2243, 0.0
        %2252 = vadd.xlane.f32.xlu0 %v2251
        %v2253 = vpop.xlane.xlu0 %2252
        %v2254 = vsel %vm813, %v2244, 0.0
        %2255 = vadd.xlane.f32.xlu0 %v2254
        %v2256 = vpop.xlane.xlu0 %2255
        %v2257 = vmul.f32 %v2247, %v1973
        %v2258 = vmul.f32 %v2250, %v1973
        %v2259 = vmul.f32 %v2253, %v1973
        %v2260 = vmul.f32 %v2256, %v1973
        %v2261 = vadd.f32 %v2257, 1e-05
        %v2262 = vadd.f32 %v2258, 1e-05
        %v2263 = vadd.f32 %v2259, 1e-05
        %v2264 = vadd.f32 %v2260, 1e-05
        %v2265 = vrsqrt.pop %v2261
        %v2266 = vrsqrt.pop %v2262
        %v2267 = vrsqrt.pop %v2263
        %v2268 = vrsqrt.pop %v2264
        %v2269 = vmul.f32 %v2237, %v2265
        %v2270 = vmul.f32 %v2238, %v2266
        %v2271 = vmul.f32 %v2239, %v2267
        %v2272 = vmul.f32 %v2240, %v2268
        %v2274 = vlaneseq
        %v2275 = vshrl.u32 %v2274, 7
        %v2276 = vsub.s32 0, %v2275
        %v2277 = vrot.slane %v2219, %v2276
        %v2279 = vmul.f32 %v2269, %v2277
        %v2280 = vmul.f32 %v2270, %v2277
        %v2281 = vmul.f32 %v2271, %v2277
        %v2282 = vmul.f32 %v2272, %v2277
        %v2284 = vlaneseq
        %v2285 = vshrl.u32 %v2284, 7
        %v2286 = vsub.s32 0, %v2285
        %v2287 = vrot.slane %v2220, %v2286
        %v2289 = vadd.f32 %v2279, %v2287
        %v2290 = vadd.f32 %v2280, %v2287
        %v2291 = vadd.f32 %v2281, %v2287
        %v2292 = vadd.f32 %v2282, %v2287
        %2293 = vst.msk [vmem:[%s729] sm:$0xff] %vm813, %v2289
        %2295 = vrot.lane.b32.xlu0 %v2290, 32
        %v2296 = vpop.permute.xlu0 %2295
        %vm2298 = vcmask 523520
        %2299 = vst.msk [vmem:[%s729] sm:$0xff] %vm2298, %v2296
        %2301 = vrot.lane.b32.xlu0 %v2291, 64
        %v2302 = vpop.permute.xlu0 %2301
        %vm2304 = vcmask 785920
        %2305 = vst.msk [vmem:[%s729] sm:$0xff] %vm2304, %v2302
        %2307 = vrot.lane.b32.xlu0 %v2292, 96
        %v2308 = vpop.permute.xlu0 %2307
        %vm2310 = vcmask 1048320
        %2311 = vst.msk [vmem:[%s729] sm:$0xff] %vm2310, %v2308
        %s2312 = scalar_lea.vmem [#allocation3], 16
        %v2313 = vld [vmem:[%s2312] sm:$0xf]
        %v2314 = vld [vmem:[%s2312 + $0x4] sm:$0xf]
        %v2315 = vld [vmem:[%s2312 + $0x8] sm:$0xf]
        %v2316 = vld [vmem:[%s2312 + $0xc] sm:$0xf]
        %s2317 = scalar_lea.vmem %s3, 16
        %v2318 = vld [vmem:[%s2317] sm:$0xf]
        %v2319 = vld [vmem:[%s2317 + $0x4] sm:$0xf]
        %v2320 = vld [vmem:[%s2317 + $0x8] sm:$0xf]
        %v2321 = vld [vmem:[%s2317 + $0xc] sm:$0xf]
        %v2322 = vpack.c.bf16 %v2290, %v2289
        %v2323 = vpack.c.bf16 %v2292, %v2291
        %s2324 = scalar_lea.vmem %s4, 1
        %v2325 = vld [vmem:[%s2324] sm:$0x1]
        %v2327 = vlaneseq
        %v2328 = vshrl.u32 %v2327, 7
        %v2329 = vsub.s32 0, %v2328
        %v2330 = vrot.slane %v2325, %v2329
        %v2336 = vunpack.c.l.b16 %v2318
        %v2337 = vunpack.c.l.b16 %v2319
        %v2338 = vunpack.c.l.b16 %v2320
        %v2339 = vunpack.c.l.b16 %v2321
        %v2340 = vpack.c.b16 %v2337, %v2336
        %v2341 = vpack.c.b16 %v2339, %v2338
        %v2345 = vsel %vm813, %v2322, 0
        %v2348 = vsel %vm813, %v2323, 0
        %2350 = vmatprep.subr.bf16.mxu0 0
        %2351 = vmatpush1.bf16.msra.mxu0 %v2340
        %2352 = vmatprep.subr.bf16.mxu0 0
        %2353 = vmatpush1.bf16.msra.mxu0 %v2341
        %2354 = vmatprep.subr.bf16.mxu0 0
        %2355 = vmatpush1.bf16.msra.mxu0 0
        %2356 = vmatprep.subr.bf16.mxu0 0
        %2357 = vmatpush1.bf16.msra.mxu0 0
        %2358 = vmatprep.subr.bf16.mxu0 0
        %2359 = vmatpush1.bf16.msra.mxu0 0
        %2360 = vmatprep.subr.bf16.mxu0 0
        %2361 = vmatpush1.bf16.msra.mxu0 0
        %2362 = vmatprep.subr.bf16.mxu0 0
        %2363 = vmatpush1.bf16.msra.mxu0 0
        %2364 = vmatprep.subr.bf16.mxu0 0
        %2365 = vmatpush1.bf16.msra.mxu0 0
        %2366 = vmatprep.subr.bf16.mxu0 0
        %2367 = vmatpush1.bf16.msra.mxu0 0
        %2368 = vmatprep.subr.bf16.mxu0 0
        %2369 = vmatpush1.bf16.msra.mxu0 0
        %2370 = vmatprep.subr.bf16.mxu0 0
        %2371 = vmatpush1.bf16.msra.mxu0 0
        %2372 = vmatprep.subr.bf16.mxu0 0
        %2373 = vmatpush1.bf16.msra.mxu0 0
        %2374 = vmatprep.subr.bf16.mxu0 0
        %2375 = vmatpush1.bf16.msra.mxu0 0
        %2376 = vmatprep.subr.bf16.mxu0 0
        %2377 = vmatpush1.bf16.msra.mxu0 0
        %2378 = vmatprep.subr.bf16.mxu0 0
        %2379 = vmatpush1.bf16.msra.mxu0 0
        %2380 = vmatprep.subr.bf16.mxu0 0
        %2381 = vmatpush1.bf16.msra.mxu0 0
        %2382 = vmatprep.mubr.bf16.mxu0 0
        %2383 = vmatmul.mubr.bf16.gmra.mrb[0].mxu0 %v2345
        %v2384 = vpop.f32.mrb[0].mxu0
        %v2385 = vadd.f32 %v2330, %v2384
        %v2386 = vpop.f32.mrb[0].mxu0
        %v2387 = vpop.f32.mrb[0].mxu0
        %v2388 = vadd.f32 %v2330, %v2387
        %v2389 = vpop.f32.mrb[0].mxu0
        %2390 = vmatprep.mubr.bf16.mxu0 0
        %2391 = vmatmul.mubr.bf16.gmra.mrb[0].mxu0 %v2348
        %v2392 = vpop.f32.mrb[0].mxu0
        %v2393 = vadd.f32 %v2330, %v2392
        %v2394 = vpop.f32.mrb[0].mxu0
        %v2395 = vpop.f32.mrb[0].mxu0
        %v2396 = vadd.f32 %v2330, %v2395
        %v2397 = vpop.f32.mrb[0].mxu0
        %2398 = vdwg.mxu0
        %v2399 = vpack.c.bf16 %v2388, %v2385
        %v2400 = vpack.c.bf16 %v2396, %v2393
        %2403 = vrot.lane.b32.xlu0 %v2399, 96
        %v2404 = vpop.permute.xlu0 %2403
        %2405 = vrot.lane.b32.xlu0 %v2400, 96
        %v2406 = vpop.permute.xlu0 %2405
        %v2408 = vsel %vm999, %v2399, 0
        %v2411 = vsel %vm999, %v2400, 0
        %v2414 = vsel %vm999, %v2404, 0
        %v2417 = vsel %vm999, %v2406, 0
        %2419 = vmatprep.subr.bf16.mxu0 0
        %2420 = vmatpush1.bf16.xpose.msra.mxu0 %v2414
        %2421 = vmatprep.subr.bf16.mxu0 0
        %2422 = vmatpush1.bf16.xpose.msra.mxu0 %v2417
        %2423 = vmatprep.subr.bf16.mxu0 0
        %2424 = vmatpush1.bf16.xpose.msra.mxu0 0
        %2425 = vmatprep.subr.bf16.mxu0 0
        %2426 = vmatpush1.bf16.xpose.msra.mxu0 0
        %2427 = vmatprep.subr.bf16.mxu0 0
        %2428 = vmatpush1.bf16.xpose.msra.mxu0 0
        %2429 = vmatprep.subr.bf16.mxu0 0
        %2430 = vmatpush1.bf16.xpose.msra.mxu0 0
        %2431 = vmatprep.subr.bf16.mxu0 0
        %2432 = vmatpush1.bf16.xpose.msra.mxu0 0
        %2433 = vmatprep.subr.bf16.mxu0 0
        %2434 = vmatpush1.bf16.xpose.msra.mxu0 0
        %2435 = vmatprep.subr.bf16.mxu0 0
        %2436 = vmatpush1.bf16.xpose.msra.mxu0 0
        %2437 = vmatprep.subr.bf16.mxu0 0
        %2438 = vmatpush1.bf16.xpose.msra.mxu0 0
        %2439 = vmatprep.subr.bf16.mxu0 0
        %2440 = vmatpush1.bf16.xpose.msra.mxu0 0
        %2441 = vmatprep.subr.bf16.mxu0 0
        %2442 = vmatpush1.bf16.xpose.msra.mxu0 0
        %2443 = vmatprep.subr.bf16.mxu0 0
        %2444 = vmatpush1.bf16.xpose.msra.mxu0 0
        %2445 = vmatprep.subr.bf16.mxu0 0
        %2446 = vmatpush1.bf16.xpose.msra.mxu0 0
        %2447 = vmatprep.subr.bf16.mxu0 0
        %2448 = vmatpush1.bf16.xpose.msra.mxu0 0
        %2449 = vmatprep.subr.bf16.mxu0 0
        %2450 = vmatpush1.bf16.xpose.msra.mxu0 0
        %2451 = vmatprep.mubr.bf16.mxu0 0
        %2452 = vmatmul.mubr.bf16.gmra.mrb[0].mxu0 %v2408
        %v2453 = vpop.f32.mrb[0].mxu0
        %v2454 = vadd.f32 %v903, %v2453
        %v2455 = vpop.f32.mrb[0].mxu0
        %v2456 = vpop.f32.mrb[0].mxu0
        %v2457 = vadd.f32 %v904, %v2456
        %v2458 = vpop.f32.mrb[0].mxu0
        %2459 = vmatprep.mubr.bf16.mxu0 0
        %2460 = vmatmul.mubr.bf16.gmra.mrb[0].mxu0 %v2411
        %v2461 = vpop.f32.mrb[0].mxu0
        %v2462 = vadd.f32 %v905, %v2461
        %v2463 = vpop.f32.mrb[0].mxu0
        %v2464 = vpop.f32.mrb[0].mxu0
        %v2465 = vadd.f32 %v906, %v2464
        %v2466 = vpop.f32.mrb[0].mxu0
        %2467 = vdwg.mxu0
        %v2468 = vsel %vm813, %v2454, -inf
        %2469 = vmax.xlane.f32.xlu0 %v2468
        %v2470 = vpop.xlane.xlu0 %2469
        %v2471 = vsel %vm813, %v2457, -inf
        %2472 = vmax.xlane.f32.xlu0 %v2471
        %v2473 = vpop.xlane.xlu0 %2472
        %v2474 = vsel %vm813, %v2462, -inf
        %2475 = vmax.xlane.f32.xlu0 %v2474
        %v2476 = vpop.xlane.xlu0 %2475
        %v2477 = vsel %vm813, %v2465, -inf
        %2478 = vmax.xlane.f32.xlu0 %v2477
        %v2479 = vpop.xlane.xlu0 %2478
        %v2480 = vsub.f32 %v2454, %v2470
        %v2481 = vsub.f32 %v2457, %v2473
        %v2482 = vsub.f32 %v2462, %v2476
        %v2483 = vsub.f32 %v2465, %v2479
        %v2484 = vmul.f32 %v2480, 1.442695
        %v2485 = vpow.pop %v2484
        %v2486 = vmul.f32 %v2481, 1.442695
        %v2487 = vpow.pop %v2486
        %v2488 = vmul.f32 %v2482, 1.442695
        %v2489 = vpow.pop %v2488
        %v2490 = vmul.f32 %v2483, 1.442695
        %v2491 = vpow.pop %v2490
        %v2492 = vsel %vm813, %v2485, 0.0
        %2493 = vadd.xlane.f32.xlu0 %v2492
        %v2494 = vpop.xlane.xlu0 %2493
        %v2495 = vsel %vm813, %v2487, 0.0
        %2496 = vadd.xlane.f32.xlu0 %v2495
        %v2497 = vpop.xlane.xlu0 %2496
        %v2498 = vsel %vm813, %v2489, 0.0
        %2499 = vadd.xlane.f32.xlu0 %v2498
        %v2500 = vpop.xlane.xlu0 %2499
        %v2501 = vsel %vm813, %v2491, 0.0
        %2502 = vadd.xlane.f32.xlu0 %v2501
        %v2503 = vpop.xlane.xlu0 %2502
        %v2504 = vrcp.pop %v2494
        %v2505 = vmul.f32 %v2485, %v2504
        %v2506 = vrcp.pop %v2497
        %v2507 = vmul.f32 %v2487, %v2506
        %v2508 = vrcp.pop %v2500
        %v2509 = vmul.f32 %v2489, %v2508
        %v2510 = vrcp.pop %v2503
        %v2511 = vmul.f32 %v2491, %v2510
        %v2512 = vpack.c.bf16 %v2507, %v2505
        %v2513 = vpack.c.bf16 %v2511, %v2509
        %2514 = vrot.lane.b32.xlu0 %v2399, 64
        %v2515 = vpop.permute.xlu0 %2514
        %2516 = vrot.lane.b32.xlu0 %v2400, 64
        %v2517 = vpop.permute.xlu0 %2516
        %v2521 = vsel %vm813, %v2512, 0
        %v2524 = vsel %vm813, %v2513, 0
        %2526 = vmatprep.subr.bf16.mxu0 0
        %2527 = vmatpush1.bf16.msra.mxu0 %v2515
        %2528 = vmatprep.subr.bf16.mxu0 0
        %2529 = vmatpush1.bf16.msra.mxu0 %v2517
        %2530 = vmatprep.subr.bf16.mxu0 0
        %2531 = vmatpush1.bf16.msra.mxu0 0
        %2532 = vmatprep.subr.bf16.mxu0 0
        %2533 = vmatpush1.bf16.msra.mxu0 0
        %2534 = vmatprep.subr.bf16.mxu0 0
        %2535 = vmatpush1.bf16.msra.mxu0 0
        %2536 = vmatprep.subr.bf16.mxu0 0
        %2537 = vmatpush1.bf16.msra.mxu0 0
        %2538 = vmatprep.subr.bf16.mxu0 0
        %2539 = vmatpush1.bf16.msra.mxu0 0
        %2540 = vmatprep.subr.bf16.mxu0 0
        %2541 = vmatpush1.bf16.msra.mxu0 0
        %2542 = vmatprep.subr.bf16.mxu0 0
        %2543 = vmatpush1.bf16.msra.mxu0 0
        %2544 = vmatprep.subr.bf16.mxu0 0
        %2545 = vmatpush1.bf16.msra.mxu0 0
        %2546 = vmatprep.subr.bf16.mxu0 0
        %2547 = vmatpush1.bf16.msra.mxu0 0
        %2548 = vmatprep.subr.bf16.mxu0 0
        %2549 = vmatpush1.bf16.msra.mxu0 0
        %2550 = vmatprep.subr.bf16.mxu0 0
        %2551 = vmatpush1.bf16.msra.mxu0 0
        %2552 = vmatprep.subr.bf16.mxu0 0
        %2553 = vmatpush1.bf16.msra.mxu0 0
        %2554 = vmatprep.subr.bf16.mxu0 0
        %2555 = vmatpush1.bf16.msra.mxu0 0
        %2556 = vmatprep.subr.bf16.mxu0 0
        %2557 = vmatpush1.bf16.msra.mxu0 0
        %2558 = vmatprep.mubr.bf16.mxu0 0
        %2559 = vmatmul.mubr.bf16.gmra.mrb[0].mxu0 %v2521
        %v2560 = vpop.f32.mrb[0].mxu0
        %v2561 = vadd.f32 0.0, %v2560
        %v2562 = vpop.f32.mrb[0].mxu0
        %v2563 = vpop.f32.mrb[0].mxu0
        %v2564 = vadd.f32 0.0, %v2563
        %v2565 = vpop.f32.mrb[0].mxu0
        %2566 = vmatprep.mubr.bf16.mxu0 0
        %2567 = vmatmul.mubr.bf16.gmra.mrb[0].mxu0 %v2524
        %v2568 = vpop.f32.mrb[0].mxu0
        %v2569 = vadd.f32 0.0, %v2568
        %v2570 = vpop.f32.mrb[0].mxu0
        %v2571 = vpop.f32.mrb[0].mxu0
        %v2572 = vadd.f32 0.0, %v2571
        %v2573 = vpop.f32.mrb[0].mxu0
        %2574 = vdwg.mxu0
        %v2575 = vpack.c.bf16 %v2564, %v2561
        %v2576 = vpack.c.bf16 %v2572, %v2569
        %2577 = vrot.lane.b32.xlu0 %v2399, 120
        %v2578 = vpop.permute.xlu0 %2577
        %2579 = vrot.lane.b32.xlu0 %v2400, 120
        %v2580 = vpop.permute.xlu0 %2579
        %2581 = vrot.lane.b32.xlu0 %v2399, 88
        %v2582 = vpop.permute.xlu0 %2581
        %2583 = vrot.lane.b32.xlu0 %v2400, 88
        %v2584 = vpop.permute.xlu0 %2583
        %v2586 = vsel %vm999, %v2578, 0
        %v2589 = vsel %vm999, %v2580, 0
        %v2592 = vsel %vm999, %v2582, 0
        %v2595 = vsel %vm999, %v2584, 0
        %2597 = vmatprep.subr.bf16.mxu0 0
        %2598 = vmatpush1.bf16.xpose.msra.mxu0 %v2592
        %2599 = vmatprep.subr.bf16.mxu0 0
        %2600 = vmatpush1.bf16.xpose.msra.mxu0 %v2595
        %2601 = vmatprep.subr.bf16.mxu0 0
        %2602 = vmatpush1.bf16.xpose.msra.mxu0 0
        %2603 = vmatprep.subr.bf16.mxu0 0
        %2604 = vmatpush1.bf16.xpose.msra.mxu0 0
        %2605 = vmatprep.subr.bf16.mxu0 0
        %2606 = vmatpush1.bf16.xpose.msra.mxu0 0
        %2607 = vmatprep.subr.bf16.mxu0 0
        %2608 = vmatpush1.bf16.xpose.msra.mxu0 0
        %2609 = vmatprep.subr.bf16.mxu0 0
        %2610 = vmatpush1.bf16.xpose.msra.mxu0 0
        %2611 = vmatprep.subr.bf16.mxu0 0
        %2612 = vmatpush1.bf16.xpose.msra.mxu0 0
        %2613 = vmatprep.subr.bf16.mxu0 0
        %2614 = vmatpush1.bf16.xpose.msra.mxu0 0
        %2615 = vmatprep.subr.bf16.mxu0 0
        %2616 = vmatpush1.bf16.xpose.msra.mxu0 0
        %2617 = vmatprep.subr.bf16.mxu0 0
        %2618 = vmatpush1.bf16.xpose.msra.mxu0 0
        %2619 = vmatprep.subr.bf16.mxu0 0
        %2620 = vmatpush1.bf16.xpose.msra.mxu0 0
        %2621 = vmatprep.subr.bf16.mxu0 0
        %2622 = vmatpush1.bf16.xpose.msra.mxu0 0
        %2623 = vmatprep.subr.bf16.mxu0 0
        %2624 = vmatpush1.bf16.xpose.msra.mxu0 0
        %2625 = vmatprep.subr.bf16.mxu0 0
        %2626 = vmatpush1.bf16.xpose.msra.mxu0 0
        %2627 = vmatprep.subr.bf16.mxu0 0
        %2628 = vmatpush1.bf16.xpose.msra.mxu0 0
        %2629 = vmatprep.mubr.bf16.mxu0 0
        %2630 = vmatmul.mubr.bf16.gmra.mrb[0].mxu0 %v2586
        %v2631 = vpop.f32.mrb[0].mxu0
        %v2632 = vadd.f32 %v903, %v2631
        %v2633 = vpop.f32.mrb[0].mxu0
        %v2634 = vpop.f32.mrb[0].mxu0
        %v2635 = vadd.f32 %v904, %v2634
        %v2636 = vpop.f32.mrb[0].mxu0
        %2637 = vmatprep.mubr.bf16.mxu0 0
        %2638 = vmatmul.mubr.bf16.gmra.mrb[0].mxu0 %v2589
        %v2639 = vpop.f32.mrb[0].mxu0
        %v2640 = vadd.f32 %v905, %v2639
        %v2641 = vpop.f32.mrb[0].mxu0
        %v2642 = vpop.f32.mrb[0].mxu0
        %v2643 = vadd.f32 %v906, %v2642
        %v2644 = vpop.f32.mrb[0].mxu0
        %2645 = vdwg.mxu0
        %v2646 = vsel %vm813, %v2632, -inf
        %2647 = vmax.xlane.f32.xlu0 %v2646
        %v2648 = vpop.xlane.xlu0 %2647
        %v2649 = vsel %vm813, %v2635, -inf
        %2650 = vmax.xlane.f32.xlu0 %v2649
        %v2651 = vpop.xlane.xlu0 %2650
        %v2652 = vsel %vm813, %v2640, -inf
        %2653 = vmax.xlane.f32.xlu0 %v2652
        %v2654 = vpop.xlane.xlu0 %2653
        %v2655 = vsel %vm813, %v2643, -inf
        %2656 = vmax.xlane.f32.xlu0 %v2655
        %v2657 = vpop.xlane.xlu0 %2656
        %v2658 = vsub.f32 %v2632, %v2648
        %v2659 = vsub.f32 %v2635, %v2651
        %v2660 = vsub.f32 %v2640, %v2654
        %v2661 = vsub.f32 %v2643, %v2657
        %v2662 = vmul.f32 %v2658, 1.442695
        %v2663 = vpow.pop %v2662
        %v2664 = vmul.f32 %v2659, 1.442695
        %v2665 = vpow.pop %v2664
        %v2666 = vmul.f32 %v2660, 1.442695
        %v2667 = vpow.pop %v2666
        %v2668 = vmul.f32 %v2661, 1.442695
        %v2669 = vpow.pop %v2668
        %v2670 = vsel %vm813, %v2663, 0.0
        %2671 = vadd.xlane.f32.xlu0 %v2670
        %v2672 = vpop.xlane.xlu0 %2671
        %v2673 = vsel %vm813, %v2665, 0.0
        %2674 = vadd.xlane.f32.xlu0 %v2673
        %v2675 = vpop.xlane.xlu0 %2674
        %v2676 = vsel %vm813, %v2667, 0.0
        %2677 = vadd.xlane.f32.xlu0 %v2676
        %v2678 = vpop.xlane.xlu0 %2677
        %v2679 = vsel %vm813, %v2669, 0.0
        %2680 = vadd.xlane.f32.xlu0 %v2679
        %v2681 = vpop.xlane.xlu0 %2680
        %v2682 = vrcp.pop %v2672
        %v2683 = vmul.f32 %v2663, %v2682
        %v2684 = vrcp.pop %v2675
        %v2685 = vmul.f32 %v2665, %v2684
        %v2686 = vrcp.pop %v2678
        %v2687 = vmul.f32 %v2667, %v2686
        %v2688 = vrcp.pop %v2681
        %v2689 = vmul.f32 %v2669, %v2688
        %v2690 = vpack.c.bf16 %v2685, %v2683
        %v2691 = vpack.c.bf16 %v2689, %v2687
        %2692 = vrot.lane.b32.xlu0 %v2399, 56
        %v2693 = vpop.permute.xlu0 %2692
        %2694 = vrot.lane.b32.xlu0 %v2400, 56
        %v2695 = vpop.permute.xlu0 %2694
        %v2699 = vsel %vm813, %v2690, 0
        %v2702 = vsel %vm813, %v2691, 0
        %2704 = vmatprep.subr.bf16.mxu0 0
        %2705 = vmatpush1.bf16.msra.mxu0 %v2693
        %2706 = vmatprep.subr.bf16.mxu0 0
        %2707 = vmatpush1.bf16.msra.mxu0 %v2695
        %2708 = vmatprep.subr.bf16.mxu0 0
        %2709 = vmatpush1.bf16.msra.mxu0 0
        %2710 = vmatprep.subr.bf16.mxu0 0
        %2711 = vmatpush1.bf16.msra.mxu0 0
        %2712 = vmatprep.subr.bf16.mxu0 0
        %2713 = vmatpush1.bf16.msra.mxu0 0
        %2714 = vmatprep.subr.bf16.mxu0 0
        %2715 = vmatpush1.bf16.msra.mxu0 0
        %2716 = vmatprep.subr.bf16.mxu0 0
        %2717 = vmatpush1.bf16.msra.mxu0 0
        %2718 = vmatprep.subr.bf16.mxu0 0
        %2719 = vmatpush1.bf16.msra.mxu0 0
        %2720 = vmatprep.subr.bf16.mxu0 0
        %2721 = vmatpush1.bf16.msra.mxu0 0
        %2722 = vmatprep.subr.bf16.mxu0 0
        %2723 = vmatpush1.bf16.msra.mxu0 0
        %2724 = vmatprep.subr.bf16.mxu0 0
        %2725 = vmatpush1.bf16.msra.mxu0 0
        %2726 = vmatprep.subr.bf16.mxu0 0
        %2727 = vmatpush1.bf16.msra.mxu0 0
        %2728 = vmatprep.subr.bf16.mxu0 0
        %2729 = vmatpush1.bf16.msra.mxu0 0
        %2730 = vmatprep.subr.bf16.mxu0 0
        %2731 = vmatpush1.bf16.msra.mxu0 0
        %2732 = vmatprep.subr.bf16.mxu0 0
        %2733 = vmatpush1.bf16.msra.mxu0 0
        %2734 = vmatprep.subr.bf16.mxu0 0
        %2735 = vmatpush1.bf16.msra.mxu0 0
        %2736 = vmatprep.mubr.bf16.mxu0 0
        %2737 = vmatmul.mubr.bf16.gmra.mrb[0].mxu0 %v2699
        %v2738 = vpop.f32.mrb[0].mxu0
        %v2739 = vadd.f32 0.0, %v2738
        %v2740 = vpop.f32.mrb[0].mxu0
        %v2741 = vpop.f32.mrb[0].mxu0
        %v2742 = vadd.f32 0.0, %v2741
        %v2743 = vpop.f32.mrb[0].mxu0
        %2744 = vmatprep.mubr.bf16.mxu0 0
        %2745 = vmatmul.mubr.bf16.gmra.mrb[0].mxu0 %v2702
        %v2746 = vpop.f32.mrb[0].mxu0
        %v2747 = vadd.f32 0.0, %v2746
        %v2748 = vpop.f32.mrb[0].mxu0
        %v2749 = vpop.f32.mrb[0].mxu0
        %v2750 = vadd.f32 0.0, %v2749
        %v2751 = vpop.f32.mrb[0].mxu0
        %2752 = vdwg.mxu0
        %v2753 = vpack.c.bf16 %v2742, %v2739
        %v2754 = vpack.c.bf16 %v2750, %v2747
        %v2756 = vsel %vm999, %v2753, 0
        %v2759 = vsel %vm999, %v2754, 0
        %v2762 = vsel %vm768, %v2314, 0
        %2764 = vmatprep.subr.bf16.mxu0 0
        %2765 = vmatpush1.bf16.msra.mxu0 %v2762
        %2766 = vmatprep.subr.bf16.mxu0 0
        %2767 = vmatpush1.bf16.msra.mxu0 0
        %2768 = vmatprep.subr.bf16.mxu0 0
        %2769 = vmatpush1.bf16.msra.mxu0 0
        %2770 = vmatprep.subr.bf16.mxu0 0
        %2771 = vmatpush1.bf16.msra.mxu0 0
        %2772 = vmatprep.subr.bf16.mxu0 0
        %2773 = vmatpush1.bf16.msra.mxu0 0
        %2774 = vmatprep.subr.bf16.mxu0 0
        %2775 = vmatpush1.bf16.msra.mxu0 0
        %2776 = vmatprep.subr.bf16.mxu0 0
        %2777 = vmatpush1.bf16.msra.mxu0 0
        %2778 = vmatprep.subr.bf16.mxu0 0
        %2779 = vmatpush1.bf16.msra.mxu0 0
        %2780 = vmatprep.subr.bf16.mxu0 0
        %2781 = vmatpush1.bf16.msra.mxu0 0
        %2782 = vmatprep.subr.bf16.mxu0 0
        %2783 = vmatpush1.bf16.msra.mxu0 0
        %2784 = vmatprep.subr.bf16.mxu0 0
        %2785 = vmatpush1.bf16.msra.mxu0 0
        %2786 = vmatprep.subr.bf16.mxu0 0
        %2787 = vmatpush1.bf16.msra.mxu0 0
        %2788 = vmatprep.subr.bf16.mxu0 0
        %2789 = vmatpush1.bf16.msra.mxu0 0
        %2790 = vmatprep.subr.bf16.mxu0 0
        %2791 = vmatpush1.bf16.msra.mxu0 0
        %2792 = vmatprep.subr.bf16.mxu0 0
        %2793 = vmatpush1.bf16.msra.mxu0 0
        %2794 = vmatprep.subr.bf16.mxu0 0
        %2795 = vmatpush1.bf16.msra.mxu0 0
        %2796 = vmatprep.mubr.bf16.mxu0 0
        %2797 = vmatmul.mubr.bf16.gmra.mrb[0].mxu0 %v2756
        %v2798 = vpop.f32.mrb[0].mxu0
        %v2799 = vadd.f32 0.0, %v2798
        %v2800 = vpop.f32.mrb[0].mxu0
        %v2801 = vpop.f32.mrb[0].mxu0
        %v2802 = vadd.f32 0.0, %v2801
        %v2803 = vpop.f32.mrb[0].mxu0
        %2804 = vmatprep.mubr.bf16.mxu0 0
        %2805 = vmatmul.mubr.bf16.gmra.mrb[0].mxu0 %v2759
        %v2806 = vpop.f32.mrb[0].mxu0
        %v2807 = vadd.f32 0.0, %v2806
        %v2808 = vpop.f32.mrb[0].mxu0
        %v2809 = vpop.f32.mrb[0].mxu0
        %v2810 = vadd.f32 0.0, %v2809
        %v2811 = vpop.f32.mrb[0].mxu0
        %2812 = vdwg.mxu0
        %v2814 = vsel %vm999, %v2575, 0
        %v2817 = vsel %vm999, %v2576, 0
        %v2820 = vsel %vm768, %v2313, 0
        %2822 = vmatprep.subr.bf16.mxu0 0
        %2823 = vmatpush1.bf16.msra.mxu0 %v2820
        %2824 = vmatprep.subr.bf16.mxu0 0
        %2825 = vmatpush1.bf16.msra.mxu0 0
        %2826 = vmatprep.subr.bf16.mxu0 0
        %2827 = vmatpush1.bf16.msra.mxu0 0
        %2828 = vmatprep.subr.bf16.mxu0 0
        %2829 = vmatpush1.bf16.msra.mxu0 0
        %2830 = vmatprep.subr.bf16.mxu0 0
        %2831 = vmatpush1.bf16.msra.mxu0 0
        %2832 = vmatprep.subr.bf16.mxu0 0
        %2833 = vmatpush1.bf16.msra.mxu0 0
        %2834 = vmatprep.subr.bf16.mxu0 0
        %2835 = vmatpush1.bf16.msra.mxu0 0
        %2836 = vmatprep.subr.bf16.mxu0 0
        %2837 = vmatpush1.bf16.msra.mxu0 0
        %2838 = vmatprep.subr.bf16.mxu0 0
        %2839 = vmatpush1.bf16.msra.mxu0 0
        %2840 = vmatprep.subr.bf16.mxu0 0
        %2841 = vmatpush1.bf16.msra.mxu0 0
        %2842 = vmatprep.subr.bf16.mxu0 0
        %2843 = vmatpush1.bf16.msra.mxu0 0
        %2844 = vmatprep.subr.bf16.mxu0 0
        %2845 = vmatpush1.bf16.msra.mxu0 0
        %2846 = vmatprep.subr.bf16.mxu0 0
        %2847 = vmatpush1.bf16.msra.mxu0 0
        %2848 = vmatprep.subr.bf16.mxu0 0
        %2849 = vmatpush1.bf16.msra.mxu0 0
        %2850 = vmatprep.subr.bf16.mxu0 0
        %2851 = vmatpush1.bf16.msra.mxu0 0
        %2852 = vmatprep.subr.bf16.mxu0 0
        %2853 = vmatpush1.bf16.msra.mxu0 0
        %2854 = vmatprep.mubr.bf16.mxu0 0
        %2855 = vmatmul.mubr.bf16.gmra.mrb[0].mxu0 %v2814
        %v2856 = vpop.f32.mrb[0].mxu0
        %v2857 = vadd.f32 %v2799, %v2856
        %v2858 = vpop.f32.mrb[0].mxu0
        %v2859 = vpop.f32.mrb[0].mxu0
        %v2860 = vadd.f32 %v2802, %v2859
        %v2861 = vpop.f32.mrb[0].mxu0
        %2862 = vmatprep.mubr.bf16.mxu0 0
        %2863 = vmatmul.mubr.bf16.gmra.mrb[0].mxu0 %v2817
        %v2864 = vpop.f32.mrb[0].mxu0
        %v2865 = vadd.f32 %v2807, %v2864
        %v2866 = vpop.f32.mrb[0].mxu0
        %v2867 = vpop.f32.mrb[0].mxu0
        %v2868 = vadd.f32 %v2810, %v2867
        %v2869 = vpop.f32.mrb[0].mxu0
        %2870 = vdwg.mxu0
        %2871 = vrot.lane.b32.xlu0 %v2399, 112
        %v2872 = vpop.permute.xlu0 %2871
        %2873 = vrot.lane.b32.xlu0 %v2400, 112
        %v2874 = vpop.permute.xlu0 %2873
        %2875 = vrot.lane.b32.xlu0 %v2399, 80
        %v2876 = vpop.permute.xlu0 %2875
        %2877 = vrot.lane.b32.xlu0 %v2400, 80
        %v2878 = vpop.permute.xlu0 %2877
        %v2880 = vsel %vm999, %v2872, 0
        %v2883 = vsel %vm999, %v2874, 0
        %v2886 = vsel %vm999, %v2876, 0
        %v2889 = vsel %vm999, %v2878, 0
        %2891 = vmatprep.subr.bf16.mxu0 0
        %2892 = vmatpush1.bf16.xpose.msra.mxu0 %v2886
        %2893 = vmatprep.subr.bf16.mxu0 0
        %2894 = vmatpush1.bf16.xpose.msra.mxu0 %v2889
        %2895 = vmatprep.subr.bf16.mxu0 0
        %2896 = vmatpush1.bf16.xpose.msra.mxu0 0
        %2897 = vmatprep.subr.bf16.mxu0 0
        %2898 = vmatpush1.bf16.xpose.msra.mxu0 0
        %2899 = vmatprep.subr.bf16.mxu0 0
        %2900 = vmatpush1.bf16.xpose.msra.mxu0 0
        %2901 = vmatprep.subr.bf16.mxu0 0
        %2902 = vmatpush1.bf16.xpose.msra.mxu0 0
        %2903 = vmatprep.subr.bf16.mxu0 0
        %2904 = vmatpush1.bf16.xpose.msra.mxu0 0
        %2905 = vmatprep.subr.bf16.mxu0 0
        %2906 = vmatpush1.bf16.xpose.msra.mxu0 0
        %2907 = vmatprep.subr.bf16.mxu0 0
        %2908 = vmatpush1.bf16.xpose.msra.mxu0 0
        %2909 = vmatprep.subr.bf16.mxu0 0
        %2910 = vmatpush1.bf16.xpose.msra.mxu0 0
        %2911 = vmatprep.subr.bf16.mxu0 0
        %2912 = vmatpush1.bf16.xpose.msra.mxu0 0
        %2913 = vmatprep.subr.bf16.mxu0 0
        %2914 = vmatpush1.bf16.xpose.msra.mxu0 0
        %2915 = vmatprep.subr.bf16.mxu0 0
        %2916 = vmatpush1.bf16.xpose.msra.mxu0 0
        %2917 = vmatprep.subr.bf16.mxu0 0
        %2918 = vmatpush1.bf16.xpose.msra.mxu0 0
        %2919 = vmatprep.subr.bf16.mxu0 0
        %2920 = vmatpush1.bf16.xpose.msra.mxu0 0
        %2921 = vmatprep.subr.bf16.mxu0 0
        %2922 = vmatpush1.bf16.xpose.msra.mxu0 0
        %2923 = vmatprep.mubr.bf16.mxu0 0
        %2924 = vmatmul.mubr.bf16.gmra.mrb[0].mxu0 %v2880
        %v2925 = vpop.f32.mrb[0].mxu0
        %v2926 = vadd.f32 %v903, %v2925
        %v2927 = vpop.f32.mrb[0].mxu0
        %v2928 = vpop.f32.mrb[0].mxu0
        %v2929 = vadd.f32 %v904, %v2928
        %v2930 = vpop.f32.mrb[0].mxu0
        %2931 = vmatprep.mubr.bf16.mxu0 0
        %2932 = vmatmul.mubr.bf16.gmra.mrb[0].mxu0 %v2883
        %v2933 = vpop.f32.mrb[0].mxu0
        %v2934 = vadd.f32 %v905, %v2933
        %v2935 = vpop.f32.mrb[0].mxu0
        %v2936 = vpop.f32.mrb[0].mxu0
        %v2937 = vadd.f32 %v906, %v2936
        %v2938 = vpop.f32.mrb[0].mxu0
        %2939 = vdwg.mxu0
        %v2940 = vsel %vm813, %v2926, -inf
        %2941 = vmax.xlane.f32.xlu0 %v2940
        %v2942 = vpop.xlane.xlu0 %2941
        %v2943 = vsel %vm813, %v2929, -inf
        %2944 = vmax.xlane.f32.xlu0 %v2943
        %v2945 = vpop.xlane.xlu0 %2944
        %v2946 = vsel %vm813, %v2934, -inf
        %2947 = vmax.xlane.f32.xlu0 %v2946
        %v2948 = vpop.xlane.xlu0 %2947
        %v2949 = vsel %vm813, %v2937, -inf
        %2950 = vmax.xlane.f32.xlu0 %v2949
        %v2951 = vpop.xlane.xlu0 %2950
        %v2952 = vsub.f32 %v2926, %v2942
        %v2953 = vsub.f32 %v2929, %v2945
        %v2954 = vsub.f32 %v2934, %v2948
        %v2955 = vsub.f32 %v2937, %v2951
        %v2956 = vmul.f32 %v2952, 1.442695
        %v2957 = vpow.pop %v2956
        %v2958 = vmul.f32 %v2953, 1.442695
        %v2959 = vpow.pop %v2958
        %v2960 = vmul.f32 %v2954, 1.442695
        %v2961 = vpow.pop %v2960
        %v2962 = vmul.f32 %v2955, 1.442695
        %v2963 = vpow.pop %v2962
        %v2964 = vsel %vm813, %v2957, 0.0
        %2965 = vadd.xlane.f32.xlu0 %v2964
        %v2966 = vpop.xlane.xlu0 %2965
        %v2967 = vsel %vm813, %v2959, 0.0
        %2968 = vadd.xlane.f32.xlu0 %v2967
        %v2969 = vpop.xlane.xlu0 %2968
        %v2970 = vsel %vm813, %v2961, 0.0
        %2971 = vadd.xlane.f32.xlu0 %v2970
        %v2972 = vpop.xlane.xlu0 %2971
        %v2973 = vsel %vm813, %v2963, 0.0
        %2974 = vadd.xlane.f32.xlu0 %v2973
        %v2975 = vpop.xlane.xlu0 %2974
        %v2976 = vrcp.pop %v2966
        %v2977 = vmul.f32 %v2957, %v2976
        %v2978 = vrcp.pop %v2969
        %v2979 = vmul.f32 %v2959, %v2978
        %v2980 = vrcp.pop %v2972
        %v2981 = vmul.f32 %v2961, %v2980
        %v2982 = vrcp.pop %v2975
        %v2983 = vmul.f32 %v2963, %v2982
        %v2984 = vpack.c.bf16 %v2979, %v2977
        %v2985 = vpack.c.bf16 %v2983, %v2981
        %2986 = vrot.lane.b32.xlu0 %v2399, 48
        %v2987 = vpop.permute.xlu0 %2986
        %2988 = vrot.lane.b32.xlu0 %v2400, 48
        %v2989 = vpop.permute.xlu0 %2988
        %v2993 = vsel %vm813, %v2984, 0
        %v2996 = vsel %vm813, %v2985, 0
        %2998 = vmatprep.subr.bf16.mxu0 0
        %2999 = vmatpush1.bf16.msra.mxu0 %v2987
        %3000 = vmatprep.subr.bf16.mxu0 0
        %3001 = vmatpush1.bf16.msra.mxu0 %v2989
        %3002 = vmatprep.subr.bf16.mxu0 0
        %3003 = vmatpush1.bf16.msra.mxu0 0
        %3004 = vmatprep.subr.bf16.mxu0 0
        %3005 = vmatpush1.bf16.msra.mxu0 0
        %3006 = vmatprep.subr.bf16.mxu0 0
        %3007 = vmatpush1.bf16.msra.mxu0 0
        %3008 = vmatprep.subr.bf16.mxu0 0
        %3009 = vmatpush1.bf16.msra.mxu0 0
        %3010 = vmatprep.subr.bf16.mxu0 0
        %3011 = vmatpush1.bf16.msra.mxu0 0
        %3012 = vmatprep.subr.bf16.mxu0 0
        %3013 = vmatpush1.bf16.msra.mxu0 0
        %3014 = vmatprep.subr.bf16.mxu0 0
        %3015 = vmatpush1.bf16.msra.mxu0 0
        %3016 = vmatprep.subr.bf16.mxu0 0
        %3017 = vmatpush1.bf16.msra.mxu0 0
        %3018 = vmatprep.subr.bf16.mxu0 0
        %3019 = vmatpush1.bf16.msra.mxu0 0
        %3020 = vmatprep.subr.bf16.mxu0 0
        %3021 = vmatpush1.bf16.msra.mxu0 0
        %3022 = vmatprep.subr.bf16.mxu0 0
        %3023 = vmatpush1.bf16.msra.mxu0 0
        %3024 = vmatprep.subr.bf16.mxu0 0
        %3025 = vmatpush1.bf16.msra.mxu0 0
        %3026 = vmatprep.subr.bf16.mxu0 0
        %3027 = vmatpush1.bf16.msra.mxu0 0
        %3028 = vmatprep.subr.bf16.mxu0 0
        %3029 = vmatpush1.bf16.msra.mxu0 0
        %3030 = vmatprep.mubr.bf16.mxu0 0
        %3031 = vmatmul.mubr.bf16.gmra.mrb[0].mxu0 %v2993
        %v3032 = vpop.f32.mrb[0].mxu0
        %v3033 = vadd.f32 0.0, %v3032
        %v3034 = vpop.f32.mrb[0].mxu0
        %v3035 = vpop.f32.mrb[0].mxu0
        %v3036 = vadd.f32 0.0, %v3035
        %v3037 = vpop.f32.mrb[0].mxu0
        %3038 = vmatprep.mubr.bf16.mxu0 0
        %3039 = vmatmul.mubr.bf16.gmra.mrb[0].mxu0 %v2996
        %v3040 = vpop.f32.mrb[0].mxu0
        %v3041 = vadd.f32 0.0, %v3040
        %v3042 = vpop.f32.mrb[0].mxu0
        %v3043 = vpop.f32.mrb[0].mxu0
        %v3044 = vadd.f32 0.0, %v3043
        %v3045 = vpop.f32.mrb[0].mxu0
        %3046 = vdwg.mxu0
        %v3047 = vpack.c.bf16 %v3036, %v3033
        %v3048 = vpack.c.bf16 %v3044, %v3041
        %v3050 = vsel %vm999, %v3047, 0
        %v3053 = vsel %vm999, %v3048, 0
        %v3056 = vsel %vm768, %v2315, 0
        %3058 = vmatprep.subr.bf16.mxu0 0
        %3059 = vmatpush1.bf16.msra.mxu0 %v3056
        %3060 = vmatprep.subr.bf16.mxu0 0
        %3061 = vmatpush1.bf16.msra.mxu0 0
        %3062 = vmatprep.subr.bf16.mxu0 0
        %3063 = vmatpush1.bf16.msra.mxu0 0
        %3064 = vmatprep.subr.bf16.mxu0 0
        %3065 = vmatpush1.bf16.msra.mxu0 0
        %3066 = vmatprep.subr.bf16.mxu0 0
        %3067 = vmatpush1.bf16.msra.mxu0 0
        %3068 = vmatprep.subr.bf16.mxu0 0
        %3069 = vmatpush1.bf16.msra.mxu0 0
        %3070 = vmatprep.subr.bf16.mxu0 0
        %3071 = vmatpush1.bf16.msra.mxu0 0
        %3072 = vmatprep.subr.bf16.mxu0 0
        %3073 = vmatpush1.bf16.msra.mxu0 0
        %3074 = vmatprep.subr.bf16.mxu0 0
        %3075 = vmatpush1.bf16.msra.mxu0 0
        %3076 = vmatprep.subr.bf16.mxu0 0
        %3077 = vmatpush1.bf16.msra.mxu0 0
        %3078 = vmatprep.subr.bf16.mxu0 0
        %3079 = vmatpush1.bf16.msra.mxu0 0
        %3080 = vmatprep.subr.bf16.mxu0 0
        %3081 = vmatpush1.bf16.msra.mxu0 0
        %3082 = vmatprep.subr.bf16.mxu0 0
        %3083 = vmatpush1.bf16.msra.mxu0 0
        %3084 = vmatprep.subr.bf16.mxu0 0
        %3085 = vmatpush1.bf16.msra.mxu0 0
        %3086 = vmatprep.subr.bf16.mxu0 0
        %3087 = vmatpush1.bf16.msra.mxu0 0
        %3088 = vmatprep.subr.bf16.mxu0 0
        %3089 = vmatpush1.bf16.msra.mxu0 0
        %3090 = vmatprep.mubr.bf16.mxu0 0
        %3091 = vmatmul.mubr.bf16.gmra.mrb[0].mxu0 %v3050
        %v3092 = vpop.f32.mrb[0].mxu0
        %v3093 = vadd.f32 0.0, %v3092
        %v3094 = vpop.f32.mrb[0].mxu0
        %v3095 = vpop.f32.mrb[0].mxu0
        %v3096 = vadd.f32 0.0, %v3095
        %v3097 = vpop.f32.mrb[0].mxu0
        %3098 = vmatprep.mubr.bf16.mxu0 0
        %3099 = vmatmul.mubr.bf16.gmra.mrb[0].mxu0 %v3053
        %v3100 = vpop.f32.mrb[0].mxu0
        %v3101 = vadd.f32 0.0, %v3100
        %v3102 = vpop.f32.mrb[0].mxu0
        %v3103 = vpop.f32.mrb[0].mxu0
        %v3104 = vadd.f32 0.0, %v3103
        %v3105 = vpop.f32.mrb[0].mxu0
        %3106 = vdwg.mxu0
        %v3107 = vadd.f32 %v2857, %v3093
        %v3108 = vadd.f32 %v2860, %v3096
        %v3109 = vadd.f32 %v2865, %v3101
        %v3110 = vadd.f32 %v2868, %v3104
        %3111 = vrot.lane.b32.xlu0 %v2399, 104
        %v3112 = vpop.permute.xlu0 %3111
        %3113 = vrot.lane.b32.xlu0 %v2400, 104
        %v3114 = vpop.permute.xlu0 %3113
        %3115 = vrot.lane.b32.xlu0 %v2399, 72
        %v3116 = vpop.permute.xlu0 %3115
        %3117 = vrot.lane.b32.xlu0 %v2400, 72
        %v3118 = vpop.permute.xlu0 %3117
        %v3120 = vsel %vm999, %v3112, 0
        %v3123 = vsel %vm999, %v3114, 0
        %v3126 = vsel %vm999, %v3116, 0
        %v3129 = vsel %vm999, %v3118, 0
        %3131 = vmatprep.subr.bf16.mxu0 0
        %3132 = vmatpush1.bf16.xpose.msra.mxu0 %v3126
        %3133 = vmatprep.subr.bf16.mxu0 0
        %3134 = vmatpush1.bf16.xpose.msra.mxu0 %v3129
        %3135 = vmatprep.subr.bf16.mxu0 0
        %3136 = vmatpush1.bf16.xpose.msra.mxu0 0
        %3137 = vmatprep.subr.bf16.mxu0 0
        %3138 = vmatpush1.bf16.xpose.msra.mxu0 0
        %3139 = vmatprep.subr.bf16.mxu0 0
        %3140 = vmatpush1.bf16.xpose.msra.mxu0 0
        %3141 = vmatprep.subr.bf16.mxu0 0
        %3142 = vmatpush1.bf16.xpose.msra.mxu0 0
        %3143 = vmatprep.subr.bf16.mxu0 0
        %3144 = vmatpush1.bf16.xpose.msra.mxu0 0
        %3145 = vmatprep.subr.bf16.mxu0 0
        %3146 = vmatpush1.bf16.xpose.msra.mxu0 0
        %3147 = vmatprep.subr.bf16.mxu0 0
        %3148 = vmatpush1.bf16.xpose.msra.mxu0 0
        %3149 = vmatprep.subr.bf16.mxu0 0
        %3150 = vmatpush1.bf16.xpose.msra.mxu0 0
        %3151 = vmatprep.subr.bf16.mxu0 0
        %3152 = vmatpush1.bf16.xpose.msra.mxu0 0
        %3153 = vmatprep.subr.bf16.mxu0 0
        %3154 = vmatpush1.bf16.xpose.msra.mxu0 0
        %3155 = vmatprep.subr.bf16.mxu0 0
        %3156 = vmatpush1.bf16.xpose.msra.mxu0 0
        %3157 = vmatprep.subr.bf16.mxu0 0
        %3158 = vmatpush1.bf16.xpose.msra.mxu0 0
        %3159 = vmatprep.subr.bf16.mxu0 0
        %3160 = vmatpush1.bf16.xpose.msra.mxu0 0
        %3161 = vmatprep.subr.bf16.mxu0 0
        %3162 = vmatpush1.bf16.xpose.msra.mxu0 0
        %3163 = vmatprep.mubr.bf16.mxu0 0
        %3164 = vmatmul.mubr.bf16.gmra.mrb[0].mxu0 %v3120
        %v3165 = vpop.f32.mrb[0].mxu0
        %v3166 = vadd.f32 %v903, %v3165
        %v3167 = vpop.f32.mrb[0].mxu0
        %v3168 = vpop.f32.mrb[0].mxu0
        %v3169 = vadd.f32 %v904, %v3168
        %v3170 = vpop.f32.mrb[0].mxu0
        %3171 = vmatprep.mubr.bf16.mxu0 0
        %3172 = vmatmul.mubr.bf16.gmra.mrb[0].mxu0 %v3123
        %v3173 = vpop.f32.mrb[0].mxu0
        %v3174 = vadd.f32 %v905, %v3173
        %v3175 = vpop.f32.mrb[0].mxu0
        %v3176 = vpop.f32.mrb[0].mxu0
        %v3177 = vadd.f32 %v906, %v3176
        %v3178 = vpop.f32.mrb[0].mxu0
        %3179 = vdwg.mxu0
        %v3180 = vsel %vm813, %v3166, -inf
        %3181 = vmax.xlane.f32.xlu0 %v3180
        %v3182 = vpop.xlane.xlu0 %3181
        %v3183 = vsel %vm813, %v3169, -inf
        %3184 = vmax.xlane.f32.xlu0 %v3183
        %v3185 = vpop.xlane.xlu0 %3184
        %v3186 = vsel %vm813, %v3174, -inf
        %3187 = vmax.xlane.f32.xlu0 %v3186
        %v3188 = vpop.xlane.xlu0 %3187
        %v3189 = vsel %vm813, %v3177, -inf
        %3190 = vmax.xlane.f32.xlu0 %v3189
        %v3191 = vpop.xlane.xlu0 %3190
        %v3192 = vsub.f32 %v3166, %v3182
        %v3193 = vsub.f32 %v3169, %v3185
        %v3194 = vsub.f32 %v3174, %v3188
        %v3195 = vsub.f32 %v3177, %v3191
        %v3196 = vmul.f32 %v3192, 1.442695
        %v3197 = vpow.pop %v3196
        %v3198 = vmul.f32 %v3193, 1.442695
        %v3199 = vpow.pop %v3198
        %v3200 = vmul.f32 %v3194, 1.442695
        %v3201 = vpow.pop %v3200
        %v3202 = vmul.f32 %v3195, 1.442695
        %v3203 = vpow.pop %v3202
        %v3204 = vsel %vm813, %v3197, 0.0
        %3205 = vadd.xlane.f32.xlu0 %v3204
        %v3206 = vpop.xlane.xlu0 %3205
        %v3207 = vsel %vm813, %v3199, 0.0
        %3208 = vadd.xlane.f32.xlu0 %v3207
        %v3209 = vpop.xlane.xlu0 %3208
        %v3210 = vsel %vm813, %v3201, 0.0
        %3211 = vadd.xlane.f32.xlu0 %v3210
        %v3212 = vpop.xlane.xlu0 %3211
        %v3213 = vsel %vm813, %v3203, 0.0
        %3214 = vadd.xlane.f32.xlu0 %v3213
        %v3215 = vpop.xlane.xlu0 %3214
        %v3216 = vrcp.pop %v3206
        %v3217 = vmul.f32 %v3197, %v3216
        %v3218 = vrcp.pop %v3209
        %v3219 = vmul.f32 %v3199, %v3218
        %v3220 = vrcp.pop %v3212
        %v3221 = vmul.f32 %v3201, %v3220
        %v3222 = vrcp.pop %v3215
        %v3223 = vmul.f32 %v3203, %v3222
        %v3224 = vpack.c.bf16 %v3219, %v3217
        %v3225 = vpack.c.bf16 %v3223, %v3221
        %3226 = vrot.lane.b32.xlu0 %v2399, 40
        %v3227 = vpop.permute.xlu0 %3226
        %3228 = vrot.lane.b32.xlu0 %v2400, 40
        %v3229 = vpop.permute.xlu0 %3228
        %v3233 = vsel %vm813, %v3224, 0
        %v3236 = vsel %vm813, %v3225, 0
        %3238 = vmatprep.subr.bf16.mxu0 0
        %3239 = vmatpush1.bf16.msra.mxu0 %v3227
        %3240 = vmatprep.subr.bf16.mxu0 0
        %3241 = vmatpush1.bf16.msra.mxu0 %v3229
        %3242 = vmatprep.subr.bf16.mxu0 0
        %3243 = vmatpush1.bf16.msra.mxu0 0
        %3244 = vmatprep.subr.bf16.mxu0 0
        %3245 = vmatpush1.bf16.msra.mxu0 0
        %3246 = vmatprep.subr.bf16.mxu0 0
        %3247 = vmatpush1.bf16.msra.mxu0 0
        %3248 = vmatprep.subr.bf16.mxu0 0
        %3249 = vmatpush1.bf16.msra.mxu0 0
        %3250 = vmatprep.subr.bf16.mxu0 0
        %3251 = vmatpush1.bf16.msra.mxu0 0
        %3252 = vmatprep.subr.bf16.mxu0 0
        %3253 = vmatpush1.bf16.msra.mxu0 0
        %3254 = vmatprep.subr.bf16.mxu0 0
        %3255 = vmatpush1.bf16.msra.mxu0 0
        %3256 = vmatprep.subr.bf16.mxu0 0
        %3257 = vmatpush1.bf16.msra.mxu0 0
        %3258 = vmatprep.subr.bf16.mxu0 0
        %3259 = vmatpush1.bf16.msra.mxu0 0
        %3260 = vmatprep.subr.bf16.mxu0 0
        %3261 = vmatpush1.bf16.msra.mxu0 0
        %3262 = vmatprep.subr.bf16.mxu0 0
        %3263 = vmatpush1.bf16.msra.mxu0 0
        %3264 = vmatprep.subr.bf16.mxu0 0
        %3265 = vmatpush1.bf16.msra.mxu0 0
        %3266 = vmatprep.subr.bf16.mxu0 0
        %3267 = vmatpush1.bf16.msra.mxu0 0
        %3268 = vmatprep.subr.bf16.mxu0 0
        %3269 = vmatpush1.bf16.msra.mxu0 0
        %3270 = vmatprep.mubr.bf16.mxu0 0
        %3271 = vmatmul.mubr.bf16.gmra.mrb[0].mxu0 %v3233
        %v3272 = vpop.f32.mrb[0].mxu0
        %v3273 = vadd.f32 0.0, %v3272
        %v3274 = vpop.f32.mrb[0].mxu0
        %v3275 = vpop.f32.mrb[0].mxu0
        %v3276 = vadd.f32 0.0, %v3275
        %v3277 = vpop.f32.mrb[0].mxu0
        %3278 = vmatprep.mubr.bf16.mxu0 0
        %3279 = vmatmul.mubr.bf16.gmra.mrb[0].mxu0 %v3236
        %v3280 = vpop.f32.mrb[0].mxu0
        %v3281 = vadd.f32 0.0, %v3280
        %v3282 = vpop.f32.mrb[0].mxu0
        %v3283 = vpop.f32.mrb[0].mxu0
        %v3284 = vadd.f32 0.0, %v3283
        %v3285 = vpop.f32.mrb[0].mxu0
        %3286 = vdwg.mxu0
        %v3287 = vpack.c.bf16 %v3276, %v3273
        %v3288 = vpack.c.bf16 %v3284, %v3281
        %v3290 = vsel %vm999, %v3287, 0
        %v3293 = vsel %vm999, %v3288, 0
        %v3296 = vsel %vm768, %v2316, 0
        %3298 = vmatprep.subr.bf16.mxu0 0
        %3299 = vmatpush1.bf16.msra.mxu0 %v3296
        %3300 = vmatprep.subr.bf16.mxu0 0
        %3301 = vmatpush1.bf16.msra.mxu0 0
        %3302 = vmatprep.subr.bf16.mxu0 0
        %3303 = vmatpush1.bf16.msra.mxu0 0
        %3304 = vmatprep.subr.bf16.mxu0 0
        %3305 = vmatpush1.bf16.msra.mxu0 0
        %3306 = vmatprep.subr.bf16.mxu0 0
        %3307 = vmatpush1.bf16.msra.mxu0 0
        %3308 = vmatprep.subr.bf16.mxu0 0
        %3309 = vmatpush1.bf16.msra.mxu0 0
        %3310 = vmatprep.subr.bf16.mxu0 0
        %3311 = vmatpush1.bf16.msra.mxu0 0
        %3312 = vmatprep.subr.bf16.mxu0 0
        %3313 = vmatpush1.bf16.msra.mxu0 0
        %3314 = vmatprep.subr.bf16.mxu0 0
        %3315 = vmatpush1.bf16.msra.mxu0 0
        %3316 = vmatprep.subr.bf16.mxu0 0
        %3317 = vmatpush1.bf16.msra.mxu0 0
        %3318 = vmatprep.subr.bf16.mxu0 0
        %3319 = vmatpush1.bf16.msra.mxu0 0
        %3320 = vmatprep.subr.bf16.mxu0 0
        %3321 = vmatpush1.bf16.msra.mxu0 0
        %3322 = vmatprep.subr.bf16.mxu0 0
        %3323 = vmatpush1.bf16.msra.mxu0 0
        %3324 = vmatprep.subr.bf16.mxu0 0
        %3325 = vmatpush1.bf16.msra.mxu0 0
        %3326 = vmatprep.subr.bf16.mxu0 0
        %3327 = vmatpush1.bf16.msra.mxu0 0
        %3328 = vmatprep.subr.bf16.mxu0 0
        %3329 = vmatpush1.bf16.msra.mxu0 0
        %3330 = vmatprep.mubr.bf16.mxu0 0
        %3331 = vmatmul.mubr.bf16.gmra.mrb[0].mxu0 %v3290
        %v3332 = vpop.f32.mrb[0].mxu0
        %v3333 = vadd.f32 0.0, %v3332
        %v3334 = vpop.f32.mrb[0].mxu0
        %v3335 = vpop.f32.mrb[0].mxu0
        %v3336 = vadd.f32 0.0, %v3335
        %v3337 = vpop.f32.mrb[0].mxu0
        %3338 = vmatprep.mubr.bf16.mxu0 0
        %3339 = vmatmul.mubr.bf16.gmra.mrb[0].mxu0 %v3293
        %v3340 = vpop.f32.mrb[0].mxu0
        %v3341 = vadd.f32 0.0, %v3340
        %v3342 = vpop.f32.mrb[0].mxu0
        %v3343 = vpop.f32.mrb[0].mxu0
        %v3344 = vadd.f32 0.0, %v3343
        %v3345 = vpop.f32.mrb[0].mxu0
        %3346 = vdwg.mxu0
        %v3347 = vadd.f32 %v3107, %v3333
        %v3348 = vadd.f32 %v3108, %v3336
        %v3349 = vadd.f32 %v3109, %v3341
        %v3350 = vadd.f32 %v3110, %v3344
        %s3351 = scalar_lea.vmem %s6, 1
        %v3352 = vld [vmem:[%s3351] sm:$0x1]
        %v3354 = vlaneseq
        %v3355 = vshrl.u32 %v3354, 7
        %v3356 = vsub.s32 0, %v3355
        %v3357 = vrot.slane %v3352, %v3356
        %v3359 = vadd.f32 %v3347, %v3357
        %v3360 = vadd.f32 %v3348, %v3357
        %v3361 = vadd.f32 %v3349, %v3357
        %v3362 = vadd.f32 %v3350, %v3357
        %v3363 = vadd.f32 %v2289, %v3359
        %v3364 = vadd.f32 %v2290, %v3360
        %v3365 = vadd.f32 %v2291, %v3361
        %v3366 = vadd.f32 %v2292, %v3362
        %s3367 = scalar_lea.vmem %s11, 1
        %v3368 = vld [vmem:[%s3367] sm:$0x1]
        %s3369 = scalar_lea.vmem [#allocation7], 1
        %v3370 = vld [vmem:[%s3369] sm:$0x1]
        %v3371 = vsel %vm813, %v3363, 0.0
        %3372 = vadd.xlane.f32.xlu0 %v3371
        %v3373 = vpop.xlane.xlu0 %3372
        %v3374 = vsel %vm813, %v3364, 0.0
        %3375 = vadd.xlane.f32.xlu0 %v3374
        %v3376 = vpop.xlane.xlu0 %3375
        %v3377 = vsel %vm813, %v3365, 0.0
        %3378 = vadd.xlane.f32.xlu0 %v3377
        %v3379 = vpop.xlane.xlu0 %3378
        %v3380 = vsel %vm813, %v3366, 0.0
        %3381 = vadd.xlane.f32.xlu0 %v3380
        %v3382 = vpop.xlane.xlu0 %3381
        %v3383 = vmul.f32 %v3373, %v1973
        %v3384 = vmul.f32 %v3376, %v1973
        %v3385 = vmul.f32 %v3379, %v1973
        %v3386 = vmul.f32 %v3382, %v1973
        %v3387 = vsub.f32 %v3363, %v3383
        %v3388 = vsub.f32 %v3364, %v3384
        %v3389 = vsub.f32 %v3365, %v3385
        %v3390 = vsub.f32 %v3366, %v3386
        %v3391 = vmul.f32 %v3387, %v3387
        %v3392 = vmul.f32 %v3388, %v3388
        %v3393 = vmul.f32 %v3389, %v3389
        %v3394 = vmul.f32 %v3390, %v3390
        %v3395 = vsel %vm813, %v3391, 0.0
        %3396 = vadd.xlane.f32.xlu0 %v3395
        %v3397 = vpop.xlane.xlu0 %3396
        %v3398 = vsel %vm813, %v3392, 0.0
        %3399 = vadd.xlane.f32.xlu0 %v3398
        %v3400 = vpop.xlane.xlu0 %3399
        %v3401 = vsel %vm813, %v3393, 0.0
        %3402 = vadd.xlane.f32.xlu0 %v3401
        %v3403 = vpop.xlane.xlu0 %3402
        %v3404 = vsel %vm813, %v3394, 0.0
        %3405 = vadd.xlane.f32.xlu0 %v3404
        %v3406 = vpop.xlane.xlu0 %3405
        %v3407 = vmul.f32 %v3397, %v1973
        %v3408 = vmul.f32 %v3400, %v1973
        %v3409 = vmul.f32 %v3403, %v1973
        %v3410 = vmul.f32 %v3406, %v1973
        %v3411 = vadd.f32 %v3407, 1e-05
        %v3412 = vadd.f32 %v3408, 1e-05
        %v3413 = vadd.f32 %v3409, 1e-05
        %v3414 = vadd.f32 %v3410, 1e-05
        %v3415 = vrsqrt.pop %v3411
        %v3416 = vrsqrt.pop %v3412
        %v3417 = vrsqrt.pop %v3413
        %v3418 = vrsqrt.pop %v3414
        %v3419 = vmul.f32 %v3387, %v3415
        %v3420 = vmul.f32 %v3388, %v3416
        %v3421 = vmul.f32 %v3389, %v3417
        %v3422 = vmul.f32 %v3390, %v3418
        %v3424 = vlaneseq
        %v3425 = vshrl.u32 %v3424, 7
        %v3426 = vsub.s32 0, %v3425
        %v3427 = vrot.slane %v3368, %v3426
        %v3429 = vmul.f32 %v3419, %v3427
        %v3430 = vmul.f32 %v3420, %v3427
        %v3431 = vmul.f32 %v3421, %v3427
        %v3432 = vmul.f32 %v3422, %v3427
        %v3434 = vlaneseq
        %v3435 = vshrl.u32 %v3434, 7
        %v3436 = vsub.s32 0, %v3435
        %v3437 = vrot.slane %v3370, %v3436
        %v3439 = vadd.f32 %v3429, %v3437
        %v3440 = vadd.f32 %v3430, %v3437
        %v3441 = vadd.f32 %v3431, %v3437
        %v3442 = vadd.f32 %v3432, %v3437
        %s3443 = scalar_lea.vmem [#allocation5], 16
        %v3444 = vld [vmem:[%s3443] sm:$0xf]
        %v3445 = vld [vmem:[%s3443 + $0x4] sm:$0xf]
        %v3446 = vld [vmem:[%s3443 + $0x8] sm:$0xf]
        %v3447 = vld [vmem:[%s3443 + $0xc] sm:$0xf]
        %v3448 = vpack.c.bf16 %v3440, %v3439
        %v3449 = vpack.c.bf16 %v3442, %v3441
        %s3450 = scalar_lea.vmem %s8, 1
        %v3451 = vld [vmem:[%s3450] sm:$0x1]
        %v3453 = vlaneseq
        %v3454 = vshrl.u32 %v3453, 7
        %v3455 = vsub.s32 0, %v3454
        %v3456 = vrot.slane %v3451, %v3455
        %v3462 = vunpack.c.l.b16 %v3444
        %v3463 = vunpack.c.l.b16 %v3445
        %v3464 = vunpack.c.l.b16 %v3446
        %v3465 = vunpack.c.l.b16 %v3447
        %v3466 = vpack.c.b16 %v3463, %v3462
        %v3467 = vpack.c.b16 %v3465, %v3464
        %v3471 = vsel %vm813, %v3448, 0
        %v3474 = vsel %vm813, %v3449, 0
        %3476 = vmatprep.subr.bf16.mxu0 0
        %3477 = vmatpush1.bf16.msra.mxu0 %v3466
        %3478 = vmatprep.subr.bf16.mxu0 0
        %3479 = vmatpush1.bf16.msra.mxu0 %v3467
        %3480 = vmatprep.subr.bf16.mxu0 0
        %3481 = vmatpush1.bf16.msra.mxu0 0
        %3482 = vmatprep.subr.bf16.mxu0 0
        %3483 = vmatpush1.bf16.msra.mxu0 0
        %3484 = vmatprep.subr.bf16.mxu0 0
        %3485 = vmatpush1.bf16.msra.mxu0 0
        %3486 = vmatprep.subr.bf16.mxu0 0
        %3487 = vmatpush1.bf16.msra.mxu0 0
        %3488 = vmatprep.subr.bf16.mxu0 0
        %3489 = vmatpush1.bf16.msra.mxu0 0
        %3490 = vmatprep.subr.bf16.mxu0 0
        %3491 = vmatpush1.bf16.msra.mxu0 0
        %3492 = vmatprep.subr.bf16.mxu0 0
        %3493 = vmatpush1.bf16.msra.mxu0 0
        %3494 = vmatprep.subr.bf16.mxu0 0
        %3495 = vmatpush1.bf16.msra.mxu0 0
        %3496 = vmatprep.subr.bf16.mxu0 0
        %3497 = vmatpush1.bf16.msra.mxu0 0
        %3498 = vmatprep.subr.bf16.mxu0 0
        %3499 = vmatpush1.bf16.msra.mxu0 0
        %3500 = vmatprep.subr.bf16.mxu0 0
        %3501 = vmatpush1.bf16.msra.mxu0 0
        %3502 = vmatprep.subr.bf16.mxu0 0
        %3503 = vmatpush1.bf16.msra.mxu0 0
        %3504 = vmatprep.subr.bf16.mxu0 0
        %3505 = vmatpush1.bf16.msra.mxu0 0
        %3506 = vmatprep.subr.bf16.mxu0 0
        %3507 = vmatpush1.bf16.msra.mxu0 0
        %3508 = vmatprep.mubr.bf16.mxu0 0
        %3509 = vmatmul.mubr.bf16.gmra.mrb[0].mxu0 %v3471
        %v3510 = vpop.f32.mrb[0].mxu0
        %v3511 = vadd.f32 %v3456, %v3510
        %v3512 = vpop.f32.mrb[0].mxu0
        %v3513 = vpop.f32.mrb[0].mxu0
        %v3514 = vadd.f32 %v3456, %v3513
        %v3515 = vpop.f32.mrb[0].mxu0
        %3516 = vmatprep.mubr.bf16.mxu0 0
        %3517 = vmatmul.mubr.bf16.gmra.mrb[0].mxu0 %v3474
        %v3518 = vpop.f32.mrb[0].mxu0
        %v3519 = vadd.f32 %v3456, %v3518
        %v3520 = vpop.f32.mrb[0].mxu0
        %v3521 = vpop.f32.mrb[0].mxu0
        %v3522 = vadd.f32 %v3456, %v3521
        %v3523 = vpop.f32.mrb[0].mxu0
        %3524 = vdwg.mxu0
        %v3525 = vmax.f32 %v3511, 0.0
        %v3526 = vmax.f32 %v3514, 0.0
        %v3527 = vmax.f32 %v3519, 0.0
        %v3528 = vmax.f32 %v3522, 0.0
        %s3529 = scalar_lea.vmem %s9, 32
        %v3530 = vld [vmem:[%s3529] sm:$0xf]
        %v3531 = vld [vmem:[%s3529 + $0x4] sm:$0xf]
        %v3532 = vld [vmem:[%s3529 + $0x8] sm:$0xf]
        %v3533 = vld [vmem:[%s3529 + $0xc] sm:$0xf]
        %v3534 = vld [vmem:[%s3529 + $0x10] sm:$0xf]
        %v3535 = vld [vmem:[%s3529 + $0x14] sm:$0xf]
        %v3536 = vld [vmem:[%s3529 + $0x18] sm:$0xf]
        %v3537 = vld [vmem:[%s3529 + $0x1c] sm:$0xf]
        %v3538 = vpack.c.bf16 %v3526, %v3525
        %v3539 = vpack.c.bf16 %v3528, %v3527
        %s3540 = scalar_lea.vmem %s10, 1
        %v3541 = vld [vmem:[%s3540] sm:$0x1]
        %v3543 = vlaneseq
        %v3544 = vshrl.u32 %v3543, 7
        %v3545 = vsub.s32 0, %v3544
        %v3546 = vrot.slane %v3541, %v3545
        %v3556 = vunpack.c.l.b16 %v3530
        %v3557 = vunpack.c.l.b16 %v3531
        %v3558 = vunpack.c.l.b16 %v3532
        %v3559 = vunpack.c.l.b16 %v3533
        %v3560 = vunpack.c.l.b16 %v3534
        %v3561 = vunpack.c.l.b16 %v3535
        %v3562 = vunpack.c.l.b16 %v3536
        %v3563 = vunpack.c.l.b16 %v3537
        %v3564 = vpack.c.b16 %v3557, %v3556
        %v3565 = vpack.c.b16 %v3559, %v3558
        %v3566 = vpack.c.b16 %v3561, %v3560
        %v3567 = vpack.c.b16 %v3563, %v3562
        %v3573 = vsel %vm2159, %v3538, 0
        %v3576 = vsel %vm2159, %v3539, 0
        %3578 = vmatprep.subr.bf16.mxu0 0
        %3579 = vmatpush1.bf16.msra.mxu0 %v3564
        %3580 = vmatprep.subr.bf16.mxu0 0
        %3581 = vmatpush1.bf16.msra.mxu0 %v3565
        %3582 = vmatprep.subr.bf16.mxu0 0
        %3583 = vmatpush1.bf16.msra.mxu0 %v3566
        %3584 = vmatprep.subr.bf16.mxu0 0
        %3585 = vmatpush1.bf16.msra.mxu0 %v3567
        %3586 = vmatprep.subr.bf16.mxu0 0
        %3587 = vmatpush1.bf16.msra.mxu0 0
        %3588 = vmatprep.subr.bf16.mxu0 0
        %3589 = vmatpush1.bf16.msra.mxu0 0
        %3590 = vmatprep.subr.bf16.mxu0 0
        %3591 = vmatpush1.bf16.msra.mxu0 0
        %3592 = vmatprep.subr.bf16.mxu0 0
        %3593 = vmatpush1.bf16.msra.mxu0 0
        %3594 = vmatprep.subr.bf16.mxu0 0
        %3595 = vmatpush1.bf16.msra.mxu0 0
        %3596 = vmatprep.subr.bf16.mxu0 0
        %3597 = vmatpush1.bf16.msra.mxu0 0
        %3598 = vmatprep.subr.bf16.mxu0 0
        %3599 = vmatpush1.bf16.msra.mxu0 0
        %3600 = vmatprep.subr.bf16.mxu0 0
        %3601 = vmatpush1.bf16.msra.mxu0 0
        %3602 = vmatprep.subr.bf16.mxu0 0
        %3603 = vmatpush1.bf16.msra.mxu0 0
        %3604 = vmatprep.subr.bf16.mxu0 0
        %3605 = vmatpush1.bf16.msra.mxu0 0
        %3606 = vmatprep.subr.bf16.mxu0 0
        %3607 = vmatpush1.bf16.msra.mxu0 0
        %3608 = vmatprep.subr.bf16.mxu0 0
        %3609 = vmatpush1.bf16.msra.mxu0 0
        %3610 = vmatprep.mubr.bf16.mxu0 0
        %3611 = vmatmul.mubr.bf16.gmra.mrb[0].mxu0 %v3573
        %v3612 = vpop.f32.mrb[0].mxu0
        %v3613 = vadd.f32 %v3546, %v3612
        %v3614 = vpop.f32.mrb[0].mxu0
        %v3615 = vpop.f32.mrb[0].mxu0
        %v3616 = vadd.f32 %v3546, %v3615
        %v3617 = vpop.f32.mrb[0].mxu0
        %3618 = vmatprep.mubr.bf16.mxu0 0
        %3619 = vmatmul.mubr.bf16.gmra.mrb[0].mxu0 %v3576
        %v3620 = vpop.f32.mrb[0].mxu0
        %v3621 = vadd.f32 %v3546, %v3620
        %v3622 = vpop.f32.mrb[0].mxu0
        %v3623 = vpop.f32.mrb[0].mxu0
        %v3624 = vadd.f32 %v3546, %v3623
        %v3625 = vpop.f32.mrb[0].mxu0
        %3626 = vdwg.mxu0
        %v3627 = vadd.f32 %v3439, %v3613
        %v3628 = vadd.f32 %v3440, %v3616
        %v3629 = vadd.f32 %v3441, %v3621
        %v3630 = vadd.f32 %v3442, %v3624
        %s3631 = scalar_lea.vmem [#allocation8], 1
        %v3632 = vld [vmem:[%s3631] sm:$0x1]
        %s3633 = scalar_lea.vmem [#allocation10], 1
        %v3634 = vld [vmem:[%s3633] sm:$0x1]
        %v3635 = vsel %vm813, %v3627, 0.0
        %3636 = vadd.xlane.f32.xlu0 %v3635
        %v3637 = vpop.xlane.xlu0 %3636
        %v3638 = vsel %vm813, %v3628, 0.0
        %3639 = vadd.xlane.f32.xlu0 %v3638
        %v3640 = vpop.xlane.xlu0 %3639
        %v3641 = vsel %vm813, %v3629, 0.0
        %3642 = vadd.xlane.f32.xlu0 %v3641
        %v3643 = vpop.xlane.xlu0 %3642
        %v3644 = vsel %vm813, %v3630, 0.0
        %3645 = vadd.xlane.f32.xlu0 %v3644
        %v3646 = vpop.xlane.xlu0 %3645
        %v3647 = vmul.f32 %v3637, %v1973
        %v3648 = vmul.f32 %v3640, %v1973
        %v3649 = vmul.f32 %v3643, %v1973
        %v3650 = vmul.f32 %v3646, %v1973
        %v3651 = vsub.f32 %v3627, %v3647
        %v3652 = vsub.f32 %v3628, %v3648
        %v3653 = vsub.f32 %v3629, %v3649
        %v3654 = vsub.f32 %v3630, %v3650
        %v3655 = vmul.f32 %v3651, %v3651
        %v3656 = vmul.f32 %v3652, %v3652
        %v3657 = vmul.f32 %v3653, %v3653
        %v3658 = vmul.f32 %v3654, %v3654
        %v3659 = vsel %vm813, %v3655, 0.0
        %3660 = vadd.xlane.f32.xlu0 %v3659
        %v3661 = vpop.xlane.xlu0 %3660
        %v3662 = vsel %vm813, %v3656, 0.0
        %3663 = vadd.xlane.f32.xlu0 %v3662
        %v3664 = vpop.xlane.xlu0 %3663
        %v3665 = vsel %vm813, %v3657, 0.0
        %3666 = vadd.xlane.f32.xlu0 %v3665
        %v3667 = vpop.xlane.xlu0 %3666
        %v3668 = vsel %vm813, %v3658, 0.0
        %3669 = vadd.xlane.f32.xlu0 %v3668
        %v3670 = vpop.xlane.xlu0 %3669
        %v3671 = vmul.f32 %v3661, %v1973
        %v3672 = vmul.f32 %v3664, %v1973
        %v3673 = vmul.f32 %v3667, %v1973
        %v3674 = vmul.f32 %v3670, %v1973
        %v3675 = vadd.f32 %v3671, 1e-05
        %v3676 = vadd.f32 %v3672, 1e-05
        %v3677 = vadd.f32 %v3673, 1e-05
        %v3678 = vadd.f32 %v3674, 1e-05
        %v3679 = vrsqrt.pop %v3675
        %v3680 = vrsqrt.pop %v3676
        %v3681 = vrsqrt.pop %v3677
        %v3682 = vrsqrt.pop %v3678
        %v3683 = vmul.f32 %v3651, %v3679
        %v3684 = vmul.f32 %v3652, %v3680
        %v3685 = vmul.f32 %v3653, %v3681
        %v3686 = vmul.f32 %v3654, %v3682
        %v3688 = vlaneseq
        %v3689 = vshrl.u32 %v3688, 7
        %v3690 = vsub.s32 0, %v3689
        %v3691 = vrot.slane %v3632, %v3690
        %v3693 = vmul.f32 %v3683, %v3691
        %v3694 = vmul.f32 %v3684, %v3691
        %v3695 = vmul.f32 %v3685, %v3691
        %v3696 = vmul.f32 %v3686, %v3691
        %v3698 = vlaneseq
        %v3699 = vshrl.u32 %v3698, 7
        %v3700 = vsub.s32 0, %v3699
        %v3701 = vrot.slane %v3634, %v3700
        %v3703 = vadd.f32 %v3693, %v3701
        %v3704 = vadd.f32 %v3694, %v3701
        %v3705 = vadd.f32 %v3695, %v3701
        %v3706 = vadd.f32 %v3696, %v3701
        %3707 = vst.msk [vmem:[%s733] sm:$0xff] %vm813, %v3703
        %3709 = vrot.lane.b32.xlu0 %v3704, 32
        %v3710 = vpop.permute.xlu0 %3709
        %3712 = vst.msk [vmem:[%s733] sm:$0xff] %vm2298, %v3710
        %3714 = vrot.lane.b32.xlu0 %v3705, 64
        %v3715 = vpop.permute.xlu0 %3714
        %3717 = vst.msk [vmem:[%s733] sm:$0xff] %vm2304, %v3715
        %3719 = vrot.lane.b32.xlu0 %v3706, 96
        %v3720 = vpop.permute.xlu0 %3719
        %3722 = vst.msk [vmem:[%s733] sm:$0xff] %vm2310, %v3720
        %s3723 = scalar_lea.vmem [#allocation3], 32
        %v3724 = vld [vmem:[%s3723] sm:$0xf]
        %v3725 = vld [vmem:[%s3723 + $0x4] sm:$0xf]
        %v3726 = vld [vmem:[%s3723 + $0x8] sm:$0xf]
        %v3727 = vld [vmem:[%s3723 + $0xc] sm:$0xf]
        %s3728 = scalar_lea.vmem %s3, 32
        %v3729 = vld [vmem:[%s3728] sm:$0xf]
        %v3730 = vld [vmem:[%s3728 + $0x4] sm:$0xf]
        %v3731 = vld [vmem:[%s3728 + $0x8] sm:$0xf]
        %v3732 = vld [vmem:[%s3728 + $0xc] sm:$0xf]
        %v3733 = vpack.c.bf16 %v3704, %v3703
        %v3734 = vpack.c.bf16 %v3706, %v3705
        %s3735 = scalar_lea.vmem %s4, 2
        %v3736 = vld [vmem:[%s3735] sm:$0x1]
        %v3738 = vlaneseq
        %v3739 = vshrl.u32 %v3738, 7
        %v3740 = vsub.s32 0, %v3739
        %v3741 = vrot.slane %v3736, %v3740
        %v3747 = vunpack.c.l.b16 %v3729
        %v3748 = vunpack.c.l.b16 %v3730
        %v3749 = vunpack.c.l.b16 %v3731
        %v3750 = vunpack.c.l.b16 %v3732
        %v3751 = vpack.c.b16 %v3748, %v3747
        %v3752 = vpack.c.b16 %v3750, %v3749
        %v3756 = vsel %vm813, %v3733, 0
        %v3759 = vsel %vm813, %v3734, 0
        %3761 = vmatprep.subr.bf16.mxu0 0
        %3762 = vmatpush1.bf16.msra.mxu0 %v3751
        %3763 = vmatprep.subr.bf16.mxu0 0
        %3764 = vmatpush1.bf16.msra.mxu0 %v3752
        %3765 = vmatprep.subr.bf16.mxu0 0
        %3766 = vmatpush1.bf16.msra.mxu0 0
        %3767 = vmatprep.subr.bf16.mxu0 0
        %3768 = vmatpush1.bf16.msra.mxu0 0
        %3769 = vmatprep.subr.bf16.mxu0 0
        %3770 = vmatpush1.bf16.msra.mxu0 0
        %3771 = vmatprep.subr.bf16.mxu0 0
        %3772 = vmatpush1.bf16.msra.mxu0 0
        %3773 = vmatprep.subr.bf16.mxu0 0
        %3774 = vmatpush1.bf16.msra.mxu0 0
        %3775 = vmatprep.subr.bf16.mxu0 0
        %3776 = vmatpush1.bf16.msra.mxu0 0
        %3777 = vmatprep.subr.bf16.mxu0 0
        %3778 = vmatpush1.bf16.msra.mxu0 0
        %3779 = vmatprep.subr.bf16.mxu0 0
        %3780 = vmatpush1.bf16.msra.mxu0 0
        %3781 = vmatprep.subr.bf16.mxu0 0
        %3782 = vmatpush1.bf16.msra.mxu0 0
        %3783 = vmatprep.subr.bf16.mxu0 0
        %3784 = vmatpush1.bf16.msra.mxu0 0
        %3785 = vmatprep.subr.bf16.mxu0 0
        %3786 = vmatpush1.bf16.msra.mxu0 0
        %3787 = vmatprep.subr.bf16.mxu0 0
        %3788 = vmatpush1.bf16.msra.mxu0 0
        %3789 = vmatprep.subr.bf16.mxu0 0
        %3790 = vmatpush1.bf16.msra.mxu0 0
        %3791 = vmatprep.subr.bf16.mxu0 0
        %3792 = vmatpush1.bf16.msra.mxu0 0
        %3793 = vmatprep.mubr.bf16.mxu0 0
        %3794 = vmatmul.mubr.bf16.gmra.mrb[0].mxu0 %v3756
        %v3795 = vpop.f32.mrb[0].mxu0
        %v3796 = vadd.f32 %v3741, %v3795
        %v3797 = vpop.f32.mrb[0].mxu0
        %v3798 = vpop.f32.mrb[0].mxu0
        %v3799 = vadd.f32 %v3741, %v3798
        %v3800 = vpop.f32.mrb[0].mxu0
        %3801 = vmatprep.mubr.bf16.mxu0 0
        %3802 = vmatmul.mubr.bf16.gmra.mrb[0].mxu0 %v3759
        %v3803 = vpop.f32.mrb[0].mxu0
        %v3804 = vadd.f32 %v3741, %v3803
        %v3805 = vpop.f32.mrb[0].mxu0
        %v3806 = vpop.f32.mrb[0].mxu0
        %v3807 = vadd.f32 %v3741, %v3806
        %v3808 = vpop.f32.mrb[0].mxu0
        %3809 = vdwg.mxu0
        %v3810 = vpack.c.bf16 %v3799, %v3796
        %v3811 = vpack.c.bf16 %v3807, %v3804
        %3814 = vrot.lane.b32.xlu0 %v3810, 96
        %v3815 = vpop.permute.xlu0 %3814
        %3816 = vrot.lane.b32.xlu0 %v3811, 96
        %v3817 = vpop.permute.xlu0 %3816
        %v3819 = vsel %vm999, %v3810, 0
        %v3822 = vsel %vm999, %v3811, 0
        %v3825 = vsel %vm999, %v3815, 0
        %v3828 = vsel %vm999, %v3817, 0
        %3830 = vmatprep.subr.bf16.mxu0 0
        %3831 = vmatpush1.bf16.xpose.msra.mxu0 %v3825
        %3832 = vmatprep.subr.bf16.mxu0 0
        %3833 = vmatpush1.bf16.xpose.msra.mxu0 %v3828
        %3834 = vmatprep.subr.bf16.mxu0 0
        %3835 = vmatpush1.bf16.xpose.msra.mxu0 0
        %3836 = vmatprep.subr.bf16.mxu0 0
        %3837 = vmatpush1.bf16.xpose.msra.mxu0 0
        %3838 = vmatprep.subr.bf16.mxu0 0
        %3839 = vmatpush1.bf16.xpose.msra.mxu0 0
        %3840 = vmatprep.subr.bf16.mxu0 0
        %3841 = vmatpush1.bf16.xpose.msra.mxu0 0
        %3842 = vmatprep.subr.bf16.mxu0 0
        %3843 = vmatpush1.bf16.xpose.msra.mxu0 0
        %3844 = vmatprep.subr.bf16.mxu0 0
        %3845 = vmatpush1.bf16.xpose.msra.mxu0 0
        %3846 = vmatprep.subr.bf16.mxu0 0
        %3847 = vmatpush1.bf16.xpose.msra.mxu0 0
        %3848 = vmatprep.subr.bf16.mxu0 0
        %3849 = vmatpush1.bf16.xpose.msra.mxu0 0
        %3850 = vmatprep.subr.bf16.mxu0 0
        %3851 = vmatpush1.bf16.xpose.msra.mxu0 0
        %3852 = vmatprep.subr.bf16.mxu0 0
        %3853 = vmatpush1.bf16.xpose.msra.mxu0 0
        %3854 = vmatprep.subr.bf16.mxu0 0
        %3855 = vmatpush1.bf16.xpose.msra.mxu0 0
        %3856 = vmatprep.subr.bf16.mxu0 0
        %3857 = vmatpush1.bf16.xpose.msra.mxu0 0
        %3858 = vmatprep.subr.bf16.mxu0 0
        %3859 = vmatpush1.bf16.xpose.msra.mxu0 0
        %3860 = vmatprep.subr.bf16.mxu0 0
        %3861 = vmatpush1.bf16.xpose.msra.mxu0 0
        %3862 = vmatprep.mubr.bf16.mxu0 0
        %3863 = vmatmul.mubr.bf16.gmra.mrb[0].mxu0 %v3819
        %v3864 = vpop.f32.mrb[0].mxu0
        %v3865 = vadd.f32 %v903, %v3864
        %v3866 = vpop.f32.mrb[0].mxu0
        %v3867 = vpop.f32.mrb[0].mxu0
        %v3868 = vadd.f32 %v904, %v3867
        %v3869 = vpop.f32.mrb[0].mxu0
        %3870 = vmatprep.mubr.bf16.mxu0 0
        %3871 = vmatmul.mubr.bf16.gmra.mrb[0].mxu0 %v3822
        %v3872 = vpop.f32.mrb[0].mxu0
        %v3873 = vadd.f32 %v905, %v3872
        %v3874 = vpop.f32.mrb[0].mxu0
        %v3875 = vpop.f32.mrb[0].mxu0
        %v3876 = vadd.f32 %v906, %v3875
        %v3877 = vpop.f32.mrb[0].mxu0
        %3878 = vdwg.mxu0
        %v3879 = vsel %vm813, %v3865, -inf
        %3880 = vmax.xlane.f32.xlu0 %v3879
        %v3881 = vpop.xlane.xlu0 %3880
        %v3882 = vsel %vm813, %v3868, -inf
        %3883 = vmax.xlane.f32.xlu0 %v3882
        %v3884 = vpop.xlane.xlu0 %3883
        %v3885 = vsel %vm813, %v3873, -inf
        %3886 = vmax.xlane.f32.xlu0 %v3885
        %v3887 = vpop.xlane.xlu0 %3886
        %v3888 = vsel %vm813, %v3876, -inf
        %3889 = vmax.xlane.f32.xlu0 %v3888
        %v3890 = vpop.xlane.xlu0 %3889
        %v3891 = vsub.f32 %v3865, %v3881
        %v3892 = vsub.f32 %v3868, %v3884
        %v3893 = vsub.f32 %v3873, %v3887
        %v3894 = vsub.f32 %v3876, %v3890
        %v3895 = vmul.f32 %v3891, 1.442695
        %v3896 = vpow.pop %v3895
        %v3897 = vmul.f32 %v3892, 1.442695
        %v3898 = vpow.pop %v3897
        %v3899 = vmul.f32 %v3893, 1.442695
        %v3900 = vpow.pop %v3899
        %v3901 = vmul.f32 %v3894, 1.442695
        %v3902 = vpow.pop %v3901
        %v3903 = vsel %vm813, %v3896, 0.0
        %3904 = vadd.xlane.f32.xlu0 %v3903
        %v3905 = vpop.xlane.xlu0 %3904
        %v3906 = vsel %vm813, %v3898, 0.0
        %3907 = vadd.xlane.f32.xlu0 %v3906
        %v3908 = vpop.xlane.xlu0 %3907
        %v3909 = vsel %vm813, %v3900, 0.0
        %3910 = vadd.xlane.f32.xlu0 %v3909
        %v3911 = vpop.xlane.xlu0 %3910
        %v3912 = vsel %vm813, %v3902, 0.0
        %3913 = vadd.xlane.f32.xlu0 %v3912
        %v3914 = vpop.xlane.xlu0 %3913
        %v3915 = vrcp.pop %v3905
        %v3916 = vmul.f32 %v3896, %v3915
        %v3917 = vrcp.pop %v3908
        %v3918 = vmul.f32 %v3898, %v3917
        %v3919 = vrcp.pop %v3911
        %v3920 = vmul.f32 %v3900, %v3919
        %v3921 = vrcp.pop %v3914
        %v3922 = vmul.f32 %v3902, %v3921
        %v3923 = vpack.c.bf16 %v3918, %v3916
        %v3924 = vpack.c.bf16 %v3922, %v3920
        %3925 = vrot.lane.b32.xlu0 %v3810, 64
        %v3926 = vpop.permute.xlu0 %3925
        %3927 = vrot.lane.b32.xlu0 %v3811, 64
        %v3928 = vpop.permute.xlu0 %3927
        %v3932 = vsel %vm813, %v3923, 0
        %v3935 = vsel %vm813, %v3924, 0
        %3937 = vmatprep.subr.bf16.mxu0 0
        %3938 = vmatpush1.bf16.msra.mxu0 %v3926
        %3939 = vmatprep.subr.bf16.mxu0 0
        %3940 = vmatpush1.bf16.msra.mxu0 %v3928
        %3941 = vmatprep.subr.bf16.mxu0 0
        %3942 = vmatpush1.bf16.msra.mxu0 0
        %3943 = vmatprep.subr.bf16.mxu0 0
        %3944 = vmatpush1.bf16.msra.mxu0 0
        %3945 = vmatprep.subr.bf16.mxu0 0
        %3946 = vmatpush1.bf16.msra.mxu0 0
        %3947 = vmatprep.subr.bf16.mxu0 0
        %3948 = vmatpush1.bf16.msra.mxu0 0
        %3949 = vmatprep.subr.bf16.mxu0 0
        %3950 = vmatpush1.bf16.msra.mxu0 0
        %3951 = vmatprep.subr.bf16.mxu0 0
        %3952 = vmatpush1.bf16.msra.mxu0 0
        %3953 = vmatprep.subr.bf16.mxu0 0
        %3954 = vmatpush1.bf16.msra.mxu0 0
        %3955 = vmatprep.subr.bf16.mxu0 0
        %3956 = vmatpush1.bf16.msra.mxu0 0
        %3957 = vmatprep.subr.bf16.mxu0 0
        %3958 = vmatpush1.bf16.msra.mxu0 0
        %3959 = vmatprep.subr.bf16.mxu0 0
        %3960 = vmatpush1.bf16.msra.mxu0 0
        %3961 = vmatprep.subr.bf16.mxu0 0
        %3962 = vmatpush1.bf16.msra.mxu0 0
        %3963 = vmatprep.subr.bf16.mxu0 0
        %3964 = vmatpush1.bf16.msra.mxu0 0
        %3965 = vmatprep.subr.bf16.mxu0 0
        %3966 = vmatpush1.bf16.msra.mxu0 0
        %3967 = vmatprep.subr.bf16.mxu0 0
        %3968 = vmatpush1.bf16.msra.mxu0 0
        %3969 = vmatprep.mubr.bf16.mxu0 0
        %3970 = vmatmul.mubr.bf16.gmra.mrb[0].mxu0 %v3932
        %v3971 = vpop.f32.mrb[0].mxu0
        %v3972 = vadd.f32 0.0, %v3971
        %v3973 = vpop.f32.mrb[0].mxu0
        %v3974 = vpop.f32.mrb[0].mxu0
        %v3975 = vadd.f32 0.0, %v3974
        %v3976 = vpop.f32.mrb[0].mxu0
        %3977 = vmatprep.mubr.bf16.mxu0 0
        %3978 = vmatmul.mubr.bf16.gmra.mrb[0].mxu0 %v3935
        %v3979 = vpop.f32.mrb[0].mxu0
        %v3980 = vadd.f32 0.0, %v3979
        %v3981 = vpop.f32.mrb[0].mxu0
        %v3982 = vpop.f32.mrb[0].mxu0
        %v3983 = vadd.f32 0.0, %v3982
        %v3984 = vpop.f32.mrb[0].mxu0
        %3985 = vdwg.mxu0
        %v3986 = vpack.c.bf16 %v3975, %v3972
        %v3987 = vpack.c.bf16 %v3983, %v3980
        %3988 = vrot.lane.b32.xlu0 %v3810, 120
        %v3989 = vpop.permute.xlu0 %3988
        %3990 = vrot.lane.b32.xlu0 %v3811, 120
        %v3991 = vpop.permute.xlu0 %3990
        %3992 = vrot.lane.b32.xlu0 %v3810, 88
        %v3993 = vpop.permute.xlu0 %3992
        %3994 = vrot.lane.b32.xlu0 %v3811, 88
        %v3995 = vpop.permute.xlu0 %3994
        %v3997 = vsel %vm999, %v3989, 0
        %v4000 = vsel %vm999, %v3991, 0
        %v4003 = vsel %vm999, %v3993, 0
        %v4006 = vsel %vm999, %v3995, 0
        %4008 = vmatprep.subr.bf16.mxu0 0
        %4009 = vmatpush1.bf16.xpose.msra.mxu0 %v4003
        %4010 = vmatprep.subr.bf16.mxu0 0
        %4011 = vmatpush1.bf16.xpose.msra.mxu0 %v4006
        %4012 = vmatprep.subr.bf16.mxu0 0
        %4013 = vmatpush1.bf16.xpose.msra.mxu0 0
        %4014 = vmatprep.subr.bf16.mxu0 0
        %4015 = vmatpush1.bf16.xpose.msra.mxu0 0
        %4016 = vmatprep.subr.bf16.mxu0 0
        %4017 = vmatpush1.bf16.xpose.msra.mxu0 0
        %4018 = vmatprep.subr.bf16.mxu0 0
        %4019 = vmatpush1.bf16.xpose.msra.mxu0 0
        %4020 = vmatprep.subr.bf16.mxu0 0
        %4021 = vmatpush1.bf16.xpose.msra.mxu0 0
        %4022 = vmatprep.subr.bf16.mxu0 0
        %4023 = vmatpush1.bf16.xpose.msra.mxu0 0
        %4024 = vmatprep.subr.bf16.mxu0 0
        %4025 = vmatpush1.bf16.xpose.msra.mxu0 0
        %4026 = vmatprep.subr.bf16.mxu0 0
        %4027 = vmatpush1.bf16.xpose.msra.mxu0 0
        %4028 = vmatprep.subr.bf16.mxu0 0
        %4029 = vmatpush1.bf16.xpose.msra.mxu0 0
        %4030 = vmatprep.subr.bf16.mxu0 0
        %4031 = vmatpush1.bf16.xpose.msra.mxu0 0
        %4032 = vmatprep.subr.bf16.mxu0 0
        %4033 = vmatpush1.bf16.xpose.msra.mxu0 0
        %4034 = vmatprep.subr.bf16.mxu0 0
        %4035 = vmatpush1.bf16.xpose.msra.mxu0 0
        %4036 = vmatprep.subr.bf16.mxu0 0
        %4037 = vmatpush1.bf16.xpose.msra.mxu0 0
        %4038 = vmatprep.subr.bf16.mxu0 0
        %4039 = vmatpush1.bf16.xpose.msra.mxu0 0
        %4040 = vmatprep.mubr.bf16.mxu0 0
        %4041 = vmatmul.mubr.bf16.gmra.mrb[0].mxu0 %v3997
        %v4042 = vpop.f32.mrb[0].mxu0
        %v4043 = vadd.f32 %v903, %v4042
        %v4044 = vpop.f32.mrb[0].mxu0
        %v4045 = vpop.f32.mrb[0].mxu0
        %v4046 = vadd.f32 %v904, %v4045
        %v4047 = vpop.f32.mrb[0].mxu0
        %4048 = vmatprep.mubr.bf16.mxu0 0
        %4049 = vmatmul.mubr.bf16.gmra.mrb[0].mxu0 %v4000
        %v4050 = vpop.f32.mrb[0].mxu0
        %v4051 = vadd.f32 %v905, %v4050
        %v4052 = vpop.f32.mrb[0].mxu0
        %v4053 = vpop.f32.mrb[0].mxu0
        %v4054 = vadd.f32 %v906, %v4053
        %v4055 = vpop.f32.mrb[0].mxu0
        %4056 = vdwg.mxu0
        %v4057 = vsel %vm813, %v4043, -inf
        %4058 = vmax.xlane.f32.xlu0 %v4057
        %v4059 = vpop.xlane.xlu0 %4058
        %v4060 = vsel %vm813, %v4046, -inf
        %4061 = vmax.xlane.f32.xlu0 %v4060
        %v4062 = vpop.xlane.xlu0 %4061
        %v4063 = vsel %vm813, %v4051, -inf
        %4064 = vmax.xlane.f32.xlu0 %v4063
        %v4065 = vpop.xlane.xlu0 %4064
        %v4066 = vsel %vm813, %v4054, -inf
        %4067 = vmax.xlane.f32.xlu0 %v4066
        %v4068 = vpop.xlane.xlu0 %4067
        %v4069 = vsub.f32 %v4043, %v4059
        %v4070 = vsub.f32 %v4046, %v4062
        %v4071 = vsub.f32 %v4051, %v4065
        %v4072 = vsub.f32 %v4054, %v4068
        %v4073 = vmul.f32 %v4069, 1.442695
        %v4074 = vpow.pop %v4073
        %v4075 = vmul.f32 %v4070, 1.442695
        %v4076 = vpow.pop %v4075
        %v4077 = vmul.f32 %v4071, 1.442695
        %v4078 = vpow.pop %v4077
        %v4079 = vmul.f32 %v4072, 1.442695
        %v4080 = vpow.pop %v4079
        %v4081 = vsel %vm813, %v4074, 0.0
        %4082 = vadd.xlane.f32.xlu0 %v4081
        %v4083 = vpop.xlane.xlu0 %4082
        %v4084 = vsel %vm813, %v4076, 0.0
        %4085 = vadd.xlane.f32.xlu0 %v4084
        %v4086 = vpop.xlane.xlu0 %4085
        %v4087 = vsel %vm813, %v4078, 0.0
        %4088 = vadd.xlane.f32.xlu0 %v4087
        %v4089 = vpop.xlane.xlu0 %4088
        %v4090 = vsel %vm813, %v4080, 0.0
        %4091 = vadd.xlane.f32.xlu0 %v4090
        %v4092 = vpop.xlane.xlu0 %4091
        %v4093 = vrcp.pop %v4083
        %v4094 = vmul.f32 %v4074, %v4093
        %v4095 = vrcp.pop %v4086
        %v4096 = vmul.f32 %v4076, %v4095
        %v4097 = vrcp.pop %v4089
        %v4098 = vmul.f32 %v4078, %v4097
        %v4099 = vrcp.pop %v4092
        %v4100 = vmul.f32 %v4080, %v4099
        %v4101 = vpack.c.bf16 %v4096, %v4094
        %v4102 = vpack.c.bf16 %v4100, %v4098
        %4103 = vrot.lane.b32.xlu0 %v3810, 56
        %v4104 = vpop.permute.xlu0 %4103
        %4105 = vrot.lane.b32.xlu0 %v3811, 56
        %v4106 = vpop.permute.xlu0 %4105
        %v4110 = vsel %vm813, %v4101, 0
        %v4113 = vsel %vm813, %v4102, 0
        %4115 = vmatprep.subr.bf16.mxu0 0
        %4116 = vmatpush1.bf16.msra.mxu0 %v4104
        %4117 = vmatprep.subr.bf16.mxu0 0
        %4118 = vmatpush1.bf16.msra.mxu0 %v4106
        %4119 = vmatprep.subr.bf16.mxu0 0
        %4120 = vmatpush1.bf16.msra.mxu0 0
        %4121 = vmatprep.subr.bf16.mxu0 0
        %4122 = vmatpush1.bf16.msra.mxu0 0
        %4123 = vmatprep.subr.bf16.mxu0 0
        %4124 = vmatpush1.bf16.msra.mxu0 0
        %4125 = vmatprep.subr.bf16.mxu0 0
        %4126 = vmatpush1.bf16.msra.mxu0 0
        %4127 = vmatprep.subr.bf16.mxu0 0
        %4128 = vmatpush1.bf16.msra.mxu0 0
        %4129 = vmatprep.subr.bf16.mxu0 0
        %4130 = vmatpush1.bf16.msra.mxu0 0
        %4131 = vmatprep.subr.bf16.mxu0 0
        %4132 = vmatpush1.bf16.msra.mxu0 0
        %4133 = vmatprep.subr.bf16.mxu0 0
        %4134 = vmatpush1.bf16.msra.mxu0 0
        %4135 = vmatprep.subr.bf16.mxu0 0
        %4136 = vmatpush1.bf16.msra.mxu0 0
        %4137 = vmatprep.subr.bf16.mxu0 0
        %4138 = vmatpush1.bf16.msra.mxu0 0
        %4139 = vmatprep.subr.bf16.mxu0 0
        %4140 = vmatpush1.bf16.msra.mxu0 0
        %4141 = vmatprep.subr.bf16.mxu0 0
        %4142 = vmatpush1.bf16.msra.mxu0 0
        %4143 = vmatprep.subr.bf16.mxu0 0
        %4144 = vmatpush1.bf16.msra.mxu0 0
        %4145 = vmatprep.subr.bf16.mxu0 0
        %4146 = vmatpush1.bf16.msra.mxu0 0
        %4147 = vmatprep.mubr.bf16.mxu0 0
        %4148 = vmatmul.mubr.bf16.gmra.mrb[0].mxu0 %v4110
        %v4149 = vpop.f32.mrb[0].mxu0
        %v4150 = vadd.f32 0.0, %v4149
        %v4151 = vpop.f32.mrb[0].mxu0
        %v4152 = vpop.f32.mrb[0].mxu0
        %v4153 = vadd.f32 0.0, %v4152
        %v4154 = vpop.f32.mrb[0].mxu0
        %4155 = vmatprep.mubr.bf16.mxu0 0
        %4156 = vmatmul.mubr.bf16.gmra.mrb[0].mxu0 %v4113
        %v4157 = vpop.f32.mrb[0].mxu0
        %v4158 = vadd.f32 0.0, %v4157
        %v4159 = vpop.f32.mrb[0].mxu0
        %v4160 = vpop.f32.mrb[0].mxu0
        %v4161 = vadd.f32 0.0, %v4160
        %v4162 = vpop.f32.mrb[0].mxu0
        %4163 = vdwg.mxu0
        %v4164 = vpack.c.bf16 %v4153, %v4150
        %v4165 = vpack.c.bf16 %v4161, %v4158
        %v4167 = vsel %vm999, %v4164, 0
        %v4170 = vsel %vm999, %v4165, 0
        %v4173 = vsel %vm768, %v3725, 0
        %4175 = vmatprep.subr.bf16.mxu0 0
        %4176 = vmatpush1.bf16.msra.mxu0 %v4173
        %4177 = vmatprep.subr.bf16.mxu0 0
        %4178 = vmatpush1.bf16.msra.mxu0 0
        %4179 = vmatprep.subr.bf16.mxu0 0
        %4180 = vmatpush1.bf16.msra.mxu0 0
        %4181 = vmatprep.subr.bf16.mxu0 0
        %4182 = vmatpush1.bf16.msra.mxu0 0
        %4183 = vmatprep.subr.bf16.mxu0 0
        %4184 = vmatpush1.bf16.msra.mxu0 0
        %4185 = vmatprep.subr.bf16.mxu0 0
        %4186 = vmatpush1.bf16.msra.mxu0 0
        %4187 = vmatprep.subr.bf16.mxu0 0
        %4188 = vmatpush1.bf16.msra.mxu0 0
        %4189 = vmatprep.subr.bf16.mxu0 0
        %4190 = vmatpush1.bf16.msra.mxu0 0
        %4191 = vmatprep.subr.bf16.mxu0 0
        %4192 = vmatpush1.bf16.msra.mxu0 0
        %4193 = vmatprep.subr.bf16.mxu0 0
        %4194 = vmatpush1.bf16.msra.mxu0 0
        %4195 = vmatprep.subr.bf16.mxu0 0
        %4196 = vmatpush1.bf16.msra.mxu0 0
        %4197 = vmatprep.subr.bf16.mxu0 0
        %4198 = vmatpush1.bf16.msra.mxu0 0
        %4199 = vmatprep.subr.bf16.mxu0 0
        %4200 = vmatpush1.bf16.msra.mxu0 0
        %4201 = vmatprep.subr.bf16.mxu0 0
        %4202 = vmatpush1.bf16.msra.mxu0 0
        %4203 = vmatprep.subr.bf16.mxu0 0
        %4204 = vmatpush1.bf16.msra.mxu0 0
        %4205 = vmatprep.subr.bf16.mxu0 0
        %4206 = vmatpush1.bf16.msra.mxu0 0
        %4207 = vmatprep.mubr.bf16.mxu0 0
        %4208 = vmatmul.mubr.bf16.gmra.mrb[0].mxu0 %v4167
        %v4209 = vpop.f32.mrb[0].mxu0
        %v4210 = vadd.f32 0.0, %v4209
        %v4211 = vpop.f32.mrb[0].mxu0
        %v4212 = vpop.f32.mrb[0].mxu0
        %v4213 = vadd.f32 0.0, %v4212
        %v4214 = vpop.f32.mrb[0].mxu0
        %4215 = vmatprep.mubr.bf16.mxu0 0
        %4216 = vmatmul.mubr.bf16.gmra.mrb[0].mxu0 %v4170
        %v4217 = vpop.f32.mrb[0].mxu0
        %v4218 = vadd.f32 0.0, %v4217
        %v4219 = vpop.f32.mrb[0].mxu0
        %v4220 = vpop.f32.mrb[0].mxu0
        %v4221 = vadd.f32 0.0, %v4220
        %v4222 = vpop.f32.mrb[0].mxu0
        %4223 = vdwg.mxu0
        %v4225 = vsel %vm999, %v3986, 0
        %v4228 = vsel %vm999, %v3987, 0
        %v4231 = vsel %vm768, %v3724, 0
        %4233 = vmatprep.subr.bf16.mxu0 0
        %4234 = vmatpush1.bf16.msra.mxu0 %v4231
        %4235 = vmatprep.subr.bf16.mxu0 0
        %4236 = vmatpush1.bf16.msra.mxu0 0
        %4237 = vmatprep.subr.bf16.mxu0 0
        %4238 = vmatpush1.bf16.msra.mxu0 0
        %4239 = vmatprep.subr.bf16.mxu0 0
        %4240 = vmatpush1.bf16.msra.mxu0 0
        %4241 = vmatprep.subr.bf16.mxu0 0
        %4242 = vmatpush1.bf16.msra.mxu0 0
        %4243 = vmatprep.subr.bf16.mxu0 0
        %4244 = vmatpush1.bf16.msra.mxu0 0
        %4245 = vmatprep.subr.bf16.mxu0 0
        %4246 = vmatpush1.bf16.msra.mxu0 0
        %4247 = vmatprep.subr.bf16.mxu0 0
        %4248 = vmatpush1.bf16.msra.mxu0 0
        %4249 = vmatprep.subr.bf16.mxu0 0
        %4250 = vmatpush1.bf16.msra.mxu0 0
        %4251 = vmatprep.subr.bf16.mxu0 0
        %4252 = vmatpush1.bf16.msra.mxu0 0
        %4253 = vmatprep.subr.bf16.mxu0 0
        %4254 = vmatpush1.bf16.msra.mxu0 0
        %4255 = vmatprep.subr.bf16.mxu0 0
        %4256 = vmatpush1.bf16.msra.mxu0 0
        %4257 = vmatprep.subr.bf16.mxu0 0
        %4258 = vmatpush1.bf16.msra.mxu0 0
        %4259 = vmatprep.subr.bf16.mxu0 0
        %4260 = vmatpush1.bf16.msra.mxu0 0
        %4261 = vmatprep.subr.bf16.mxu0 0
        %4262 = vmatpush1.bf16.msra.mxu0 0
        %4263 = vmatprep.subr.bf16.mxu0 0
        %4264 = vmatpush1.bf16.msra.mxu0 0
        %4265 = vmatprep.mubr.bf16.mxu0 0
        %4266 = vmatmul.mubr.bf16.gmra.mrb[0].mxu0 %v4225
        %v4267 = vpop.f32.mrb[0].mxu0
        %v4268 = vadd.f32 %v4210, %v4267
        %v4269 = vpop.f32.mrb[0].mxu0
        %v4270 = vpop.f32.mrb[0].mxu0
        %v4271 = vadd.f32 %v4213, %v4270
        %v4272 = vpop.f32.mrb[0].mxu0
        %4273 = vmatprep.mubr.bf16.mxu0 0
        %4274 = vmatmul.mubr.bf16.gmra.mrb[0].mxu0 %v4228
        %v4275 = vpop.f32.mrb[0].mxu0
        %v4276 = vadd.f32 %v4218, %v4275
        %v4277 = vpop.f32.mrb[0].mxu0
        %v4278 = vpop.f32.mrb[0].mxu0
        %v4279 = vadd.f32 %v4221, %v4278
        %v4280 = vpop.f32.mrb[0].mxu0
        %4281 = vdwg.mxu0
        %4282 = vrot.lane.b32.xlu0 %v3810, 112
        %v4283 = vpop.permute.xlu0 %4282
        %4284 = vrot.lane.b32.xlu0 %v3811, 112
        %v4285 = vpop.permute.xlu0 %4284
        %4286 = vrot.lane.b32.xlu0 %v3810, 80
        %v4287 = vpop.permute.xlu0 %4286
        %4288 = vrot.lane.b32.xlu0 %v3811, 80
        %v4289 = vpop.permute.xlu0 %4288
        %v4291 = vsel %vm999, %v4283, 0
        %v4294 = vsel %vm999, %v4285, 0
        %v4297 = vsel %vm999, %v4287, 0
        %v4300 = vsel %vm999, %v4289, 0
        %4302 = vmatprep.subr.bf16.mxu0 0
        %4303 = vmatpush1.bf16.xpose.msra.mxu0 %v4297
        %4304 = vmatprep.subr.bf16.mxu0 0
        %4305 = vmatpush1.bf16.xpose.msra.mxu0 %v4300
        %4306 = vmatprep.subr.bf16.mxu0 0
        %4307 = vmatpush1.bf16.xpose.msra.mxu0 0
        %4308 = vmatprep.subr.bf16.mxu0 0
        %4309 = vmatpush1.bf16.xpose.msra.mxu0 0
        %4310 = vmatprep.subr.bf16.mxu0 0
        %4311 = vmatpush1.bf16.xpose.msra.mxu0 0
        %4312 = vmatprep.subr.bf16.mxu0 0
        %4313 = vmatpush1.bf16.xpose.msra.mxu0 0
        %4314 = vmatprep.subr.bf16.mxu0 0
        %4315 = vmatpush1.bf16.xpose.msra.mxu0 0
        %4316 = vmatprep.subr.bf16.mxu0 0
        %4317 = vmatpush1.bf16.xpose.msra.mxu0 0
        %4318 = vmatprep.subr.bf16.mxu0 0
        %4319 = vmatpush1.bf16.xpose.msra.mxu0 0
        %4320 = vmatprep.subr.bf16.mxu0 0
        %4321 = vmatpush1.bf16.xpose.msra.mxu0 0
        %4322 = vmatprep.subr.bf16.mxu0 0
        %4323 = vmatpush1.bf16.xpose.msra.mxu0 0
        %4324 = vmatprep.subr.bf16.mxu0 0
        %4325 = vmatpush1.bf16.xpose.msra.mxu0 0
        %4326 = vmatprep.subr.bf16.mxu0 0
        %4327 = vmatpush1.bf16.xpose.msra.mxu0 0
        %4328 = vmatprep.subr.bf16.mxu0 0
        %4329 = vmatpush1.bf16.xpose.msra.mxu0 0
        %4330 = vmatprep.subr.bf16.mxu0 0
        %4331 = vmatpush1.bf16.xpose.msra.mxu0 0
        %4332 = vmatprep.subr.bf16.mxu0 0
        %4333 = vmatpush1.bf16.xpose.msra.mxu0 0
        %4334 = vmatprep.mubr.bf16.mxu0 0
        %4335 = vmatmul.mubr.bf16.gmra.mrb[0].mxu0 %v4291
        %v4336 = vpop.f32.mrb[0].mxu0
        %v4337 = vadd.f32 %v903, %v4336
        %v4338 = vpop.f32.mrb[0].mxu0
        %v4339 = vpop.f32.mrb[0].mxu0
        %v4340 = vadd.f32 %v904, %v4339
        %v4341 = vpop.f32.mrb[0].mxu0
        %4342 = vmatprep.mubr.bf16.mxu0 0
        %4343 = vmatmul.mubr.bf16.gmra.mrb[0].mxu0 %v4294
        %v4344 = vpop.f32.mrb[0].mxu0
        %v4345 = vadd.f32 %v905, %v4344
        %v4346 = vpop.f32.mrb[0].mxu0
        %v4347 = vpop.f32.mrb[0].mxu0
        %v4348 = vadd.f32 %v906, %v4347
        %v4349 = vpop.f32.mrb[0].mxu0
        %4350 = vdwg.mxu0
        %v4351 = vsel %vm813, %v4337, -inf
        %4352 = vmax.xlane.f32.xlu0 %v4351
        %v4353 = vpop.xlane.xlu0 %4352
        %v4354 = vsel %vm813, %v4340, -inf
        %4355 = vmax.xlane.f32.xlu0 %v4354
        %v4356 = vpop.xlane.xlu0 %4355
        %v4357 = vsel %vm813, %v4345, -inf
        %4358 = vmax.xlane.f32.xlu0 %v4357
        %v4359 = vpop.xlane.xlu0 %4358
        %v4360 = vsel %vm813, %v4348, -inf
        %4361 = vmax.xlane.f32.xlu0 %v4360
        %v4362 = vpop.xlane.xlu0 %4361
        %v4363 = vsub.f32 %v4337, %v4353
        %v4364 = vsub.f32 %v4340, %v4356
        %v4365 = vsub.f32 %v4345, %v4359
        %v4366 = vsub.f32 %v4348, %v4362
        %v4367 = vmul.f32 %v4363, 1.442695
        %v4368 = vpow.pop %v4367
        %v4369 = vmul.f32 %v4364, 1.442695
        %v4370 = vpow.pop %v4369
        %v4371 = vmul.f32 %v4365, 1.442695
        %v4372 = vpow.pop %v4371
        %v4373 = vmul.f32 %v4366, 1.442695
        %v4374 = vpow.pop %v4373
        %v4375 = vsel %vm813, %v4368, 0.0
        %4376 = vadd.xlane.f32.xlu0 %v4375
        %v4377 = vpop.xlane.xlu0 %4376
        %v4378 = vsel %vm813, %v4370, 0.0
        %4379 = vadd.xlane.f32.xlu0 %v4378
        %v4380 = vpop.xlane.xlu0 %4379
        %v4381 = vsel %vm813, %v4372, 0.0
        %4382 = vadd.xlane.f32.xlu0 %v4381
        %v4383 = vpop.xlane.xlu0 %4382
        %v4384 = vsel %vm813, %v4374, 0.0
        %4385 = vadd.xlane.f32.xlu0 %v4384
        %v4386 = vpop.xlane.xlu0 %4385
        %v4387 = vrcp.pop %v4377
        %v4388 = vmul.f32 %v4368, %v4387
        %v4389 = vrcp.pop %v4380
        %v4390 = vmul.f32 %v4370, %v4389
        %v4391 = vrcp.pop %v4383
        %v4392 = vmul.f32 %v4372, %v4391
        %v4393 = vrcp.pop %v4386
        %v4394 = vmul.f32 %v4374, %v4393
        %v4395 = vpack.c.bf16 %v4390, %v4388
        %v4396 = vpack.c.bf16 %v4394, %v4392
        %4397 = vrot.lane.b32.xlu0 %v3810, 48
        %v4398 = vpop.permute.xlu0 %4397
        %4399 = vrot.lane.b32.xlu0 %v3811, 48
        %v4400 = vpop.permute.xlu0 %4399
        %v4404 = vsel %vm813, %v4395, 0
        %v4407 = vsel %vm813, %v4396, 0
        %4409 = vmatprep.subr.bf16.mxu0 0
        %4410 = vmatpush1.bf16.msra.mxu0 %v4398
        %4411 = vmatprep.subr.bf16.mxu0 0
        %4412 = vmatpush1.bf16.msra.mxu0 %v4400
        %4413 = vmatprep.subr.bf16.mxu0 0
        %4414 = vmatpush1.bf16.msra.mxu0 0
        %4415 = vmatprep.subr.bf16.mxu0 0
        %4416 = vmatpush1.bf16.msra.mxu0 0
        %4417 = vmatprep.subr.bf16.mxu0 0
        %4418 = vmatpush1.bf16.msra.mxu0 0
        %4419 = vmatprep.subr.bf16.mxu0 0
        %4420 = vmatpush1.bf16.msra.mxu0 0
        %4421 = vmatprep.subr.bf16.mxu0 0
        %4422 = vmatpush1.bf16.msra.mxu0 0
        %4423 = vmatprep.subr.bf16.mxu0 0
        %4424 = vmatpush1.bf16.msra.mxu0 0
        %4425 = vmatprep.subr.bf16.mxu0 0
        %4426 = vmatpush1.bf16.msra.mxu0 0
        %4427 = vmatprep.subr.bf16.mxu0 0
        %4428 = vmatpush1.bf16.msra.mxu0 0
        %4429 = vmatprep.subr.bf16.mxu0 0
        %4430 = vmatpush1.bf16.msra.mxu0 0
        %4431 = vmatprep.subr.bf16.mxu0 0
        %4432 = vmatpush1.bf16.msra.mxu0 0
        %4433 = vmatprep.subr.bf16.mxu0 0
        %4434 = vmatpush1.bf16.msra.mxu0 0
        %4435 = vmatprep.subr.bf16.mxu0 0
        %4436 = vmatpush1.bf16.msra.mxu0 0
        %4437 = vmatprep.subr.bf16.mxu0 0
        %4438 = vmatpush1.bf16.msra.mxu0 0
        %4439 = vmatprep.subr.bf16.mxu0 0
        %4440 = vmatpush1.bf16.msra.mxu0 0
        %4441 = vmatprep.mubr.bf16.mxu0 0
        %4442 = vmatmul.mubr.bf16.gmra.mrb[0].mxu0 %v4404
        %v4443 = vpop.f32.mrb[0].mxu0
        %v4444 = vadd.f32 0.0, %v4443
        %v4445 = vpop.f32.mrb[0].mxu0
        %v4446 = vpop.f32.mrb[0].mxu0
        %v4447 = vadd.f32 0.0, %v4446
        %v4448 = vpop.f32.mrb[0].mxu0
        %4449 = vmatprep.mubr.bf16.mxu0 0
        %4450 = vmatmul.mubr.bf16.gmra.mrb[0].mxu0 %v4407
        %v4451 = vpop.f32.mrb[0].mxu0
        %v4452 = vadd.f32 0.0, %v4451
        %v4453 = vpop.f32.mrb[0].mxu0
        %v4454 = vpop.f32.mrb[0].mxu0
        %v4455 = vadd.f32 0.0, %v4454
        %v4456 = vpop.f32.mrb[0].mxu0
        %4457 = vdwg.mxu0
        %v4458 = vpack.c.bf16 %v4447, %v4444
        %v4459 = vpack.c.bf16 %v4455, %v4452
        %v4461 = vsel %vm999, %v4458, 0
        %v4464 = vsel %vm999, %v4459, 0
        %v4467 = vsel %vm768, %v3726, 0
        %4469 = vmatprep.subr.bf16.mxu0 0
        %4470 = vmatpush1.bf16.msra.mxu0 %v4467
        %4471 = vmatprep.subr.bf16.mxu0 0
        %4472 = vmatpush1.bf16.msra.mxu0 0
        %4473 = vmatprep.subr.bf16.mxu0 0
        %4474 = vmatpush1.bf16.msra.mxu0 0
        %4475 = vmatprep.subr.bf16.mxu0 0
        %4476 = vmatpush1.bf16.msra.mxu0 0
        %4477 = vmatprep.subr.bf16.mxu0 0
        %4478 = vmatpush1.bf16.msra.mxu0 0
        %4479 = vmatprep.subr.bf16.mxu0 0
        %4480 = vmatpush1.bf16.msra.mxu0 0
        %4481 = vmatprep.subr.bf16.mxu0 0
        %4482 = vmatpush1.bf16.msra.mxu0 0
        %4483 = vmatprep.subr.bf16.mxu0 0
        %4484 = vmatpush1.bf16.msra.mxu0 0
        %4485 = vmatprep.subr.bf16.mxu0 0
        %4486 = vmatpush1.bf16.msra.mxu0 0
        %4487 = vmatprep.subr.bf16.mxu0 0
        %4488 = vmatpush1.bf16.msra.mxu0 0
        %4489 = vmatprep.subr.bf16.mxu0 0
        %4490 = vmatpush1.bf16.msra.mxu0 0
        %4491 = vmatprep.subr.bf16.mxu0 0
        %4492 = vmatpush1.bf16.msra.mxu0 0
        %4493 = vmatprep.subr.bf16.mxu0 0
        %4494 = vmatpush1.bf16.msra.mxu0 0
        %4495 = vmatprep.subr.bf16.mxu0 0
        %4496 = vmatpush1.bf16.msra.mxu0 0
        %4497 = vmatprep.subr.bf16.mxu0 0
        %4498 = vmatpush1.bf16.msra.mxu0 0
        %4499 = vmatprep.subr.bf16.mxu0 0
        %4500 = vmatpush1.bf16.msra.mxu0 0
        %4501 = vmatprep.mubr.bf16.mxu0 0
        %4502 = vmatmul.mubr.bf16.gmra.mrb[0].mxu0 %v4461
        %v4503 = vpop.f32.mrb[0].mxu0
        %v4504 = vadd.f32 0.0, %v4503
        %v4505 = vpop.f32.mrb[0].mxu0
        %v4506 = vpop.f32.mrb[0].mxu0
        %v4507 = vadd.f32 0.0, %v4506
        %v4508 = vpop.f32.mrb[0].mxu0
        %4509 = vmatprep.mubr.bf16.mxu0 0
        %4510 = vmatmul.mubr.bf16.gmra.mrb[0].mxu0 %v4464
        %v4511 = vpop.f32.mrb[0].mxu0
        %v4512 = vadd.f32 0.0, %v4511
        %v4513 = vpop.f32.mrb[0].mxu0
        %v4514 = vpop.f32.mrb[0].mxu0
        %v4515 = vadd.f32 0.0, %v4514
        %v4516 = vpop.f32.mrb[0].mxu0
        %4517 = vdwg.mxu0
        %v4518 = vadd.f32 %v4268, %v4504
        %v4519 = vadd.f32 %v4271, %v4507
        %v4520 = vadd.f32 %v4276, %v4512
        %v4521 = vadd.f32 %v4279, %v4515
        %4522 = vrot.lane.b32.xlu0 %v3810, 104
        %v4523 = vpop.permute.xlu0 %4522
        %4524 = vrot.lane.b32.xlu0 %v3811, 104
        %v4525 = vpop.permute.xlu0 %4524
        %4526 = vrot.lane.b32.xlu0 %v3810, 72
        %v4527 = vpop.permute.xlu0 %4526
        %4528 = vrot.lane.b32.xlu0 %v3811, 72
        %v4529 = vpop.permute.xlu0 %4528
        %v4531 = vsel %vm999, %v4523, 0
        %v4534 = vsel %vm999, %v4525, 0
        %v4537 = vsel %vm999, %v4527, 0
        %v4540 = vsel %vm999, %v4529, 0
        %4542 = vmatprep.subr.bf16.mxu0 0
        %4543 = vmatpush1.bf16.xpose.msra.mxu0 %v4537
        %4544 = vmatprep.subr.bf16.mxu0 0
        %4545 = vmatpush1.bf16.xpose.msra.mxu0 %v4540
        %4546 = vmatprep.subr.bf16.mxu0 0
        %4547 = vmatpush1.bf16.xpose.msra.mxu0 0
        %4548 = vmatprep.subr.bf16.mxu0 0
        %4549 = vmatpush1.bf16.xpose.msra.mxu0 0
        %4550 = vmatprep.subr.bf16.mxu0 0
        %4551 = vmatpush1.bf16.xpose.msra.mxu0 0
        %4552 = vmatprep.subr.bf16.mxu0 0
        %4553 = vmatpush1.bf16.xpose.msra.mxu0 0
        %4554 = vmatprep.subr.bf16.mxu0 0
        %4555 = vmatpush1.bf16.xpose.msra.mxu0 0
        %4556 = vmatprep.subr.bf16.mxu0 0
        %4557 = vmatpush1.bf16.xpose.msra.mxu0 0
        %4558 = vmatprep.subr.bf16.mxu0 0
        %4559 = vmatpush1.bf16.xpose.msra.mxu0 0
        %4560 = vmatprep.subr.bf16.mxu0 0
        %4561 = vmatpush1.bf16.xpose.msra.mxu0 0
        %4562 = vmatprep.subr.bf16.mxu0 0
        %4563 = vmatpush1.bf16.xpose.msra.mxu0 0
        %4564 = vmatprep.subr.bf16.mxu0 0
        %4565 = vmatpush1.bf16.xpose.msra.mxu0 0
        %4566 = vmatprep.subr.bf16.mxu0 0
        %4567 = vmatpush1.bf16.xpose.msra.mxu0 0
        %4568 = vmatprep.subr.bf16.mxu0 0
        %4569 = vmatpush1.bf16.xpose.msra.mxu0 0
        %4570 = vmatprep.subr.bf16.mxu0 0
        %4571 = vmatpush1.bf16.xpose.msra.mxu0 0
        %4572 = vmatprep.subr.bf16.mxu0 0
        %4573 = vmatpush1.bf16.xpose.msra.mxu0 0
        %4574 = vmatprep.mubr.bf16.mxu0 0
        %4575 = vmatmul.mubr.bf16.gmra.mrb[0].mxu0 %v4531
        %v4576 = vpop.f32.mrb[0].mxu0
        %v4577 = vadd.f32 %v903, %v4576
        %v4578 = vpop.f32.mrb[0].mxu0
        %v4579 = vpop.f32.mrb[0].mxu0
        %v4580 = vadd.f32 %v904, %v4579
        %v4581 = vpop.f32.mrb[0].mxu0
        %4582 = vmatprep.mubr.bf16.mxu0 0
        %4583 = vmatmul.mubr.bf16.gmra.mrb[0].mxu0 %v4534
        %v4584 = vpop.f32.mrb[0].mxu0
        %v4585 = vadd.f32 %v905, %v4584
        %v4586 = vpop.f32.mrb[0].mxu0
        %v4587 = vpop.f32.mrb[0].mxu0
        %v4588 = vadd.f32 %v906, %v4587
        %v4589 = vpop.f32.mrb[0].mxu0
        %4590 = vdwg.mxu0
        %v4591 = vsel %vm813, %v4577, -inf
        %4592 = vmax.xlane.f32.xlu0 %v4591
        %v4593 = vpop.xlane.xlu0 %4592
        %v4594 = vsel %vm813, %v4580, -inf
        %4595 = vmax.xlane.f32.xlu0 %v4594
        %v4596 = vpop.xlane.xlu0 %4595
        %v4597 = vsel %vm813, %v4585, -inf
        %4598 = vmax.xlane.f32.xlu0 %v4597
        %v4599 = vpop.xlane.xlu0 %4598
        %v4600 = vsel %vm813, %v4588, -inf
        %4601 = vmax.xlane.f32.xlu0 %v4600
        %v4602 = vpop.xlane.xlu0 %4601
        %v4603 = vsub.f32 %v4577, %v4593
        %v4604 = vsub.f32 %v4580, %v4596
        %v4605 = vsub.f32 %v4585, %v4599
        %v4606 = vsub.f32 %v4588, %v4602
        %v4607 = vmul.f32 %v4603, 1.442695
        %v4608 = vpow.pop %v4607
        %v4609 = vmul.f32 %v4604, 1.442695
        %v4610 = vpow.pop %v4609
        %v4611 = vmul.f32 %v4605, 1.442695
        %v4612 = vpow.pop %v4611
        %v4613 = vmul.f32 %v4606, 1.442695
        %v4614 = vpow.pop %v4613
        %v4615 = vsel %vm813, %v4608, 0.0
        %4616 = vadd.xlane.f32.xlu0 %v4615
        %v4617 = vpop.xlane.xlu0 %4616
        %v4618 = vsel %vm813, %v4610, 0.0
        %4619 = vadd.xlane.f32.xlu0 %v4618
        %v4620 = vpop.xlane.xlu0 %4619
        %v4621 = vsel %vm813, %v4612, 0.0
        %4622 = vadd.xlane.f32.xlu0 %v4621
        %v4623 = vpop.xlane.xlu0 %4622
        %v4624 = vsel %vm813, %v4614, 0.0
        %4625 = vadd.xlane.f32.xlu0 %v4624
        %v4626 = vpop.xlane.xlu0 %4625
        %v4627 = vrcp.pop %v4617
        %v4628 = vmul.f32 %v4608, %v4627
        %v4629 = vrcp.pop %v4620
        %v4630 = vmul.f32 %v4610, %v4629
        %v4631 = vrcp.pop %v4623
        %v4632 = vmul.f32 %v4612, %v4631
        %v4633 = vrcp.pop %v4626
        %v4634 = vmul.f32 %v4614, %v4633
        %v4635 = vpack.c.bf16 %v4630, %v4628
        %v4636 = vpack.c.bf16 %v4634, %v4632
        %4637 = vrot.lane.b32.xlu0 %v3810, 40
        %v4638 = vpop.permute.xlu0 %4637
        %4639 = vrot.lane.b32.xlu0 %v3811, 40
        %v4640 = vpop.permute.xlu0 %4639
        %v4644 = vsel %vm813, %v4635, 0
        %v4647 = vsel %vm813, %v4636, 0
        %4649 = vmatprep.subr.bf16.mxu0 0
        %4650 = vmatpush1.bf16.msra.mxu0 %v4638
        %4651 = vmatprep.subr.bf16.mxu0 0
        %4652 = vmatpush1.bf16.msra.mxu0 %v4640
        %4653 = vmatprep.subr.bf16.mxu0 0
        %4654 = vmatpush1.bf16.msra.mxu0 0
        %4655 = vmatprep.subr.bf16.mxu0 0
        %4656 = vmatpush1.bf16.msra.mxu0 0
        %4657 = vmatprep.subr.bf16.mxu0 0
        %4658 = vmatpush1.bf16.msra.mxu0 0
        %4659 = vmatprep.subr.bf16.mxu0 0
        %4660 = vmatpush1.bf16.msra.mxu0 0
        %4661 = vmatprep.subr.bf16.mxu0 0
        %4662 = vmatpush1.bf16.msra.mxu0 0
        %4663 = vmatprep.subr.bf16.mxu0 0
        %4664 = vmatpush1.bf16.msra.mxu0 0
        %4665 = vmatprep.subr.bf16.mxu0 0
        %4666 = vmatpush1.bf16.msra.mxu0 0
        %4667 = vmatprep.subr.bf16.mxu0 0
        %4668 = vmatpush1.bf16.msra.mxu0 0
        %4669 = vmatprep.subr.bf16.mxu0 0
        %4670 = vmatpush1.bf16.msra.mxu0 0
        %4671 = vmatprep.subr.bf16.mxu0 0
        %4672 = vmatpush1.bf16.msra.mxu0 0
        %4673 = vmatprep.subr.bf16.mxu0 0
        %4674 = vmatpush1.bf16.msra.mxu0 0
        %4675 = vmatprep.subr.bf16.mxu0 0
        %4676 = vmatpush1.bf16.msra.mxu0 0
        %4677 = vmatprep.subr.bf16.mxu0 0
        %4678 = vmatpush1.bf16.msra.mxu0 0
        %4679 = vmatprep.subr.bf16.mxu0 0
        %4680 = vmatpush1.bf16.msra.mxu0 0
        %4681 = vmatprep.mubr.bf16.mxu0 0
        %4682 = vmatmul.mubr.bf16.gmra.mrb[0].mxu0 %v4644
        %v4683 = vpop.f32.mrb[0].mxu0
        %v4684 = vadd.f32 0.0, %v4683
        %v4685 = vpop.f32.mrb[0].mxu0
        %v4686 = vpop.f32.mrb[0].mxu0
        %v4687 = vadd.f32 0.0, %v4686
        %v4688 = vpop.f32.mrb[0].mxu0
        %4689 = vmatprep.mubr.bf16.mxu0 0
        %4690 = vmatmul.mubr.bf16.gmra.mrb[0].mxu0 %v4647
        %v4691 = vpop.f32.mrb[0].mxu0
        %v4692 = vadd.f32 0.0, %v4691
        %v4693 = vpop.f32.mrb[0].mxu0
        %v4694 = vpop.f32.mrb[0].mxu0
        %v4695 = vadd.f32 0.0, %v4694
        %v4696 = vpop.f32.mrb[0].mxu0
        %4697 = vdwg.mxu0
        %v4698 = vpack.c.bf16 %v4687, %v4684
        %v4699 = vpack.c.bf16 %v4695, %v4692
        %v4701 = vsel %vm999, %v4698, 0
        %v4704 = vsel %vm999, %v4699, 0
        %v4707 = vsel %vm768, %v3727, 0
        %4709 = vmatprep.subr.bf16.mxu0 0
        %4710 = vmatpush1.bf16.msra.mxu0 %v4707
        %4711 = vmatprep.subr.bf16.mxu0 0
        %4712 = vmatpush1.bf16.msra.mxu0 0
        %4713 = vmatprep.subr.bf16.mxu0 0
        %4714 = vmatpush1.bf16.msra.mxu0 0
        %4715 = vmatprep.subr.bf16.mxu0 0
        %4716 = vmatpush1.bf16.msra.mxu0 0
        %4717 = vmatprep.subr.bf16.mxu0 0
        %4718 = vmatpush1.bf16.msra.mxu0 0
        %4719 = vmatprep.subr.bf16.mxu0 0
        %4720 = vmatpush1.bf16.msra.mxu0 0
        %4721 = vmatprep.subr.bf16.mxu0 0
        %4722 = vmatpush1.bf16.msra.mxu0 0
        %4723 = vmatprep.subr.bf16.mxu0 0
        %4724 = vmatpush1.bf16.msra.mxu0 0
        %4725 = vmatprep.subr.bf16.mxu0 0
        %4726 = vmatpush1.bf16.msra.mxu0 0
        %4727 = vmatprep.subr.bf16.mxu0 0
        %4728 = vmatpush1.bf16.msra.mxu0 0
        %4729 = vmatprep.subr.bf16.mxu0 0
        %4730 = vmatpush1.bf16.msra.mxu0 0
        %4731 = vmatprep.subr.bf16.mxu0 0
        %4732 = vmatpush1.bf16.msra.mxu0 0
        %4733 = vmatprep.subr.bf16.mxu0 0
        %4734 = vmatpush1.bf16.msra.mxu0 0
        %4735 = vmatprep.subr.bf16.mxu0 0
        %4736 = vmatpush1.bf16.msra.mxu0 0
        %4737 = vmatprep.subr.bf16.mxu0 0
        %4738 = vmatpush1.bf16.msra.mxu0 0
        %4739 = vmatprep.subr.bf16.mxu0 0
        %4740 = vmatpush1.bf16.msra.mxu0 0
        %4741 = vmatprep.mubr.bf16.mxu0 0
        %4742 = vmatmul.mubr.bf16.gmra.mrb[0].mxu0 %v4701
        %v4743 = vpop.f32.mrb[0].mxu0
        %v4744 = vadd.f32 0.0, %v4743
        %v4745 = vpop.f32.mrb[0].mxu0
        %v4746 = vpop.f32.mrb[0].mxu0
        %v4747 = vadd.f32 0.0, %v4746
        %v4748 = vpop.f32.mrb[0].mxu0
        %4749 = vmatprep.mubr.bf16.mxu0 0
        %4750 = vmatmul.mubr.bf16.gmra.mrb[0].mxu0 %v4704
        %v4751 = vpop.f32.mrb[0].mxu0
        %v4752 = vadd.f32 0.0, %v4751
        %v4753 = vpop.f32.mrb[0].mxu0
        %v4754 = vpop.f32.mrb[0].mxu0
        %v4755 = vadd.f32 0.0, %v4754
        %v4756 = vpop.f32.mrb[0].mxu0
        %4757 = vdwg.mxu0
        %v4758 = vadd.f32 %v4518, %v4744
        %v4759 = vadd.f32 %v4519, %v4747
        %v4760 = vadd.f32 %v4520, %v4752
        %v4761 = vadd.f32 %v4521, %v4755
        %s4762 = scalar_lea.vmem %s6, 2
        %v4763 = vld [vmem:[%s4762] sm:$0x1]
        %v4765 = vlaneseq
        %v4766 = vshrl.u32 %v4765, 7
        %v4767 = vsub.s32 0, %v4766
        %v4768 = vrot.slane %v4763, %v4767
        %v4770 = vadd.f32 %v4758, %v4768
        %v4771 = vadd.f32 %v4759, %v4768
        %v4772 = vadd.f32 %v4760, %v4768
        %v4773 = vadd.f32 %v4761, %v4768
        %v4774 = vadd.f32 %v3703, %v4770
        %v4775 = vadd.f32 %v3704, %v4771
        %v4776 = vadd.f32 %v3705, %v4772
        %v4777 = vadd.f32 %v3706, %v4773
        %s4778 = scalar_lea.vmem %s11, 2
        %v4779 = vld [vmem:[%s4778] sm:$0x1]
        %s4780 = scalar_lea.vmem [#allocation7], 2
        %v4781 = vld [vmem:[%s4780] sm:$0x1]
        %v4782 = vsel %vm813, %v4774, 0.0
        %4783 = vadd.xlane.f32.xlu0 %v4782
        %v4784 = vpop.xlane.xlu0 %4783
        %v4785 = vsel %vm813, %v4775, 0.0
        %4786 = vadd.xlane.f32.xlu0 %v4785
        %v4787 = vpop.xlane.xlu0 %4786
        %v4788 = vsel %vm813, %v4776, 0.0
        %4789 = vadd.xlane.f32.xlu0 %v4788
        %v4790 = vpop.xlane.xlu0 %4789
        %v4791 = vsel %vm813, %v4777, 0.0
        %4792 = vadd.xlane.f32.xlu0 %v4791
        %v4793 = vpop.xlane.xlu0 %4792
        %v4794 = vmul.f32 %v4784, %v1973
        %v4795 = vmul.f32 %v4787, %v1973
        %v4796 = vmul.f32 %v4790, %v1973
        %v4797 = vmul.f32 %v4793, %v1973
        %v4798 = vsub.f32 %v4774, %v4794
        %v4799 = vsub.f32 %v4775, %v4795
        %v4800 = vsub.f32 %v4776, %v4796
        %v4801 = vsub.f32 %v4777, %v4797
        %v4802 = vmul.f32 %v4798, %v4798
        %v4803 = vmul.f32 %v4799, %v4799
        %v4804 = vmul.f32 %v4800, %v4800
        %v4805 = vmul.f32 %v4801, %v4801
        %v4806 = vsel %vm813, %v4802, 0.0
        %4807 = vadd.xlane.f32.xlu0 %v4806
        %v4808 = vpop.xlane.xlu0 %4807
        %v4809 = vsel %vm813, %v4803, 0.0
        %4810 = vadd.xlane.f32.xlu0 %v4809
        %v4811 = vpop.xlane.xlu0 %4810
        %v4812 = vsel %vm813, %v4804, 0.0
        %4813 = vadd.xlane.f32.xlu0 %v4812
        %v4814 = vpop.xlane.xlu0 %4813
        %v4815 = vsel %vm813, %v4805, 0.0
        %4816 = vadd.xlane.f32.xlu0 %v4815
        %v4817 = vpop.xlane.xlu0 %4816
        %v4818 = vmul.f32 %v4808, %v1973
        %v4819 = vmul.f32 %v4811, %v1973
        %v4820 = vmul.f32 %v4814, %v1973
        %v4821 = vmul.f32 %v4817, %v1973
        %v4822 = vadd.f32 %v4818, 1e-05
        %v4823 = vadd.f32 %v4819, 1e-05
        %v4824 = vadd.f32 %v4820, 1e-05
        %v4825 = vadd.f32 %v4821, 1e-05
        %v4826 = vrsqrt.pop %v4822
        %v4827 = vrsqrt.pop %v4823
        %v4828 = vrsqrt.pop %v4824
        %v4829 = vrsqrt.pop %v4825
        %v4830 = vmul.f32 %v4798, %v4826
        %v4831 = vmul.f32 %v4799, %v4827
        %v4832 = vmul.f32 %v4800, %v4828
        %v4833 = vmul.f32 %v4801, %v4829
        %v4835 = vlaneseq
        %v4836 = vshrl.u32 %v4835, 7
        %v4837 = vsub.s32 0, %v4836
        %v4838 = vrot.slane %v4779, %v4837
        %v4840 = vmul.f32 %v4830, %v4838
        %v4841 = vmul.f32 %v4831, %v4838
        %v4842 = vmul.f32 %v4832, %v4838
        %v4843 = vmul.f32 %v4833, %v4838
        %v4845 = vlaneseq
        %v4846 = vshrl.u32 %v4845, 7
        %v4847 = vsub.s32 0, %v4846
        %v4848 = vrot.slane %v4781, %v4847
        %v4850 = vadd.f32 %v4840, %v4848
        %v4851 = vadd.f32 %v4841, %v4848
        %v4852 = vadd.f32 %v4842, %v4848
        %v4853 = vadd.f32 %v4843, %v4848
        %s4854 = scalar_lea.vmem [#allocation5], 32
        %v4855 = vld [vmem:[%s4854] sm:$0xf]
        %v4856 = vld [vmem:[%s4854 + $0x4] sm:$0xf]
        %v4857 = vld [vmem:[%s4854 + $0x8] sm:$0xf]
        %v4858 = vld [vmem:[%s4854 + $0xc] sm:$0xf]
        %v4859 = vpack.c.bf16 %v4851, %v4850
        %v4860 = vpack.c.bf16 %v4853, %v4852
        %s4861 = scalar_lea.vmem %s8, 2
        %v4862 = vld [vmem:[%s4861] sm:$0x1]
        %v4864 = vlaneseq
        %v4865 = vshrl.u32 %v4864, 7
        %v4866 = vsub.s32 0, %v4865
        %v4867 = vrot.slane %v4862, %v4866
        %v4873 = vunpack.c.l.b16 %v4855
        %v4874 = vunpack.c.l.b16 %v4856
        %v4875 = vunpack.c.l.b16 %v4857
        %v4876 = vunpack.c.l.b16 %v4858
        %v4877 = vpack.c.b16 %v4874, %v4873
        %v4878 = vpack.c.b16 %v4876, %v4875
        %v4882 = vsel %vm813, %v4859, 0
        %v4885 = vsel %vm813, %v4860, 0
        %4887 = vmatprep.subr.bf16.mxu0 0
        %4888 = vmatpush1.bf16.msra.mxu0 %v4877
        %4889 = vmatprep.subr.bf16.mxu0 0
        %4890 = vmatpush1.bf16.msra.mxu0 %v4878
        %4891 = vmatprep.subr.bf16.mxu0 0
        %4892 = vmatpush1.bf16.msra.mxu0 0
        %4893 = vmatprep.subr.bf16.mxu0 0
        %4894 = vmatpush1.bf16.msra.mxu0 0
        %4895 = vmatprep.subr.bf16.mxu0 0
        %4896 = vmatpush1.bf16.msra.mxu0 0
        %4897 = vmatprep.subr.bf16.mxu0 0
        %4898 = vmatpush1.bf16.msra.mxu0 0
        %4899 = vmatprep.subr.bf16.mxu0 0
        %4900 = vmatpush1.bf16.msra.mxu0 0
        %4901 = vmatprep.subr.bf16.mxu0 0
        %4902 = vmatpush1.bf16.msra.mxu0 0
        %4903 = vmatprep.subr.bf16.mxu0 0
        %4904 = vmatpush1.bf16.msra.mxu0 0
        %4905 = vmatprep.subr.bf16.mxu0 0
        %4906 = vmatpush1.bf16.msra.mxu0 0
        %4907 = vmatprep.subr.bf16.mxu0 0
        %4908 = vmatpush1.bf16.msra.mxu0 0
        %4909 = vmatprep.subr.bf16.mxu0 0
        %4910 = vmatpush1.bf16.msra.mxu0 0
        %4911 = vmatprep.subr.bf16.mxu0 0
        %4912 = vmatpush1.bf16.msra.mxu0 0
        %4913 = vmatprep.subr.bf16.mxu0 0
        %4914 = vmatpush1.bf16.msra.mxu0 0
        %4915 = vmatprep.subr.bf16.mxu0 0
        %4916 = vmatpush1.bf16.msra.mxu0 0
        %4917 = vmatprep.subr.bf16.mxu0 0
        %4918 = vmatpush1.bf16.msra.mxu0 0
        %4919 = vmatprep.mubr.bf16.mxu0 0
        %4920 = vmatmul.mubr.bf16.gmra.mrb[0].mxu0 %v4882
        %v4921 = vpop.f32.mrb[0].mxu0
        %v4922 = vadd.f32 %v4867, %v4921
        %v4923 = vpop.f32.mrb[0].mxu0
        %v4924 = vpop.f32.mrb[0].mxu0
        %v4925 = vadd.f32 %v4867, %v4924
        %v4926 = vpop.f32.mrb[0].mxu0
        %4927 = vmatprep.mubr.bf16.mxu0 0
        %4928 = vmatmul.mubr.bf16.gmra.mrb[0].mxu0 %v4885
        %v4929 = vpop.f32.mrb[0].mxu0
        %v4930 = vadd.f32 %v4867, %v4929
        %v4931 = vpop.f32.mrb[0].mxu0
        %v4932 = vpop.f32.mrb[0].mxu0
        %v4933 = vadd.f32 %v4867, %v4932
        %v4934 = vpop.f32.mrb[0].mxu0
        %4935 = vdwg.mxu0
        %v4936 = vmax.f32 %v4922, 0.0
        %v4937 = vmax.f32 %v4925, 0.0
        %v4938 = vmax.f32 %v4930, 0.0
        %v4939 = vmax.f32 %v4933, 0.0
        %s4940 = scalar_lea.vmem %s9, 64
        %v4941 = vld [vmem:[%s4940] sm:$0xf]
        %v4942 = vld [vmem:[%s4940 + $0x4] sm:$0xf]
        %v4943 = vld [vmem:[%s4940 + $0x8] sm:$0xf]
        %v4944 = vld [vmem:[%s4940 + $0xc] sm:$0xf]
        %v4945 = vld [vmem:[%s4940 + $0x10] sm:$0xf]
        %v4946 = vld [vmem:[%s4940 + $0x14] sm:$0xf]
        %v4947 = vld [vmem:[%s4940 + $0x18] sm:$0xf]
        %v4948 = vld [vmem:[%s4940 + $0x1c] sm:$0xf]
        %v4949 = vpack.c.bf16 %v4937, %v4936
        %v4950 = vpack.c.bf16 %v4939, %v4938
        %s4951 = scalar_lea.vmem %s10, 2
        %v4952 = vld [vmem:[%s4951] sm:$0x1]
        %v4954 = vlaneseq
        %v4955 = vshrl.u32 %v4954, 7
        %v4956 = vsub.s32 0, %v4955
        %v4957 = vrot.slane %v4952, %v4956
        %v4967 = vunpack.c.l.b16 %v4941
        %v4968 = vunpack.c.l.b16 %v4942
        %v4969 = vunpack.c.l.b16 %v4943
        %v4970 = vunpack.c.l.b16 %v4944
        %v4971 = vunpack.c.l.b16 %v4945
        %v4972 = vunpack.c.l.b16 %v4946
        %v4973 = vunpack.c.l.b16 %v4947
        %v4974 = vunpack.c.l.b16 %v4948
        %v4975 = vpack.c.b16 %v4968, %v4967
        %v4976 = vpack.c.b16 %v4970, %v4969
        %v4977 = vpack.c.b16 %v4972, %v4971
        %v4978 = vpack.c.b16 %v4974, %v4973
        %v4984 = vsel %vm2159, %v4949, 0
        %v4987 = vsel %vm2159, %v4950, 0
        %4989 = vmatprep.subr.bf16.mxu0 0
        %4990 = vmatpush1.bf16.msra.mxu0 %v4975
        %4991 = vmatprep.subr.bf16.mxu0 0
        %4992 = vmatpush1.bf16.msra.mxu0 %v4976
        %4993 = vmatprep.subr.bf16.mxu0 0
        %4994 = vmatpush1.bf16.msra.mxu0 %v4977
        %4995 = vmatprep.subr.bf16.mxu0 0
        %4996 = vmatpush1.bf16.msra.mxu0 %v4978
        %4997 = vmatprep.subr.bf16.mxu0 0
        %4998 = vmatpush1.bf16.msra.mxu0 0
        %4999 = vmatprep.subr.bf16.mxu0 0
        %5000 = vmatpush1.bf16.msra.mxu0 0
        %5001 = vmatprep.subr.bf16.mxu0 0
        %5002 = vmatpush1.bf16.msra.mxu0 0
        %5003 = vmatprep.subr.bf16.mxu0 0
        %5004 = vmatpush1.bf16.msra.mxu0 0
        %5005 = vmatprep.subr.bf16.mxu0 0
        %5006 = vmatpush1.bf16.msra.mxu0 0
        %5007 = vmatprep.subr.bf16.mxu0 0
        %5008 = vmatpush1.bf16.msra.mxu0 0
        %5009 = vmatprep.subr.bf16.mxu0 0
        %5010 = vmatpush1.bf16.msra.mxu0 0
        %5011 = vmatprep.subr.bf16.mxu0 0
        %5012 = vmatpush1.bf16.msra.mxu0 0
        %5013 = vmatprep.subr.bf16.mxu0 0
        %5014 = vmatpush1.bf16.msra.mxu0 0
        %5015 = vmatprep.subr.bf16.mxu0 0
        %5016 = vmatpush1.bf16.msra.mxu0 0
        %5017 = vmatprep.subr.bf16.mxu0 0
        %5018 = vmatpush1.bf16.msra.mxu0 0
        %5019 = vmatprep.subr.bf16.mxu0 0
        %5020 = vmatpush1.bf16.msra.mxu0 0
        %5021 = vmatprep.mubr.bf16.mxu0 0
        %5022 = vmatmul.mubr.bf16.gmra.mrb[0].mxu0 %v4984
        %v5023 = vpop.f32.mrb[0].mxu0
        %v5024 = vadd.f32 %v4957, %v5023
        %v5025 = vpop.f32.mrb[0].mxu0
        %v5026 = vpop.f32.mrb[0].mxu0
        %v5027 = vadd.f32 %v4957, %v5026
        %v5028 = vpop.f32.mrb[0].mxu0
        %5029 = vmatprep.mubr.bf16.mxu0 0
        %5030 = vmatmul.mubr.bf16.gmra.mrb[0].mxu0 %v4987
        %v5031 = vpop.f32.mrb[0].mxu0
        %v5032 = vadd.f32 %v4957, %v5031
        %v5033 = vpop.f32.mrb[0].mxu0
        %v5034 = vpop.f32.mrb[0].mxu0
        %v5035 = vadd.f32 %v4957, %v5034
        %v5036 = vpop.f32.mrb[0].mxu0
        %5037 = vdwg.mxu0
        %v5038 = vadd.f32 %v4850, %v5024
        %v5039 = vadd.f32 %v4851, %v5027
        %v5040 = vadd.f32 %v4852, %v5032
        %v5041 = vadd.f32 %v4853, %v5035
        %s5042 = scalar_lea.vmem [#allocation8], 2
        %v5043 = vld [vmem:[%s5042] sm:$0x1]
        %s5044 = scalar_lea.vmem [#allocation10], 2
        %v5045 = vld [vmem:[%s5044] sm:$0x1]
        %v5046 = vsel %vm813, %v5038, 0.0
        %5047 = vadd.xlane.f32.xlu0 %v5046
        %v5048 = vpop.xlane.xlu0 %5047
        %v5049 = vsel %vm813, %v5039, 0.0
        %5050 = vadd.xlane.f32.xlu0 %v5049
        %v5051 = vpop.xlane.xlu0 %5050
        %v5052 = vsel %vm813, %v5040, 0.0
        %5053 = vadd.xlane.f32.xlu0 %v5052
        %v5054 = vpop.xlane.xlu0 %5053
        %v5055 = vsel %vm813, %v5041, 0.0
        %5056 = vadd.xlane.f32.xlu0 %v5055
        %v5057 = vpop.xlane.xlu0 %5056
        %v5058 = vmul.f32 %v5048, %v1973
        %v5059 = vmul.f32 %v5051, %v1973
        %v5060 = vmul.f32 %v5054, %v1973
        %v5061 = vmul.f32 %v5057, %v1973
        %v5062 = vsub.f32 %v5038, %v5058
        %v5063 = vsub.f32 %v5039, %v5059
        %v5064 = vsub.f32 %v5040, %v5060
        %v5065 = vsub.f32 %v5041, %v5061
        %v5066 = vmul.f32 %v5062, %v5062
        %v5067 = vmul.f32 %v5063, %v5063
        %v5068 = vmul.f32 %v5064, %v5064
        %v5069 = vmul.f32 %v5065, %v5065
        %v5070 = vsel %vm813, %v5066, 0.0
        %5071 = vadd.xlane.f32.xlu0 %v5070
        %v5072 = vpop.xlane.xlu0 %5071
        %v5073 = vsel %vm813, %v5067, 0.0
        %5074 = vadd.xlane.f32.xlu0 %v5073
        %v5075 = vpop.xlane.xlu0 %5074
        %v5076 = vsel %vm813, %v5068, 0.0
        %5077 = vadd.xlane.f32.xlu0 %v5076
        %v5078 = vpop.xlane.xlu0 %5077
        %v5079 = vsel %vm813, %v5069, 0.0
        %5080 = vadd.xlane.f32.xlu0 %v5079
        %v5081 = vpop.xlane.xlu0 %5080
        %v5082 = vmul.f32 %v5072, %v1973
        %v5083 = vmul.f32 %v5075, %v1973
        %v5084 = vmul.f32 %v5078, %v1973
        %v5085 = vmul.f32 %v5081, %v1973
        %v5086 = vadd.f32 %v5082, 1e-05
        %v5087 = vadd.f32 %v5083, 1e-05
        %v5088 = vadd.f32 %v5084, 1e-05
        %v5089 = vadd.f32 %v5085, 1e-05
        %v5090 = vrsqrt.pop %v5086
        %v5091 = vrsqrt.pop %v5087
        %v5092 = vrsqrt.pop %v5088
        %v5093 = vrsqrt.pop %v5089
        %v5094 = vmul.f32 %v5062, %v5090
        %v5095 = vmul.f32 %v5063, %v5091
        %v5096 = vmul.f32 %v5064, %v5092
        %v5097 = vmul.f32 %v5065, %v5093
        %v5099 = vlaneseq
        %v5100 = vshrl.u32 %v5099, 7
        %v5101 = vsub.s32 0, %v5100
        %v5102 = vrot.slane %v5043, %v5101
        %v5104 = vmul.f32 %v5094, %v5102
        %v5105 = vmul.f32 %v5095, %v5102
        %v5106 = vmul.f32 %v5096, %v5102
        %v5107 = vmul.f32 %v5097, %v5102
        %v5109 = vlaneseq
        %v5110 = vshrl.u32 %v5109, 7
        %v5111 = vsub.s32 0, %v5110
        %v5112 = vrot.slane %v5045, %v5111
        %v5114 = vadd.f32 %v5104, %v5112
        %v5115 = vadd.f32 %v5105, %v5112
        %v5116 = vadd.f32 %v5106, %v5112
        %v5117 = vadd.f32 %v5107, %v5112
        %5118 = vst.msk [vmem:[%s737] sm:$0xff] %vm813, %v5114
        %5120 = vrot.lane.b32.xlu0 %v5115, 32
        %v5121 = vpop.permute.xlu0 %5120
        %5123 = vst.msk [vmem:[%s737] sm:$0xff] %vm2298, %v5121
        %5125 = vrot.lane.b32.xlu0 %v5116, 64
        %v5126 = vpop.permute.xlu0 %5125
        %5128 = vst.msk [vmem:[%s737] sm:$0xff] %vm2304, %v5126
        %5130 = vrot.lane.b32.xlu0 %v5117, 96
        %v5131 = vpop.permute.xlu0 %5130
        %5133 = vst.msk [vmem:[%s737] sm:$0xff] %vm2310, %v5131
        %v5134 = vld [vmem:[%s737] sm:$0xff]
        %v5135 = vld [vmem:[%s15] sm:$0xf]
        %v5136 = vld [vmem:[%s15 + $0x4] sm:$0xf]
        %v5137 = vld [vmem:[%s15 + $0x8] sm:$0xf]
        %v5138 = vld [vmem:[%s15 + $0xc] sm:$0xf]
        %v5139 = vld [vmem:[%s15 + $0x10] sm:$0xf]
        %v5140 = vld [vmem:[%s15 + $0x14] sm:$0xf]
        %v5141 = vld [vmem:[%s15 + $0x18] sm:$0xf]
        %v5142 = vld [vmem:[%s15 + $0x1c] sm:$0xf]
        %v5143 = vld [vmem:[%s15 + $0x20] sm:$0xf]
        %v5144 = vld [vmem:[%s15 + $0x24] sm:$0xf]
        %v5145 = vld [vmem:[%s15 + $0x28] sm:$0xf]
        %v5146 = vld [vmem:[%s15 + $0x2c] sm:$0xf]
        %v5147 = vld [vmem:[%s15 + $0x30] sm:$0xf]
        %v5148 = vld [vmem:[%s15 + $0x34] sm:$0xf]
        %v5149 = vld [vmem:[%s15 + $0x38] sm:$0xf]
        %v5150 = vld [vmem:[%s15 + $0x3c] sm:$0xf]
        %v5151 = vpack.c.bf16 %v5134, %v5134
        %v5152 = vld [vmem:[#allocation11] sm:$0x1]
        %v5154 = vlaneseq
        %v5155 = vshrl.u32 %v5154, 7
        %v5156 = vsub.s32 0, %v5155
        %v5157 = vrot.slane %v5152, %v5156
        %v5175 = vunpack.c.l.b16 %v5135
        %v5176 = vunpack.c.l.b16 %v5136
        %v5177 = vunpack.c.l.b16 %v5137
        %v5178 = vunpack.c.l.b16 %v5138
        %v5179 = vunpack.c.l.b16 %v5139
        %v5180 = vunpack.c.l.b16 %v5140
        %v5181 = vunpack.c.l.b16 %v5141
        %v5182 = vunpack.c.l.b16 %v5142
        %v5183 = vunpack.c.l.b16 %v5143
        %v5184 = vunpack.c.l.b16 %v5144
        %v5185 = vunpack.c.l.b16 %v5145
        %v5186 = vunpack.c.l.b16 %v5146
        %v5187 = vunpack.c.l.b16 %v5147
        %v5188 = vunpack.c.l.b16 %v5148
        %v5189 = vunpack.c.l.b16 %v5149
        %v5190 = vunpack.c.l.b16 %v5150
        %v5191 = vpack.c.b16 %v5176, %v5175
        %v5192 = vpack.c.b16 %v5178, %v5177
        %v5193 = vpack.c.b16 %v5180, %v5179
        %v5194 = vpack.c.b16 %v5182, %v5181
        %v5195 = vpack.c.b16 %v5184, %v5183
        %v5196 = vpack.c.b16 %v5186, %v5185
        %v5197 = vpack.c.b16 %v5188, %v5187
        %v5198 = vpack.c.b16 %v5190, %v5189
        %5207 = vmatprep.subr.bf16.mxu0 0
        %5208 = vmatpush1.bf16.msra.mxu0 %v5191
        %5209 = vmatprep.subr.bf16.mxu0 0
        %5210 = vmatpush1.bf16.msra.mxu0 %v5192
        %5211 = vmatprep.subr.bf16.mxu0 0
        %5212 = vmatpush1.bf16.msra.mxu0 %v5193
        %5213 = vmatprep.subr.bf16.mxu0 0
        %5214 = vmatpush1.bf16.msra.mxu0 %v5194
        %5215 = vmatprep.subr.bf16.mxu0 0
        %5216 = vmatpush1.bf16.msra.mxu0 %v5195
        %5217 = vmatprep.subr.bf16.mxu0 0
        %5218 = vmatpush1.bf16.msra.mxu0 %v5196
        %5219 = vmatprep.subr.bf16.mxu0 0
        %5220 = vmatpush1.bf16.msra.mxu0 %v5197
        %5221 = vmatprep.subr.bf16.mxu0 0
        %5222 = vmatpush1.bf16.msra.mxu0 %v5198
        %5223 = vmatprep.subr.bf16.mxu0 0
        %5224 = vmatpush1.bf16.msra.mxu0 0
        %5225 = vmatprep.subr.bf16.mxu0 0
        %5226 = vmatpush1.bf16.msra.mxu0 0
        %5227 = vmatprep.subr.bf16.mxu0 0
        %5228 = vmatpush1.bf16.msra.mxu0 0
        %5229 = vmatprep.subr.bf16.mxu0 0
        %5230 = vmatpush1.bf16.msra.mxu0 0
        %5231 = vmatprep.subr.bf16.mxu0 0
        %5232 = vmatpush1.bf16.msra.mxu0 0
        %5233 = vmatprep.subr.bf16.mxu0 0
        %5234 = vmatpush1.bf16.msra.mxu0 0
        %5235 = vmatprep.subr.bf16.mxu0 0
        %5236 = vmatpush1.bf16.msra.mxu0 0
        %5237 = vmatprep.subr.bf16.mxu0 0
        %5238 = vmatpush1.bf16.msra.mxu0 0
        %5239 = vmatprep.mubr.bf16.mxu0 0
        %5240 = vmatmul.mubr.bf16.gmra.mrb[0].mxu0 %v5151
        %v5241 = vpop.f32.mrb[0].mxu0
        %v5242 = vadd.f32 %v5157, %v5241
        %v5243 = vpop.f32.mrb[0].mxu0
        %v5244 = vpop.f32.mrb[0].mxu0
        %v5245 = vpop.f32.mrb[0].mxu0
        %5246 = vdwg.mxu0
        %5247 = vst [vmem:[%s741] sm:$0xff] %v5242
        %p5248 = scmp.lt.s32.totalorder %s36, 1
        %s5249 = scalar_select %p5248, %s36, 1
        %s5250 = smul.addr %s5249, 8
        %s5251 = scalar_lea.vmem %s17, %s5250
        %p5252 = scmp.lt.s32.totalorder %s36, 1
        %s5253 = scalar_select %p5252, %s36, 1
        %s5254 = smul.addr %s5253, 8
        %s5255 = scalar_lea.vmem %s18, %s5254
        %p5256 = scmp.lt.s32.totalorder %s36, 1
        %s5257 = scalar_select %p5256, %s36, 1
        %s5258 = smul.addr %s5257, 8
        %s5259 = scalar_lea.vmem %s19, %s5258
        %p5260 = scmp.lt.s32.totalorder %s36, 1
        %s5261 = scalar_select %p5260, %s36, 1
        %s5262 = smul.addr %s5261, 8
        %s5263 = scalar_lea.vmem %s20, %s5262
        // Predicated region
        $region113: #{forward.1} parent=87 // pred_check
          %p5264 = pneg %p416
        $region114: #{forward.1} parent=87 // pred_check_branch
          %5266 = sbr.rel (%p5264) target = $region116
        $region115: #{forward.1} parent=87 // pred_region
          _
        $region116: #{forward.1} parent=87 // pred_fallthru
          _
        // Predicated region
        $region117: #{forward.1} parent=87 // pred_check
          %p5267 = pneg %p442
        $region118: #{forward.1} parent=87 // pred_check_branch
          %5269 = sbr.rel (%p5267) target = $region120
        $region119: #{forward.1} parent=87 // pred_region
          _
        $region120: #{forward.1} parent=87 // pred_fallthru
          _
        // Predicated region
        $region121: #{forward.1} parent=87 // pred_check
          %p5270 = pneg %p468
        $region122: #{forward.1} parent=87 // pred_check_branch
          %5272 = sbr.rel (%p5270) target = $region124
        $region123: #{forward.1} parent=87 // pred_region
          _
        $region124: #{forward.1} parent=87 // pred_fallthru
          _
        // Predicated region
        $region125: #{forward.1} parent=87 // pred_check
          %p5273 = pneg %p494
        $region126: #{forward.1} parent=87 // pred_check_branch
          %5275 = sbr.rel (%p5273) target = $region128
        $region127: #{forward.1} parent=87 // pred_region
          _
        $region128: #{forward.1} parent=87 // pred_fallthru
          _
      $region88: #{forward.1} parent=5 // pred_fallthru
        _
      %p5276 = scmp.le.s32.totalorder 2, %s31
      // Predicated region
      $region129: #{forward.1} parent=5 // pred_check
        %p5277 = pneg %p5276
      $region130: #{forward.1} parent=5 // pred_check_branch
        %5279 = sbr.rel (%p5277) target = $region132
      $region131: #{forward.1} parent=5 // pred_region
        %s5280 = ssub.s32 %s31, 2
        // Predicated region
        $region133: #{forward.1} parent=131 // pred_check
          %p5281 = pneg %p422
        $region134: #{forward.1} parent=131 // pred_check_branch
          %5283 = sbr.rel (%p5281) target = $region136
        $region135: #{forward.1} parent=131 // pred_region
          %p5284 = scmp.lt.s32.totalorder %s37, 1
          %s5285 = scalar_select %p5284, %s37, 1
          %s5286 = smul.addr %s5285, 8
          %s5287 = scalar_lea.vmem %s17, %s5286
        $region136: #{forward.1} parent=131 // pred_fallthru
          _
        // Predicated region
        $region137: #{forward.1} parent=131 // pred_check
          %p5288 = pneg %p448
        $region138: #{forward.1} parent=131 // pred_check_branch
          %5290 = sbr.rel (%p5288) target = $region140
        $region139: #{forward.1} parent=131 // pred_region
          %p5291 = scmp.lt.s32.totalorder %s37, 1
          %s5292 = scalar_select %p5291, %s37, 1
          %s5293 = smul.addr %s5292, 8
          %s5294 = scalar_lea.vmem %s18, %s5293
        $region140: #{forward.1} parent=131 // pred_fallthru
          _
        // Predicated region
        $region141: #{forward.1} parent=131 // pred_check
          %p5295 = pneg %p474
        $region142: #{forward.1} parent=131 // pred_check_branch
          %5297 = sbr.rel (%p5295) target = $region144
        $region143: #{forward.1} parent=131 // pred_region
          %p5298 = scmp.lt.s32.totalorder %s37, 1
          %s5299 = scalar_select %p5298, %s37, 1
          %s5300 = smul.addr %s5299, 8
          %s5301 = scalar_lea.vmem %s19, %s5300
        $region144: #{forward.1} parent=131 // pred_fallthru
          _
        // Predicated region
        $region145: #{forward.1} parent=131 // pred_check
          %p5302 = pneg %p500
        $region146: #{forward.1} parent=131 // pred_check_branch
          %5304 = sbr.rel (%p5302) target = $region148
        $region147: #{forward.1} parent=131 // pred_region
          %p5305 = scmp.lt.s32.totalorder %s37, 1
          %s5306 = scalar_select %p5305, %s37, 1
          %s5307 = smul.addr %s5306, 8
          %s5308 = scalar_lea.vmem %s20, %s5307
        $region148: #{forward.1} parent=131 // pred_fallthru
          _
      $region132: #{forward.1} parent=5 // pred_fallthru
        _
    $region6: #{forward.1} parent=1 // loop_footer
      %s35 = sadd.s32 1, %s31
    $region7: #{forward.1} parent=1 // loop_footer_branch
      %30 = sbr.rel target = $region3
    $region8: #{forward.1} parent=1 // loop_exit
      _
    %5309 = vsyncpa [#allocation4], 1
    %s5310 = scalar_lea.sflag [#allocation4], 1
    %5311 = vsyncpa %s5310, 1
    %5312 = vsyncpa [#allocation6], 1
    %5313 = vsyncpa [#allocation9], 1
    %5314 = vsyncpa [#allocation12], 1

</llo_original>
